<compile_context>
chip_gen: v6e
topology: v6e:2x2x1
jax: 0.10.0
libtpu: 0.0.40
codegen_flags: <defaults>
</compile_context>

<pallas_src>
import jax
import jax.numpy as jnp
import numpy as np
from jax.experimental import pallas as pl
from jax.experimental.pallas import tpu as pltpu

BN_EPS = 1e-5


# ----------------------------------------------------------------------------
# parameter construction (deterministic, synthetic)
# ----------------------------------------------------------------------------
def _uniform(key, shape, fan_in):
    k = 1.0 / float(np.sqrt(fan_in))
    return jax.random.uniform(key, shape, jnp.float32, -k, k)


def _bn_params(key, c):
    k1, k2, k3, k4 = jax.random.split(key, 4)
    gamma = jax.random.uniform(k1, (c,), jnp.float32, 0.8, 1.2)
    beta = jax.random.uniform(k2, (c,), jnp.float32, -0.1, 0.1)
    mean = jax.random.uniform(k3, (c,), jnp.float32, -0.1, 0.1)
    var = jax.random.uniform(k4, (c,), jnp.float32, 0.9, 1.1)
    return gamma, beta, mean, var


def _fold_bn(w, b, gamma, beta, mean, var):
    # y = gamma * (x@w + b - mean) / sqrt(var+eps) + beta  ==  x @ (w*s) + (b*s + t)
    s = gamma / jnp.sqrt(var + BN_EPS)
    t = beta - mean * s
    return w * s[None, :], (b * s + t)[None, :]  # bias kept 2D (1, C)


def init_params(key, bottleneck=126, n_prim=4):
    keys = iter(jax.random.split(key, 64))
    nk = lambda: next(keys)

    bott_pad = ((bottleneck + 127) // 128) * 128   # lane-align the latent code (126 -> 128)
    pad = bott_pad - bottleneck

    # --- encoder: PointNetfeat (3 -> 64 -> 128 -> 1024) + Linear(1024, bottleneck) ---
    w1 = _uniform(nk(), (3, 64), 3)
    b1 = _uniform(nk(), (64,), 3)
    w2 = _uniform(nk(), (64, 128), 64)
    b2 = _uniform(nk(), (128,), 64)
    w3 = _uniform(nk(), (128, 1024), 128)
    b3 = _uniform(nk(), (1024,), 128)
    w1e, b1e = _fold_bn(w1, b1, *_bn_params(nk(), 64))
    w2e, b2e = _fold_bn(w2, b2, *_bn_params(nk(), 128))
    w3e, b3e = _fold_bn(w3, b3, *_bn_params(nk(), 1024))
    wl = _uniform(nk(), (1024, bottleneck), 1024)
    bl = _uniform(nk(), (bottleneck,), 1024)
    wle, ble = _fold_bn(wl, bl, *_bn_params(nk(), bottleneck))
    # zero-pad to 128 lanes: padded latent entries are relu(0 + 0) = 0 -> inert
    wle = jnp.pad(wle, ((0, 0), (0, pad)))
    ble = jnp.pad(ble, ((0, 0), (0, pad)))
    enc = (w1e, b1e, w2e, b2e, w3e, b3e, wle, ble)

    # --- decoders: n_prim x PointGenCon(bottleneck_size = 2 + bottleneck) ---
    C = 2 + bottleneck                      # 128
    dims = [(C, C), (C, C // 2), (C // 2, C // 4), (C // 4, 3)]
    per = {k: [] for k in ("w1g", "w1f", "b1", "w2", "b2", "w3", "b3", "w4", "b4")}
    for _ in range(n_prim):
        ws, bs = [], []
        for li, (cin, cout) in enumerate(dims):
            w = _uniform(nk(), (cin, cout), cin)
            b = _uniform(nk(), (cout,), cin)
            if li < 3:                       # conv1/2/3 have BN, conv4 does not
                w, b2d = _fold_bn(w, b, *_bn_params(nk(), cout))
            else:
                b2d = b[None, :]
            ws.append(w)
            bs.append(b2d)
        wc1 = ws[0]
        per["w1g"].append(wc1[:2])                                 # grid channels     (2, C)
        per["w1f"].append(jnp.pad(wc1[2:], ((0, pad), (0, 0))))    # latent channels   (bott_pad, C)
        per["b1"].append(bs[0])
        per["w2"].append(ws[1]); per["b2"].append(bs[1])
        per["w3"].append(ws[2]); per["b3"].append(bs[2])
        per["w4"].append(ws[3]); per["b4"].append(bs[3])
    dec = tuple(jnp.stack(per[k], axis=0)
                for k in ("w1g", "w1f", "b1", "w2", "b2", "w3", "b3", "w4", "b4"))
    return enc, dec


# ----------------------------------------------------------------------------
# fused Pallas kernel: PointNet encoder + n_prim PointGenCon decoders
# ----------------------------------------------------------------------------
def _atlasnet_kernel(x_ref, grids_ref,
                     w1, b1, w2, b2, w3, b3, wl, bl,
                     w1g, w1f, b1d, w2d, b2d, w3d, b3d, w4d, b4d,
                     out_ref):
    # x_ref:     (B*N, 3)          all input points, whole batch
    # grids_ref: (n_prim, B*P, 2)  per-primitive random grids (batch folded into M)
    # out_ref:   (B, n_prim*P, 3)  final primitive-major point layout
    B = out_ref.shape[0]
    n_prim = grids_ref.shape[0]
    P = grids_ref.shape[1] // B
    N = x_ref.shape[0] // B

    # ---- encoder (PointNetfeat + bottleneck linear), feat stays in VMEM ----
    h = jnp.maximum(jnp.dot(x_ref[...], w1[...], preferred_element_type=jnp.float32) + b1[...], 0.0)
    h = jnp.maximum(jnp.dot(h, w2[...], preferred_element_type=jnp.float32) + b2[...], 0.0)
    h = jnp.dot(h, w3[...], preferred_element_type=jnp.float32) + b3[...]          # bn3, no relu
    pooled = jnp.max(h.reshape(B, N, h.shape[-1]), axis=1)                          # (B, 1024)
    feat = jnp.maximum(
        jnp.dot(pooled, wl[...], preferred_element_type=jnp.float32) + bl[...], 0.0)  # (B, 128) lane-dense

    # ---- decoders: unrolled over primitives, weights already VMEM-resident ----
    for p in range(n_prim):
        # conv1 split: latent half computed once per batch row (b1 folded in here),
        # then broadcast over the P points of this primitive via one reshape-broadcast.
        fproj = jnp.dot(feat, w1f[p], preferred_element_type=jnp.float32) + b1d[p]   # (B, C1)
        c1 = fproj.shape[-1]
        fproj_full = jnp.broadcast_to(fproj[:, None, :], (B, P, c1)).reshape(B * P, c1)
        hd = jnp.dot(grids_ref[p], w1g[p], preferred_element_type=jnp.float32) + fproj_full
        hd = jnp.maximum(hd, 0.0)
        hd = jnp.maximum(jnp.dot(hd, w2d[p], preferred_element_type=jnp.float32) + b2d[p], 0.0)
        hd = jnp.maximum(jnp.dot(hd, w3d[p], preferred_element_type=jnp.float32) + b3d[p], 0.0)
        o = jnp.tanh(jnp.dot(hd, w4d[p], preferred_element_type=jnp.float32) + b4d[p])  # (B*P, 3)
        # single aligned store for this primitive's block of points
        out_ref[:, p * P:(p + 1) * P, :] = o.reshape(B, P, 3)


def atlasnet_forward(x, enc_params, dec_params, rand_grids):
    """x: (B, N, 3) input cloud (channels-last); rand_grids: (n_prim, B, P, 2) ~ U(0,1)."""
    B, N, _ = x.shape
    n_prim, _, P, _ = rand_grids.shape
    # alignment assumptions used by the in-kernel reshapes / slices
    assert N % 8 == 0 and P % 8 == 0, "N and P must be multiples of 8 (sublane alignment)"

    x_flat = x.reshape(B * N, 3)                     # contiguous view
    grids_flat = rand_grids.reshape(n_prim, B * P, 2)  # contiguous view
    params = (*enc_params, *dec_params)

    def full(a):  # whole array resident in VMEM, loaded once
        return pl.BlockSpec(a.shape, lambda i, nd=a.ndim: (0,) * nd)

    return pl.pallas_call(
        _atlasnet_kernel,
        out_shape=jax.ShapeDtypeStruct((B, n_prim * P, 3), jnp.float32),
        grid=(1,),
        in_specs=[full(x_flat), full(grids_flat)] + [full(a) for a in params],
        out_specs=pl.BlockSpec((B, n_prim * P, 3), lambda i: (0, 0, 0)),
        compiler_params=pltpu.CompilerParams(dimension_semantics=("arbitrary",)),
    )(x_flat, grids_flat, *params)


# ----------------------------------------------------------------------------
# plain-JAX reference for correctness checking (f32, highest matmul precision)
# ----------------------------------------------------------------------------
def reference_forward(x, enc, dec, rand_grids):
    hp = jax.lax.Precision.HIGHEST
    mm = lambda a, b: jnp.matmul(a, b, precision=hp)

    w1, b1, w2, b2, w3, b3, wl, bl = enc
    h = jnp.maximum(mm(x, w1) + b1, 0.0)
    h = jnp.maximum(mm(h, w2) + b2, 0.0)
    h = mm(h, w3) + b3
    feat = jnp.max(h, axis=1)                                 # (B, 1024)
    feat = jnp.maximum(mm(feat, wl) + bl, 0.0)                # (B, 128), last cols are 0

    w1g, w1f, b1d, w2d, b2d, w3d, b3d, w4d, b4d = dec
    n_prim, B, P, _ = rand_grids.shape
    outs = []
    for p in range(n_prim):
        fproj = mm(feat, w1f[p])                              # (B, C1)
        g = rand_grids[p]                                     # (B, P, 2)
        h = jnp.maximum(mm(g, w1g[p]) + fproj[:, None, :] + b1d[p], 0.0)
        h = jnp.maximum(mm(h, w2d[p]) + b2d[p], 0.0)
        h = jnp.maximum(mm(h, w3d[p]) + b3d[p], 0.0)
        outs.append(jnp.tanh(mm(h, w4d[p]) + b4d[p]))         # (B, P, 3)
    return jnp.concatenate(outs, axis=1)                      # (B, n_prim*P, 3)


# ----------------------------------------------------------------------------
if __name__ == "__main__":
    B, N_in = 2, 64                      # batch, input-cloud points
    num_points, n_prim, bottleneck = 256, 4, 126
    P = num_points // n_prim             # points per primitive

    key = jax.random.PRNGKey(0)
    k_x, k_p, k_g = jax.random.split(key, 3)
    x = jax.random.normal(k_x, (B, N_in, 3), jnp.float32)
    enc_params, dec_params = init_params(k_p, bottleneck=bottleneck, n_prim=n_prim)
    rand_grids = jax.random.uniform(k_g, (n_prim, B, P, 2), jnp.float32)  # train-mode grid

    out = jax.jit(atlasnet_forward)(x, enc_params, dec_params, rand_grids)
    out = jax.block_until_ready(out)
    assert out.shape == (B, num_points, 3), out.shape

    ref = reference_forward(x, enc_params, dec_params, rand_grids)
    np.testing.assert_allclose(np.asarray(out), np.asarray(ref), atol=5e-3, rtol=5e-3)

    print("KERNEL_OK")
</pallas_src>

<mosaic_0001>
module attributes {stable_mosaic.version = 11 : i64} {
  func.func @_atlasnet_kernel(%arg0: i32, %arg1: memref<128x3xf32, #tpu.memory_space<vmem>>, %arg2: memref<4x128x2xf32, #tpu.memory_space<vmem>>, %arg3: memref<3x64xf32, #tpu.memory_space<vmem>>, %arg4: memref<1x64xf32, #tpu.memory_space<vmem>>, %arg5: memref<64x128xf32, #tpu.memory_space<vmem>>, %arg6: memref<1x128xf32, #tpu.memory_space<vmem>>, %arg7: memref<128x1024xf32, #tpu.memory_space<vmem>>, %arg8: memref<1x1024xf32, #tpu.memory_space<vmem>>, %arg9: memref<1024x128xf32, #tpu.memory_space<vmem>>, %arg10: memref<1x128xf32, #tpu.memory_space<vmem>>, %arg11: memref<4x2x128xf32, #tpu.memory_space<vmem>>, %arg12: memref<4x128x128xf32, #tpu.memory_space<vmem>>, %arg13: memref<4x1x128xf32, #tpu.memory_space<vmem>>, %arg14: memref<4x128x64xf32, #tpu.memory_space<vmem>>, %arg15: memref<4x1x64xf32, #tpu.memory_space<vmem>>, %arg16: memref<4x64x32xf32, #tpu.memory_space<vmem>>, %arg17: memref<4x1x32xf32, #tpu.memory_space<vmem>>, %arg18: memref<4x32x3xf32, #tpu.memory_space<vmem>>, %arg19: memref<4x1x3xf32, #tpu.memory_space<vmem>>, %arg20: memref<2x256x3xf32, #tpu.memory_space<vmem>>) attributes {dimension_semantics = [#tpu.dimension_semantics<arbitrary>], iteration_bounds = array<i64: 1>, scalar_prefetch = 0 : i64, scratch_operands = 0 : i64, tpu.core_type = #tpu.core_type<tc>, window_params = [{pipeline_mode = #tpu.pipeline_mode<synchronous>, transform_indices = @transform_0, window_bounds = array<i64: 128, 3>}, {pipeline_mode = #tpu.pipeline_mode<synchronous>, transform_indices = @transform_1, window_bounds = array<i64: 4, 128, 2>}, {pipeline_mode = #tpu.pipeline_mode<synchronous>, transform_indices = @transform_2, window_bounds = array<i64: 3, 64>}, {pipeline_mode = #tpu.pipeline_mode<synchronous>, transform_indices = @transform_3, window_bounds = array<i64: 1, 64>}, {pipeline_mode = #tpu.pipeline_mode<synchronous>, transform_indices = @transform_4, window_bounds = array<i64: 64, 128>}, {pipeline_mode = #tpu.pipeline_mode<synchronous>, transform_indices = @transform_5, window_bounds = array<i64: 1, 128>}, {pipeline_mode = #tpu.pipeline_mode<synchronous>, transform_indices = @transform_6, window_bounds = array<i64: 128, 1024>}, {pipeline_mode = #tpu.pipeline_mode<synchronous>, transform_indices = @transform_7, window_bounds = array<i64: 1, 1024>}, {pipeline_mode = #tpu.pipeline_mode<synchronous>, transform_indices = @transform_8, window_bounds = array<i64: 1024, 128>}, {pipeline_mode = #tpu.pipeline_mode<synchronous>, transform_indices = @transform_9, window_bounds = array<i64: 1, 128>}, {pipeline_mode = #tpu.pipeline_mode<synchronous>, transform_indices = @transform_10, window_bounds = array<i64: 4, 2, 128>}, {pipeline_mode = #tpu.pipeline_mode<synchronous>, transform_indices = @transform_11, window_bounds = array<i64: 4, 128, 128>}, {pipeline_mode = #tpu.pipeline_mode<synchronous>, transform_indices = @transform_12, window_bounds = array<i64: 4, 1, 128>}, {pipeline_mode = #tpu.pipeline_mode<synchronous>, transform_indices = @transform_13, window_bounds = array<i64: 4, 128, 64>}, {pipeline_mode = #tpu.pipeline_mode<synchronous>, transform_indices = @transform_14, window_bounds = array<i64: 4, 1, 64>}, {pipeline_mode = #tpu.pipeline_mode<synchronous>, transform_indices = @transform_15, window_bounds = array<i64: 4, 64, 32>}, {pipeline_mode = #tpu.pipeline_mode<synchronous>, transform_indices = @transform_16, window_bounds = array<i64: 4, 1, 32>}, {pipeline_mode = #tpu.pipeline_mode<synchronous>, transform_indices = @transform_17, window_bounds = array<i64: 4, 32, 3>}, {pipeline_mode = #tpu.pipeline_mode<synchronous>, transform_indices = @transform_18, window_bounds = array<i64: 4, 1, 3>}, {pipeline_mode = #tpu.pipeline_mode<synchronous>, transform_indices = @transform_19, window_bounds = array<i64: 2, 256, 3>}]} {
    %c0 = arith.constant 0 : index
    %c0_0 = arith.constant 0 : index
    %0 = vector.load %arg1[%c0, %c0_0] : memref<128x3xf32, #tpu.memory_space<vmem>>, vector<128x3xf32>
    %c0_1 = arith.constant 0 : index
    %c0_2 = arith.constant 0 : index
    %1 = vector.load %arg3[%c0_1, %c0_2] : memref<3x64xf32, #tpu.memory_space<vmem>>, vector<3x64xf32>
    %cst = arith.constant dense<0.000000e+00> : vector<128x64xf32>
    %2 = tpu.matmul %0, %1, %cst {dimension_numbers = #tpu.dot_dimension_numbers<[1], [0], [0], [1], [0, 0, 1, 1], [], []>} : vector<128x3xf32>, vector<3x64xf32>, vector<128x64xf32> -> vector<128x64xf32>
    %c0_3 = arith.constant 0 : index
    %c0_4 = arith.constant 0 : index
    %3 = vector.load %arg4[%c0_3, %c0_4] : memref<1x64xf32, #tpu.memory_space<vmem>>, vector<1x64xf32>
    %4 = vector.broadcast %3 : vector<1x64xf32> to vector<128x64xf32>
    %5 = arith.addf %2, %4 : vector<128x64xf32>
    %cst_5 = arith.constant 0.000000e+00 : f32
    %6 = vector.broadcast %cst_5 : f32 to vector<128x64xf32>
    %7 = arith.maximumf %5, %6 : vector<128x64xf32>
    %c0_6 = arith.constant 0 : index
    %c0_7 = arith.constant 0 : index
    %8 = vector.load %arg5[%c0_6, %c0_7] : memref<64x128xf32, #tpu.memory_space<vmem>>, vector<64x128xf32>
    %cst_8 = arith.constant dense<0.000000e+00> : vector<128x128xf32>
    %9 = tpu.matmul %7, %8, %cst_8 {dimension_numbers = #tpu.dot_dimension_numbers<[1], [0], [0], [1], [0, 0, 1, 1], [], []>} : vector<128x64xf32>, vector<64x128xf32>, vector<128x128xf32> -> vector<128x128xf32>
    %c0_9 = arith.constant 0 : index
    %c0_10 = arith.constant 0 : index
    %10 = vector.load %arg6[%c0_9, %c0_10] : memref<1x128xf32, #tpu.memory_space<vmem>>, vector<1x128xf32>
    %11 = vector.broadcast %10 : vector<1x128xf32> to vector<128x128xf32>
    %12 = arith.addf %9, %11 : vector<128x128xf32>
    %cst_11 = arith.constant 0.000000e+00 : f32
    %13 = vector.broadcast %cst_11 : f32 to vector<128x128xf32>
    %14 = arith.maximumf %12, %13 : vector<128x128xf32>
    %c0_12 = arith.constant 0 : index
    %c0_13 = arith.constant 0 : index
    %15 = vector.load %arg7[%c0_12, %c0_13] : memref<128x1024xf32, #tpu.memory_space<vmem>>, vector<128x1024xf32>
    %cst_14 = arith.constant dense<0.000000e+00> : vector<128x1024xf32>
    %16 = tpu.matmul %14, %15, %cst_14 {dimension_numbers = #tpu.dot_dimension_numbers<[1], [0], [0], [1], [0, 0, 1, 1], [], []>} : vector<128x128xf32>, vector<128x1024xf32>, vector<128x1024xf32> -> vector<128x1024xf32>
    %c0_15 = arith.constant 0 : index
    %c0_16 = arith.constant 0 : index
    %17 = vector.load %arg8[%c0_15, %c0_16] : memref<1x1024xf32, #tpu.memory_space<vmem>>, vector<1x1024xf32>
    %18 = vector.broadcast %17 : vector<1x1024xf32> to vector<128x1024xf32>
    %19 = arith.addf %16, %18 : vector<128x1024xf32>
    %20 = vector.shape_cast %19 : vector<128x1024xf32> to vector<2x64x1024xf32>
    %cst_17 = arith.constant dense<0xFF800000> : vector<2x1024xf32>
    %21 = vector.multi_reduction <maximumf>, %20, %cst_17 [1] : vector<2x64x1024xf32> to vector<2x1024xf32>
    %c0_18 = arith.constant 0 : index
    %c0_19 = arith.constant 0 : index
    %22 = vector.load %arg9[%c0_18, %c0_19] : memref<1024x128xf32, #tpu.memory_space<vmem>>, vector<1024x128xf32>
    %cst_20 = arith.constant dense<0.000000e+00> : vector<2x128xf32>
    %23 = tpu.matmul %21, %22, %cst_20 {dimension_numbers = #tpu.dot_dimension_numbers<[1], [0], [0], [1], [0, 0, 1, 1], [], []>} : vector<2x1024xf32>, vector<1024x128xf32>, vector<2x128xf32> -> vector<2x128xf32>
    %c0_21 = arith.constant 0 : index
    %c0_22 = arith.constant 0 : index
    %24 = vector.load %arg10[%c0_21, %c0_22] : memref<1x128xf32, #tpu.memory_space<vmem>>, vector<1x128xf32>
    %25 = vector.broadcast %24 : vector<1x128xf32> to vector<2x128xf32>
    %26 = arith.addf %23, %25 : vector<2x128xf32>
    %cst_23 = arith.constant 0.000000e+00 : f32
    %27 = vector.broadcast %cst_23 : f32 to vector<2x128xf32>
    %28 = arith.maximumf %26, %27 : vector<2x128xf32>
    %c0_24 = arith.constant 0 : index
    %c0_25 = arith.constant 0 : index
    %c0_26 = arith.constant 0 : index
    %29 = vector.load %arg12[%c0_24, %c0_25, %c0_26] : memref<4x128x128xf32, #tpu.memory_space<vmem>>, vector<1x128x128xf32>
    %30 = vector.shape_cast %29 : vector<1x128x128xf32> to vector<128x128xf32>
    %cst_27 = arith.constant dense<0.000000e+00> : vector<2x128xf32>
    %31 = tpu.matmul %28, %30, %cst_27 {dimension_numbers = #tpu.dot_dimension_numbers<[1], [0], [0], [1], [0, 0, 1, 1], [], []>} : vector<2x128xf32>, vector<128x128xf32>, vector<2x128xf32> -> vector<2x128xf32>
    %c0_28 = arith.constant 0 : index
    %c0_29 = arith.constant 0 : index
    %c0_30 = arith.constant 0 : index
    %32 = vector.load %arg13[%c0_28, %c0_29, %c0_30] : memref<4x1x128xf32, #tpu.memory_space<vmem>>, vector<1x1x128xf32>
    %33 = vector.shape_cast %32 : vector<1x1x128xf32> to vector<1x128xf32>
    %34 = vector.broadcast %33 : vector<1x128xf32> to vector<2x128xf32>
    %35 = arith.addf %31, %34 : vector<2x128xf32>
    %36 = vector.shape_cast %35 : vector<2x128xf32> to vector<2x1x128xf32>
    %37 = vector.shape_cast %36 : vector<2x1x128xf32> to vector<2x1x128xf32>
    %38 = vector.broadcast %37 : vector<2x1x128xf32> to vector<2x64x128xf32>
    %39 = vector.shape_cast %38 : vector<2x64x128xf32> to vector<128x128xf32>
    %c0_31 = arith.constant 0 : index
    %c0_32 = arith.constant 0 : index
    %c0_33 = arith.constant 0 : index
    %40 = vector.load %arg2[%c0_31, %c0_32, %c0_33] : memref<4x128x2xf32, #tpu.memory_space<vmem>>, vector<1x128x2xf32>
    %41 = vector.shape_cast %40 : vector<1x128x2xf32> to vector<128x2xf32>
    %c0_34 = arith.constant 0 : index
    %c0_35 = arith.constant 0 : index
    %c0_36 = arith.constant 0 : index
    %42 = vector.load %arg11[%c0_34, %c0_35, %c0_36] : memref<4x2x128xf32, #tpu.memory_space<vmem>>, vector<1x2x128xf32>
    %43 = vector.shape_cast %42 : vector<1x2x128xf32> to vector<2x128xf32>
    %cst_37 = arith.constant dense<0.000000e+00> : vector<128x128xf32>
    %44 = tpu.matmul %41, %43, %cst_37 {dimension_numbers = #tpu.dot_dimension_numbers<[1], [0], [0], [1], [0, 0, 1, 1], [], []>} : vector<128x2xf32>, vector<2x128xf32>, vector<128x128xf32> -> vector<128x128xf32>
    %45 = arith.addf %44, %39 : vector<128x128xf32>
    %cst_38 = arith.constant 0.000000e+00 : f32
    %46 = vector.broadcast %cst_38 : f32 to vector<128x128xf32>
    %47 = arith.maximumf %45, %46 : vector<128x128xf32>
    %c0_39 = arith.constant 0 : index
    %c0_40 = arith.constant 0 : index
    %c0_41 = arith.constant 0 : index
    %48 = vector.load %arg14[%c0_39, %c0_40, %c0_41] : memref<4x128x64xf32, #tpu.memory_space<vmem>>, vector<1x128x64xf32>
    %49 = vector.shape_cast %48 : vector<1x128x64xf32> to vector<128x64xf32>
    %cst_42 = arith.constant dense<0.000000e+00> : vector<128x64xf32>
    %50 = tpu.matmul %47, %49, %cst_42 {dimension_numbers = #tpu.dot_dimension_numbers<[1], [0], [0], [1], [0, 0, 1, 1], [], []>} : vector<128x128xf32>, vector<128x64xf32>, vector<128x64xf32> -> vector<128x64xf32>
    %c0_43 = arith.constant 0 : index
    %c0_44 = arith.constant 0 : index
    %c0_45 = arith.constant 0 : index
    %51 = vector.load %arg15[%c0_43, %c0_44, %c0_45] : memref<4x1x64xf32, #tpu.memory_space<vmem>>, vector<1x1x64xf32>
    %52 = vector.shape_cast %51 : vector<1x1x64xf32> to vector<1x64xf32>
    %53 = vector.broadcast %52 : vector<1x64xf32> to vector<128x64xf32>
    %54 = arith.addf %50, %53 : vector<128x64xf32>
    %cst_46 = arith.constant 0.000000e+00 : f32
    %55 = vector.broadcast %cst_46 : f32 to vector<128x64xf32>
    %56 = arith.maximumf %54, %55 : vector<128x64xf32>
    %c0_47 = arith.constant 0 : index
    %c0_48 = arith.constant 0 : index
    %c0_49 = arith.constant 0 : index
    %57 = vector.load %arg16[%c0_47, %c0_48, %c0_49] : memref<4x64x32xf32, #tpu.memory_space<vmem>>, vector<1x64x32xf32>
    %58 = vector.shape_cast %57 : vector<1x64x32xf32> to vector<64x32xf32>
    %cst_50 = arith.constant dense<0.000000e+00> : vector<128x32xf32>
    %59 = tpu.matmul %56, %58, %cst_50 {dimension_numbers = #tpu.dot_dimension_numbers<[1], [0], [0], [1], [0, 0, 1, 1], [], []>} : vector<128x64xf32>, vector<64x32xf32>, vector<128x32xf32> -> vector<128x32xf32>
    %c0_51 = arith.constant 0 : index
    %c0_52 = arith.constant 0 : index
    %c0_53 = arith.constant 0 : index
    %60 = vector.load %arg17[%c0_51, %c0_52, %c0_53] : memref<4x1x32xf32, #tpu.memory_space<vmem>>, vector<1x1x32xf32>
    %61 = vector.shape_cast %60 : vector<1x1x32xf32> to vector<1x32xf32>
    %62 = vector.broadcast %61 : vector<1x32xf32> to vector<128x32xf32>
    %63 = arith.addf %59, %62 : vector<128x32xf32>
    %cst_54 = arith.constant 0.000000e+00 : f32
    %64 = vector.broadcast %cst_54 : f32 to vector<128x32xf32>
    %65 = arith.maximumf %63, %64 : vector<128x32xf32>
    %c0_55 = arith.constant 0 : index
    %c0_56 = arith.constant 0 : index
    %c0_57 = arith.constant 0 : index
    %66 = vector.load %arg18[%c0_55, %c0_56, %c0_57] : memref<4x32x3xf32, #tpu.memory_space<vmem>>, vector<1x32x3xf32>
    %67 = vector.shape_cast %66 : vector<1x32x3xf32> to vector<32x3xf32>
    %cst_58 = arith.constant dense<0.000000e+00> : vector<128x3xf32>
    %68 = tpu.matmul %65, %67, %cst_58 {dimension_numbers = #tpu.dot_dimension_numbers<[1], [0], [0], [1], [0, 0, 1, 1], [], []>} : vector<128x32xf32>, vector<32x3xf32>, vector<128x3xf32> -> vector<128x3xf32>
    %c0_59 = arith.constant 0 : index
    %c0_60 = arith.constant 0 : index
    %c0_61 = arith.constant 0 : index
    %69 = vector.load %arg19[%c0_59, %c0_60, %c0_61] : memref<4x1x3xf32, #tpu.memory_space<vmem>>, vector<1x1x3xf32>
    %70 = vector.shape_cast %69 : vector<1x1x3xf32> to vector<1x3xf32>
    %71 = vector.broadcast %70 : vector<1x3xf32> to vector<128x3xf32>
    %72 = arith.addf %68, %71 : vector<128x3xf32>
    %73 = math.tanh %72 : vector<128x3xf32>
    %74 = vector.shape_cast %73 : vector<128x3xf32> to vector<2x64x3xf32>
    %c0_62 = arith.constant 0 : index
    %c0_63 = arith.constant 0 : index
    %c0_64 = arith.constant 0 : index
    %75 = vector.load %arg20[%c0_62, %c0_63, %c0_64] : memref<2x256x3xf32, #tpu.memory_space<vmem>>, vector<2x64x3xf32>
    tpu.vector_store %arg20[%c0_62, %c0_63, %c0_64], %74 {strides = array<i32>} : memref<2x256x3xf32, #tpu.memory_space<vmem>>, vector<2x64x3xf32>,
    %c1 = arith.constant 1 : index
    %c0_65 = arith.constant 0 : index
    %c0_66 = arith.constant 0 : index
    %76 = vector.load %arg12[%c1, %c0_65, %c0_66] : memref<4x128x128xf32, #tpu.memory_space<vmem>>, vector<1x128x128xf32>
    %77 = vector.shape_cast %76 : vector<1x128x128xf32> to vector<128x128xf32>
    %cst_67 = arith.constant dense<0.000000e+00> : vector<2x128xf32>
    %78 = tpu.matmul %28, %77, %cst_67 {dimension_numbers = #tpu.dot_dimension_numbers<[1], [0], [0], [1], [0, 0, 1, 1], [], []>} : vector<2x128xf32>, vector<128x128xf32>, vector<2x128xf32> -> vector<2x128xf32>
    %c1_68 = arith.constant 1 : index
    %c0_69 = arith.constant 0 : index
    %c0_70 = arith.constant 0 : index
    %79 = vector.load %arg13[%c1_68, %c0_69, %c0_70] : memref<4x1x128xf32, #tpu.memory_space<vmem>>, vector<1x1x128xf32>
    %80 = vector.shape_cast %79 : vector<1x1x128xf32> to vector<1x128xf32>
    %81 = vector.broadcast %80 : vector<1x128xf32> to vector<2x128xf32>
    %82 = arith.addf %78, %81 : vector<2x128xf32>
    %83 = vector.shape_cast %82 : vector<2x128xf32> to vector<2x1x128xf32>
    %84 = vector.shape_cast %83 : vector<2x1x128xf32> to vector<2x1x128xf32>
    %85 = vector.broadcast %84 : vector<2x1x128xf32> to vector<2x64x128xf32>
    %86 = vector.shape_cast %85 : vector<2x64x128xf32> to vector<128x128xf32>
    %c1_71 = arith.constant 1 : index
    %c0_72 = arith.constant 0 : index
    %c0_73 = arith.constant 0 : index
    %87 = vector.load %arg2[%c1_71, %c0_72, %c0_73] : memref<4x128x2xf32, #tpu.memory_space<vmem>>, vector<1x128x2xf32>
    %88 = vector.shape_cast %87 : vector<1x128x2xf32> to vector<128x2xf32>
    %c1_74 = arith.constant 1 : index
    %c0_75 = arith.constant 0 : index
    %c0_76 = arith.constant 0 : index
    %89 = vector.load %arg11[%c1_74, %c0_75, %c0_76] : memref<4x2x128xf32, #tpu.memory_space<vmem>>, vector<1x2x128xf32>
    %90 = vector.shape_cast %89 : vector<1x2x128xf32> to vector<2x128xf32>
    %cst_77 = arith.constant dense<0.000000e+00> : vector<128x128xf32>
    %91 = tpu.matmul %88, %90, %cst_77 {dimension_numbers = #tpu.dot_dimension_numbers<[1], [0], [0], [1], [0, 0, 1, 1], [], []>} : vector<128x2xf32>, vector<2x128xf32>, vector<128x128xf32> -> vector<128x128xf32>
    %92 = arith.addf %91, %86 : vector<128x128xf32>
    %cst_78 = arith.constant 0.000000e+00 : f32
    %93 = vector.broadcast %cst_78 : f32 to vector<128x128xf32>
    %94 = arith.maximumf %92, %93 : vector<128x128xf32>
    %c1_79 = arith.constant 1 : index
    %c0_80 = arith.constant 0 : index
    %c0_81 = arith.constant 0 : index
    %95 = vector.load %arg14[%c1_79, %c0_80, %c0_81] : memref<4x128x64xf32, #tpu.memory_space<vmem>>, vector<1x128x64xf32>
    %96 = vector.shape_cast %95 : vector<1x128x64xf32> to vector<128x64xf32>
    %cst_82 = arith.constant dense<0.000000e+00> : vector<128x64xf32>
    %97 = tpu.matmul %94, %96, %cst_82 {dimension_numbers = #tpu.dot_dimension_numbers<[1], [0], [0], [1], [0, 0, 1, 1], [], []>} : vector<128x128xf32>, vector<128x64xf32>, vector<128x64xf32> -> vector<128x64xf32>
    %c1_83 = arith.constant 1 : index
    %c0_84 = arith.constant 0 : index
    %c0_85 = arith.constant 0 : index
    %98 = vector.load %arg15[%c1_83, %c0_84, %c0_85] : memref<4x1x64xf32, #tpu.memory_space<vmem>>, vector<1x1x64xf32>
    %99 = vector.shape_cast %98 : vector<1x1x64xf32> to vector<1x64xf32>
    %100 = vector.broadcast %99 : vector<1x64xf32> to vector<128x64xf32>
    %101 = arith.addf %97, %100 : vector<128x64xf32>
    %cst_86 = arith.constant 0.000000e+00 : f32
    %102 = vector.broadcast %cst_86 : f32 to vector<128x64xf32>
    %103 = arith.maximumf %101, %102 : vector<128x64xf32>
    %c1_87 = arith.constant 1 : index
    %c0_88 = arith.constant 0 : index
    %c0_89 = arith.constant 0 : index
    %104 = vector.load %arg16[%c1_87, %c0_88, %c0_89] : memref<4x64x32xf32, #tpu.memory_space<vmem>>, vector<1x64x32xf32>
    %105 = vector.shape_cast %104 : vector<1x64x32xf32> to vector<64x32xf32>
    %cst_90 = arith.constant dense<0.000000e+00> : vector<128x32xf32>
    %106 = tpu.matmul %103, %105, %cst_90 {dimension_numbers = #tpu.dot_dimension_numbers<[1], [0], [0], [1], [0, 0, 1, 1], [], []>} : vector<128x64xf32>, vector<64x32xf32>, vector<128x32xf32> -> vector<128x32xf32>
    %c1_91 = arith.constant 1 : index
    %c0_92 = arith.constant 0 : index
    %c0_93 = arith.constant 0 : index
    %107 = vector.load %arg17[%c1_91, %c0_92, %c0_93] : memref<4x1x32xf32, #tpu.memory_space<vmem>>, vector<1x1x32xf32>
    %108 = vector.shape_cast %107 : vector<1x1x32xf32> to vector<1x32xf32>
    %109 = vector.broadcast %108 : vector<1x32xf32> to vector<128x32xf32>
    %110 = arith.addf %106, %109 : vector<128x32xf32>
    %cst_94 = arith.constant 0.000000e+00 : f32
    %111 = vector.broadcast %cst_94 : f32 to vector<128x32xf32>
    %112 = arith.maximumf %110, %111 : vector<128x32xf32>
    %c1_95 = arith.constant 1 : index
    %c0_96 = arith.constant 0 : index
    %c0_97 = arith.constant 0 : index
    %113 = vector.load %arg18[%c1_95, %c0_96, %c0_97] : memref<4x32x3xf32, #tpu.memory_space<vmem>>, vector<1x32x3xf32>
    %114 = vector.shape_cast %113 : vector<1x32x3xf32> to vector<32x3xf32>
    %cst_98 = arith.constant dense<0.000000e+00> : vector<128x3xf32>
    %115 = tpu.matmul %112, %114, %cst_98 {dimension_numbers = #tpu.dot_dimension_numbers<[1], [0], [0], [1], [0, 0, 1, 1], [], []>} : vector<128x32xf32>, vector<32x3xf32>, vector<128x3xf32> -> vector<128x3xf32>
    %c1_99 = arith.constant 1 : index
    %c0_100 = arith.constant 0 : index
    %c0_101 = arith.constant 0 : index
    %116 = vector.load %arg19[%c1_99, %c0_100, %c0_101] : memref<4x1x3xf32, #tpu.memory_space<vmem>>, vector<1x1x3xf32>
    %117 = vector.shape_cast %116 : vector<1x1x3xf32> to vector<1x3xf32>
    %118 = vector.broadcast %117 : vector<1x3xf32> to vector<128x3xf32>
    %119 = arith.addf %115, %118 : vector<128x3xf32>
    %120 = math.tanh %119 : vector<128x3xf32>
    %121 = vector.shape_cast %120 : vector<128x3xf32> to vector<2x64x3xf32>
    %c0_102 = arith.constant 0 : index
    %c64 = arith.constant 64 : index
    %c0_103 = arith.constant 0 : index
    %122 = vector.load %arg20[%c0_102, %c64, %c0_103] : memref<2x256x3xf32, #tpu.memory_space<vmem>>, vector<2x64x3xf32>
    tpu.vector_store %arg20[%c0_102, %c64, %c0_103], %121 {strides = array<i32>} : memref<2x256x3xf32, #tpu.memory_space<vmem>>, vector<2x64x3xf32>,
    %c2 = arith.constant 2 : index
    %c0_104 = arith.constant 0 : index
    %c0_105 = arith.constant 0 : index
    %123 = vector.load %arg12[%c2, %c0_104, %c0_105] : memref<4x128x128xf32, #tpu.memory_space<vmem>>, vector<1x128x128xf32>
    %124 = vector.shape_cast %123 : vector<1x128x128xf32> to vector<128x128xf32>
    %cst_106 = arith.constant dense<0.000000e+00> : vector<2x128xf32>
    %125 = tpu.matmul %28, %124, %cst_106 {dimension_numbers = #tpu.dot_dimension_numbers<[1], [0], [0], [1], [0, 0, 1, 1], [], []>} : vector<2x128xf32>, vector<128x128xf32>, vector<2x128xf32> -> vector<2x128xf32>
    %c2_107 = arith.constant 2 : index
    %c0_108 = arith.constant 0 : index
    %c0_109 = arith.constant 0 : index
    %126 = vector.load %arg13[%c2_107, %c0_108, %c0_109] : memref<4x1x128xf32, #tpu.memory_space<vmem>>, vector<1x1x128xf32>
    %127 = vector.shape_cast %126 : vector<1x1x128xf32> to vector<1x128xf32>
    %128 = vector.broadcast %127 : vector<1x128xf32> to vector<2x128xf32>
    %129 = arith.addf %125, %128 : vector<2x128xf32>
    %130 = vector.shape_cast %129 : vector<2x128xf32> to vector<2x1x128xf32>
    %131 = vector.shape_cast %130 : vector<2x1x128xf32> to vector<2x1x128xf32>
    %132 = vector.broadcast %131 : vector<2x1x128xf32> to vector<2x64x128xf32>
    %133 = vector.shape_cast %132 : vector<2x64x128xf32> to vector<128x128xf32>
    %c2_110 = arith.constant 2 : index
    %c0_111 = arith.constant 0 : index
    %c0_112 = arith.constant 0 : index
    %134 = vector.load %arg2[%c2_110, %c0_111, %c0_112] : memref<4x128x2xf32, #tpu.memory_space<vmem>>, vector<1x128x2xf32>
    %135 = vector.shape_cast %134 : vector<1x128x2xf32> to vector<128x2xf32>
    %c2_113 = arith.constant 2 : index
    %c0_114 = arith.constant 0 : index
    %c0_115 = arith.constant 0 : index
    %136 = vector.load %arg11[%c2_113, %c0_114, %c0_115] : memref<4x2x128xf32, #tpu.memory_space<vmem>>, vector<1x2x128xf32>
    %137 = vector.shape_cast %136 : vector<1x2x128xf32> to vector<2x128xf32>
    %cst_116 = arith.constant dense<0.000000e+00> : vector<128x128xf32>
    %138 = tpu.matmul %135, %137, %cst_116 {dimension_numbers = #tpu.dot_dimension_numbers<[1], [0], [0], [1], [0, 0, 1, 1], [], []>} : vector<128x2xf32>, vector<2x128xf32>, vector<128x128xf32> -> vector<128x128xf32>
    %139 = arith.addf %138, %133 : vector<128x128xf32>
    %cst_117 = arith.constant 0.000000e+00 : f32
    %140 = vector.broadcast %cst_117 : f32 to vector<128x128xf32>
    %141 = arith.maximumf %139, %140 : vector<128x128xf32>
    %c2_118 = arith.constant 2 : index
    %c0_119 = arith.constant 0 : index
    %c0_120 = arith.constant 0 : index
    %142 = vector.load %arg14[%c2_118, %c0_119, %c0_120] : memref<4x128x64xf32, #tpu.memory_space<vmem>>, vector<1x128x64xf32>
    %143 = vector.shape_cast %142 : vector<1x128x64xf32> to vector<128x64xf32>
    %cst_121 = arith.constant dense<0.000000e+00> : vector<128x64xf32>
    %144 = tpu.matmul %141, %143, %cst_121 {dimension_numbers = #tpu.dot_dimension_numbers<[1], [0], [0], [1], [0, 0, 1, 1], [], []>} : vector<128x128xf32>, vector<128x64xf32>, vector<128x64xf32> -> vector<128x64xf32>
    %c2_122 = arith.constant 2 : index
    %c0_123 = arith.constant 0 : index
    %c0_124 = arith.constant 0 : index
    %145 = vector.load %arg15[%c2_122, %c0_123, %c0_124] : memref<4x1x64xf32, #tpu.memory_space<vmem>>, vector<1x1x64xf32>
    %146 = vector.shape_cast %145 : vector<1x1x64xf32> to vector<1x64xf32>
    %147 = vector.broadcast %146 : vector<1x64xf32> to vector<128x64xf32>
    %148 = arith.addf %144, %147 : vector<128x64xf32>
    %cst_125 = arith.constant 0.000000e+00 : f32
    %149 = vector.broadcast %cst_125 : f32 to vector<128x64xf32>
    %150 = arith.maximumf %148, %149 : vector<128x64xf32>
    %c2_126 = arith.constant 2 : index
    %c0_127 = arith.constant 0 : index
    %c0_128 = arith.constant 0 : index
    %151 = vector.load %arg16[%c2_126, %c0_127, %c0_128] : memref<4x64x32xf32, #tpu.memory_space<vmem>>, vector<1x64x32xf32>
    %152 = vector.shape_cast %151 : vector<1x64x32xf32> to vector<64x32xf32>
    %cst_129 = arith.constant dense<0.000000e+00> : vector<128x32xf32>
    %153 = tpu.matmul %150, %152, %cst_129 {dimension_numbers = #tpu.dot_dimension_numbers<[1], [0], [0], [1], [0, 0, 1, 1], [], []>} : vector<128x64xf32>, vector<64x32xf32>, vector<128x32xf32> -> vector<128x32xf32>
    %c2_130 = arith.constant 2 : index
    %c0_131 = arith.constant 0 : index
    %c0_132 = arith.constant 0 : index
    %154 = vector.load %arg17[%c2_130, %c0_131, %c0_132] : memref<4x1x32xf32, #tpu.memory_space<vmem>>, vector<1x1x32xf32>
    %155 = vector.shape_cast %154 : vector<1x1x32xf32> to vector<1x32xf32>
    %156 = vector.broadcast %155 : vector<1x32xf32> to vector<128x32xf32>
    %157 = arith.addf %153, %156 : vector<128x32xf32>
    %cst_133 = arith.constant 0.000000e+00 : f32
    %158 = vector.broadcast %cst_133 : f32 to vector<128x32xf32>
    %159 = arith.maximumf %157, %158 : vector<128x32xf32>
    %c2_134 = arith.constant 2 : index
    %c0_135 = arith.constant 0 : index
    %c0_136 = arith.constant 0 : index
    %160 = vector.load %arg18[%c2_134, %c0_135, %c0_136] : memref<4x32x3xf32, #tpu.memory_space<vmem>>, vector<1x32x3xf32>
    %161 = vector.shape_cast %160 : vector<1x32x3xf32> to vector<32x3xf32>
    %cst_137 = arith.constant dense<0.000000e+00> : vector<128x3xf32>
    %162 = tpu.matmul %159, %161, %cst_137 {dimension_numbers = #tpu.dot_dimension_numbers<[1], [0], [0], [1], [0, 0, 1, 1], [], []>} : vector<128x32xf32>, vector<32x3xf32>, vector<128x3xf32> -> vector<128x3xf32>
    %c2_138 = arith.constant 2 : index
    %c0_139 = arith.constant 0 : index
    %c0_140 = arith.constant 0 : index
    %163 = vector.load %arg19[%c2_138, %c0_139, %c0_140] : memref<4x1x3xf32, #tpu.memory_space<vmem>>, vector<1x1x3xf32>
    %164 = vector.shape_cast %163 : vector<1x1x3xf32> to vector<1x3xf32>
    %165 = vector.broadcast %164 : vector<1x3xf32> to vector<128x3xf32>
    %166 = arith.addf %162, %165 : vector<128x3xf32>
    %167 = math.tanh %166 : vector<128x3xf32>
    %168 = vector.shape_cast %167 : vector<128x3xf32> to vector<2x64x3xf32>
    %c0_141 = arith.constant 0 : index
    %c128 = arith.constant 128 : index
    %c0_142 = arith.constant 0 : index
    %169 = vector.load %arg20[%c0_141, %c128, %c0_142] : memref<2x256x3xf32, #tpu.memory_space<vmem>>, vector<2x64x3xf32>
    tpu.vector_store %arg20[%c0_141, %c128, %c0_142], %168 {strides = array<i32>} : memref<2x256x3xf32, #tpu.memory_space<vmem>>, vector<2x64x3xf32>,
    %c3 = arith.constant 3 : index
    %c0_143 = arith.constant 0 : index
    %c0_144 = arith.constant 0 : index
    %170 = vector.load %arg12[%c3, %c0_143, %c0_144] : memref<4x128x128xf32, #tpu.memory_space<vmem>>, vector<1x128x128xf32>
    %171 = vector.shape_cast %170 : vector<1x128x128xf32> to vector<128x128xf32>
    %cst_145 = arith.constant dense<0.000000e+00> : vector<2x128xf32>
    %172 = tpu.matmul %28, %171, %cst_145 {dimension_numbers = #tpu.dot_dimension_numbers<[1], [0], [0], [1], [0, 0, 1, 1], [], []>} : vector<2x128xf32>, vector<128x128xf32>, vector<2x128xf32> -> vector<2x128xf32>
    %c3_146 = arith.constant 3 : index
    %c0_147 = arith.constant 0 : index
    %c0_148 = arith.constant 0 : index
    %173 = vector.load %arg13[%c3_146, %c0_147, %c0_148] : memref<4x1x128xf32, #tpu.memory_space<vmem>>, vector<1x1x128xf32>
    %174 = vector.shape_cast %173 : vector<1x1x128xf32> to vector<1x128xf32>
    %175 = vector.broadcast %174 : vector<1x128xf32> to vector<2x128xf32>
    %176 = arith.addf %172, %175 : vector<2x128xf32>
    %177 = vector.shape_cast %176 : vector<2x128xf32> to vector<2x1x128xf32>
    %178 = vector.shape_cast %177 : vector<2x1x128xf32> to vector<2x1x128xf32>
    %179 = vector.broadcast %178 : vector<2x1x128xf32> to vector<2x64x128xf32>
    %180 = vector.shape_cast %179 : vector<2x64x128xf32> to vector<128x128xf32>
    %c3_149 = arith.constant 3 : index
    %c0_150 = arith.constant 0 : index
    %c0_151 = arith.constant 0 : index
    %181 = vector.load %arg2[%c3_149, %c0_150, %c0_151] : memref<4x128x2xf32, #tpu.memory_space<vmem>>, vector<1x128x2xf32>
    %182 = vector.shape_cast %181 : vector<1x128x2xf32> to vector<128x2xf32>
    %c3_152 = arith.constant 3 : index
    %c0_153 = arith.constant 0 : index
    %c0_154 = arith.constant 0 : index
    %183 = vector.load %arg11[%c3_152, %c0_153, %c0_154] : memref<4x2x128xf32, #tpu.memory_space<vmem>>, vector<1x2x128xf32>
    %184 = vector.shape_cast %183 : vector<1x2x128xf32> to vector<2x128xf32>
    %cst_155 = arith.constant dense<0.000000e+00> : vector<128x128xf32>
    %185 = tpu.matmul %182, %184, %cst_155 {dimension_numbers = #tpu.dot_dimension_numbers<[1], [0], [0], [1], [0, 0, 1, 1], [], []>} : vector<128x2xf32>, vector<2x128xf32>, vector<128x128xf32> -> vector<128x128xf32>
    %186 = arith.addf %185, %180 : vector<128x128xf32>
    %cst_156 = arith.constant 0.000000e+00 : f32
    %187 = vector.broadcast %cst_156 : f32 to vector<128x128xf32>
    %188 = arith.maximumf %186, %187 : vector<128x128xf32>
    %c3_157 = arith.constant 3 : index
    %c0_158 = arith.constant 0 : index
    %c0_159 = arith.constant 0 : index
    %189 = vector.load %arg14[%c3_157, %c0_158, %c0_159] : memref<4x128x64xf32, #tpu.memory_space<vmem>>, vector<1x128x64xf32>
    %190 = vector.shape_cast %189 : vector<1x128x64xf32> to vector<128x64xf32>
    %cst_160 = arith.constant dense<0.000000e+00> : vector<128x64xf32>
    %191 = tpu.matmul %188, %190, %cst_160 {dimension_numbers = #tpu.dot_dimension_numbers<[1], [0], [0], [1], [0, 0, 1, 1], [], []>} : vector<128x128xf32>, vector<128x64xf32>, vector<128x64xf32> -> vector<128x64xf32>
    %c3_161 = arith.constant 3 : index
    %c0_162 = arith.constant 0 : index
    %c0_163 = arith.constant 0 : index
    %192 = vector.load %arg15[%c3_161, %c0_162, %c0_163] : memref<4x1x64xf32, #tpu.memory_space<vmem>>, vector<1x1x64xf32>
    %193 = vector.shape_cast %192 : vector<1x1x64xf32> to vector<1x64xf32>
    %194 = vector.broadcast %193 : vector<1x64xf32> to vector<128x64xf32>
    %195 = arith.addf %191, %194 : vector<128x64xf32>
    %cst_164 = arith.constant 0.000000e+00 : f32
    %196 = vector.broadcast %cst_164 : f32 to vector<128x64xf32>
    %197 = arith.maximumf %195, %196 : vector<128x64xf32>
    %c3_165 = arith.constant 3 : index
    %c0_166 = arith.constant 0 : index
    %c0_167 = arith.constant 0 : index
    %198 = vector.load %arg16[%c3_165, %c0_166, %c0_167] : memref<4x64x32xf32, #tpu.memory_space<vmem>>, vector<1x64x32xf32>
    %199 = vector.shape_cast %198 : vector<1x64x32xf32> to vector<64x32xf32>
    %cst_168 = arith.constant dense<0.000000e+00> : vector<128x32xf32>
    %200 = tpu.matmul %197, %199, %cst_168 {dimension_numbers = #tpu.dot_dimension_numbers<[1], [0], [0], [1], [0, 0, 1, 1], [], []>} : vector<128x64xf32>, vector<64x32xf32>, vector<128x32xf32> -> vector<128x32xf32>
    %c3_169 = arith.constant 3 : index
    %c0_170 = arith.constant 0 : index
    %c0_171 = arith.constant 0 : index
    %201 = vector.load %arg17[%c3_169, %c0_170, %c0_171] : memref<4x1x32xf32, #tpu.memory_space<vmem>>, vector<1x1x32xf32>
    %202 = vector.shape_cast %201 : vector<1x1x32xf32> to vector<1x32xf32>
    %203 = vector.broadcast %202 : vector<1x32xf32> to vector<128x32xf32>
    %204 = arith.addf %200, %203 : vector<128x32xf32>
    %cst_172 = arith.constant 0.000000e+00 : f32
    %205 = vector.broadcast %cst_172 : f32 to vector<128x32xf32>
    %206 = arith.maximumf %204, %205 : vector<128x32xf32>
    %c3_173 = arith.constant 3 : index
    %c0_174 = arith.constant 0 : index
    %c0_175 = arith.constant 0 : index
    %207 = vector.load %arg18[%c3_173, %c0_174, %c0_175] : memref<4x32x3xf32, #tpu.memory_space<vmem>>, vector<1x32x3xf32>
    %208 = vector.shape_cast %207 : vector<1x32x3xf32> to vector<32x3xf32>
    %cst_176 = arith.constant dense<0.000000e+00> : vector<128x3xf32>
    %209 = tpu.matmul %206, %208, %cst_176 {dimension_numbers = #tpu.dot_dimension_numbers<[1], [0], [0], [1], [0, 0, 1, 1], [], []>} : vector<128x32xf32>, vector<32x3xf32>, vector<128x3xf32> -> vector<128x3xf32>
    %c3_177 = arith.constant 3 : index
    %c0_178 = arith.constant 0 : index
    %c0_179 = arith.constant 0 : index
    %210 = vector.load %arg19[%c3_177, %c0_178, %c0_179] : memref<4x1x3xf32, #tpu.memory_space<vmem>>, vector<1x1x3xf32>
    %211 = vector.shape_cast %210 : vector<1x1x3xf32> to vector<1x3xf32>
    %212 = vector.broadcast %211 : vector<1x3xf32> to vector<128x3xf32>
    %213 = arith.addf %209, %212 : vector<128x3xf32>
    %214 = math.tanh %213 : vector<128x3xf32>
    %215 = vector.shape_cast %214 : vector<128x3xf32> to vector<2x64x3xf32>
    %c0_180 = arith.constant 0 : index
    %c192 = arith.constant 192 : index
    %c0_181 = arith.constant 0 : index
    %216 = vector.load %arg20[%c0_180, %c192, %c0_181] : memref<2x256x3xf32, #tpu.memory_space<vmem>>, vector<2x64x3xf32>
    tpu.vector_store %arg20[%c0_180, %c192, %c0_181], %215 {strides = array<i32>} : memref<2x256x3xf32, #tpu.memory_space<vmem>>, vector<2x64x3xf32>,
    return
  }
  func.func @transform_0(%arg0: i32) -> (i32, i32) {
    %c0_i32 = arith.constant 0 : i32
    %c0_i32_0 = arith.constant 0 : i32
    %c0_i32_1 = arith.constant 0 : i32
    return %c0_i32, %c0_i32_0 : i32, i32
  }
  func.func @transform_1(%arg0: i32) -> (i32, i32, i32) {
    %c0_i32 = arith.constant 0 : i32
    %c0_i32_0 = arith.constant 0 : i32
    %c0_i32_1 = arith.constant 0 : i32
    %c0_i32_2 = arith.constant 0 : i32
    return %c0_i32, %c0_i32_0, %c0_i32_1 : i32, i32, i32
  }
  func.func @transform_2(%arg0: i32) -> (i32, i32) {
    %c0_i32 = arith.constant 0 : i32
    %c0_i32_0 = arith.constant 0 : i32
    %c0_i32_1 = arith.constant 0 : i32
    return %c0_i32, %c0_i32_0 : i32, i32
  }
  func.func @transform_3(%arg0: i32) -> (i32, i32) {
    %c0_i32 = arith.constant 0 : i32
    %c0_i32_0 = arith.constant 0 : i32
    %c0_i32_1 = arith.constant 0 : i32
    return %c0_i32, %c0_i32_0 : i32, i32
  }
  func.func @transform_4(%arg0: i32) -> (i32, i32) {
    %c0_i32 = arith.constant 0 : i32
    %c0_i32_0 = arith.constant 0 : i32
    %c0_i32_1 = arith.constant 0 : i32
    return %c0_i32, %c0_i32_0 : i32, i32
  }
  func.func @transform_5(%arg0: i32) -> (i32, i32) {
    %c0_i32 = arith.constant 0 : i32
    %c0_i32_0 = arith.constant 0 : i32
    %c0_i32_1 = arith.constant 0 : i32
    return %c0_i32, %c0_i32_0 : i32, i32
  }
  func.func @transform_6(%arg0: i32) -> (i32, i32) {
    %c0_i32 = arith.constant 0 : i32
    %c0_i32_0 = arith.constant 0 : i32
    %c0_i32_1 = arith.constant 0 : i32
    return %c0_i32, %c0_i32_0 : i32, i32
  }
  func.func @transform_7(%arg0: i32) -> (i32, i32) {
    %c0_i32 = arith.constant 0 : i32
    %c0_i32_0 = arith.constant 0 : i32
    %c0_i32_1 = arith.constant 0 : i32
    return %c0_i32, %c0_i32_0 : i32, i32
  }
  func.func @transform_8(%arg0: i32) -> (i32, i32) {
    %c0_i32 = arith.constant 0 : i32
    %c0_i32_0 = arith.constant 0 : i32
    %c0_i32_1 = arith.constant 0 : i32
    return %c0_i32, %c0_i32_0 : i32, i32
  }
  func.func @transform_9(%arg0: i32) -> (i32, i32) {
    %c0_i32 = arith.constant 0 : i32
    %c0_i32_0 = arith.constant 0 : i32
    %c0_i32_1 = arith.constant 0 : i32
    return %c0_i32, %c0_i32_0 : i32, i32
  }
  func.func @transform_10(%arg0: i32) -> (i32, i32, i32) {
    %c0_i32 = arith.constant 0 : i32
    %c0_i32_0 = arith.constant 0 : i32
    %c0_i32_1 = arith.constant 0 : i32
    %c0_i32_2 = arith.constant 0 : i32
    return %c0_i32, %c0_i32_0, %c0_i32_1 : i32, i32, i32
  }
  func.func @transform_11(%arg0: i32) -> (i32, i32, i32) {
    %c0_i32 = arith.constant 0 : i32
    %c0_i32_0 = arith.constant 0 : i32
    %c0_i32_1 = arith.constant 0 : i32
    %c0_i32_2 = arith.constant 0 : i32
    return %c0_i32, %c0_i32_0, %c0_i32_1 : i32, i32, i32
  }
  func.func @transform_12(%arg0: i32) -> (i32, i32, i32) {
    %c0_i32 = arith.constant 0 : i32
    %c0_i32_0 = arith.constant 0 : i32
    %c0_i32_1 = arith.constant 0 : i32
    %c0_i32_2 = arith.constant 0 : i32
    return %c0_i32, %c0_i32_0, %c0_i32_1 : i32, i32, i32
  }
  func.func @transform_13(%arg0: i32) -> (i32, i32, i32) {
    %c0_i32 = arith.constant 0 : i32
    %c0_i32_0 = arith.constant 0 : i32
    %c0_i32_1 = arith.constant 0 : i32
    %c0_i32_2 = arith.constant 0 : i32
    return %c0_i32, %c0_i32_0, %c0_i32_1 : i32, i32, i32
  }
  func.func @transform_14(%arg0: i32) -> (i32, i32, i32) {
    %c0_i32 = arith.constant 0 : i32
    %c0_i32_0 = arith.constant 0 : i32
    %c0_i32_1 = arith.constant 0 : i32
    %c0_i32_2 = arith.constant 0 : i32
    return %c0_i32, %c0_i32_0, %c0_i32_1 : i32, i32, i32
  }
  func.func @transform_15(%arg0: i32) -> (i32, i32, i32) {
    %c0_i32 = arith.constant 0 : i32
    %c0_i32_0 = arith.constant 0 : i32
    %c0_i32_1 = arith.constant 0 : i32
    %c0_i32_2 = arith.constant 0 : i32
    return %c0_i32, %c0_i32_0, %c0_i32_1 : i32, i32, i32
  }
  func.func @transform_16(%arg0: i32) -> (i32, i32, i32) {
    %c0_i32 = arith.constant 0 : i32
    %c0_i32_0 = arith.constant 0 : i32
    %c0_i32_1 = arith.constant 0 : i32
    %c0_i32_2 = arith.constant 0 : i32
    return %c0_i32, %c0_i32_0, %c0_i32_1 : i32, i32, i32
  }
  func.func @transform_17(%arg0: i32) -> (i32, i32, i32) {
    %c0_i32 = arith.constant 0 : i32
    %c0_i32_0 = arith.constant 0 : i32
    %c0_i32_1 = arith.constant 0 : i32
    %c0_i32_2 = arith.constant 0 : i32
    return %c0_i32, %c0_i32_0, %c0_i32_1 : i32, i32, i32
  }
  func.func @transform_18(%arg0: i32) -> (i32, i32, i32) {
    %c0_i32 = arith.constant 0 : i32
    %c0_i32_0 = arith.constant 0 : i32
    %c0_i32_1 = arith.constant 0 : i32
    %c0_i32_2 = arith.constant 0 : i32
    return %c0_i32, %c0_i32_0, %c0_i32_1 : i32, i32, i32
  }
  func.func @transform_19(%arg0: i32) -> (i32, i32, i32) {
    %c0_i32 = arith.constant 0 : i32
    %c0_i32_0 = arith.constant 0 : i32
    %c0_i32_1 = arith.constant 0 : i32
    %c0_i32_2 = arith.constant 0 : i32
    return %c0_i32, %c0_i32_0, %c0_i32_1 : i32, i32, i32
  }
}

</mosaic_0001>

<llo_original>
// kernel: atlasnet_forward.1
$region0: #{atlasnet_forward.1}
  #allocation0 [shape = 'u32[]', space=smem, size = 0x4, offset = 0x4, fixed_abs, tag = 'smem constant byte address 0x4 - core index']
  #allocation1 [shape = 'u32[144,128]{1,0:T(1,128)}', space=vmem, size = 0x12000, scoped, tag = 'internal scratch']
  %s0 = inlined_call_operand.vmem [shape: f32[128,3], index: 0, kind: input, shape index: {}]
  %s1 = inlined_call_operand.vmem [shape: f32[4,128,2], index: 1, kind: input, shape index: {}]
  %s2 = inlined_call_operand.vmem [shape: f32[3,64], index: 2, kind: input, shape index: {}]
  %s3 = inlined_call_operand.vmem [shape: f32[1,64], index: 3, kind: input, shape index: {}]
  %s4 = inlined_call_operand.hbm [shape: f32[64,128], index: 4, kind: input, shape index: {}]
  %s5 = inlined_call_operand.hbm [shape: f32[1,128], index: 5, kind: input, shape index: {}]
  %s6 = inlined_call_operand.vmem [shape: f32[128,1024], index: 6, kind: input, shape index: {}]
  %s7 = inlined_call_operand.vmem [shape: f32[1,1024], index: 7, kind: input, shape index: {}]
  %s8 = inlined_call_operand.hbm [shape: f32[1024,128], index: 8, kind: input, shape index: {}]
  %s9 = inlined_call_operand.hbm [shape: f32[1,128], index: 9, kind: input, shape index: {}]
  %s10 = inlined_call_operand.vmem [shape: f32[4,2,128], index: 10, kind: input, shape index: {}]
  %s11 = inlined_call_operand.vmem [shape: f32[4,128,128], index: 11, kind: input, shape index: {}]
  %s12 = inlined_call_operand.vmem [shape: f32[4,1,128], index: 12, kind: input, shape index: {}]
  %s13 = inlined_call_operand.vmem [shape: f32[4,128,64], index: 13, kind: input, shape index: {}]
  %s14 = inlined_call_operand.vmem [shape: f32[4,1,64], index: 14, kind: input, shape index: {}]
  %s15 = inlined_call_operand.vmem [shape: f32[4,64,32], index: 15, kind: input, shape index: {}]
  %s16 = inlined_call_operand.vmem [shape: f32[4,1,32], index: 16, kind: input, shape index: {}]
  %s17 = inlined_call_operand.vmem [shape: f32[4,32,3], index: 17, kind: input, shape index: {}]
  %s18 = inlined_call_operand.vmem [shape: f32[4,1,3], index: 18, kind: input, shape index: {}]
  %s19 = inlined_call_operand.vmem [shape: f32[2,256,3], index: 19, kind: output, shape index: {}]
  %s20 = sld [smem:[#allocation0]]
  $region102: #{atlasnet_forward.1} parent=0
    _
  %s22 = ssub.s32 1, %s20
  %s23 = scalar_select 0, %s22, %s20
  $region1: #{atlasnet_forward.1} parent=0
    #allocation2 [shape = 'u8[32768]{0}', space=vmem, size = 0x8000, scoped, tag = 'input window, operand 4, single buffered']
    #allocation3 [shape = 's32[1]{0}', space=sflag, size = 0x4, scoped, tag = 'scoped memory for atlasnet_forward.1']
    #allocation4 [shape = 'u8[512]{0}', space=vmem, size = 0x400, scoped, tag = 'input window, operand 5, single buffered']
    #allocation5 [shape = 's32[1]{0}', space=sflag, size = 0x4, scoped, tag = 'scoped memory for atlasnet_forward.1']
    #allocation6 [shape = 'u8[524288]{0}', space=vmem, size = 0x80000, scoped, tag = 'input window, operand 8, single buffered']
    #allocation7 [shape = 'u8[512]{0}', space=vmem, size = 0x400, scoped, tag = 'input window, operand 9, single buffered']
    #allocation8 [shape = 's32[1]{0}', space=sflag, size = 0x4, scoped, tag = 'scoped memory for atlasnet_forward.1']
    %24 = vsyncpa [#allocation3], 0
    %25 = vsyncpa [#allocation5], 0
    %26 = vsyncpa [#allocation8], 0
    // Predicated region
    $region2: #{atlasnet_forward.1} parent=1 // pred_check
      _
    $region3: #{atlasnet_forward.1} parent=1 // pred_check_branch
      %28 = sbr.rel (0) target = $region5
    $region4: #{atlasnet_forward.1} parent=1 // pred_region
      _
    $region5: #{atlasnet_forward.1} parent=1 // pred_fallthru
      _
    // Predicated region
    $region6: #{atlasnet_forward.1} parent=1 // pred_check
      _
    $region7: #{atlasnet_forward.1} parent=1 // pred_check_branch
      %30 = sbr.rel (0) target = $region9
    $region8: #{atlasnet_forward.1} parent=1 // pred_region
      _
    $region9: #{atlasnet_forward.1} parent=1 // pred_fallthru
      _
    // Predicated region
    $region10: #{atlasnet_forward.1} parent=1 // pred_check
      _
    $region11: #{atlasnet_forward.1} parent=1 // pred_check_branch
      %32 = sbr.rel (0) target = $region13
    $region12: #{atlasnet_forward.1} parent=1 // pred_region
      _
    $region13: #{atlasnet_forward.1} parent=1 // pred_fallthru
      _
    // Predicated region
    $region14: #{atlasnet_forward.1} parent=1 // pred_check
      _
    $region15: #{atlasnet_forward.1} parent=1 // pred_check_branch
      %34 = sbr.rel (0) target = $region17
    $region16: #{atlasnet_forward.1} parent=1 // pred_region
      _
    $region17: #{atlasnet_forward.1} parent=1 // pred_fallthru
      _
    // Predicated region
    $region18: #{atlasnet_forward.1} parent=1 // pred_check
      _
    $region19: #{atlasnet_forward.1} parent=1 // pred_check_branch
      %36 = sbr.rel (0) target = $region21
    $region20: #{atlasnet_forward.1} parent=1 // pred_region
      %s38 = ssub.s32 1024, 1024
      %39 = vsyncadd [#allocation3], %s38
      %s40 = sshll.u32 [#allocation2], 4
      %s41 = int_to_ptr.vmem [resolvable:$true] %s40
      %46 = dma.hbm_to_vmem [thread:$0]  %s4, 1024, %s41, [#allocation3], 128, 128, 8
    $region21: #{atlasnet_forward.1} parent=1 // pred_fallthru
      _
    // Predicated region
    $region22: #{atlasnet_forward.1} parent=1 // pred_check
      _
    $region23: #{atlasnet_forward.1} parent=1 // pred_check_branch
      %48 = sbr.rel (0) target = $region25
    $region24: #{atlasnet_forward.1} parent=1 // pred_region
      %s50 = ssub.s32 16, 16
      %51 = vsyncadd [#allocation5], %s50
      %s53 = sshll.u32 [#allocation4], 4
      %s54 = int_to_ptr.vmem [resolvable:$true] %s53
      %56 = dma.hbm_to_vmem [thread:$0]  %s5, 16, %s54, [#allocation5]
    $region25: #{atlasnet_forward.1} parent=1 // pred_fallthru
      _
    // Predicated region
    $region26: #{atlasnet_forward.1} parent=1 // pred_check
      _
    $region27: #{atlasnet_forward.1} parent=1 // pred_check_branch
      %58 = sbr.rel (0) target = $region29
    $region28: #{atlasnet_forward.1} parent=1 // pred_region
      _
    $region29: #{atlasnet_forward.1} parent=1 // pred_fallthru
      _
    // Predicated region
    $region30: #{atlasnet_forward.1} parent=1 // pred_check
      _
    $region31: #{atlasnet_forward.1} parent=1 // pred_check_branch
      %60 = sbr.rel (0) target = $region33
    $region32: #{atlasnet_forward.1} parent=1 // pred_region
      _
    $region33: #{atlasnet_forward.1} parent=1 // pred_fallthru
      _
    // Predicated region
    $region34: #{atlasnet_forward.1} parent=1 // pred_check
      _
    $region35: #{atlasnet_forward.1} parent=1 // pred_check_branch
      %62 = sbr.rel (0) target = $region37
    $region36: #{atlasnet_forward.1} parent=1 // pred_region
      %s64 = ssub.s32 16384, 16384
      %65 = vsyncadd [#allocation5], %s64
      %s66 = sshll.u32 [#allocation6], 4
      %s67 = int_to_ptr.vmem [resolvable:$true] %s66
      %72 = dma.hbm_to_vmem [thread:$0]  %s8, 16384, %s67, [#allocation5], 128, 128, 8
    $region37: #{atlasnet_forward.1} parent=1 // pred_fallthru
      _
    // Predicated region
    $region38: #{atlasnet_forward.1} parent=1 // pred_check
      _
    $region39: #{atlasnet_forward.1} parent=1 // pred_check_branch
      %74 = sbr.rel (0) target = $region41
    $region40: #{atlasnet_forward.1} parent=1 // pred_region
      %s76 = ssub.s32 16, 16
      %77 = vsyncadd [#allocation8], %s76
      %s79 = sshll.u32 [#allocation7], 4
      %s80 = int_to_ptr.vmem [resolvable:$true] %s79
      %82 = dma.hbm_to_vmem [thread:$0]  %s9, 16, %s80, [#allocation8]
    $region41: #{atlasnet_forward.1} parent=1 // pred_fallthru
      _
    // Predicated region
    $region42: #{atlasnet_forward.1} parent=1 // pred_check
      _
    $region43: #{atlasnet_forward.1} parent=1 // pred_check_branch
      %84 = sbr.rel (0) target = $region45
    $region44: #{atlasnet_forward.1} parent=1 // pred_region
      _
    $region45: #{atlasnet_forward.1} parent=1 // pred_fallthru
      _
    // Predicated region
    $region46: #{atlasnet_forward.1} parent=1 // pred_check
      _
    $region47: #{atlasnet_forward.1} parent=1 // pred_check_branch
      %86 = sbr.rel (0) target = $region49
    $region48: #{atlasnet_forward.1} parent=1 // pred_region
      _
    $region49: #{atlasnet_forward.1} parent=1 // pred_fallthru
      _
    // Predicated region
    $region50: #{atlasnet_forward.1} parent=1 // pred_check
      _
    $region51: #{atlasnet_forward.1} parent=1 // pred_check_branch
      %88 = sbr.rel (0) target = $region53
    $region52: #{atlasnet_forward.1} parent=1 // pred_region
      _
    $region53: #{atlasnet_forward.1} parent=1 // pred_fallthru
      _
    // Predicated region
    $region54: #{atlasnet_forward.1} parent=1 // pred_check
      _
    $region55: #{atlasnet_forward.1} parent=1 // pred_check_branch
      %90 = sbr.rel (0) target = $region57
    $region56: #{atlasnet_forward.1} parent=1 // pred_region
      _
    $region57: #{atlasnet_forward.1} parent=1 // pred_fallthru
      _
    // Predicated region
    $region58: #{atlasnet_forward.1} parent=1 // pred_check
      _
    $region59: #{atlasnet_forward.1} parent=1 // pred_check_branch
      %92 = sbr.rel (0) target = $region61
    $region60: #{atlasnet_forward.1} parent=1 // pred_region
      _
    $region61: #{atlasnet_forward.1} parent=1 // pred_fallthru
      _
    // Predicated region
    $region62: #{atlasnet_forward.1} parent=1 // pred_check
      _
    $region63: #{atlasnet_forward.1} parent=1 // pred_check_branch
      %94 = sbr.rel (0) target = $region65
    $region64: #{atlasnet_forward.1} parent=1 // pred_region
      _
    $region65: #{atlasnet_forward.1} parent=1 // pred_fallthru
      _
    // Predicated region
    $region66: #{atlasnet_forward.1} parent=1 // pred_check
      _
    $region67: #{atlasnet_forward.1} parent=1 // pred_check_branch
      %96 = sbr.rel (0) target = $region69
    $region68: #{atlasnet_forward.1} parent=1 // pred_region
      _
    $region69: #{atlasnet_forward.1} parent=1 // pred_fallthru
      _
    // Predicated region
    $region70: #{atlasnet_forward.1} parent=1 // pred_check
      _
    $region71: #{atlasnet_forward.1} parent=1 // pred_check_branch
      %98 = sbr.rel (0) target = $region73
    $region72: #{atlasnet_forward.1} parent=1 // pred_region
      _
    $region73: #{atlasnet_forward.1} parent=1 // pred_fallthru
      _
    // Predicated region
    $region74: #{atlasnet_forward.1} parent=1 // pred_check
      _
    $region75: #{atlasnet_forward.1} parent=1 // pred_check_branch
      %100 = sbr.rel (0) target = $region77
    $region76: #{atlasnet_forward.1} parent=1 // pred_region
      _
    $region77: #{atlasnet_forward.1} parent=1 // pred_fallthru
      _
    // Predicated region
    $region78: #{atlasnet_forward.1} parent=1 // pred_check
      _
    $region79: #{atlasnet_forward.1} parent=1 // pred_check_branch
      %102 = sbr.rel (0) target = $region81
    $region80: #{atlasnet_forward.1} parent=1 // pred_region
      %103 = dma.done [#allocation3], 1024
    $region81: #{atlasnet_forward.1} parent=1 // pred_fallthru
      _
    // Predicated region
    $region82: #{atlasnet_forward.1} parent=1 // pred_check
      _
    $region83: #{atlasnet_forward.1} parent=1 // pred_check_branch
      %105 = sbr.rel (0) target = $region85
    $region84: #{atlasnet_forward.1} parent=1 // pred_region
      %106 = dma.done [#allocation5], 16
    $region85: #{atlasnet_forward.1} parent=1 // pred_fallthru
      _
    // Predicated region
    $region86: #{atlasnet_forward.1} parent=1 // pred_check
      _
    $region87: #{atlasnet_forward.1} parent=1 // pred_check_branch
      %108 = sbr.rel (0) target = $region89
    $region88: #{atlasnet_forward.1} parent=1 // pred_region
      %109 = dma.done [#allocation5], 16384
    $region89: #{atlasnet_forward.1} parent=1 // pred_fallthru
      _
    // Predicated region
    $region90: #{atlasnet_forward.1} parent=1 // pred_check
      _
    $region91: #{atlasnet_forward.1} parent=1 // pred_check_branch
      %111 = sbr.rel (0) target = $region93
    $region92: #{atlasnet_forward.1} parent=1 // pred_region
      %112 = dma.done [#allocation8], 16
    $region93: #{atlasnet_forward.1} parent=1 // pred_fallthru
      _
    %v113 = vld [vmem:[%s0] sm:$0xff]
    %v114 = vld [vmem:[%s0 + $0x8] sm:$0xff]
    %v115 = vld [vmem:[%s0 + $0x10] sm:$0xff]
    %v116 = vld [vmem:[%s0 + $0x18] sm:$0xff]
    %v117 = vld [vmem:[%s0 + $0x20] sm:$0xff]
    %v118 = vld [vmem:[%s0 + $0x28] sm:$0xff]
    %v119 = vld [vmem:[%s0 + $0x30] sm:$0xff]
    %v120 = vld [vmem:[%s0 + $0x38] sm:$0xff]
    %v121 = vld [vmem:[%s0 + $0x40] sm:$0xff]
    %v122 = vld [vmem:[%s0 + $0x48] sm:$0xff]
    %v123 = vld [vmem:[%s0 + $0x50] sm:$0xff]
    %v124 = vld [vmem:[%s0 + $0x58] sm:$0xff]
    %v125 = vld [vmem:[%s0 + $0x60] sm:$0xff]
    %v126 = vld [vmem:[%s0 + $0x68] sm:$0xff]
    %v127 = vld [vmem:[%s0 + $0x70] sm:$0xff]
    %v128 = vld [vmem:[%s0 + $0x78] sm:$0xff]
    %v129 = vld [vmem:[%s2] sm:$0x7]
    %v130 = vld [vmem:[%s3] sm:$0x1]
    %v132 = vlaneseq
    %v133 = vshrl.u32 %v132, 7
    %v134 = vsub.s32 0, %v133
    %v135 = vrot.slane %v130, %v134
    %vm137 = vcmask 23552
    %v139 = vsel %vm137, %v113, 0
    %v142 = vsel %vm137, %v114, 0
    %v145 = vsel %vm137, %v115, 0
    %v148 = vsel %vm137, %v116, 0
    %v151 = vsel %vm137, %v117, 0
    %v154 = vsel %vm137, %v118, 0
    %v157 = vsel %vm137, %v119, 0
    %v160 = vsel %vm137, %v120, 0
    %v163 = vsel %vm137, %v121, 0
    %v166 = vsel %vm137, %v122, 0
    %v169 = vsel %vm137, %v123, 0
    %v172 = vsel %vm137, %v124, 0
    %v175 = vsel %vm137, %v125, 0
    %v178 = vsel %vm137, %v126, 0
    %v181 = vsel %vm137, %v127, 0
    %v184 = vsel %vm137, %v128, 0
    %vm186 = vcmask 1042432
    %v188 = vsel %vm186, %v129, 0
    %190 = vmatprep.subr.mxu0 0.0
    %191 = vmatpush1.msra.mxu0 0.0
    %192 = vmatprep.subr.mxu0 0.0
    %193 = vmatpush1.msra.mxu0 0.0
    %194 = vmatprep.subr.mxu0 0.0
    %195 = vmatpush1.msra.mxu0 0.0
    %196 = vmatprep.subr.mxu0 0.0
    %197 = vmatpush1.msra.mxu0 0.0
    %198 = vmatprep.subr.mxu0 0.0
    %199 = vmatpush1.msra.mxu0 0.0
    %200 = vmatprep.subr.mxu0 0.0
    %201 = vmatpush1.msra.mxu0 0.0
    %202 = vmatprep.subr.mxu0 0.0
    %203 = vmatpush1.msra.mxu0 0.0
    %204 = vmatprep.subr.mxu0 0.0
    %205 = vmatpush1.msra.mxu0 0.0
    %206 = vmatprep.subr.mxu0 0.0
    %207 = vmatpush1.msra.mxu0 0.0
    %208 = vmatprep.subr.mxu0 0.0
    %209 = vmatpush1.msra.mxu0 0.0
    %210 = vmatprep.subr.mxu0 0.0
    %211 = vmatpush1.msra.mxu0 0.0
    %212 = vmatprep.subr.mxu0 0.0
    %213 = vmatpush1.msra.mxu0 0.0
    %214 = vmatprep.subr.mxu0 0.0
    %215 = vmatpush1.msra.mxu0 0.0
    %216 = vmatprep.subr.mxu0 0.0
    %217 = vmatpush1.msra.mxu0 0.0
    %218 = vmatprep.subr.mxu0 0.0
    %219 = vmatpush1.msra.mxu0 0.0
    %220 = vmatprep.subr.mxu0 0.0
    %221 = vmatpush1.msra.mxu0 %v188
    %222 = vmatprep.subr.mxu0 0.0
    %223 = vmatpush2.msra.mxu0 0.0
    %224 = vmatprep.subr.mxu0 0.0
    %225 = vmatpush2.msra.mxu0 0.0
    %226 = vmatprep.subr.mxu0 0.0
    %227 = vmatpush2.msra.mxu0 0.0
    %228 = vmatprep.subr.mxu0 0.0
    %229 = vmatpush2.msra.mxu0 0.0
    %230 = vmatprep.subr.mxu0 0.0
    %231 = vmatpush2.msra.mxu0 0.0
    %232 = vmatprep.subr.mxu0 0.0
    %233 = vmatpush2.msra.mxu0 0.0
    %234 = vmatprep.subr.mxu0 0.0
    %235 = vmatpush2.msra.mxu0 0.0
    %236 = vmatprep.subr.mxu0 0.0
    %237 = vmatpush2.msra.mxu0 0.0
    %238 = vmatprep.subr.mxu0 0.0
    %239 = vmatpush2.msra.mxu0 0.0
    %240 = vmatprep.subr.mxu0 0.0
    %241 = vmatpush2.msra.mxu0 0.0
    %242 = vmatprep.subr.mxu0 0.0
    %243 = vmatpush2.msra.mxu0 0.0
    %244 = vmatprep.subr.mxu0 0.0
    %245 = vmatpush2.msra.mxu0 0.0
    %246 = vmatprep.subr.mxu0 0.0
    %247 = vmatpush2.msra.mxu0 0.0
    %248 = vmatprep.subr.mxu0 0.0
    %249 = vmatpush2.msra.mxu0 0.0
    %250 = vmatprep.subr.mxu0 0.0
    %251 = vmatpush2.msra.mxu0 0.0
    %252 = vmatprep.subr.mxu0 0.0
    %253 = vmatpush2.msra.mxu0 0.0
    %254 = vmatprep.mubr.f32.mxu0 0.0
    %255 = vmatmul.mubr.f32.gmra.mxu0 %v139
    %v256 = vpop.f32.mrf.mxu0
    %v257 = vadd.f32 %v135, %v256
    %v258 = vpop.f32.mrf.mxu0
    %259 = vmatprep.mubr.f32.mxu0 0.0
    %260 = vmatmul.mubr.f32.gmra.mxu0 %v142
    %v261 = vpop.f32.mrf.mxu0
    %v262 = vadd.f32 %v135, %v261
    %v263 = vpop.f32.mrf.mxu0
    %264 = vmatprep.mubr.f32.mxu0 0.0
    %265 = vmatmul.mubr.f32.gmra.mxu0 %v145
    %v266 = vpop.f32.mrf.mxu0
    %v267 = vadd.f32 %v135, %v266
    %v268 = vpop.f32.mrf.mxu0
    %269 = vmatprep.mubr.f32.mxu0 0.0
    %270 = vmatmul.mubr.f32.gmra.mxu0 %v148
    %v271 = vpop.f32.mrf.mxu0
    %v272 = vadd.f32 %v135, %v271
    %v273 = vpop.f32.mrf.mxu0
    %274 = vmatprep.mubr.f32.mxu0 0.0
    %275 = vmatmul.mubr.f32.gmra.mxu0 %v151
    %v276 = vpop.f32.mrf.mxu0
    %v277 = vadd.f32 %v135, %v276
    %v278 = vpop.f32.mrf.mxu0
    %279 = vmatprep.mubr.f32.mxu0 0.0
    %280 = vmatmul.mubr.f32.gmra.mxu0 %v154
    %v281 = vpop.f32.mrf.mxu0
    %v282 = vadd.f32 %v135, %v281
    %v283 = vpop.f32.mrf.mxu0
    %284 = vmatprep.mubr.f32.mxu0 0.0
    %285 = vmatmul.mubr.f32.gmra.mxu0 %v157
    %v286 = vpop.f32.mrf.mxu0
    %v287 = vadd.f32 %v135, %v286
    %v288 = vpop.f32.mrf.mxu0
    %289 = vmatprep.mubr.f32.mxu0 0.0
    %290 = vmatmul.mubr.f32.gmra.mxu0 %v160
    %v291 = vpop.f32.mrf.mxu0
    %v292 = vadd.f32 %v135, %v291
    %v293 = vpop.f32.mrf.mxu0
    %294 = vmatprep.mubr.f32.mxu0 0.0
    %295 = vmatmul.mubr.f32.gmra.mxu0 %v163
    %v296 = vpop.f32.mrf.mxu0
    %v297 = vadd.f32 %v135, %v296
    %v298 = vpop.f32.mrf.mxu0
    %299 = vmatprep.mubr.f32.mxu0 0.0
    %300 = vmatmul.mubr.f32.gmra.mxu0 %v166
    %v301 = vpop.f32.mrf.mxu0
    %v302 = vadd.f32 %v135, %v301
    %v303 = vpop.f32.mrf.mxu0
    %304 = vmatprep.mubr.f32.mxu0 0.0
    %305 = vmatmul.mubr.f32.gmra.mxu0 %v169
    %v306 = vpop.f32.mrf.mxu0
    %v307 = vadd.f32 %v135, %v306
    %v308 = vpop.f32.mrf.mxu0
    %309 = vmatprep.mubr.f32.mxu0 0.0
    %310 = vmatmul.mubr.f32.gmra.mxu0 %v172
    %v311 = vpop.f32.mrf.mxu0
    %v312 = vadd.f32 %v135, %v311
    %v313 = vpop.f32.mrf.mxu0
    %314 = vmatprep.mubr.f32.mxu0 0.0
    %315 = vmatmul.mubr.f32.gmra.mxu0 %v175
    %v316 = vpop.f32.mrf.mxu0
    %v317 = vadd.f32 %v135, %v316
    %v318 = vpop.f32.mrf.mxu0
    %319 = vmatprep.mubr.f32.mxu0 0.0
    %320 = vmatmul.mubr.f32.gmra.mxu0 %v178
    %v321 = vpop.f32.mrf.mxu0
    %v322 = vadd.f32 %v135, %v321
    %v323 = vpop.f32.mrf.mxu0
    %324 = vmatprep.mubr.f32.mxu0 0.0
    %325 = vmatmul.mubr.f32.gmra.mxu0 %v181
    %v326 = vpop.f32.mrf.mxu0
    %v327 = vadd.f32 %v135, %v326
    %v328 = vpop.f32.mrf.mxu0
    %329 = vmatprep.mubr.f32.mxu0 0.0
    %330 = vmatmul.mubr.f32.gmra.mxu0 %v184
    %v331 = vpop.f32.mrf.mxu0
    %v332 = vadd.f32 %v135, %v331
    %v333 = vpop.f32.mrf.mxu0
    %334 = vdwg.mxu0
    %v335 = vmax.f32 %v257, 0.0
    %v336 = vmax.f32 %v262, 0.0
    %v337 = vmax.f32 %v267, 0.0
    %v338 = vmax.f32 %v272, 0.0
    %v339 = vmax.f32 %v277, 0.0
    %v340 = vmax.f32 %v282, 0.0
    %v341 = vmax.f32 %v287, 0.0
    %v342 = vmax.f32 %v292, 0.0
    %v343 = vmax.f32 %v297, 0.0
    %v344 = vmax.f32 %v302, 0.0
    %v345 = vmax.f32 %v307, 0.0
    %v346 = vmax.f32 %v312, 0.0
    %v347 = vmax.f32 %v317, 0.0
    %v348 = vmax.f32 %v322, 0.0
    %v349 = vmax.f32 %v327, 0.0
    %v350 = vmax.f32 %v332, 0.0
    %v351 = vld [vmem:[#allocation2] sm:$0xff]
    %v352 = vld [vmem:[#allocation2 + $0x8] sm:$0xff]
    %v353 = vld [vmem:[#allocation2 + $0x10] sm:$0xff]
    %v354 = vld [vmem:[#allocation2 + $0x18] sm:$0xff]
    %v355 = vld [vmem:[#allocation2 + $0x20] sm:$0xff]
    %v356 = vld [vmem:[#allocation2 + $0x28] sm:$0xff]
    %v357 = vld [vmem:[#allocation2 + $0x30] sm:$0xff]
    %v358 = vld [vmem:[#allocation2 + $0x38] sm:$0xff]
    %v359 = vld [vmem:[#allocation4] sm:$0x1]
    %v361 = vlaneseq
    %v362 = vshrl.u32 %v361, 7
    %v363 = vsub.s32 0, %v362
    %v364 = vrot.slane %v359, %v363
    %vm366 = vcmask 523264
    %v368 = vsel %vm366, %v335, 0
    %v371 = vsel %vm366, %v336, 0
    %v374 = vsel %vm366, %v337, 0
    %v377 = vsel %vm366, %v338, 0
    %v380 = vsel %vm366, %v339, 0
    %v383 = vsel %vm366, %v340, 0
    %v386 = vsel %vm366, %v341, 0
    %v389 = vsel %vm366, %v342, 0
    %v392 = vsel %vm366, %v343, 0
    %v395 = vsel %vm366, %v344, 0
    %v398 = vsel %vm366, %v345, 0
    %v401 = vsel %vm366, %v346, 0
    %v404 = vsel %vm366, %v347, 0
    %v407 = vsel %vm366, %v348, 0
    %v410 = vsel %vm366, %v349, 0
    %v413 = vsel %vm366, %v350, 0
    %415 = vmatprep.subr.mxu0 0.0
    %416 = vmatpush1.msra.mxu0 0.0
    %417 = vmatprep.subr.mxu0 0.0
    %418 = vmatpush1.msra.mxu0 0.0
    %419 = vmatprep.subr.mxu0 0.0
    %420 = vmatpush1.msra.mxu0 0.0
    %421 = vmatprep.subr.mxu0 0.0
    %422 = vmatpush1.msra.mxu0 0.0
    %423 = vmatprep.subr.mxu0 0.0
    %424 = vmatpush1.msra.mxu0 0.0
    %425 = vmatprep.subr.mxu0 0.0
    %426 = vmatpush1.msra.mxu0 0.0
    %427 = vmatprep.subr.mxu0 0.0
    %428 = vmatpush1.msra.mxu0 0.0
    %429 = vmatprep.subr.mxu0 0.0
    %430 = vmatpush1.msra.mxu0 0.0
    %431 = vmatprep.subr.mxu0 0.0
    %432 = vmatpush1.msra.mxu0 %v358
    %433 = vmatprep.subr.mxu0 0.0
    %434 = vmatpush1.msra.mxu0 %v357
    %435 = vmatprep.subr.mxu0 0.0
    %436 = vmatpush1.msra.mxu0 %v356
    %437 = vmatprep.subr.mxu0 0.0
    %438 = vmatpush1.msra.mxu0 %v355
    %439 = vmatprep.subr.mxu0 0.0
    %440 = vmatpush1.msra.mxu0 %v354
    %441 = vmatprep.subr.mxu0 0.0
    %442 = vmatpush1.msra.mxu0 %v353
    %443 = vmatprep.subr.mxu0 0.0
    %444 = vmatpush1.msra.mxu0 %v352
    %445 = vmatprep.subr.mxu0 0.0
    %446 = vmatpush1.msra.mxu0 %v351
    %447 = vmatprep.subr.mxu0 0.0
    %448 = vmatpush2.msra.mxu0 0.0
    %449 = vmatprep.subr.mxu0 0.0
    %450 = vmatpush2.msra.mxu0 0.0
    %451 = vmatprep.subr.mxu0 0.0
    %452 = vmatpush2.msra.mxu0 0.0
    %453 = vmatprep.subr.mxu0 0.0
    %454 = vmatpush2.msra.mxu0 0.0
    %455 = vmatprep.subr.mxu0 0.0
    %456 = vmatpush2.msra.mxu0 0.0
    %457 = vmatprep.subr.mxu0 0.0
    %458 = vmatpush2.msra.mxu0 0.0
    %459 = vmatprep.subr.mxu0 0.0
    %460 = vmatpush2.msra.mxu0 0.0
    %461 = vmatprep.subr.mxu0 0.0
    %462 = vmatpush2.msra.mxu0 0.0
    %463 = vmatprep.subr.mxu0 0.0
    %464 = vmatpush2.msra.mxu0 0.0
    %465 = vmatprep.subr.mxu0 0.0
    %466 = vmatpush2.msra.mxu0 0.0
    %467 = vmatprep.subr.mxu0 0.0
    %468 = vmatpush2.msra.mxu0 0.0
    %469 = vmatprep.subr.mxu0 0.0
    %470 = vmatpush2.msra.mxu0 0.0
    %471 = vmatprep.subr.mxu0 0.0
    %472 = vmatpush2.msra.mxu0 0.0
    %473 = vmatprep.subr.mxu0 0.0
    %474 = vmatpush2.msra.mxu0 0.0
    %475 = vmatprep.subr.mxu0 0.0
    %476 = vmatpush2.msra.mxu0 0.0
    %477 = vmatprep.subr.mxu0 0.0
    %478 = vmatpush2.msra.mxu0 0.0
    %479 = vmatprep.mubr.f32.mxu0 0.0
    %480 = vmatmul.mubr.f32.gmra.mxu0 %v368
    %v481 = vpop.f32.mrf.mxu0
    %v482 = vadd.f32 %v364, %v481
    %v483 = vpop.f32.mrf.mxu0
    %484 = vmatprep.mubr.f32.mxu0 0.0
    %485 = vmatmul.mubr.f32.gmra.mxu0 %v371
    %v486 = vpop.f32.mrf.mxu0
    %v487 = vadd.f32 %v364, %v486
    %v488 = vpop.f32.mrf.mxu0
    %489 = vmatprep.mubr.f32.mxu0 0.0
    %490 = vmatmul.mubr.f32.gmra.mxu0 %v374
    %v491 = vpop.f32.mrf.mxu0
    %v492 = vadd.f32 %v364, %v491
    %v493 = vpop.f32.mrf.mxu0
    %494 = vmatprep.mubr.f32.mxu0 0.0
    %495 = vmatmul.mubr.f32.gmra.mxu0 %v377
    %v496 = vpop.f32.mrf.mxu0
    %v497 = vadd.f32 %v364, %v496
    %v498 = vpop.f32.mrf.mxu0
    %499 = vmatprep.mubr.f32.mxu0 0.0
    %500 = vmatmul.mubr.f32.gmra.mxu0 %v380
    %v501 = vpop.f32.mrf.mxu0
    %v502 = vadd.f32 %v364, %v501
    %v503 = vpop.f32.mrf.mxu0
    %504 = vmatprep.mubr.f32.mxu0 0.0
    %505 = vmatmul.mubr.f32.gmra.mxu0 %v383
    %v506 = vpop.f32.mrf.mxu0
    %v507 = vadd.f32 %v364, %v506
    %v508 = vpop.f32.mrf.mxu0
    %509 = vmatprep.mubr.f32.mxu0 0.0
    %510 = vmatmul.mubr.f32.gmra.mxu0 %v386
    %v511 = vpop.f32.mrf.mxu0
    %v512 = vadd.f32 %v364, %v511
    %v513 = vpop.f32.mrf.mxu0
    %514 = vmatprep.mubr.f32.mxu0 0.0
    %515 = vmatmul.mubr.f32.gmra.mxu0 %v389
    %v516 = vpop.f32.mrf.mxu0
    %v517 = vadd.f32 %v364, %v516
    %v518 = vpop.f32.mrf.mxu0
    %519 = vmatprep.mubr.f32.mxu0 0.0
    %520 = vmatmul.mubr.f32.gmra.mxu0 %v392
    %v521 = vpop.f32.mrf.mxu0
    %v522 = vadd.f32 %v364, %v521
    %v523 = vpop.f32.mrf.mxu0
    %524 = vmatprep.mubr.f32.mxu0 0.0
    %525 = vmatmul.mubr.f32.gmra.mxu0 %v395
    %v526 = vpop.f32.mrf.mxu0
    %v527 = vadd.f32 %v364, %v526
    %v528 = vpop.f32.mrf.mxu0
    %529 = vmatprep.mubr.f32.mxu0 0.0
    %530 = vmatmul.mubr.f32.gmra.mxu0 %v398
    %v531 = vpop.f32.mrf.mxu0
    %v532 = vadd.f32 %v364, %v531
    %v533 = vpop.f32.mrf.mxu0
    %534 = vmatprep.mubr.f32.mxu0 0.0
    %535 = vmatmul.mubr.f32.gmra.mxu0 %v401
    %v536 = vpop.f32.mrf.mxu0
    %v537 = vadd.f32 %v364, %v536
    %v538 = vpop.f32.mrf.mxu0
    %539 = vmatprep.mubr.f32.mxu0 0.0
    %540 = vmatmul.mubr.f32.gmra.mxu0 %v404
    %v541 = vpop.f32.mrf.mxu0
    %v542 = vadd.f32 %v364, %v541
    %v543 = vpop.f32.mrf.mxu0
    %544 = vmatprep.mubr.f32.mxu0 0.0
    %545 = vmatmul.mubr.f32.gmra.mxu0 %v407
    %v546 = vpop.f32.mrf.mxu0
    %v547 = vadd.f32 %v364, %v546
    %v548 = vpop.f32.mrf.mxu0
    %549 = vmatprep.mubr.f32.mxu0 0.0
    %550 = vmatmul.mubr.f32.gmra.mxu0 %v410
    %v551 = vpop.f32.mrf.mxu0
    %v552 = vadd.f32 %v364, %v551
    %v553 = vpop.f32.mrf.mxu0
    %554 = vmatprep.mubr.f32.mxu0 0.0
    %555 = vmatmul.mubr.f32.gmra.mxu0 %v413
    %v556 = vpop.f32.mrf.mxu0
    %v557 = vadd.f32 %v364, %v556
    %v558 = vpop.f32.mrf.mxu0
    %559 = vdwg.mxu0
    %v560 = vmax.f32 %v482, 0.0
    %v561 = vmax.f32 %v487, 0.0
    %v562 = vmax.f32 %v492, 0.0
    %v563 = vmax.f32 %v497, 0.0
    %v564 = vmax.f32 %v502, 0.0
    %v565 = vmax.f32 %v507, 0.0
    %v566 = vmax.f32 %v512, 0.0
    %v567 = vmax.f32 %v517, 0.0
    %v568 = vmax.f32 %v522, 0.0
    %v569 = vmax.f32 %v527, 0.0
    %v570 = vmax.f32 %v532, 0.0
    %v571 = vmax.f32 %v537, 0.0
    %v572 = vmax.f32 %v542, 0.0
    %v573 = vmax.f32 %v547, 0.0
    %v574 = vmax.f32 %v552, 0.0
    %v575 = vmax.f32 %v557, 0.0
    %v576 = vld [vmem:[%s6] sm:$0xff]
    %v577 = vld [vmem:[%s6 + $0x8] sm:$0xff]
    %v578 = vld [vmem:[%s6 + $0x10] sm:$0xff]
    %v579 = vld [vmem:[%s6 + $0x18] sm:$0xff]
    %v580 = vld [vmem:[%s6 + $0x20] sm:$0xff]
    %v581 = vld [vmem:[%s6 + $0x28] sm:$0xff]
    %v582 = vld [vmem:[%s6 + $0x30] sm:$0xff]
    %v583 = vld [vmem:[%s6 + $0x38] sm:$0xff]
    %v584 = vld [vmem:[%s6 + $0x40] sm:$0xff]
    %v585 = vld [vmem:[%s6 + $0x48] sm:$0xff]
    %v586 = vld [vmem:[%s6 + $0x50] sm:$0xff]
    %v587 = vld [vmem:[%s6 + $0x58] sm:$0xff]
    %v588 = vld [vmem:[%s6 + $0x60] sm:$0xff]
    %v589 = vld [vmem:[%s6 + $0x68] sm:$0xff]
    %v590 = vld [vmem:[%s6 + $0x70] sm:$0xff]
    %v591 = vld [vmem:[%s6 + $0x78] sm:$0xff]
    %v592 = vld [vmem:[%s6 + $0x80] sm:$0xff]
    %v593 = vld [vmem:[%s6 + $0x88] sm:$0xff]
    %v594 = vld [vmem:[%s6 + $0x90] sm:$0xff]
    %v595 = vld [vmem:[%s6 + $0x98] sm:$0xff]
    %v596 = vld [vmem:[%s6 + $0xa0] sm:$0xff]
    %v597 = vld [vmem:[%s6 + $0xa8] sm:$0xff]
    %v598 = vld [vmem:[%s6 + $0xb0] sm:$0xff]
    %v599 = vld [vmem:[%s6 + $0xb8] sm:$0xff]
    %v600 = vld [vmem:[%s6 + $0xc0] sm:$0xff]
    %v601 = vld [vmem:[%s6 + $0xc8] sm:$0xff]
    %v602 = vld [vmem:[%s6 + $0xd0] sm:$0xff]
    %v603 = vld [vmem:[%s6 + $0xd8] sm:$0xff]
    %v604 = vld [vmem:[%s6 + $0xe0] sm:$0xff]
    %v605 = vld [vmem:[%s6 + $0xe8] sm:$0xff]
    %v606 = vld [vmem:[%s6 + $0xf0] sm:$0xff]
    %v607 = vld [vmem:[%s6 + $0xf8] sm:$0xff]
    %v608 = vld [vmem:[%s6 + $0x100] sm:$0xff]
    %v609 = vld [vmem:[%s6 + $0x108] sm:$0xff]
    %v610 = vld [vmem:[%s6 + $0x110] sm:$0xff]
    %v611 = vld [vmem:[%s6 + $0x118] sm:$0xff]
    %v612 = vld [vmem:[%s6 + $0x120] sm:$0xff]
    %v613 = vld [vmem:[%s6 + $0x128] sm:$0xff]
    %v614 = vld [vmem:[%s6 + $0x130] sm:$0xff]
    %v615 = vld [vmem:[%s6 + $0x138] sm:$0xff]
    %v616 = vld [vmem:[%s6 + $0x140] sm:$0xff]
    %v617 = vld [vmem:[%s6 + $0x148] sm:$0xff]
    %v618 = vld [vmem:[%s6 + $0x150] sm:$0xff]
    %v619 = vld [vmem:[%s6 + $0x158] sm:$0xff]
    %v620 = vld [vmem:[%s6 + $0x160] sm:$0xff]
    %v621 = vld [vmem:[%s6 + $0x168] sm:$0xff]
    %v622 = vld [vmem:[%s6 + $0x170] sm:$0xff]
    %v623 = vld [vmem:[%s6 + $0x178] sm:$0xff]
    %v624 = vld [vmem:[%s6 + $0x180] sm:$0xff]
    %v625 = vld [vmem:[%s6 + $0x188] sm:$0xff]
    %v626 = vld [vmem:[%s6 + $0x190] sm:$0xff]
    %v627 = vld [vmem:[%s6 + $0x198] sm:$0xff]
    %v628 = vld [vmem:[%s6 + $0x1a0] sm:$0xff]
    %v629 = vld [vmem:[%s6 + $0x1a8] sm:$0xff]
    %v630 = vld [vmem:[%s6 + $0x1b0] sm:$0xff]
    %v631 = vld [vmem:[%s6 + $0x1b8] sm:$0xff]
    %v632 = vld [vmem:[%s6 + $0x1c0] sm:$0xff]
    %v633 = vld [vmem:[%s6 + $0x1c8] sm:$0xff]
    %v634 = vld [vmem:[%s6 + $0x1d0] sm:$0xff]
    %v635 = vld [vmem:[%s6 + $0x1d8] sm:$0xff]
    %v636 = vld [vmem:[%s6 + $0x1e0] sm:$0xff]
    %v637 = vld [vmem:[%s6 + $0x1e8] sm:$0xff]
    %v638 = vld [vmem:[%s6 + $0x1f0] sm:$0xff]
    %v639 = vld [vmem:[%s6 + $0x1f8] sm:$0xff]
    %v640 = vld [vmem:[%s6 + $0x200] sm:$0xff]
    %v641 = vld [vmem:[%s6 + $0x208] sm:$0xff]
    %v642 = vld [vmem:[%s6 + $0x210] sm:$0xff]
    %v643 = vld [vmem:[%s6 + $0x218] sm:$0xff]
    %v644 = vld [vmem:[%s6 + $0x220] sm:$0xff]
    %v645 = vld [vmem:[%s6 + $0x228] sm:$0xff]
    %v646 = vld [vmem:[%s6 + $0x230] sm:$0xff]
    %v647 = vld [vmem:[%s6 + $0x238] sm:$0xff]
    %v648 = vld [vmem:[%s6 + $0x240] sm:$0xff]
    %v649 = vld [vmem:[%s6 + $0x248] sm:$0xff]
    %v650 = vld [vmem:[%s6 + $0x250] sm:$0xff]
    %v651 = vld [vmem:[%s6 + $0x258] sm:$0xff]
    %v652 = vld [vmem:[%s6 + $0x260] sm:$0xff]
    %v653 = vld [vmem:[%s6 + $0x268] sm:$0xff]
    %v654 = vld [vmem:[%s6 + $0x270] sm:$0xff]
    %v655 = vld [vmem:[%s6 + $0x278] sm:$0xff]
    %v656 = vld [vmem:[%s6 + $0x280] sm:$0xff]
    %v657 = vld [vmem:[%s6 + $0x288] sm:$0xff]
    %v658 = vld [vmem:[%s6 + $0x290] sm:$0xff]
    %v659 = vld [vmem:[%s6 + $0x298] sm:$0xff]
    %v660 = vld [vmem:[%s6 + $0x2a0] sm:$0xff]
    %v661 = vld [vmem:[%s6 + $0x2a8] sm:$0xff]
    %v662 = vld [vmem:[%s6 + $0x2b0] sm:$0xff]
    %v663 = vld [vmem:[%s6 + $0x2b8] sm:$0xff]
    %v664 = vld [vmem:[%s6 + $0x2c0] sm:$0xff]
    %v665 = vld [vmem:[%s6 + $0x2c8] sm:$0xff]
    %v666 = vld [vmem:[%s6 + $0x2d0] sm:$0xff]
    %v667 = vld [vmem:[%s6 + $0x2d8] sm:$0xff]
    %v668 = vld [vmem:[%s6 + $0x2e0] sm:$0xff]
    %v669 = vld [vmem:[%s6 + $0x2e8] sm:$0xff]
    %v670 = vld [vmem:[%s6 + $0x2f0] sm:$0xff]
    %v671 = vld [vmem:[%s6 + $0x2f8] sm:$0xff]
    %v672 = vld [vmem:[%s6 + $0x300] sm:$0xff]
    %v673 = vld [vmem:[%s6 + $0x308] sm:$0xff]
    %v674 = vld [vmem:[%s6 + $0x310] sm:$0xff]
    %v675 = vld [vmem:[%s6 + $0x318] sm:$0xff]
    %v676 = vld [vmem:[%s6 + $0x320] sm:$0xff]
    %v677 = vld [vmem:[%s6 + $0x328] sm:$0xff]
    %v678 = vld [vmem:[%s6 + $0x330] sm:$0xff]
    %v679 = vld [vmem:[%s6 + $0x338] sm:$0xff]
    %v680 = vld [vmem:[%s6 + $0x340] sm:$0xff]
    %v681 = vld [vmem:[%s6 + $0x348] sm:$0xff]
    %v682 = vld [vmem:[%s6 + $0x350] sm:$0xff]
    %v683 = vld [vmem:[%s6 + $0x358] sm:$0xff]
    %v684 = vld [vmem:[%s6 + $0x360] sm:$0xff]
    %v685 = vld [vmem:[%s6 + $0x368] sm:$0xff]
    %v686 = vld [vmem:[%s6 + $0x370] sm:$0xff]
    %v687 = vld [vmem:[%s6 + $0x378] sm:$0xff]
    %v688 = vld [vmem:[%s6 + $0x380] sm:$0xff]
    %v689 = vld [vmem:[%s6 + $0x388] sm:$0xff]
    %v690 = vld [vmem:[%s6 + $0x390] sm:$0xff]
    %v691 = vld [vmem:[%s6 + $0x398] sm:$0xff]
    %v692 = vld [vmem:[%s6 + $0x3a0] sm:$0xff]
    %v693 = vld [vmem:[%s6 + $0x3a8] sm:$0xff]
    %v694 = vld [vmem:[%s6 + $0x3b0] sm:$0xff]
    %v695 = vld [vmem:[%s6 + $0x3b8] sm:$0xff]
    %v696 = vld [vmem:[%s6 + $0x3c0] sm:$0xff]
    %v697 = vld [vmem:[%s6 + $0x3c8] sm:$0xff]
    %v698 = vld [vmem:[%s6 + $0x3d0] sm:$0xff]
    %v699 = vld [vmem:[%s6 + $0x3d8] sm:$0xff]
    %v700 = vld [vmem:[%s6 + $0x3e0] sm:$0xff]
    %v701 = vld [vmem:[%s6 + $0x3e8] sm:$0xff]
    %v702 = vld [vmem:[%s6 + $0x3f0] sm:$0xff]
    %v703 = vld [vmem:[%s6 + $0x3f8] sm:$0xff]
    %v704 = vld [vmem:[%s7] sm:$0xff]
    %v706 = vlaneseq
    %v707 = vshrl.u32 %v706, 7
    %v708 = vsub.s32 0, %v707
    %v709 = vrot.slane %v704, %v708
    %v710 = vlaneseq
    %v711 = vshrl.u32 %v710, 7
    %v712 = vsub.s32 1, %v711
    %v713 = vrot.slane %v704, %v712
    %v714 = vlaneseq
    %v715 = vshrl.u32 %v714, 7
    %v716 = vsub.s32 2, %v715
    %v717 = vrot.slane %v704, %v716
    %v718 = vlaneseq
    %v719 = vshrl.u32 %v718, 7
    %v720 = vsub.s32 3, %v719
    %v721 = vrot.slane %v704, %v720
    %v722 = vlaneseq
    %v723 = vshrl.u32 %v722, 7
    %v724 = vsub.s32 4, %v723
    %v725 = vrot.slane %v704, %v724
    %v726 = vlaneseq
    %v727 = vshrl.u32 %v726, 7
    %v728 = vsub.s32 5, %v727
    %v729 = vrot.slane %v704, %v728
    %v730 = vlaneseq
    %v731 = vshrl.u32 %v730, 7
    %v732 = vsub.s32 6, %v731
    %v733 = vrot.slane %v704, %v732
    %v734 = vlaneseq
    %v735 = vshrl.u32 %v734, 7
    %v736 = vsub.s32 7, %v735
    %v737 = vrot.slane %v704, %v736
    %746 = vmatprep.subr.mxu0 %v697
    %747 = vmatpush1.msra.mxu0 %v696
    %748 = vmatprep.subr.mxu0 %v689
    %749 = vmatpush1.msra.mxu0 %v688
    %750 = vmatprep.subr.mxu0 %v681
    %751 = vmatpush1.msra.mxu0 %v680
    %752 = vmatprep.subr.mxu0 %v673
    %753 = vmatpush1.msra.mxu0 %v672
    %754 = vmatprep.subr.mxu0 %v665
    %755 = vmatpush1.msra.mxu0 %v664
    %756 = vmatprep.subr.mxu0 %v657
    %757 = vmatpush1.msra.mxu0 %v656
    %758 = vmatprep.subr.mxu0 %v649
    %759 = vmatpush1.msra.mxu0 %v648
    %760 = vmatprep.subr.mxu0 %v641
    %761 = vmatpush1.msra.mxu0 %v640
    %762 = vmatprep.subr.mxu0 %v633
    %763 = vmatpush1.msra.mxu0 %v632
    %764 = vmatprep.subr.mxu0 %v625
    %765 = vmatpush1.msra.mxu0 %v624
    %766 = vmatprep.subr.mxu0 %v617
    %767 = vmatpush1.msra.mxu0 %v616
    %768 = vmatprep.subr.mxu0 %v609
    %769 = vmatpush1.msra.mxu0 %v608
    %770 = vmatprep.subr.mxu0 %v601
    %771 = vmatpush1.msra.mxu0 %v600
    %772 = vmatprep.subr.mxu0 %v593
    %773 = vmatpush1.msra.mxu0 %v592
    %774 = vmatprep.subr.mxu0 %v585
    %775 = vmatpush1.msra.mxu0 %v584
    %776 = vmatprep.subr.mxu0 %v577
    %777 = vmatpush1.msra.mxu0 %v576
    %778 = vmatprep.subr.mxu0 0.0
    %779 = vmatpush2.msra.mxu0 0.0
    %780 = vmatprep.subr.mxu0 0.0
    %781 = vmatpush2.msra.mxu0 0.0
    %782 = vmatprep.subr.mxu0 0.0
    %783 = vmatpush2.msra.mxu0 0.0
    %784 = vmatprep.subr.mxu0 0.0
    %785 = vmatpush2.msra.mxu0 0.0
    %786 = vmatprep.subr.mxu0 0.0
    %787 = vmatpush2.msra.mxu0 0.0
    %788 = vmatprep.subr.mxu0 0.0
    %789 = vmatpush2.msra.mxu0 0.0
    %790 = vmatprep.subr.mxu0 0.0
    %791 = vmatpush2.msra.mxu0 0.0
    %792 = vmatprep.subr.mxu0 0.0
    %793 = vmatpush2.msra.mxu0 0.0
    %794 = vmatprep.subr.mxu0 0.0
    %795 = vmatpush2.msra.mxu0 0.0
    %796 = vmatprep.subr.mxu0 0.0
    %797 = vmatpush2.msra.mxu0 0.0
    %798 = vmatprep.subr.mxu0 0.0
    %799 = vmatpush2.msra.mxu0 0.0
    %800 = vmatprep.subr.mxu0 0.0
    %801 = vmatpush2.msra.mxu0 0.0
    %802 = vmatprep.subr.mxu0 0.0
    %803 = vmatpush2.msra.mxu0 0.0
    %804 = vmatprep.subr.mxu0 0.0
    %805 = vmatpush2.msra.mxu0 0.0
    %806 = vmatprep.subr.mxu0 0.0
    %807 = vmatpush2.msra.mxu0 0.0
    %808 = vmatprep.subr.mxu0 0.0
    %809 = vmatpush2.msra.mxu0 0.0
    %810 = vmatprep.mubr.f32.mxu0 0.0
    %811 = vmatmul.mubr.f32.gmra.mxu0 %v560
    %v812 = vpop.f32.mrf.mxu0
    %v813 = vadd.f32 %v709, %v812
    %v814 = vpop.f32.mrf.mxu0
    %v815 = vadd.f32 %v713, %v814
    %816 = vmatprep.mubr.f32.mxu0 0.0
    %817 = vmatmul.mubr.f32.gmra.mxu0 %v561
    %v818 = vpop.f32.mrf.mxu0
    %v819 = vadd.f32 %v709, %v818
    %v820 = vpop.f32.mrf.mxu0
    %v821 = vadd.f32 %v713, %v820
    %822 = vmatprep.mubr.f32.mxu0 0.0
    %823 = vmatmul.mubr.f32.gmra.mxu0 %v562
    %v824 = vpop.f32.mrf.mxu0
    %v825 = vadd.f32 %v709, %v824
    %v826 = vpop.f32.mrf.mxu0
    %v827 = vadd.f32 %v713, %v826
    %828 = vmatprep.mubr.f32.mxu0 0.0
    %829 = vmatmul.mubr.f32.gmra.mxu0 %v563
    %v830 = vpop.f32.mrf.mxu0
    %v831 = vadd.f32 %v709, %v830
    %v832 = vpop.f32.mrf.mxu0
    %v833 = vadd.f32 %v713, %v832
    %834 = vmatprep.mubr.f32.mxu0 0.0
    %835 = vmatmul.mubr.f32.gmra.mxu0 %v564
    %v836 = vpop.f32.mrf.mxu0
    %v837 = vadd.f32 %v709, %v836
    %v838 = vpop.f32.mrf.mxu0
    %v839 = vadd.f32 %v713, %v838
    %840 = vmatprep.mubr.f32.mxu0 0.0
    %841 = vmatmul.mubr.f32.gmra.mxu0 %v565
    %v842 = vpop.f32.mrf.mxu0
    %v843 = vadd.f32 %v709, %v842
    %v844 = vpop.f32.mrf.mxu0
    %v845 = vadd.f32 %v713, %v844
    %846 = vmatprep.mubr.f32.mxu0 0.0
    %847 = vmatmul.mubr.f32.gmra.mxu0 %v566
    %v848 = vpop.f32.mrf.mxu0
    %v849 = vadd.f32 %v709, %v848
    %v850 = vpop.f32.mrf.mxu0
    %v851 = vadd.f32 %v713, %v850
    %852 = vmatprep.mubr.f32.mxu0 0.0
    %853 = vmatmul.mubr.f32.gmra.mxu0 %v567
    %v854 = vpop.f32.mrf.mxu0
    %v855 = vadd.f32 %v709, %v854
    %v856 = vpop.f32.mrf.mxu0
    %v857 = vadd.f32 %v713, %v856
    %858 = vmatprep.mubr.f32.mxu0 0.0
    %859 = vmatmul.mubr.f32.gmra.mxu0 %v568
    %v860 = vpop.f32.mrf.mxu0
    %v861 = vadd.f32 %v709, %v860
    %v862 = vpop.f32.mrf.mxu0
    %v863 = vadd.f32 %v713, %v862
    %864 = vmatprep.mubr.f32.mxu0 0.0
    %865 = vmatmul.mubr.f32.gmra.mxu0 %v569
    %v866 = vpop.f32.mrf.mxu0
    %v867 = vadd.f32 %v709, %v866
    %v868 = vpop.f32.mrf.mxu0
    %v869 = vadd.f32 %v713, %v868
    %870 = vmatprep.mubr.f32.mxu0 0.0
    %871 = vmatmul.mubr.f32.gmra.mxu0 %v570
    %v872 = vpop.f32.mrf.mxu0
    %v873 = vadd.f32 %v709, %v872
    %v874 = vpop.f32.mrf.mxu0
    %v875 = vadd.f32 %v713, %v874
    %876 = vmatprep.mubr.f32.mxu0 0.0
    %877 = vmatmul.mubr.f32.gmra.mxu0 %v571
    %v878 = vpop.f32.mrf.mxu0
    %v879 = vadd.f32 %v709, %v878
    %v880 = vpop.f32.mrf.mxu0
    %v881 = vadd.f32 %v713, %v880
    %882 = vmatprep.mubr.f32.mxu0 0.0
    %883 = vmatmul.mubr.f32.gmra.mxu0 %v572
    %v884 = vpop.f32.mrf.mxu0
    %v885 = vadd.f32 %v709, %v884
    %v886 = vpop.f32.mrf.mxu0
    %v887 = vadd.f32 %v713, %v886
    %888 = vmatprep.mubr.f32.mxu0 0.0
    %889 = vmatmul.mubr.f32.gmra.mxu0 %v573
    %v890 = vpop.f32.mrf.mxu0
    %v891 = vadd.f32 %v709, %v890
    %v892 = vpop.f32.mrf.mxu0
    %v893 = vadd.f32 %v713, %v892
    %894 = vmatprep.mubr.f32.mxu0 0.0
    %895 = vmatmul.mubr.f32.gmra.mxu0 %v574
    %v896 = vpop.f32.mrf.mxu0
    %v897 = vadd.f32 %v709, %v896
    %v898 = vpop.f32.mrf.mxu0
    %v899 = vadd.f32 %v713, %v898
    %900 = vmatprep.mubr.f32.mxu0 0.0
    %901 = vmatmul.mubr.f32.gmra.mxu0 %v575
    %v902 = vpop.f32.mrf.mxu0
    %v903 = vadd.f32 %v709, %v902
    %v904 = vpop.f32.mrf.mxu0
    %v905 = vadd.f32 %v713, %v904
    %906 = vdwg.mxu0
    %907 = vmatprep.subr.mxu0 %v699
    %908 = vmatpush1.msra.mxu0 %v698
    %909 = vmatprep.subr.mxu0 %v691
    %910 = vmatpush1.msra.mxu0 %v690
    %911 = vmatprep.subr.mxu0 %v683
    %912 = vmatpush1.msra.mxu0 %v682
    %913 = vmatprep.subr.mxu0 %v675
    %914 = vmatpush1.msra.mxu0 %v674
    %915 = vmatprep.subr.mxu0 %v667
    %916 = vmatpush1.msra.mxu0 %v666
    %917 = vmatprep.subr.mxu0 %v659
    %918 = vmatpush1.msra.mxu0 %v658
    %919 = vmatprep.subr.mxu0 %v651
    %920 = vmatpush1.msra.mxu0 %v650
    %921 = vmatprep.subr.mxu0 %v643
    %922 = vmatpush1.msra.mxu0 %v642
    %923 = vmatprep.subr.mxu0 %v635
    %924 = vmatpush1.msra.mxu0 %v634
    %925 = vmatprep.subr.mxu0 %v627
    %926 = vmatpush1.msra.mxu0 %v626
    %927 = vmatprep.subr.mxu0 %v619
    %928 = vmatpush1.msra.mxu0 %v618
    %929 = vmatprep.subr.mxu0 %v611
    %930 = vmatpush1.msra.mxu0 %v610
    %931 = vmatprep.subr.mxu0 %v603
    %932 = vmatpush1.msra.mxu0 %v602
    %933 = vmatprep.subr.mxu0 %v595
    %934 = vmatpush1.msra.mxu0 %v594
    %935 = vmatprep.subr.mxu0 %v587
    %936 = vmatpush1.msra.mxu0 %v586
    %937 = vmatprep.subr.mxu0 %v579
    %938 = vmatpush1.msra.mxu0 %v578
    %939 = vmatprep.subr.mxu0 0.0
    %940 = vmatpush2.msra.mxu0 0.0
    %941 = vmatprep.subr.mxu0 0.0
    %942 = vmatpush2.msra.mxu0 0.0
    %943 = vmatprep.subr.mxu0 0.0
    %944 = vmatpush2.msra.mxu0 0.0
    %945 = vmatprep.subr.mxu0 0.0
    %946 = vmatpush2.msra.mxu0 0.0
    %947 = vmatprep.subr.mxu0 0.0
    %948 = vmatpush2.msra.mxu0 0.0
    %949 = vmatprep.subr.mxu0 0.0
    %950 = vmatpush2.msra.mxu0 0.0
    %951 = vmatprep.subr.mxu0 0.0
    %952 = vmatpush2.msra.mxu0 0.0
    %953 = vmatprep.subr.mxu0 0.0
    %954 = vmatpush2.msra.mxu0 0.0
    %955 = vmatprep.subr.mxu0 0.0
    %956 = vmatpush2.msra.mxu0 0.0
    %957 = vmatprep.subr.mxu0 0.0
    %958 = vmatpush2.msra.mxu0 0.0
    %959 = vmatprep.subr.mxu0 0.0
    %960 = vmatpush2.msra.mxu0 0.0
    %961 = vmatprep.subr.mxu0 0.0
    %962 = vmatpush2.msra.mxu0 0.0
    %963 = vmatprep.subr.mxu0 0.0
    %964 = vmatpush2.msra.mxu0 0.0
    %965 = vmatprep.subr.mxu0 0.0
    %966 = vmatpush2.msra.mxu0 0.0
    %967 = vmatprep.subr.mxu0 0.0
    %968 = vmatpush2.msra.mxu0 0.0
    %969 = vmatprep.subr.mxu0 0.0
    %970 = vmatpush2.msra.mxu0 0.0
    %971 = vmatprep.mubr.f32.mxu0 0.0
    %972 = vmatmul.mubr.f32.gmra.mxu0 %v560
    %v973 = vpop.f32.mrf.mxu0
    %v974 = vadd.f32 %v717, %v973
    %v975 = vpop.f32.mrf.mxu0
    %v976 = vadd.f32 %v721, %v975
    %977 = vmatprep.mubr.f32.mxu0 0.0
    %978 = vmatmul.mubr.f32.gmra.mxu0 %v561
    %v979 = vpop.f32.mrf.mxu0
    %v980 = vadd.f32 %v717, %v979
    %v981 = vpop.f32.mrf.mxu0
    %v982 = vadd.f32 %v721, %v981
    %983 = vmatprep.mubr.f32.mxu0 0.0
    %984 = vmatmul.mubr.f32.gmra.mxu0 %v562
    %v985 = vpop.f32.mrf.mxu0
    %v986 = vadd.f32 %v717, %v985
    %v987 = vpop.f32.mrf.mxu0
    %v988 = vadd.f32 %v721, %v987
    %989 = vmatprep.mubr.f32.mxu0 0.0
    %990 = vmatmul.mubr.f32.gmra.mxu0 %v563
    %v991 = vpop.f32.mrf.mxu0
    %v992 = vadd.f32 %v717, %v991
    %v993 = vpop.f32.mrf.mxu0
    %v994 = vadd.f32 %v721, %v993
    %995 = vmatprep.mubr.f32.mxu0 0.0
    %996 = vmatmul.mubr.f32.gmra.mxu0 %v564
    %v997 = vpop.f32.mrf.mxu0
    %v998 = vadd.f32 %v717, %v997
    %v999 = vpop.f32.mrf.mxu0
    %v1000 = vadd.f32 %v721, %v999
    %1001 = vmatprep.mubr.f32.mxu0 0.0
    %1002 = vmatmul.mubr.f32.gmra.mxu0 %v565
    %v1003 = vpop.f32.mrf.mxu0
    %v1004 = vadd.f32 %v717, %v1003
    %v1005 = vpop.f32.mrf.mxu0
    %v1006 = vadd.f32 %v721, %v1005
    %1007 = vmatprep.mubr.f32.mxu0 0.0
    %1008 = vmatmul.mubr.f32.gmra.mxu0 %v566
    %v1009 = vpop.f32.mrf.mxu0
    %v1010 = vadd.f32 %v717, %v1009
    %v1011 = vpop.f32.mrf.mxu0
    %v1012 = vadd.f32 %v721, %v1011
    %1013 = vmatprep.mubr.f32.mxu0 0.0
    %1014 = vmatmul.mubr.f32.gmra.mxu0 %v567
    %v1015 = vpop.f32.mrf.mxu0
    %v1016 = vadd.f32 %v717, %v1015
    %v1017 = vpop.f32.mrf.mxu0
    %v1018 = vadd.f32 %v721, %v1017
    %1019 = vmatprep.mubr.f32.mxu0 0.0
    %1020 = vmatmul.mubr.f32.gmra.mxu0 %v568
    %v1021 = vpop.f32.mrf.mxu0
    %v1022 = vadd.f32 %v717, %v1021
    %v1023 = vpop.f32.mrf.mxu0
    %v1024 = vadd.f32 %v721, %v1023
    %1025 = vmatprep.mubr.f32.mxu0 0.0
    %1026 = vmatmul.mubr.f32.gmra.mxu0 %v569
    %v1027 = vpop.f32.mrf.mxu0
    %v1028 = vadd.f32 %v717, %v1027
    %v1029 = vpop.f32.mrf.mxu0
    %v1030 = vadd.f32 %v721, %v1029
    %1031 = vmatprep.mubr.f32.mxu0 0.0
    %1032 = vmatmul.mubr.f32.gmra.mxu0 %v570
    %v1033 = vpop.f32.mrf.mxu0
    %v1034 = vadd.f32 %v717, %v1033
    %v1035 = vpop.f32.mrf.mxu0
    %v1036 = vadd.f32 %v721, %v1035
    %1037 = vmatprep.mubr.f32.mxu0 0.0
    %1038 = vmatmul.mubr.f32.gmra.mxu0 %v571
    %v1039 = vpop.f32.mrf.mxu0
    %v1040 = vadd.f32 %v717, %v1039
    %v1041 = vpop.f32.mrf.mxu0
    %v1042 = vadd.f32 %v721, %v1041
    %1043 = vmatprep.mubr.f32.mxu0 0.0
    %1044 = vmatmul.mubr.f32.gmra.mxu0 %v572
    %v1045 = vpop.f32.mrf.mxu0
    %v1046 = vadd.f32 %v717, %v1045
    %v1047 = vpop.f32.mrf.mxu0
    %v1048 = vadd.f32 %v721, %v1047
    %1049 = vmatprep.mubr.f32.mxu0 0.0
    %1050 = vmatmul.mubr.f32.gmra.mxu0 %v573
    %v1051 = vpop.f32.mrf.mxu0
    %v1052 = vadd.f32 %v717, %v1051
    %v1053 = vpop.f32.mrf.mxu0
    %v1054 = vadd.f32 %v721, %v1053
    %1055 = vmatprep.mubr.f32.mxu0 0.0
    %1056 = vmatmul.mubr.f32.gmra.mxu0 %v574
    %v1057 = vpop.f32.mrf.mxu0
    %v1058 = vadd.f32 %v717, %v1057
    %v1059 = vpop.f32.mrf.mxu0
    %v1060 = vadd.f32 %v721, %v1059
    %1061 = vmatprep.mubr.f32.mxu0 0.0
    %1062 = vmatmul.mubr.f32.gmra.mxu0 %v575
    %v1063 = vpop.f32.mrf.mxu0
    %v1064 = vadd.f32 %v717, %v1063
    %v1065 = vpop.f32.mrf.mxu0
    %v1066 = vadd.f32 %v721, %v1065
    %1067 = vdwg.mxu0
    %1068 = vmatprep.subr.mxu0 %v701
    %1069 = vmatpush1.msra.mxu0 %v700
    %1070 = vmatprep.subr.mxu0 %v693
    %1071 = vmatpush1.msra.mxu0 %v692
    %1072 = vmatprep.subr.mxu0 %v685
    %1073 = vmatpush1.msra.mxu0 %v684
    %1074 = vmatprep.subr.mxu0 %v677
    %1075 = vmatpush1.msra.mxu0 %v676
    %1076 = vmatprep.subr.mxu0 %v669
    %1077 = vmatpush1.msra.mxu0 %v668
    %1078 = vmatprep.subr.mxu0 %v661
    %1079 = vmatpush1.msra.mxu0 %v660
    %1080 = vmatprep.subr.mxu0 %v653
    %1081 = vmatpush1.msra.mxu0 %v652
    %1082 = vmatprep.subr.mxu0 %v645
    %1083 = vmatpush1.msra.mxu0 %v644
    %1084 = vmatprep.subr.mxu0 %v637
    %1085 = vmatpush1.msra.mxu0 %v636
    %1086 = vmatprep.subr.mxu0 %v629
    %1087 = vmatpush1.msra.mxu0 %v628
    %1088 = vmatprep.subr.mxu0 %v621
    %1089 = vmatpush1.msra.mxu0 %v620
    %1090 = vmatprep.subr.mxu0 %v613
    %1091 = vmatpush1.msra.mxu0 %v612
    %1092 = vmatprep.subr.mxu0 %v605
    %1093 = vmatpush1.msra.mxu0 %v604
    %1094 = vmatprep.subr.mxu0 %v597
    %1095 = vmatpush1.msra.mxu0 %v596
    %1096 = vmatprep.subr.mxu0 %v589
    %1097 = vmatpush1.msra.mxu0 %v588
    %1098 = vmatprep.subr.mxu0 %v581
    %1099 = vmatpush1.msra.mxu0 %v580
    %1100 = vmatprep.subr.mxu0 0.0
    %1101 = vmatpush2.msra.mxu0 0.0
    %1102 = vmatprep.subr.mxu0 0.0
    %1103 = vmatpush2.msra.mxu0 0.0
    %1104 = vmatprep.subr.mxu0 0.0
    %1105 = vmatpush2.msra.mxu0 0.0
    %1106 = vmatprep.subr.mxu0 0.0
    %1107 = vmatpush2.msra.mxu0 0.0
    %1108 = vmatprep.subr.mxu0 0.0
    %1109 = vmatpush2.msra.mxu0 0.0
    %1110 = vmatprep.subr.mxu0 0.0
    %1111 = vmatpush2.msra.mxu0 0.0
    %1112 = vmatprep.subr.mxu0 0.0
    %1113 = vmatpush2.msra.mxu0 0.0
    %1114 = vmatprep.subr.mxu0 0.0
    %1115 = vmatpush2.msra.mxu0 0.0
    %1116 = vmatprep.subr.mxu0 0.0
    %1117 = vmatpush2.msra.mxu0 0.0
    %1118 = vmatprep.subr.mxu0 0.0
    %1119 = vmatpush2.msra.mxu0 0.0
    %1120 = vmatprep.subr.mxu0 0.0
    %1121 = vmatpush2.msra.mxu0 0.0
    %1122 = vmatprep.subr.mxu0 0.0
    %1123 = vmatpush2.msra.mxu0 0.0
    %1124 = vmatprep.subr.mxu0 0.0
    %1125 = vmatpush2.msra.mxu0 0.0
    %1126 = vmatprep.subr.mxu0 0.0
    %1127 = vmatpush2.msra.mxu0 0.0
    %1128 = vmatprep.subr.mxu0 0.0
    %1129 = vmatpush2.msra.mxu0 0.0
    %1130 = vmatprep.subr.mxu0 0.0
    %1131 = vmatpush2.msra.mxu0 0.0
    %1132 = vmatprep.mubr.f32.mxu0 0.0
    %1133 = vmatmul.mubr.f32.gmra.mxu0 %v560
    %v1134 = vpop.f32.mrf.mxu0
    %v1135 = vadd.f32 %v725, %v1134
    %v1136 = vpop.f32.mrf.mxu0
    %v1137 = vadd.f32 %v729, %v1136
    %1138 = vmatprep.mubr.f32.mxu0 0.0
    %1139 = vmatmul.mubr.f32.gmra.mxu0 %v561
    %v1140 = vpop.f32.mrf.mxu0
    %v1141 = vadd.f32 %v725, %v1140
    %v1142 = vpop.f32.mrf.mxu0
    %v1143 = vadd.f32 %v729, %v1142
    %1144 = vmatprep.mubr.f32.mxu0 0.0
    %1145 = vmatmul.mubr.f32.gmra.mxu0 %v562
    %v1146 = vpop.f32.mrf.mxu0
    %v1147 = vadd.f32 %v725, %v1146
    %v1148 = vpop.f32.mrf.mxu0
    %v1149 = vadd.f32 %v729, %v1148
    %1150 = vmatprep.mubr.f32.mxu0 0.0
    %1151 = vmatmul.mubr.f32.gmra.mxu0 %v563
    %v1152 = vpop.f32.mrf.mxu0
    %v1153 = vadd.f32 %v725, %v1152
    %v1154 = vpop.f32.mrf.mxu0
    %v1155 = vadd.f32 %v729, %v1154
    %1156 = vmatprep.mubr.f32.mxu0 0.0
    %1157 = vmatmul.mubr.f32.gmra.mxu0 %v564
    %v1158 = vpop.f32.mrf.mxu0
    %v1159 = vadd.f32 %v725, %v1158
    %v1160 = vpop.f32.mrf.mxu0
    %v1161 = vadd.f32 %v729, %v1160
    %1162 = vmatprep.mubr.f32.mxu0 0.0
    %1163 = vmatmul.mubr.f32.gmra.mxu0 %v565
    %v1164 = vpop.f32.mrf.mxu0
    %v1165 = vadd.f32 %v725, %v1164
    %v1166 = vpop.f32.mrf.mxu0
    %v1167 = vadd.f32 %v729, %v1166
    %1168 = vmatprep.mubr.f32.mxu0 0.0
    %1169 = vmatmul.mubr.f32.gmra.mxu0 %v566
    %v1170 = vpop.f32.mrf.mxu0
    %v1171 = vadd.f32 %v725, %v1170
    %v1172 = vpop.f32.mrf.mxu0
    %v1173 = vadd.f32 %v729, %v1172
    %1174 = vmatprep.mubr.f32.mxu0 0.0
    %1175 = vmatmul.mubr.f32.gmra.mxu0 %v567
    %v1176 = vpop.f32.mrf.mxu0
    %v1177 = vadd.f32 %v725, %v1176
    %v1178 = vpop.f32.mrf.mxu0
    %v1179 = vadd.f32 %v729, %v1178
    %1180 = vmatprep.mubr.f32.mxu0 0.0
    %1181 = vmatmul.mubr.f32.gmra.mxu0 %v568
    %v1182 = vpop.f32.mrf.mxu0
    %v1183 = vadd.f32 %v725, %v1182
    %v1184 = vpop.f32.mrf.mxu0
    %v1185 = vadd.f32 %v729, %v1184
    %1186 = vmatprep.mubr.f32.mxu0 0.0
    %1187 = vmatmul.mubr.f32.gmra.mxu0 %v569
    %v1188 = vpop.f32.mrf.mxu0
    %v1189 = vadd.f32 %v725, %v1188
    %v1190 = vpop.f32.mrf.mxu0
    %v1191 = vadd.f32 %v729, %v1190
    %1192 = vmatprep.mubr.f32.mxu0 0.0
    %1193 = vmatmul.mubr.f32.gmra.mxu0 %v570
    %v1194 = vpop.f32.mrf.mxu0
    %v1195 = vadd.f32 %v725, %v1194
    %v1196 = vpop.f32.mrf.mxu0
    %v1197 = vadd.f32 %v729, %v1196
    %1198 = vmatprep.mubr.f32.mxu0 0.0
    %1199 = vmatmul.mubr.f32.gmra.mxu0 %v571
    %v1200 = vpop.f32.mrf.mxu0
    %v1201 = vadd.f32 %v725, %v1200
    %v1202 = vpop.f32.mrf.mxu0
    %v1203 = vadd.f32 %v729, %v1202
    %1204 = vmatprep.mubr.f32.mxu0 0.0
    %1205 = vmatmul.mubr.f32.gmra.mxu0 %v572
    %v1206 = vpop.f32.mrf.mxu0
    %v1207 = vadd.f32 %v725, %v1206
    %v1208 = vpop.f32.mrf.mxu0
    %v1209 = vadd.f32 %v729, %v1208
    %1210 = vmatprep.mubr.f32.mxu0 0.0
    %1211 = vmatmul.mubr.f32.gmra.mxu0 %v573
    %v1212 = vpop.f32.mrf.mxu0
    %v1213 = vadd.f32 %v725, %v1212
    %v1214 = vpop.f32.mrf.mxu0
    %v1215 = vadd.f32 %v729, %v1214
    %1216 = vmatprep.mubr.f32.mxu0 0.0
    %1217 = vmatmul.mubr.f32.gmra.mxu0 %v574
    %v1218 = vpop.f32.mrf.mxu0
    %v1219 = vadd.f32 %v725, %v1218
    %v1220 = vpop.f32.mrf.mxu0
    %v1221 = vadd.f32 %v729, %v1220
    %1222 = vmatprep.mubr.f32.mxu0 0.0
    %1223 = vmatmul.mubr.f32.gmra.mxu0 %v575
    %v1224 = vpop.f32.mrf.mxu0
    %v1225 = vadd.f32 %v725, %v1224
    %v1226 = vpop.f32.mrf.mxu0
    %v1227 = vadd.f32 %v729, %v1226
    %1228 = vdwg.mxu0
    %1229 = vmatprep.subr.mxu0 %v703
    %1230 = vmatpush1.msra.mxu0 %v702
    %1231 = vmatprep.subr.mxu0 %v695
    %1232 = vmatpush1.msra.mxu0 %v694
    %1233 = vmatprep.subr.mxu0 %v687
    %1234 = vmatpush1.msra.mxu0 %v686
    %1235 = vmatprep.subr.mxu0 %v679
    %1236 = vmatpush1.msra.mxu0 %v678
    %1237 = vmatprep.subr.mxu0 %v671
    %1238 = vmatpush1.msra.mxu0 %v670
    %1239 = vmatprep.subr.mxu0 %v663
    %1240 = vmatpush1.msra.mxu0 %v662
    %1241 = vmatprep.subr.mxu0 %v655
    %1242 = vmatpush1.msra.mxu0 %v654
    %1243 = vmatprep.subr.mxu0 %v647
    %1244 = vmatpush1.msra.mxu0 %v646
    %1245 = vmatprep.subr.mxu0 %v639
    %1246 = vmatpush1.msra.mxu0 %v638
    %1247 = vmatprep.subr.mxu0 %v631
    %1248 = vmatpush1.msra.mxu0 %v630
    %1249 = vmatprep.subr.mxu0 %v623
    %1250 = vmatpush1.msra.mxu0 %v622
    %1251 = vmatprep.subr.mxu0 %v615
    %1252 = vmatpush1.msra.mxu0 %v614
    %1253 = vmatprep.subr.mxu0 %v607
    %1254 = vmatpush1.msra.mxu0 %v606
    %1255 = vmatprep.subr.mxu0 %v599
    %1256 = vmatpush1.msra.mxu0 %v598
    %1257 = vmatprep.subr.mxu0 %v591
    %1258 = vmatpush1.msra.mxu0 %v590
    %1259 = vmatprep.subr.mxu0 %v583
    %1260 = vmatpush1.msra.mxu0 %v582
    %1261 = vmatprep.subr.mxu0 0.0
    %1262 = vmatpush2.msra.mxu0 0.0
    %1263 = vmatprep.subr.mxu0 0.0
    %1264 = vmatpush2.msra.mxu0 0.0
    %1265 = vmatprep.subr.mxu0 0.0
    %1266 = vmatpush2.msra.mxu0 0.0
    %1267 = vmatprep.subr.mxu0 0.0
    %1268 = vmatpush2.msra.mxu0 0.0
    %1269 = vmatprep.subr.mxu0 0.0
    %1270 = vmatpush2.msra.mxu0 0.0
    %1271 = vmatprep.subr.mxu0 0.0
    %1272 = vmatpush2.msra.mxu0 0.0
    %1273 = vmatprep.subr.mxu0 0.0
    %1274 = vmatpush2.msra.mxu0 0.0
    %1275 = vmatprep.subr.mxu0 0.0
    %1276 = vmatpush2.msra.mxu0 0.0
    %1277 = vmatprep.subr.mxu0 0.0
    %1278 = vmatpush2.msra.mxu0 0.0
    %1279 = vmatprep.subr.mxu0 0.0
    %1280 = vmatpush2.msra.mxu0 0.0
    %1281 = vmatprep.subr.mxu0 0.0
    %1282 = vmatpush2.msra.mxu0 0.0
    %1283 = vmatprep.subr.mxu0 0.0
    %1284 = vmatpush2.msra.mxu0 0.0
    %1285 = vmatprep.subr.mxu0 0.0
    %1286 = vmatpush2.msra.mxu0 0.0
    %1287 = vmatprep.subr.mxu0 0.0
    %1288 = vmatpush2.msra.mxu0 0.0
    %1289 = vmatprep.subr.mxu0 0.0
    %1290 = vmatpush2.msra.mxu0 0.0
    %1291 = vmatprep.subr.mxu0 0.0
    %1292 = vmatpush2.msra.mxu0 0.0
    %1293 = vmatprep.mubr.f32.mxu0 0.0
    %1294 = vmatmul.mubr.f32.gmra.mxu0 %v560
    %v1295 = vpop.f32.mrf.mxu0
    %v1296 = vadd.f32 %v733, %v1295
    %v1297 = vpop.f32.mrf.mxu0
    %v1298 = vadd.f32 %v737, %v1297
    %1299 = vmatprep.mubr.f32.mxu0 0.0
    %1300 = vmatmul.mubr.f32.gmra.mxu0 %v561
    %v1301 = vpop.f32.mrf.mxu0
    %v1302 = vadd.f32 %v733, %v1301
    %v1303 = vpop.f32.mrf.mxu0
    %v1304 = vadd.f32 %v737, %v1303
    %1305 = vmatprep.mubr.f32.mxu0 0.0
    %1306 = vmatmul.mubr.f32.gmra.mxu0 %v562
    %v1307 = vpop.f32.mrf.mxu0
    %v1308 = vadd.f32 %v733, %v1307
    %v1309 = vpop.f32.mrf.mxu0
    %v1310 = vadd.f32 %v737, %v1309
    %1311 = vmatprep.mubr.f32.mxu0 0.0
    %1312 = vmatmul.mubr.f32.gmra.mxu0 %v563
    %v1313 = vpop.f32.mrf.mxu0
    %v1314 = vadd.f32 %v733, %v1313
    %v1315 = vpop.f32.mrf.mxu0
    %v1316 = vadd.f32 %v737, %v1315
    %1317 = vmatprep.mubr.f32.mxu0 0.0
    %1318 = vmatmul.mubr.f32.gmra.mxu0 %v564
    %v1319 = vpop.f32.mrf.mxu0
    %v1320 = vadd.f32 %v733, %v1319
    %v1321 = vpop.f32.mrf.mxu0
    %v1322 = vadd.f32 %v737, %v1321
    %1323 = vmatprep.mubr.f32.mxu0 0.0
    %1324 = vmatmul.mubr.f32.gmra.mxu0 %v565
    %v1325 = vpop.f32.mrf.mxu0
    %v1326 = vadd.f32 %v733, %v1325
    %v1327 = vpop.f32.mrf.mxu0
    %v1328 = vadd.f32 %v737, %v1327
    %1329 = vmatprep.mubr.f32.mxu0 0.0
    %1330 = vmatmul.mubr.f32.gmra.mxu0 %v566
    %v1331 = vpop.f32.mrf.mxu0
    %v1332 = vadd.f32 %v733, %v1331
    %v1333 = vpop.f32.mrf.mxu0
    %v1334 = vadd.f32 %v737, %v1333
    %1335 = vmatprep.mubr.f32.mxu0 0.0
    %1336 = vmatmul.mubr.f32.gmra.mxu0 %v567
    %v1337 = vpop.f32.mrf.mxu0
    %v1338 = vadd.f32 %v733, %v1337
    %v1339 = vpop.f32.mrf.mxu0
    %v1340 = vadd.f32 %v737, %v1339
    %1341 = vmatprep.mubr.f32.mxu0 0.0
    %1342 = vmatmul.mubr.f32.gmra.mxu0 %v568
    %v1343 = vpop.f32.mrf.mxu0
    %v1344 = vadd.f32 %v733, %v1343
    %v1345 = vpop.f32.mrf.mxu0
    %v1346 = vadd.f32 %v737, %v1345
    %1347 = vmatprep.mubr.f32.mxu0 0.0
    %1348 = vmatmul.mubr.f32.gmra.mxu0 %v569
    %v1349 = vpop.f32.mrf.mxu0
    %v1350 = vadd.f32 %v733, %v1349
    %v1351 = vpop.f32.mrf.mxu0
    %v1352 = vadd.f32 %v737, %v1351
    %1353 = vmatprep.mubr.f32.mxu0 0.0
    %1354 = vmatmul.mubr.f32.gmra.mxu0 %v570
    %v1355 = vpop.f32.mrf.mxu0
    %v1356 = vadd.f32 %v733, %v1355
    %v1357 = vpop.f32.mrf.mxu0
    %v1358 = vadd.f32 %v737, %v1357
    %1359 = vmatprep.mubr.f32.mxu0 0.0
    %1360 = vmatmul.mubr.f32.gmra.mxu0 %v571
    %v1361 = vpop.f32.mrf.mxu0
    %v1362 = vadd.f32 %v733, %v1361
    %v1363 = vpop.f32.mrf.mxu0
    %v1364 = vadd.f32 %v737, %v1363
    %1365 = vmatprep.mubr.f32.mxu0 0.0
    %1366 = vmatmul.mubr.f32.gmra.mxu0 %v572
    %v1367 = vpop.f32.mrf.mxu0
    %v1368 = vadd.f32 %v733, %v1367
    %v1369 = vpop.f32.mrf.mxu0
    %v1370 = vadd.f32 %v737, %v1369
    %1371 = vmatprep.mubr.f32.mxu0 0.0
    %1372 = vmatmul.mubr.f32.gmra.mxu0 %v573
    %v1373 = vpop.f32.mrf.mxu0
    %v1374 = vadd.f32 %v733, %v1373
    %v1375 = vpop.f32.mrf.mxu0
    %v1376 = vadd.f32 %v737, %v1375
    %1377 = vmatprep.mubr.f32.mxu0 0.0
    %1378 = vmatmul.mubr.f32.gmra.mxu0 %v574
    %v1379 = vpop.f32.mrf.mxu0
    %v1380 = vadd.f32 %v733, %v1379
    %v1381 = vpop.f32.mrf.mxu0
    %v1382 = vadd.f32 %v737, %v1381
    %1383 = vmatprep.mubr.f32.mxu0 0.0
    %1384 = vmatmul.mubr.f32.gmra.mxu0 %v575
    %v1385 = vpop.f32.mrf.mxu0
    %v1386 = vadd.f32 %v733, %v1385
    %v1387 = vpop.f32.mrf.mxu0
    %v1388 = vadd.f32 %v737, %v1387
    %1389 = vdwg.mxu0
    %v1390 = vmax.f32 %v813, %v819
    %v1391 = vmax.f32 %v1390, %v825
    %v1392 = vmax.f32 %v1391, %v831
    %v1393 = vmax.f32 %v1392, %v837
    %v1394 = vmax.f32 %v1393, %v843
    %v1395 = vmax.f32 %v1394, %v849
    %v1396 = vmax.f32 %v1395, %v855
    %v1397 = vrot.slane %v1396, 4
    %v1398 = vmax.f32 %v1396, %v1397
    %v1399 = vrot.slane %v1398, 2
    %v1400 = vmax.f32 %v1398, %v1399
    %v1401 = vrot.slane %v1400, 1
    %v1402 = vmax.f32 %v1400, %v1401
    %v1403 = vmax.f32 %v815, %v821
    %v1404 = vmax.f32 %v1403, %v827
    %v1405 = vmax.f32 %v1404, %v833
    %v1406 = vmax.f32 %v1405, %v839
    %v1407 = vmax.f32 %v1406, %v845
    %v1408 = vmax.f32 %v1407, %v851
    %v1409 = vmax.f32 %v1408, %v857
    %v1410 = vrot.slane %v1409, 4
    %v1411 = vmax.f32 %v1409, %v1410
    %v1412 = vrot.slane %v1411, 2
    %v1413 = vmax.f32 %v1411, %v1412
    %v1414 = vrot.slane %v1413, 1
    %v1415 = vmax.f32 %v1413, %v1414
    %v1416 = vmax.f32 %v974, %v980
    %v1417 = vmax.f32 %v1416, %v986
    %v1418 = vmax.f32 %v1417, %v992
    %v1419 = vmax.f32 %v1418, %v998
    %v1420 = vmax.f32 %v1419, %v1004
    %v1421 = vmax.f32 %v1420, %v1010
    %v1422 = vmax.f32 %v1421, %v1016
    %v1423 = vrot.slane %v1422, 4
    %v1424 = vmax.f32 %v1422, %v1423
    %v1425 = vrot.slane %v1424, 2
    %v1426 = vmax.f32 %v1424, %v1425
    %v1427 = vrot.slane %v1426, 1
    %v1428 = vmax.f32 %v1426, %v1427
    %v1429 = vmax.f32 %v976, %v982
    %v1430 = vmax.f32 %v1429, %v988
    %v1431 = vmax.f32 %v1430, %v994
    %v1432 = vmax.f32 %v1431, %v1000
    %v1433 = vmax.f32 %v1432, %v1006
    %v1434 = vmax.f32 %v1433, %v1012
    %v1435 = vmax.f32 %v1434, %v1018
    %v1436 = vrot.slane %v1435, 4
    %v1437 = vmax.f32 %v1435, %v1436
    %v1438 = vrot.slane %v1437, 2
    %v1439 = vmax.f32 %v1437, %v1438
    %v1440 = vrot.slane %v1439, 1
    %v1441 = vmax.f32 %v1439, %v1440
    %v1442 = vmax.f32 %v1135, %v1141
    %v1443 = vmax.f32 %v1442, %v1147
    %v1444 = vmax.f32 %v1443, %v1153
    %v1445 = vmax.f32 %v1444, %v1159
    %v1446 = vmax.f32 %v1445, %v1165
    %v1447 = vmax.f32 %v1446, %v1171
    %v1448 = vmax.f32 %v1447, %v1177
    %v1449 = vrot.slane %v1448, 4
    %v1450 = vmax.f32 %v1448, %v1449
    %v1451 = vrot.slane %v1450, 2
    %v1452 = vmax.f32 %v1450, %v1451
    %v1453 = vrot.slane %v1452, 1
    %v1454 = vmax.f32 %v1452, %v1453
    %v1455 = vmax.f32 %v1137, %v1143
    %v1456 = vmax.f32 %v1455, %v1149
    %v1457 = vmax.f32 %v1456, %v1155
    %v1458 = vmax.f32 %v1457, %v1161
    %v1459 = vmax.f32 %v1458, %v1167
    %v1460 = vmax.f32 %v1459, %v1173
    %v1461 = vmax.f32 %v1460, %v1179
    %v1462 = vrot.slane %v1461, 4
    %v1463 = vmax.f32 %v1461, %v1462
    %v1464 = vrot.slane %v1463, 2
    %v1465 = vmax.f32 %v1463, %v1464
    %v1466 = vrot.slane %v1465, 1
    %v1467 = vmax.f32 %v1465, %v1466
    %v1468 = vmax.f32 %v1296, %v1302
    %v1469 = vmax.f32 %v1468, %v1308
    %v1470 = vmax.f32 %v1469, %v1314
    %v1471 = vmax.f32 %v1470, %v1320
    %v1472 = vmax.f32 %v1471, %v1326
    %v1473 = vmax.f32 %v1472, %v1332
    %v1474 = vmax.f32 %v1473, %v1338
    %v1475 = vrot.slane %v1474, 4
    %v1476 = vmax.f32 %v1474, %v1475
    %v1477 = vrot.slane %v1476, 2
    %v1478 = vmax.f32 %v1476, %v1477
    %v1479 = vrot.slane %v1478, 1
    %v1480 = vmax.f32 %v1478, %v1479
    %v1481 = vmax.f32 %v1298, %v1304
    %v1482 = vmax.f32 %v1481, %v1310
    %v1483 = vmax.f32 %v1482, %v1316
    %v1484 = vmax.f32 %v1483, %v1322
    %v1485 = vmax.f32 %v1484, %v1328
    %v1486 = vmax.f32 %v1485, %v1334
    %v1487 = vmax.f32 %v1486, %v1340
    %v1488 = vrot.slane %v1487, 4
    %v1489 = vmax.f32 %v1487, %v1488
    %v1490 = vrot.slane %v1489, 2
    %v1491 = vmax.f32 %v1489, %v1490
    %v1492 = vrot.slane %v1491, 1
    %v1493 = vmax.f32 %v1491, %v1492
    %v1494 = vmax.f32 %v861, %v867
    %v1495 = vmax.f32 %v1494, %v873
    %v1496 = vmax.f32 %v1495, %v879
    %v1497 = vmax.f32 %v1496, %v885
    %v1498 = vmax.f32 %v1497, %v891
    %v1499 = vmax.f32 %v1498, %v897
    %v1500 = vmax.f32 %v1499, %v903
    %v1501 = vrot.slane %v1500, 4
    %v1502 = vmax.f32 %v1500, %v1501
    %v1503 = vrot.slane %v1502, 2
    %v1504 = vmax.f32 %v1502, %v1503
    %v1505 = vrot.slane %v1504, 1
    %v1506 = vmax.f32 %v1504, %v1505
    %v1507 = vmax.f32 %v863, %v869
    %v1508 = vmax.f32 %v1507, %v875
    %v1509 = vmax.f32 %v1508, %v881
    %v1510 = vmax.f32 %v1509, %v887
    %v1511 = vmax.f32 %v1510, %v893
    %v1512 = vmax.f32 %v1511, %v899
    %v1513 = vmax.f32 %v1512, %v905
    %v1514 = vrot.slane %v1513, 4
    %v1515 = vmax.f32 %v1513, %v1514
    %v1516 = vrot.slane %v1515, 2
    %v1517 = vmax.f32 %v1515, %v1516
    %v1518 = vrot.slane %v1517, 1
    %v1519 = vmax.f32 %v1517, %v1518
    %v1520 = vmax.f32 %v1022, %v1028
    %v1521 = vmax.f32 %v1520, %v1034
    %v1522 = vmax.f32 %v1521, %v1040
    %v1523 = vmax.f32 %v1522, %v1046
    %v1524 = vmax.f32 %v1523, %v1052
    %v1525 = vmax.f32 %v1524, %v1058
    %v1526 = vmax.f32 %v1525, %v1064
    %v1527 = vrot.slane %v1526, 4
    %v1528 = vmax.f32 %v1526, %v1527
    %v1529 = vrot.slane %v1528, 2
    %v1530 = vmax.f32 %v1528, %v1529
    %v1531 = vrot.slane %v1530, 1
    %v1532 = vmax.f32 %v1530, %v1531
    %v1533 = vmax.f32 %v1024, %v1030
    %v1534 = vmax.f32 %v1533, %v1036
    %v1535 = vmax.f32 %v1534, %v1042
    %v1536 = vmax.f32 %v1535, %v1048
    %v1537 = vmax.f32 %v1536, %v1054
    %v1538 = vmax.f32 %v1537, %v1060
    %v1539 = vmax.f32 %v1538, %v1066
    %v1540 = vrot.slane %v1539, 4
    %v1541 = vmax.f32 %v1539, %v1540
    %v1542 = vrot.slane %v1541, 2
    %v1543 = vmax.f32 %v1541, %v1542
    %v1544 = vrot.slane %v1543, 1
    %v1545 = vmax.f32 %v1543, %v1544
    %v1546 = vmax.f32 %v1183, %v1189
    %v1547 = vmax.f32 %v1546, %v1195
    %v1548 = vmax.f32 %v1547, %v1201
    %v1549 = vmax.f32 %v1548, %v1207
    %v1550 = vmax.f32 %v1549, %v1213
    %v1551 = vmax.f32 %v1550, %v1219
    %v1552 = vmax.f32 %v1551, %v1225
    %v1553 = vrot.slane %v1552, 4
    %v1554 = vmax.f32 %v1552, %v1553
    %v1555 = vrot.slane %v1554, 2
    %v1556 = vmax.f32 %v1554, %v1555
    %v1557 = vrot.slane %v1556, 1
    %v1558 = vmax.f32 %v1556, %v1557
    %v1559 = vmax.f32 %v1185, %v1191
    %v1560 = vmax.f32 %v1559, %v1197
    %v1561 = vmax.f32 %v1560, %v1203
    %v1562 = vmax.f32 %v1561, %v1209
    %v1563 = vmax.f32 %v1562, %v1215
    %v1564 = vmax.f32 %v1563, %v1221
    %v1565 = vmax.f32 %v1564, %v1227
    %v1566 = vrot.slane %v1565, 4
    %v1567 = vmax.f32 %v1565, %v1566
    %v1568 = vrot.slane %v1567, 2
    %v1569 = vmax.f32 %v1567, %v1568
    %v1570 = vrot.slane %v1569, 1
    %v1571 = vmax.f32 %v1569, %v1570
    %v1572 = vmax.f32 %v1344, %v1350
    %v1573 = vmax.f32 %v1572, %v1356
    %v1574 = vmax.f32 %v1573, %v1362
    %v1575 = vmax.f32 %v1574, %v1368
    %v1576 = vmax.f32 %v1575, %v1374
    %v1577 = vmax.f32 %v1576, %v1380
    %v1578 = vmax.f32 %v1577, %v1386
    %v1579 = vrot.slane %v1578, 4
    %v1580 = vmax.f32 %v1578, %v1579
    %v1581 = vrot.slane %v1580, 2
    %v1582 = vmax.f32 %v1580, %v1581
    %v1583 = vrot.slane %v1582, 1
    %v1584 = vmax.f32 %v1582, %v1583
    %v1585 = vmax.f32 %v1346, %v1352
    %v1586 = vmax.f32 %v1585, %v1358
    %v1587 = vmax.f32 %v1586, %v1364
    %v1588 = vmax.f32 %v1587, %v1370
    %v1589 = vmax.f32 %v1588, %v1376
    %v1590 = vmax.f32 %v1589, %v1382
    %v1591 = vmax.f32 %v1590, %v1388
    %v1592 = vrot.slane %v1591, 4
    %v1593 = vmax.f32 %v1591, %v1592
    %v1594 = vrot.slane %v1593, 2
    %v1595 = vmax.f32 %v1593, %v1594
    %v1596 = vrot.slane %v1595, 1
    %v1597 = vmax.f32 %v1595, %v1596
    %v1598 = vld [vmem:[#allocation6] sm:$0xff]
    %v1599 = vld [vmem:[#allocation6 + $0x8] sm:$0xff]
    %v1600 = vld [vmem:[#allocation6 + $0x10] sm:$0xff]
    %v1601 = vld [vmem:[#allocation6 + $0x18] sm:$0xff]
    %v1602 = vld [vmem:[#allocation6 + $0x20] sm:$0xff]
    %v1603 = vld [vmem:[#allocation6 + $0x28] sm:$0xff]
    %v1604 = vld [vmem:[#allocation6 + $0x30] sm:$0xff]
    %v1605 = vld [vmem:[#allocation6 + $0x38] sm:$0xff]
    %v1606 = vld [vmem:[#allocation6 + $0x40] sm:$0xff]
    %v1607 = vld [vmem:[#allocation6 + $0x48] sm:$0xff]
    %v1608 = vld [vmem:[#allocation6 + $0x50] sm:$0xff]
    %v1609 = vld [vmem:[#allocation6 + $0x58] sm:$0xff]
    %v1610 = vld [vmem:[#allocation6 + $0x60] sm:$0xff]
    %v1611 = vld [vmem:[#allocation6 + $0x68] sm:$0xff]
    %v1612 = vld [vmem:[#allocation6 + $0x70] sm:$0xff]
    %v1613 = vld [vmem:[#allocation6 + $0x78] sm:$0xff]
    %v1614 = vld [vmem:[#allocation6 + $0x80] sm:$0xff]
    %v1615 = vld [vmem:[#allocation6 + $0x88] sm:$0xff]
    %v1616 = vld [vmem:[#allocation6 + $0x90] sm:$0xff]
    %v1617 = vld [vmem:[#allocation6 + $0x98] sm:$0xff]
    %v1618 = vld [vmem:[#allocation6 + $0xa0] sm:$0xff]
    %v1619 = vld [vmem:[#allocation6 + $0xa8] sm:$0xff]
    %v1620 = vld [vmem:[#allocation6 + $0xb0] sm:$0xff]
    %v1621 = vld [vmem:[#allocation6 + $0xb8] sm:$0xff]
    %v1622 = vld [vmem:[#allocation6 + $0xc0] sm:$0xff]
    %v1623 = vld [vmem:[#allocation6 + $0xc8] sm:$0xff]
    %v1624 = vld [vmem:[#allocation6 + $0xd0] sm:$0xff]
    %v1625 = vld [vmem:[#allocation6 + $0xd8] sm:$0xff]
    %v1626 = vld [vmem:[#allocation6 + $0xe0] sm:$0xff]
    %v1627 = vld [vmem:[#allocation6 + $0xe8] sm:$0xff]
    %v1628 = vld [vmem:[#allocation6 + $0xf0] sm:$0xff]
    %v1629 = vld [vmem:[#allocation6 + $0xf8] sm:$0xff]
    %v1630 = vld [vmem:[#allocation6 + $0x100] sm:$0xff]
    %v1631 = vld [vmem:[#allocation6 + $0x108] sm:$0xff]
    %v1632 = vld [vmem:[#allocation6 + $0x110] sm:$0xff]
    %v1633 = vld [vmem:[#allocation6 + $0x118] sm:$0xff]
    %v1634 = vld [vmem:[#allocation6 + $0x120] sm:$0xff]
    %v1635 = vld [vmem:[#allocation6 + $0x128] sm:$0xff]
    %v1636 = vld [vmem:[#allocation6 + $0x130] sm:$0xff]
    %v1637 = vld [vmem:[#allocation6 + $0x138] sm:$0xff]
    %v1638 = vld [vmem:[#allocation6 + $0x140] sm:$0xff]
    %v1639 = vld [vmem:[#allocation6 + $0x148] sm:$0xff]
    %v1640 = vld [vmem:[#allocation6 + $0x150] sm:$0xff]
    %v1641 = vld [vmem:[#allocation6 + $0x158] sm:$0xff]
    %v1642 = vld [vmem:[#allocation6 + $0x160] sm:$0xff]
    %v1643 = vld [vmem:[#allocation6 + $0x168] sm:$0xff]
    %v1644 = vld [vmem:[#allocation6 + $0x170] sm:$0xff]
    %v1645 = vld [vmem:[#allocation6 + $0x178] sm:$0xff]
    %v1646 = vld [vmem:[#allocation6 + $0x180] sm:$0xff]
    %v1647 = vld [vmem:[#allocation6 + $0x188] sm:$0xff]
    %v1648 = vld [vmem:[#allocation6 + $0x190] sm:$0xff]
    %v1649 = vld [vmem:[#allocation6 + $0x198] sm:$0xff]
    %v1650 = vld [vmem:[#allocation6 + $0x1a0] sm:$0xff]
    %v1651 = vld [vmem:[#allocation6 + $0x1a8] sm:$0xff]
    %v1652 = vld [vmem:[#allocation6 + $0x1b0] sm:$0xff]
    %v1653 = vld [vmem:[#allocation6 + $0x1b8] sm:$0xff]
    %v1654 = vld [vmem:[#allocation6 + $0x1c0] sm:$0xff]
    %v1655 = vld [vmem:[#allocation6 + $0x1c8] sm:$0xff]
    %v1656 = vld [vmem:[#allocation6 + $0x1d0] sm:$0xff]
    %v1657 = vld [vmem:[#allocation6 + $0x1d8] sm:$0xff]
    %v1658 = vld [vmem:[#allocation6 + $0x1e0] sm:$0xff]
    %v1659 = vld [vmem:[#allocation6 + $0x1e8] sm:$0xff]
    %v1660 = vld [vmem:[#allocation6 + $0x1f0] sm:$0xff]
    %v1661 = vld [vmem:[#allocation6 + $0x1f8] sm:$0xff]
    %v1662 = vld [vmem:[#allocation6 + $0x200] sm:$0xff]
    %v1663 = vld [vmem:[#allocation6 + $0x208] sm:$0xff]
    %v1664 = vld [vmem:[#allocation6 + $0x210] sm:$0xff]
    %v1665 = vld [vmem:[#allocation6 + $0x218] sm:$0xff]
    %v1666 = vld [vmem:[#allocation6 + $0x220] sm:$0xff]
    %v1667 = vld [vmem:[#allocation6 + $0x228] sm:$0xff]
    %v1668 = vld [vmem:[#allocation6 + $0x230] sm:$0xff]
    %v1669 = vld [vmem:[#allocation6 + $0x238] sm:$0xff]
    %v1670 = vld [vmem:[#allocation6 + $0x240] sm:$0xff]
    %v1671 = vld [vmem:[#allocation6 + $0x248] sm:$0xff]
    %v1672 = vld [vmem:[#allocation6 + $0x250] sm:$0xff]
    %v1673 = vld [vmem:[#allocation6 + $0x258] sm:$0xff]
    %v1674 = vld [vmem:[#allocation6 + $0x260] sm:$0xff]
    %v1675 = vld [vmem:[#allocation6 + $0x268] sm:$0xff]
    %v1676 = vld [vmem:[#allocation6 + $0x270] sm:$0xff]
    %v1677 = vld [vmem:[#allocation6 + $0x278] sm:$0xff]
    %v1678 = vld [vmem:[#allocation6 + $0x280] sm:$0xff]
    %v1679 = vld [vmem:[#allocation6 + $0x288] sm:$0xff]
    %v1680 = vld [vmem:[#allocation6 + $0x290] sm:$0xff]
    %v1681 = vld [vmem:[#allocation6 + $0x298] sm:$0xff]
    %v1682 = vld [vmem:[#allocation6 + $0x2a0] sm:$0xff]
    %v1683 = vld [vmem:[#allocation6 + $0x2a8] sm:$0xff]
    %v1684 = vld [vmem:[#allocation6 + $0x2b0] sm:$0xff]
    %v1685 = vld [vmem:[#allocation6 + $0x2b8] sm:$0xff]
    %v1686 = vld [vmem:[#allocation6 + $0x2c0] sm:$0xff]
    %v1687 = vld [vmem:[#allocation6 + $0x2c8] sm:$0xff]
    %v1688 = vld [vmem:[#allocation6 + $0x2d0] sm:$0xff]
    %v1689 = vld [vmem:[#allocation6 + $0x2d8] sm:$0xff]
    %v1690 = vld [vmem:[#allocation6 + $0x2e0] sm:$0xff]
    %v1691 = vld [vmem:[#allocation6 + $0x2e8] sm:$0xff]
    %v1692 = vld [vmem:[#allocation6 + $0x2f0] sm:$0xff]
    %v1693 = vld [vmem:[#allocation6 + $0x2f8] sm:$0xff]
    %v1694 = vld [vmem:[#allocation6 + $0x300] sm:$0xff]
    %v1695 = vld [vmem:[#allocation6 + $0x308] sm:$0xff]
    %v1696 = vld [vmem:[#allocation6 + $0x310] sm:$0xff]
    %v1697 = vld [vmem:[#allocation6 + $0x318] sm:$0xff]
    %v1698 = vld [vmem:[#allocation6 + $0x320] sm:$0xff]
    %v1699 = vld [vmem:[#allocation6 + $0x328] sm:$0xff]
    %v1700 = vld [vmem:[#allocation6 + $0x330] sm:$0xff]
    %v1701 = vld [vmem:[#allocation6 + $0x338] sm:$0xff]
    %v1702 = vld [vmem:[#allocation6 + $0x340] sm:$0xff]
    %v1703 = vld [vmem:[#allocation6 + $0x348] sm:$0xff]
    %v1704 = vld [vmem:[#allocation6 + $0x350] sm:$0xff]
    %v1705 = vld [vmem:[#allocation6 + $0x358] sm:$0xff]
    %v1706 = vld [vmem:[#allocation6 + $0x360] sm:$0xff]
    %v1707 = vld [vmem:[#allocation6 + $0x368] sm:$0xff]
    %v1708 = vld [vmem:[#allocation6 + $0x370] sm:$0xff]
    %v1709 = vld [vmem:[#allocation6 + $0x378] sm:$0xff]
    %v1710 = vld [vmem:[#allocation6 + $0x380] sm:$0xff]
    %v1711 = vld [vmem:[#allocation6 + $0x388] sm:$0xff]
    %v1712 = vld [vmem:[#allocation6 + $0x390] sm:$0xff]
    %v1713 = vld [vmem:[#allocation6 + $0x398] sm:$0xff]
    %v1714 = vld [vmem:[#allocation6 + $0x3a0] sm:$0xff]
    %v1715 = vld [vmem:[#allocation6 + $0x3a8] sm:$0xff]
    %v1716 = vld [vmem:[#allocation6 + $0x3b0] sm:$0xff]
    %v1717 = vld [vmem:[#allocation6 + $0x3b8] sm:$0xff]
    %v1718 = vld [vmem:[#allocation6 + $0x3c0] sm:$0xff]
    %v1719 = vld [vmem:[#allocation6 + $0x3c8] sm:$0xff]
    %v1720 = vld [vmem:[#allocation6 + $0x3d0] sm:$0xff]
    %v1721 = vld [vmem:[#allocation6 + $0x3d8] sm:$0xff]
    %v1722 = vld [vmem:[#allocation6 + $0x3e0] sm:$0xff]
    %v1723 = vld [vmem:[#allocation6 + $0x3e8] sm:$0xff]
    %v1724 = vld [vmem:[#allocation6 + $0x3f0] sm:$0xff]
    %v1725 = vld [vmem:[#allocation6 + $0x3f8] sm:$0xff]
    %v1726 = vld [vmem:[#allocation7] sm:$0x1]
    %v1728 = vlaneseq
    %v1729 = vshrl.u32 %v1728, 7
    %v1730 = vsub.s32 0, %v1729
    %v1731 = vrot.slane %v1726, %v1730
    %vm1749 = vcmask 1041409
    %v1750 = vsel %vm1749, %v1506, %v1402
    %v1751 = vsel %vm1749, %v1519, %v1415
    %v1752 = vsel %vm1749, %v1532, %v1428
    %v1753 = vsel %vm1749, %v1545, %v1441
    %v1754 = vsel %vm1749, %v1558, %v1454
    %v1755 = vsel %vm1749, %v1571, %v1467
    %v1756 = vsel %vm1749, %v1584, %v1480
    %v1757 = vsel %vm1749, %v1597, %v1493
    %1766 = vmatprep.subr.mxu0 0.0
    %1767 = vmatpush1.msra.mxu0 %v1613
    %1768 = vmatprep.subr.mxu0 0.0
    %1769 = vmatpush1.msra.mxu0 %v1612
    %1770 = vmatprep.subr.mxu0 0.0
    %1771 = vmatpush1.msra.mxu0 %v1611
    %1772 = vmatprep.subr.mxu0 0.0
    %1773 = vmatpush1.msra.mxu0 %v1610
    %1774 = vmatprep.subr.mxu0 0.0
    %1775 = vmatpush1.msra.mxu0 %v1609
    %1776 = vmatprep.subr.mxu0 0.0
    %1777 = vmatpush1.msra.mxu0 %v1608
    %1778 = vmatprep.subr.mxu0 0.0
    %1779 = vmatpush1.msra.mxu0 %v1607
    %1780 = vmatprep.subr.mxu0 0.0
    %1781 = vmatpush1.msra.mxu0 %v1606
    %1782 = vmatprep.subr.mxu0 0.0
    %1783 = vmatpush1.msra.mxu0 %v1605
    %1784 = vmatprep.subr.mxu0 0.0
    %1785 = vmatpush1.msra.mxu0 %v1604
    %1786 = vmatprep.subr.mxu0 0.0
    %1787 = vmatpush1.msra.mxu0 %v1603
    %1788 = vmatprep.subr.mxu0 0.0
    %1789 = vmatpush1.msra.mxu0 %v1602
    %1790 = vmatprep.subr.mxu0 0.0
    %1791 = vmatpush1.msra.mxu0 %v1601
    %1792 = vmatprep.subr.mxu0 0.0
    %1793 = vmatpush1.msra.mxu0 %v1600
    %1794 = vmatprep.subr.mxu0 0.0
    %1795 = vmatpush1.msra.mxu0 %v1599
    %1796 = vmatprep.subr.mxu0 0.0
    %1797 = vmatpush1.msra.mxu0 %v1598
    %1798 = vmatprep.subr.mxu0 0.0
    %1799 = vmatpush2.msra.mxu0 %v1629
    %1800 = vmatprep.subr.mxu0 0.0
    %1801 = vmatpush2.msra.mxu0 %v1628
    %1802 = vmatprep.subr.mxu0 0.0
    %1803 = vmatpush2.msra.mxu0 %v1627
    %1804 = vmatprep.subr.mxu0 0.0
    %1805 = vmatpush2.msra.mxu0 %v1626
    %1806 = vmatprep.subr.mxu0 0.0
    %1807 = vmatpush2.msra.mxu0 %v1625
    %1808 = vmatprep.subr.mxu0 0.0
    %1809 = vmatpush2.msra.mxu0 %v1624
    %1810 = vmatprep.subr.mxu0 0.0
    %1811 = vmatpush2.msra.mxu0 %v1623
    %1812 = vmatprep.subr.mxu0 0.0
    %1813 = vmatpush2.msra.mxu0 %v1622
    %1814 = vmatprep.subr.mxu0 0.0
    %1815 = vmatpush2.msra.mxu0 %v1621
    %1816 = vmatprep.subr.mxu0 0.0
    %1817 = vmatpush2.msra.mxu0 %v1620
    %1818 = vmatprep.subr.mxu0 0.0
    %1819 = vmatpush2.msra.mxu0 %v1619
    %1820 = vmatprep.subr.mxu0 0.0
    %1821 = vmatpush2.msra.mxu0 %v1618
    %1822 = vmatprep.subr.mxu0 0.0
    %1823 = vmatpush2.msra.mxu0 %v1617
    %1824 = vmatprep.subr.mxu0 0.0
    %1825 = vmatpush2.msra.mxu0 %v1616
    %1826 = vmatprep.subr.mxu0 0.0
    %1827 = vmatpush2.msra.mxu0 %v1615
    %1828 = vmatprep.subr.mxu0 0.0
    %1829 = vmatpush2.msra.mxu0 %v1614
    %1830 = vmatprep.mubr.f32.mxu0 %v1751
    %1831 = vmatmul.mubr.f32.gmra.mxu0 %v1750
    %v1832 = vpop.f32.mrf.mxu0
    %v1833 = vadd.f32 %v1731, %v1832
    %v1834 = vpop.f32.mrf.mxu0
    %1835 = vdwg.mxu0
    %1836 = vmatprep.subr.mxu0 0.0
    %1837 = vmatpush1.msra.mxu0 %v1645
    %1838 = vmatprep.subr.mxu0 0.0
    %1839 = vmatpush1.msra.mxu0 %v1644
    %1840 = vmatprep.subr.mxu0 0.0
    %1841 = vmatpush1.msra.mxu0 %v1643
    %1842 = vmatprep.subr.mxu0 0.0
    %1843 = vmatpush1.msra.mxu0 %v1642
    %1844 = vmatprep.subr.mxu0 0.0
    %1845 = vmatpush1.msra.mxu0 %v1641
    %1846 = vmatprep.subr.mxu0 0.0
    %1847 = vmatpush1.msra.mxu0 %v1640
    %1848 = vmatprep.subr.mxu0 0.0
    %1849 = vmatpush1.msra.mxu0 %v1639
    %1850 = vmatprep.subr.mxu0 0.0
    %1851 = vmatpush1.msra.mxu0 %v1638
    %1852 = vmatprep.subr.mxu0 0.0
    %1853 = vmatpush1.msra.mxu0 %v1637
    %1854 = vmatprep.subr.mxu0 0.0
    %1855 = vmatpush1.msra.mxu0 %v1636
    %1856 = vmatprep.subr.mxu0 0.0
    %1857 = vmatpush1.msra.mxu0 %v1635
    %1858 = vmatprep.subr.mxu0 0.0
    %1859 = vmatpush1.msra.mxu0 %v1634
    %1860 = vmatprep.subr.mxu0 0.0
    %1861 = vmatpush1.msra.mxu0 %v1633
    %1862 = vmatprep.subr.mxu0 0.0
    %1863 = vmatpush1.msra.mxu0 %v1632
    %1864 = vmatprep.subr.mxu0 0.0
    %1865 = vmatpush1.msra.mxu0 %v1631
    %1866 = vmatprep.subr.mxu0 0.0
    %1867 = vmatpush1.msra.mxu0 %v1630
    %1868 = vmatprep.subr.mxu0 0.0
    %1869 = vmatpush2.msra.mxu0 %v1661
    %1870 = vmatprep.subr.mxu0 0.0
    %1871 = vmatpush2.msra.mxu0 %v1660
    %1872 = vmatprep.subr.mxu0 0.0
    %1873 = vmatpush2.msra.mxu0 %v1659
    %1874 = vmatprep.subr.mxu0 0.0
    %1875 = vmatpush2.msra.mxu0 %v1658
    %1876 = vmatprep.subr.mxu0 0.0
    %1877 = vmatpush2.msra.mxu0 %v1657
    %1878 = vmatprep.subr.mxu0 0.0
    %1879 = vmatpush2.msra.mxu0 %v1656
    %1880 = vmatprep.subr.mxu0 0.0
    %1881 = vmatpush2.msra.mxu0 %v1655
    %1882 = vmatprep.subr.mxu0 0.0
    %1883 = vmatpush2.msra.mxu0 %v1654
    %1884 = vmatprep.subr.mxu0 0.0
    %1885 = vmatpush2.msra.mxu0 %v1653
    %1886 = vmatprep.subr.mxu0 0.0
    %1887 = vmatpush2.msra.mxu0 %v1652
    %1888 = vmatprep.subr.mxu0 0.0
    %1889 = vmatpush2.msra.mxu0 %v1651
    %1890 = vmatprep.subr.mxu0 0.0
    %1891 = vmatpush2.msra.mxu0 %v1650
    %1892 = vmatprep.subr.mxu0 0.0
    %1893 = vmatpush2.msra.mxu0 %v1649
    %1894 = vmatprep.subr.mxu0 0.0
    %1895 = vmatpush2.msra.mxu0 %v1648
    %1896 = vmatprep.subr.mxu0 0.0
    %1897 = vmatpush2.msra.mxu0 %v1647
    %1898 = vmatprep.subr.mxu0 0.0
    %1899 = vmatpush2.msra.mxu0 %v1646
    %1900 = vmatprep.mubr.f32.mxu0 %v1753
    %1901 = vmatmul.mubr.f32.gmra.mxu0 %v1752
    %v1902 = vpop.f32.mrf.mxu0
    %v1903 = vadd.f32 %v1833, %v1902
    %v1904 = vpop.f32.mrf.mxu0
    %1905 = vdwg.mxu0
    %1906 = vmatprep.subr.mxu0 0.0
    %1907 = vmatpush1.msra.mxu0 %v1677
    %1908 = vmatprep.subr.mxu0 0.0
    %1909 = vmatpush1.msra.mxu0 %v1676
    %1910 = vmatprep.subr.mxu0 0.0
    %1911 = vmatpush1.msra.mxu0 %v1675
    %1912 = vmatprep.subr.mxu0 0.0
    %1913 = vmatpush1.msra.mxu0 %v1674
    %1914 = vmatprep.subr.mxu0 0.0
    %1915 = vmatpush1.msra.mxu0 %v1673
    %1916 = vmatprep.subr.mxu0 0.0
    %1917 = vmatpush1.msra.mxu0 %v1672
    %1918 = vmatprep.subr.mxu0 0.0
    %1919 = vmatpush1.msra.mxu0 %v1671
    %1920 = vmatprep.subr.mxu0 0.0
    %1921 = vmatpush1.msra.mxu0 %v1670
    %1922 = vmatprep.subr.mxu0 0.0
    %1923 = vmatpush1.msra.mxu0 %v1669
    %1924 = vmatprep.subr.mxu0 0.0
    %1925 = vmatpush1.msra.mxu0 %v1668
    %1926 = vmatprep.subr.mxu0 0.0
    %1927 = vmatpush1.msra.mxu0 %v1667
    %1928 = vmatprep.subr.mxu0 0.0
    %1929 = vmatpush1.msra.mxu0 %v1666
    %1930 = vmatprep.subr.mxu0 0.0
    %1931 = vmatpush1.msra.mxu0 %v1665
    %1932 = vmatprep.subr.mxu0 0.0
    %1933 = vmatpush1.msra.mxu0 %v1664
    %1934 = vmatprep.subr.mxu0 0.0
    %1935 = vmatpush1.msra.mxu0 %v1663
    %1936 = vmatprep.subr.mxu0 0.0
    %1937 = vmatpush1.msra.mxu0 %v1662
    %1938 = vmatprep.subr.mxu0 0.0
    %1939 = vmatpush2.msra.mxu0 %v1693
    %1940 = vmatprep.subr.mxu0 0.0
    %1941 = vmatpush2.msra.mxu0 %v1692
    %1942 = vmatprep.subr.mxu0 0.0
    %1943 = vmatpush2.msra.mxu0 %v1691
    %1944 = vmatprep.subr.mxu0 0.0
    %1945 = vmatpush2.msra.mxu0 %v1690
    %1946 = vmatprep.subr.mxu0 0.0
    %1947 = vmatpush2.msra.mxu0 %v1689
    %1948 = vmatprep.subr.mxu0 0.0
    %1949 = vmatpush2.msra.mxu0 %v1688
    %1950 = vmatprep.subr.mxu0 0.0
    %1951 = vmatpush2.msra.mxu0 %v1687
    %1952 = vmatprep.subr.mxu0 0.0
    %1953 = vmatpush2.msra.mxu0 %v1686
    %1954 = vmatprep.subr.mxu0 0.0
    %1955 = vmatpush2.msra.mxu0 %v1685
    %1956 = vmatprep.subr.mxu0 0.0
    %1957 = vmatpush2.msra.mxu0 %v1684
    %1958 = vmatprep.subr.mxu0 0.0
    %1959 = vmatpush2.msra.mxu0 %v1683
    %1960 = vmatprep.subr.mxu0 0.0
    %1961 = vmatpush2.msra.mxu0 %v1682
    %1962 = vmatprep.subr.mxu0 0.0
    %1963 = vmatpush2.msra.mxu0 %v1681
    %1964 = vmatprep.subr.mxu0 0.0
    %1965 = vmatpush2.msra.mxu0 %v1680
    %1966 = vmatprep.subr.mxu0 0.0
    %1967 = vmatpush2.msra.mxu0 %v1679
    %1968 = vmatprep.subr.mxu0 0.0
    %1969 = vmatpush2.msra.mxu0 %v1678
    %1970 = vmatprep.mubr.f32.mxu0 %v1755
    %1971 = vmatmul.mubr.f32.gmra.mxu0 %v1754
    %v1972 = vpop.f32.mrf.mxu0
    %v1973 = vadd.f32 %v1903, %v1972
    %v1974 = vpop.f32.mrf.mxu0
    %1975 = vdwg.mxu0
    %1976 = vmatprep.subr.mxu0 0.0
    %1977 = vmatpush1.msra.mxu0 %v1709
    %1978 = vmatprep.subr.mxu0 0.0
    %1979 = vmatpush1.msra.mxu0 %v1708
    %1980 = vmatprep.subr.mxu0 0.0
    %1981 = vmatpush1.msra.mxu0 %v1707
    %1982 = vmatprep.subr.mxu0 0.0
    %1983 = vmatpush1.msra.mxu0 %v1706
    %1984 = vmatprep.subr.mxu0 0.0
    %1985 = vmatpush1.msra.mxu0 %v1705
    %1986 = vmatprep.subr.mxu0 0.0
    %1987 = vmatpush1.msra.mxu0 %v1704
    %1988 = vmatprep.subr.mxu0 0.0
    %1989 = vmatpush1.msra.mxu0 %v1703
    %1990 = vmatprep.subr.mxu0 0.0
    %1991 = vmatpush1.msra.mxu0 %v1702
    %1992 = vmatprep.subr.mxu0 0.0
    %1993 = vmatpush1.msra.mxu0 %v1701
    %1994 = vmatprep.subr.mxu0 0.0
    %1995 = vmatpush1.msra.mxu0 %v1700
    %1996 = vmatprep.subr.mxu0 0.0
    %1997 = vmatpush1.msra.mxu0 %v1699
    %1998 = vmatprep.subr.mxu0 0.0
    %1999 = vmatpush1.msra.mxu0 %v1698
    %2000 = vmatprep.subr.mxu0 0.0
    %2001 = vmatpush1.msra.mxu0 %v1697
    %2002 = vmatprep.subr.mxu0 0.0
    %2003 = vmatpush1.msra.mxu0 %v1696
    %2004 = vmatprep.subr.mxu0 0.0
    %2005 = vmatpush1.msra.mxu0 %v1695
    %2006 = vmatprep.subr.mxu0 0.0
    %2007 = vmatpush1.msra.mxu0 %v1694
    %2008 = vmatprep.subr.mxu0 0.0
    %2009 = vmatpush2.msra.mxu0 %v1725
    %2010 = vmatprep.subr.mxu0 0.0
    %2011 = vmatpush2.msra.mxu0 %v1724
    %2012 = vmatprep.subr.mxu0 0.0
    %2013 = vmatpush2.msra.mxu0 %v1723
    %2014 = vmatprep.subr.mxu0 0.0
    %2015 = vmatpush2.msra.mxu0 %v1722
    %2016 = vmatprep.subr.mxu0 0.0
    %2017 = vmatpush2.msra.mxu0 %v1721
    %2018 = vmatprep.subr.mxu0 0.0
    %2019 = vmatpush2.msra.mxu0 %v1720
    %2020 = vmatprep.subr.mxu0 0.0
    %2021 = vmatpush2.msra.mxu0 %v1719
    %2022 = vmatprep.subr.mxu0 0.0
    %2023 = vmatpush2.msra.mxu0 %v1718
    %2024 = vmatprep.subr.mxu0 0.0
    %2025 = vmatpush2.msra.mxu0 %v1717
    %2026 = vmatprep.subr.mxu0 0.0
    %2027 = vmatpush2.msra.mxu0 %v1716
    %2028 = vmatprep.subr.mxu0 0.0
    %2029 = vmatpush2.msra.mxu0 %v1715
    %2030 = vmatprep.subr.mxu0 0.0
    %2031 = vmatpush2.msra.mxu0 %v1714
    %2032 = vmatprep.subr.mxu0 0.0
    %2033 = vmatpush2.msra.mxu0 %v1713
    %2034 = vmatprep.subr.mxu0 0.0
    %2035 = vmatpush2.msra.mxu0 %v1712
    %2036 = vmatprep.subr.mxu0 0.0
    %2037 = vmatpush2.msra.mxu0 %v1711
    %2038 = vmatprep.subr.mxu0 0.0
    %2039 = vmatpush2.msra.mxu0 %v1710
    %2040 = vmatprep.mubr.f32.mxu0 %v1757
    %2041 = vmatmul.mubr.f32.gmra.mxu0 %v1756
    %v2042 = vpop.f32.mrf.mxu0
    %v2043 = vadd.f32 %v1973, %v2042
    %v2044 = vpop.f32.mrf.mxu0
    %2045 = vdwg.mxu0
    %v2046 = vmax.f32 %v2043, 0.0
    %v2047 = vld [vmem:[%s11] sm:$0xff]
    %v2048 = vld [vmem:[%s11 + $0x8] sm:$0xff]
    %v2049 = vld [vmem:[%s11 + $0x10] sm:$0xff]
    %v2050 = vld [vmem:[%s11 + $0x18] sm:$0xff]
    %v2051 = vld [vmem:[%s11 + $0x20] sm:$0xff]
    %v2052 = vld [vmem:[%s11 + $0x28] sm:$0xff]
    %v2053 = vld [vmem:[%s11 + $0x30] sm:$0xff]
    %v2054 = vld [vmem:[%s11 + $0x38] sm:$0xff]
    %v2055 = vld [vmem:[%s11 + $0x40] sm:$0xff]
    %v2056 = vld [vmem:[%s11 + $0x48] sm:$0xff]
    %v2057 = vld [vmem:[%s11 + $0x50] sm:$0xff]
    %v2058 = vld [vmem:[%s11 + $0x58] sm:$0xff]
    %v2059 = vld [vmem:[%s11 + $0x60] sm:$0xff]
    %v2060 = vld [vmem:[%s11 + $0x68] sm:$0xff]
    %v2061 = vld [vmem:[%s11 + $0x70] sm:$0xff]
    %v2062 = vld [vmem:[%s11 + $0x78] sm:$0xff]
    %v2063 = vld [vmem:[%s12] sm:$0x1]
    %v2065 = vlaneseq
    %v2066 = vshrl.u32 %v2065, 7
    %v2067 = vsub.s32 0, %v2066
    %v2068 = vrot.slane %v2063, %v2067
    %2070 = vmatprep.subr.mxu0 0.0
    %2071 = vmatpush1.msra.mxu0 %v2062
    %2072 = vmatprep.subr.mxu0 0.0
    %2073 = vmatpush1.msra.mxu0 %v2061
    %2074 = vmatprep.subr.mxu0 0.0
    %2075 = vmatpush1.msra.mxu0 %v2060
    %2076 = vmatprep.subr.mxu0 0.0
    %2077 = vmatpush1.msra.mxu0 %v2059
    %2078 = vmatprep.subr.mxu0 0.0
    %2079 = vmatpush1.msra.mxu0 %v2058
    %2080 = vmatprep.subr.mxu0 0.0
    %2081 = vmatpush1.msra.mxu0 %v2057
    %2082 = vmatprep.subr.mxu0 0.0
    %2083 = vmatpush1.msra.mxu0 %v2056
    %2084 = vmatprep.subr.mxu0 0.0
    %2085 = vmatpush1.msra.mxu0 %v2055
    %2086 = vmatprep.subr.mxu0 0.0
    %2087 = vmatpush1.msra.mxu0 %v2054
    %2088 = vmatprep.subr.mxu0 0.0
    %2089 = vmatpush1.msra.mxu0 %v2053
    %2090 = vmatprep.subr.mxu0 0.0
    %2091 = vmatpush1.msra.mxu0 %v2052
    %2092 = vmatprep.subr.mxu0 0.0
    %2093 = vmatpush1.msra.mxu0 %v2051
    %2094 = vmatprep.subr.mxu0 0.0
    %2095 = vmatpush1.msra.mxu0 %v2050
    %2096 = vmatprep.subr.mxu0 0.0
    %2097 = vmatpush1.msra.mxu0 %v2049
    %2098 = vmatprep.subr.mxu0 0.0
    %2099 = vmatpush1.msra.mxu0 %v2048
    %2100 = vmatprep.subr.mxu0 0.0
    %2101 = vmatpush1.msra.mxu0 %v2047
    %2102 = vmatprep.subr.mxu0 0.0
    %2103 = vmatpush2.msra.mxu0 0.0
    %2104 = vmatprep.subr.mxu0 0.0
    %2105 = vmatpush2.msra.mxu0 0.0
    %2106 = vmatprep.subr.mxu0 0.0
    %2107 = vmatpush2.msra.mxu0 0.0
    %2108 = vmatprep.subr.mxu0 0.0
    %2109 = vmatpush2.msra.mxu0 0.0
    %2110 = vmatprep.subr.mxu0 0.0
    %2111 = vmatpush2.msra.mxu0 0.0
    %2112 = vmatprep.subr.mxu0 0.0
    %2113 = vmatpush2.msra.mxu0 0.0
    %2114 = vmatprep.subr.mxu0 0.0
    %2115 = vmatpush2.msra.mxu0 0.0
    %2116 = vmatprep.subr.mxu0 0.0
    %2117 = vmatpush2.msra.mxu0 0.0
    %2118 = vmatprep.subr.mxu0 0.0
    %2119 = vmatpush2.msra.mxu0 0.0
    %2120 = vmatprep.subr.mxu0 0.0
    %2121 = vmatpush2.msra.mxu0 0.0
    %2122 = vmatprep.subr.mxu0 0.0
    %2123 = vmatpush2.msra.mxu0 0.0
    %2124 = vmatprep.subr.mxu0 0.0
    %2125 = vmatpush2.msra.mxu0 0.0
    %2126 = vmatprep.subr.mxu0 0.0
    %2127 = vmatpush2.msra.mxu0 0.0
    %2128 = vmatprep.subr.mxu0 0.0
    %2129 = vmatpush2.msra.mxu0 0.0
    %2130 = vmatprep.subr.mxu0 0.0
    %2131 = vmatpush2.msra.mxu0 0.0
    %2132 = vmatprep.subr.mxu0 0.0
    %2133 = vmatpush2.msra.mxu0 0.0
    %2134 = vmatprep.mubr.f32.mxu0 0.0
    %2135 = vmatmul.mubr.f32.gmra.mxu0 %v2046
    %v2136 = vpop.f32.mrf.mxu0
    %v2137 = vadd.f32 %v2068, %v2136
    %v2138 = vpop.f32.mrf.mxu0
    %2139 = vdwg.mxu0
    %v2142 = vunpack.c.l.s4 1966171168
    %v2143 = vunpack.c.0.s8 %v2142
    %v2144 = vlaneseq
    %v2145 = vshrl.u32 %v2144, 7
    %v2146 = vsub.s32 %v2143, %v2145
    %v2147 = vrot.slane %v2137, %v2146
    %v2148 = vcombine.high %v2147, %v2147
    %v2150 = vunpack.c.l.s4 1966171168
    %v2151 = vunpack.c.0.s8 %v2150
    %v2152 = vlaneseq
    %v2153 = vshrl.u32 %v2152, 7
    %v2154 = vsub.s32 %v2151, %v2153
    %v2155 = vrot.slane %v2147, %v2154
    %v2157 = vunpack.c.l.s4 1966171168
    %v2158 = vunpack.c.0.s8 %v2157
    %v2159 = vlaneseq
    %v2160 = vshrl.u32 %v2159, 7
    %v2161 = vsub.s32 %v2158, %v2160
    %v2162 = vrot.slane %v2148, %v2161
    %v2163 = vlaneseq
    %v2164 = vshrl.u32 %v2163, 7
    %v2165 = vsub.s32 0, %v2164
    %v2166 = vrot.slane %v2155, %v2165
    %v2167 = vlaneseq
    %v2168 = vshrl.u32 %v2167, 7
    %v2169 = vsub.s32 0, %v2168
    %v2170 = vrot.slane %v2162, %v2169
    %v2173 = vld [vmem:[%s1] sm:$0xff]
    %v2174 = vld [vmem:[%s1 + $0x8] sm:$0xff]
    %v2175 = vld [vmem:[%s1 + $0x10] sm:$0xff]
    %v2176 = vld [vmem:[%s1 + $0x18] sm:$0xff]
    %v2177 = vld [vmem:[%s1 + $0x20] sm:$0xff]
    %v2178 = vld [vmem:[%s1 + $0x28] sm:$0xff]
    %v2179 = vld [vmem:[%s1 + $0x30] sm:$0xff]
    %v2180 = vld [vmem:[%s1 + $0x38] sm:$0xff]
    %v2181 = vld [vmem:[%s1 + $0x40] sm:$0xff]
    %v2182 = vld [vmem:[%s1 + $0x48] sm:$0xff]
    %v2183 = vld [vmem:[%s1 + $0x50] sm:$0xff]
    %v2184 = vld [vmem:[%s1 + $0x58] sm:$0xff]
    %v2185 = vld [vmem:[%s1 + $0x60] sm:$0xff]
    %v2186 = vld [vmem:[%s1 + $0x68] sm:$0xff]
    %v2187 = vld [vmem:[%s1 + $0x70] sm:$0xff]
    %v2188 = vld [vmem:[%s1 + $0x78] sm:$0xff]
    %v2189 = vld [vmem:[%s10] sm:$0x3]
    %vm2190 = vcmask 15360
    %v2192 = vsel %vm2190, %v2173, 0
    %v2195 = vsel %vm2190, %v2174, 0
    %v2198 = vsel %vm2190, %v2175, 0
    %v2201 = vsel %vm2190, %v2176, 0
    %v2204 = vsel %vm2190, %v2177, 0
    %v2207 = vsel %vm2190, %v2178, 0
    %v2210 = vsel %vm2190, %v2179, 0
    %v2213 = vsel %vm2190, %v2180, 0
    %v2216 = vsel %vm2190, %v2181, 0
    %v2219 = vsel %vm2190, %v2182, 0
    %v2222 = vsel %vm2190, %v2183, 0
    %v2225 = vsel %vm2190, %v2184, 0
    %v2228 = vsel %vm2190, %v2185, 0
    %v2231 = vsel %vm2190, %v2186, 0
    %v2234 = vsel %vm2190, %v2187, 0
    %v2237 = vsel %vm2190, %v2188, 0
    %vm2239 = vcmask 1041408
    %v2241 = vsel %vm2239, %v2189, 0
    %2243 = vmatprep.subr.mxu0 0.0
    %2244 = vmatpush1.msra.mxu0 0.0
    %2245 = vmatprep.subr.mxu0 0.0
    %2246 = vmatpush1.msra.mxu0 0.0
    %2247 = vmatprep.subr.mxu0 0.0
    %2248 = vmatpush1.msra.mxu0 0.0
    %2249 = vmatprep.subr.mxu0 0.0
    %2250 = vmatpush1.msra.mxu0 0.0
    %2251 = vmatprep.subr.mxu0 0.0
    %2252 = vmatpush1.msra.mxu0 0.0
    %2253 = vmatprep.subr.mxu0 0.0
    %2254 = vmatpush1.msra.mxu0 0.0
    %2255 = vmatprep.subr.mxu0 0.0
    %2256 = vmatpush1.msra.mxu0 0.0
    %2257 = vmatprep.subr.mxu0 0.0
    %2258 = vmatpush1.msra.mxu0 0.0
    %2259 = vmatprep.subr.mxu0 0.0
    %2260 = vmatpush1.msra.mxu0 0.0
    %2261 = vmatprep.subr.mxu0 0.0
    %2262 = vmatpush1.msra.mxu0 0.0
    %2263 = vmatprep.subr.mxu0 0.0
    %2264 = vmatpush1.msra.mxu0 0.0
    %2265 = vmatprep.subr.mxu0 0.0
    %2266 = vmatpush1.msra.mxu0 0.0
    %2267 = vmatprep.subr.mxu0 0.0
    %2268 = vmatpush1.msra.mxu0 0.0
    %2269 = vmatprep.subr.mxu0 0.0
    %2270 = vmatpush1.msra.mxu0 0.0
    %2271 = vmatprep.subr.mxu0 0.0
    %2272 = vmatpush1.msra.mxu0 0.0
    %2273 = vmatprep.subr.mxu0 0.0
    %2274 = vmatpush1.msra.mxu0 %v2241
    %2275 = vmatprep.subr.mxu0 0.0
    %2276 = vmatpush2.msra.mxu0 0.0
    %2277 = vmatprep.subr.mxu0 0.0
    %2278 = vmatpush2.msra.mxu0 0.0
    %2279 = vmatprep.subr.mxu0 0.0
    %2280 = vmatpush2.msra.mxu0 0.0
    %2281 = vmatprep.subr.mxu0 0.0
    %2282 = vmatpush2.msra.mxu0 0.0
    %2283 = vmatprep.subr.mxu0 0.0
    %2284 = vmatpush2.msra.mxu0 0.0
    %2285 = vmatprep.subr.mxu0 0.0
    %2286 = vmatpush2.msra.mxu0 0.0
    %2287 = vmatprep.subr.mxu0 0.0
    %2288 = vmatpush2.msra.mxu0 0.0
    %2289 = vmatprep.subr.mxu0 0.0
    %2290 = vmatpush2.msra.mxu0 0.0
    %2291 = vmatprep.subr.mxu0 0.0
    %2292 = vmatpush2.msra.mxu0 0.0
    %2293 = vmatprep.subr.mxu0 0.0
    %2294 = vmatpush2.msra.mxu0 0.0
    %2295 = vmatprep.subr.mxu0 0.0
    %2296 = vmatpush2.msra.mxu0 0.0
    %2297 = vmatprep.subr.mxu0 0.0
    %2298 = vmatpush2.msra.mxu0 0.0
    %2299 = vmatprep.subr.mxu0 0.0
    %2300 = vmatpush2.msra.mxu0 0.0
    %2301 = vmatprep.subr.mxu0 0.0
    %2302 = vmatpush2.msra.mxu0 0.0
    %2303 = vmatprep.subr.mxu0 0.0
    %2304 = vmatpush2.msra.mxu0 0.0
    %2305 = vmatprep.subr.mxu0 0.0
    %2306 = vmatpush2.msra.mxu0 0.0
    %2307 = vmatprep.mubr.f32.mxu0 0.0
    %2308 = vmatmul.mubr.f32.gmra.mxu0 %v2192
    %v2309 = vpop.f32.mrf.mxu0
    %v2310 = vadd.f32 %v2166, %v2309
    %v2311 = vpop.f32.mrf.mxu0
    %2312 = vmatprep.mubr.f32.mxu0 0.0
    %2313 = vmatmul.mubr.f32.gmra.mxu0 %v2195
    %v2314 = vpop.f32.mrf.mxu0
    %v2315 = vadd.f32 %v2166, %v2314
    %v2316 = vpop.f32.mrf.mxu0
    %2317 = vmatprep.mubr.f32.mxu0 0.0
    %2318 = vmatmul.mubr.f32.gmra.mxu0 %v2198
    %v2319 = vpop.f32.mrf.mxu0
    %v2320 = vadd.f32 %v2166, %v2319
    %v2321 = vpop.f32.mrf.mxu0
    %2322 = vmatprep.mubr.f32.mxu0 0.0
    %2323 = vmatmul.mubr.f32.gmra.mxu0 %v2201
    %v2324 = vpop.f32.mrf.mxu0
    %v2325 = vadd.f32 %v2166, %v2324
    %v2326 = vpop.f32.mrf.mxu0
    %2327 = vmatprep.mubr.f32.mxu0 0.0
    %2328 = vmatmul.mubr.f32.gmra.mxu0 %v2204
    %v2329 = vpop.f32.mrf.mxu0
    %v2330 = vadd.f32 %v2166, %v2329
    %v2331 = vpop.f32.mrf.mxu0
    %2332 = vmatprep.mubr.f32.mxu0 0.0
    %2333 = vmatmul.mubr.f32.gmra.mxu0 %v2207
    %v2334 = vpop.f32.mrf.mxu0
    %v2335 = vadd.f32 %v2166, %v2334
    %v2336 = vpop.f32.mrf.mxu0
    %2337 = vmatprep.mubr.f32.mxu0 0.0
    %2338 = vmatmul.mubr.f32.gmra.mxu0 %v2210
    %v2339 = vpop.f32.mrf.mxu0
    %v2340 = vadd.f32 %v2166, %v2339
    %v2341 = vpop.f32.mrf.mxu0
    %2342 = vmatprep.mubr.f32.mxu0 0.0
    %2343 = vmatmul.mubr.f32.gmra.mxu0 %v2213
    %v2344 = vpop.f32.mrf.mxu0
    %v2345 = vadd.f32 %v2166, %v2344
    %v2346 = vpop.f32.mrf.mxu0
    %2347 = vmatprep.mubr.f32.mxu0 0.0
    %2348 = vmatmul.mubr.f32.gmra.mxu0 %v2216
    %v2349 = vpop.f32.mrf.mxu0
    %v2350 = vadd.f32 %v2170, %v2349
    %v2351 = vpop.f32.mrf.mxu0
    %2352 = vmatprep.mubr.f32.mxu0 0.0
    %2353 = vmatmul.mubr.f32.gmra.mxu0 %v2219
    %v2354 = vpop.f32.mrf.mxu0
    %v2355 = vadd.f32 %v2170, %v2354
    %v2356 = vpop.f32.mrf.mxu0
    %2357 = vmatprep.mubr.f32.mxu0 0.0
    %2358 = vmatmul.mubr.f32.gmra.mxu0 %v2222
    %v2359 = vpop.f32.mrf.mxu0
    %v2360 = vadd.f32 %v2170, %v2359
    %v2361 = vpop.f32.mrf.mxu0
    %2362 = vmatprep.mubr.f32.mxu0 0.0
    %2363 = vmatmul.mubr.f32.gmra.mxu0 %v2225
    %v2364 = vpop.f32.mrf.mxu0
    %v2365 = vadd.f32 %v2170, %v2364
    %v2366 = vpop.f32.mrf.mxu0
    %2367 = vmatprep.mubr.f32.mxu0 0.0
    %2368 = vmatmul.mubr.f32.gmra.mxu0 %v2228
    %v2369 = vpop.f32.mrf.mxu0
    %v2370 = vadd.f32 %v2170, %v2369
    %v2371 = vpop.f32.mrf.mxu0
    %2372 = vmatprep.mubr.f32.mxu0 0.0
    %2373 = vmatmul.mubr.f32.gmra.mxu0 %v2231
    %v2374 = vpop.f32.mrf.mxu0
    %v2375 = vadd.f32 %v2170, %v2374
    %v2376 = vpop.f32.mrf.mxu0
    %2377 = vmatprep.mubr.f32.mxu0 0.0
    %2378 = vmatmul.mubr.f32.gmra.mxu0 %v2234
    %v2379 = vpop.f32.mrf.mxu0
    %v2380 = vadd.f32 %v2170, %v2379
    %v2381 = vpop.f32.mrf.mxu0
    %2382 = vmatprep.mubr.f32.mxu0 0.0
    %2383 = vmatmul.mubr.f32.gmra.mxu0 %v2237
    %v2384 = vpop.f32.mrf.mxu0
    %v2385 = vadd.f32 %v2170, %v2384
    %v2386 = vpop.f32.mrf.mxu0
    %2387 = vdwg.mxu0
    %v2388 = vmax.f32 %v2310, 0.0
    %v2389 = vmax.f32 %v2315, 0.0
    %v2390 = vmax.f32 %v2320, 0.0
    %v2391 = vmax.f32 %v2325, 0.0
    %v2392 = vmax.f32 %v2330, 0.0
    %v2393 = vmax.f32 %v2335, 0.0
    %v2394 = vmax.f32 %v2340, 0.0
    %v2395 = vmax.f32 %v2345, 0.0
    %v2396 = vmax.f32 %v2350, 0.0
    %v2397 = vmax.f32 %v2355, 0.0
    %v2398 = vmax.f32 %v2360, 0.0
    %v2399 = vmax.f32 %v2365, 0.0
    %v2400 = vmax.f32 %v2370, 0.0
    %v2401 = vmax.f32 %v2375, 0.0
    %v2402 = vmax.f32 %v2380, 0.0
    %v2403 = vmax.f32 %v2385, 0.0
    %v2404 = vld [vmem:[%s13] sm:$0xff]
    %v2405 = vld [vmem:[%s13 + $0x8] sm:$0xff]
    %v2406 = vld [vmem:[%s13 + $0x10] sm:$0xff]
    %v2407 = vld [vmem:[%s13 + $0x18] sm:$0xff]
    %v2408 = vld [vmem:[%s13 + $0x20] sm:$0xff]
    %v2409 = vld [vmem:[%s13 + $0x28] sm:$0xff]
    %v2410 = vld [vmem:[%s13 + $0x30] sm:$0xff]
    %v2411 = vld [vmem:[%s13 + $0x38] sm:$0xff]
    %v2412 = vld [vmem:[%s13 + $0x40] sm:$0xff]
    %v2413 = vld [vmem:[%s13 + $0x48] sm:$0xff]
    %v2414 = vld [vmem:[%s13 + $0x50] sm:$0xff]
    %v2415 = vld [vmem:[%s13 + $0x58] sm:$0xff]
    %v2416 = vld [vmem:[%s13 + $0x60] sm:$0xff]
    %v2417 = vld [vmem:[%s13 + $0x68] sm:$0xff]
    %v2418 = vld [vmem:[%s13 + $0x70] sm:$0xff]
    %v2419 = vld [vmem:[%s13 + $0x78] sm:$0xff]
    %v2420 = vld [vmem:[%s14] sm:$0x1]
    %v2422 = vlaneseq
    %v2423 = vshrl.u32 %v2422, 7
    %v2424 = vsub.s32 0, %v2423
    %v2425 = vrot.slane %v2420, %v2424
    %2427 = vmatprep.subr.mxu0 0.0
    %2428 = vmatpush1.msra.mxu0 %v2419
    %2429 = vmatprep.subr.mxu0 0.0
    %2430 = vmatpush1.msra.mxu0 %v2418
    %2431 = vmatprep.subr.mxu0 0.0
    %2432 = vmatpush1.msra.mxu0 %v2417
    %2433 = vmatprep.subr.mxu0 0.0
    %2434 = vmatpush1.msra.mxu0 %v2416
    %2435 = vmatprep.subr.mxu0 0.0
    %2436 = vmatpush1.msra.mxu0 %v2415
    %2437 = vmatprep.subr.mxu0 0.0
    %2438 = vmatpush1.msra.mxu0 %v2414
    %2439 = vmatprep.subr.mxu0 0.0
    %2440 = vmatpush1.msra.mxu0 %v2413
    %2441 = vmatprep.subr.mxu0 0.0
    %2442 = vmatpush1.msra.mxu0 %v2412
    %2443 = vmatprep.subr.mxu0 0.0
    %2444 = vmatpush1.msra.mxu0 %v2411
    %2445 = vmatprep.subr.mxu0 0.0
    %2446 = vmatpush1.msra.mxu0 %v2410
    %2447 = vmatprep.subr.mxu0 0.0
    %2448 = vmatpush1.msra.mxu0 %v2409
    %2449 = vmatprep.subr.mxu0 0.0
    %2450 = vmatpush1.msra.mxu0 %v2408
    %2451 = vmatprep.subr.mxu0 0.0
    %2452 = vmatpush1.msra.mxu0 %v2407
    %2453 = vmatprep.subr.mxu0 0.0
    %2454 = vmatpush1.msra.mxu0 %v2406
    %2455 = vmatprep.subr.mxu0 0.0
    %2456 = vmatpush1.msra.mxu0 %v2405
    %2457 = vmatprep.subr.mxu0 0.0
    %2458 = vmatpush1.msra.mxu0 %v2404
    %2459 = vmatprep.subr.mxu0 0.0
    %2460 = vmatpush2.msra.mxu0 0.0
    %2461 = vmatprep.subr.mxu0 0.0
    %2462 = vmatpush2.msra.mxu0 0.0
    %2463 = vmatprep.subr.mxu0 0.0
    %2464 = vmatpush2.msra.mxu0 0.0
    %2465 = vmatprep.subr.mxu0 0.0
    %2466 = vmatpush2.msra.mxu0 0.0
    %2467 = vmatprep.subr.mxu0 0.0
    %2468 = vmatpush2.msra.mxu0 0.0
    %2469 = vmatprep.subr.mxu0 0.0
    %2470 = vmatpush2.msra.mxu0 0.0
    %2471 = vmatprep.subr.mxu0 0.0
    %2472 = vmatpush2.msra.mxu0 0.0
    %2473 = vmatprep.subr.mxu0 0.0
    %2474 = vmatpush2.msra.mxu0 0.0
    %2475 = vmatprep.subr.mxu0 0.0
    %2476 = vmatpush2.msra.mxu0 0.0
    %2477 = vmatprep.subr.mxu0 0.0
    %2478 = vmatpush2.msra.mxu0 0.0
    %2479 = vmatprep.subr.mxu0 0.0
    %2480 = vmatpush2.msra.mxu0 0.0
    %2481 = vmatprep.subr.mxu0 0.0
    %2482 = vmatpush2.msra.mxu0 0.0
    %2483 = vmatprep.subr.mxu0 0.0
    %2484 = vmatpush2.msra.mxu0 0.0
    %2485 = vmatprep.subr.mxu0 0.0
    %2486 = vmatpush2.msra.mxu0 0.0
    %2487 = vmatprep.subr.mxu0 0.0
    %2488 = vmatpush2.msra.mxu0 0.0
    %2489 = vmatprep.subr.mxu0 0.0
    %2490 = vmatpush2.msra.mxu0 0.0
    %2491 = vmatprep.mubr.f32.mxu0 0.0
    %2492 = vmatmul.mubr.f32.gmra.mxu0 %v2388
    %v2493 = vpop.f32.mrf.mxu0
    %v2494 = vadd.f32 %v2425, %v2493
    %v2495 = vpop.f32.mrf.mxu0
    %2496 = vmatprep.mubr.f32.mxu0 0.0
    %2497 = vmatmul.mubr.f32.gmra.mxu0 %v2389
    %v2498 = vpop.f32.mrf.mxu0
    %v2499 = vadd.f32 %v2425, %v2498
    %v2500 = vpop.f32.mrf.mxu0
    %2501 = vmatprep.mubr.f32.mxu0 0.0
    %2502 = vmatmul.mubr.f32.gmra.mxu0 %v2390
    %v2503 = vpop.f32.mrf.mxu0
    %v2504 = vadd.f32 %v2425, %v2503
    %v2505 = vpop.f32.mrf.mxu0
    %2506 = vmatprep.mubr.f32.mxu0 0.0
    %2507 = vmatmul.mubr.f32.gmra.mxu0 %v2391
    %v2508 = vpop.f32.mrf.mxu0
    %v2509 = vadd.f32 %v2425, %v2508
    %v2510 = vpop.f32.mrf.mxu0
    %2511 = vmatprep.mubr.f32.mxu0 0.0
    %2512 = vmatmul.mubr.f32.gmra.mxu0 %v2392
    %v2513 = vpop.f32.mrf.mxu0
    %v2514 = vadd.f32 %v2425, %v2513
    %v2515 = vpop.f32.mrf.mxu0
    %2516 = vmatprep.mubr.f32.mxu0 0.0
    %2517 = vmatmul.mubr.f32.gmra.mxu0 %v2393
    %v2518 = vpop.f32.mrf.mxu0
    %v2519 = vadd.f32 %v2425, %v2518
    %v2520 = vpop.f32.mrf.mxu0
    %2521 = vmatprep.mubr.f32.mxu0 0.0
    %2522 = vmatmul.mubr.f32.gmra.mxu0 %v2394
    %v2523 = vpop.f32.mrf.mxu0
    %v2524 = vadd.f32 %v2425, %v2523
    %v2525 = vpop.f32.mrf.mxu0
    %2526 = vmatprep.mubr.f32.mxu0 0.0
    %2527 = vmatmul.mubr.f32.gmra.mxu0 %v2395
    %v2528 = vpop.f32.mrf.mxu0
    %v2529 = vadd.f32 %v2425, %v2528
    %v2530 = vpop.f32.mrf.mxu0
    %2531 = vmatprep.mubr.f32.mxu0 0.0
    %2532 = vmatmul.mubr.f32.gmra.mxu0 %v2396
    %v2533 = vpop.f32.mrf.mxu0
    %v2534 = vadd.f32 %v2425, %v2533
    %v2535 = vpop.f32.mrf.mxu0
    %2536 = vmatprep.mubr.f32.mxu0 0.0
    %2537 = vmatmul.mubr.f32.gmra.mxu0 %v2397
    %v2538 = vpop.f32.mrf.mxu0
    %v2539 = vadd.f32 %v2425, %v2538
    %v2540 = vpop.f32.mrf.mxu0
    %2541 = vmatprep.mubr.f32.mxu0 0.0
    %2542 = vmatmul.mubr.f32.gmra.mxu0 %v2398
    %v2543 = vpop.f32.mrf.mxu0
    %v2544 = vadd.f32 %v2425, %v2543
    %v2545 = vpop.f32.mrf.mxu0
    %2546 = vmatprep.mubr.f32.mxu0 0.0
    %2547 = vmatmul.mubr.f32.gmra.mxu0 %v2399
    %v2548 = vpop.f32.mrf.mxu0
    %v2549 = vadd.f32 %v2425, %v2548
    %v2550 = vpop.f32.mrf.mxu0
    %2551 = vmatprep.mubr.f32.mxu0 0.0
    %2552 = vmatmul.mubr.f32.gmra.mxu0 %v2400
    %v2553 = vpop.f32.mrf.mxu0
    %v2554 = vadd.f32 %v2425, %v2553
    %v2555 = vpop.f32.mrf.mxu0
    %2556 = vmatprep.mubr.f32.mxu0 0.0
    %2557 = vmatmul.mubr.f32.gmra.mxu0 %v2401
    %v2558 = vpop.f32.mrf.mxu0
    %v2559 = vadd.f32 %v2425, %v2558
    %v2560 = vpop.f32.mrf.mxu0
    %2561 = vmatprep.mubr.f32.mxu0 0.0
    %2562 = vmatmul.mubr.f32.gmra.mxu0 %v2402
    %v2563 = vpop.f32.mrf.mxu0
    %v2564 = vadd.f32 %v2425, %v2563
    %v2565 = vpop.f32.mrf.mxu0
    %2566 = vmatprep.mubr.f32.mxu0 0.0
    %2567 = vmatmul.mubr.f32.gmra.mxu0 %v2403
    %v2568 = vpop.f32.mrf.mxu0
    %v2569 = vadd.f32 %v2425, %v2568
    %v2570 = vpop.f32.mrf.mxu0
    %2571 = vdwg.mxu0
    %v2572 = vmax.f32 %v2494, 0.0
    %v2573 = vmax.f32 %v2499, 0.0
    %v2574 = vmax.f32 %v2504, 0.0
    %v2575 = vmax.f32 %v2509, 0.0
    %v2576 = vmax.f32 %v2514, 0.0
    %v2577 = vmax.f32 %v2519, 0.0
    %v2578 = vmax.f32 %v2524, 0.0
    %v2579 = vmax.f32 %v2529, 0.0
    %v2580 = vmax.f32 %v2534, 0.0
    %v2581 = vmax.f32 %v2539, 0.0
    %v2582 = vmax.f32 %v2544, 0.0
    %v2583 = vmax.f32 %v2549, 0.0
    %v2584 = vmax.f32 %v2554, 0.0
    %v2585 = vmax.f32 %v2559, 0.0
    %v2586 = vmax.f32 %v2564, 0.0
    %v2587 = vmax.f32 %v2569, 0.0
    %v2588 = vld [vmem:[%s15] sm:$0xff]
    %v2589 = vld [vmem:[%s15 + $0x8] sm:$0xff]
    %v2590 = vld [vmem:[%s15 + $0x10] sm:$0xff]
    %v2591 = vld [vmem:[%s15 + $0x18] sm:$0xff]
    %v2592 = vld [vmem:[%s15 + $0x20] sm:$0xff]
    %v2593 = vld [vmem:[%s15 + $0x28] sm:$0xff]
    %v2594 = vld [vmem:[%s15 + $0x30] sm:$0xff]
    %v2595 = vld [vmem:[%s15 + $0x38] sm:$0xff]
    %v2596 = vld [vmem:[%s16] sm:$0x1]
    %v2598 = vlaneseq
    %v2599 = vshrl.u32 %v2598, 7
    %v2600 = vsub.s32 0, %v2599
    %v2601 = vrot.slane %v2596, %v2600
    %v2604 = vsel %vm366, %v2572, 0
    %v2607 = vsel %vm366, %v2573, 0
    %v2610 = vsel %vm366, %v2574, 0
    %v2613 = vsel %vm366, %v2575, 0
    %v2616 = vsel %vm366, %v2576, 0
    %v2619 = vsel %vm366, %v2577, 0
    %v2622 = vsel %vm366, %v2578, 0
    %v2625 = vsel %vm366, %v2579, 0
    %v2628 = vsel %vm366, %v2580, 0
    %v2631 = vsel %vm366, %v2581, 0
    %v2634 = vsel %vm366, %v2582, 0
    %v2637 = vsel %vm366, %v2583, 0
    %v2640 = vsel %vm366, %v2584, 0
    %v2643 = vsel %vm366, %v2585, 0
    %v2646 = vsel %vm366, %v2586, 0
    %v2649 = vsel %vm366, %v2587, 0
    %2651 = vmatprep.subr.mxu0 0.0
    %2652 = vmatpush1.msra.mxu0 0.0
    %2653 = vmatprep.subr.mxu0 0.0
    %2654 = vmatpush1.msra.mxu0 0.0
    %2655 = vmatprep.subr.mxu0 0.0
    %2656 = vmatpush1.msra.mxu0 0.0
    %2657 = vmatprep.subr.mxu0 0.0
    %2658 = vmatpush1.msra.mxu0 0.0
    %2659 = vmatprep.subr.mxu0 0.0
    %2660 = vmatpush1.msra.mxu0 0.0
    %2661 = vmatprep.subr.mxu0 0.0
    %2662 = vmatpush1.msra.mxu0 0.0
    %2663 = vmatprep.subr.mxu0 0.0
    %2664 = vmatpush1.msra.mxu0 0.0
    %2665 = vmatprep.subr.mxu0 0.0
    %2666 = vmatpush1.msra.mxu0 0.0
    %2667 = vmatprep.subr.mxu0 0.0
    %2668 = vmatpush1.msra.mxu0 %v2595
    %2669 = vmatprep.subr.mxu0 0.0
    %2670 = vmatpush1.msra.mxu0 %v2594
    %2671 = vmatprep.subr.mxu0 0.0
    %2672 = vmatpush1.msra.mxu0 %v2593
    %2673 = vmatprep.subr.mxu0 0.0
    %2674 = vmatpush1.msra.mxu0 %v2592
    %2675 = vmatprep.subr.mxu0 0.0
    %2676 = vmatpush1.msra.mxu0 %v2591
    %2677 = vmatprep.subr.mxu0 0.0
    %2678 = vmatpush1.msra.mxu0 %v2590
    %2679 = vmatprep.subr.mxu0 0.0
    %2680 = vmatpush1.msra.mxu0 %v2589
    %2681 = vmatprep.subr.mxu0 0.0
    %2682 = vmatpush1.msra.mxu0 %v2588
    %2683 = vmatprep.subr.mxu0 0.0
    %2684 = vmatpush2.msra.mxu0 0.0
    %2685 = vmatprep.subr.mxu0 0.0
    %2686 = vmatpush2.msra.mxu0 0.0
    %2687 = vmatprep.subr.mxu0 0.0
    %2688 = vmatpush2.msra.mxu0 0.0
    %2689 = vmatprep.subr.mxu0 0.0
    %2690 = vmatpush2.msra.mxu0 0.0
    %2691 = vmatprep.subr.mxu0 0.0
    %2692 = vmatpush2.msra.mxu0 0.0
    %2693 = vmatprep.subr.mxu0 0.0
    %2694 = vmatpush2.msra.mxu0 0.0
    %2695 = vmatprep.subr.mxu0 0.0
    %2696 = vmatpush2.msra.mxu0 0.0
    %2697 = vmatprep.subr.mxu0 0.0
    %2698 = vmatpush2.msra.mxu0 0.0
    %2699 = vmatprep.subr.mxu0 0.0
    %2700 = vmatpush2.msra.mxu0 0.0
    %2701 = vmatprep.subr.mxu0 0.0
    %2702 = vmatpush2.msra.mxu0 0.0
    %2703 = vmatprep.subr.mxu0 0.0
    %2704 = vmatpush2.msra.mxu0 0.0
    %2705 = vmatprep.subr.mxu0 0.0
    %2706 = vmatpush2.msra.mxu0 0.0
    %2707 = vmatprep.subr.mxu0 0.0
    %2708 = vmatpush2.msra.mxu0 0.0
    %2709 = vmatprep.subr.mxu0 0.0
    %2710 = vmatpush2.msra.mxu0 0.0
    %2711 = vmatprep.subr.mxu0 0.0
    %2712 = vmatpush2.msra.mxu0 0.0
    %2713 = vmatprep.subr.mxu0 0.0
    %2714 = vmatpush2.msra.mxu0 0.0
    %2715 = vmatprep.mubr.f32.mxu0 0.0
    %2716 = vmatmul.mubr.f32.gmra.mxu0 %v2604
    %v2717 = vpop.f32.mrf.mxu0
    %v2718 = vadd.f32 %v2601, %v2717
    %v2719 = vpop.f32.mrf.mxu0
    %2720 = vmatprep.mubr.f32.mxu0 0.0
    %2721 = vmatmul.mubr.f32.gmra.mxu0 %v2607
    %v2722 = vpop.f32.mrf.mxu0
    %v2723 = vadd.f32 %v2601, %v2722
    %v2724 = vpop.f32.mrf.mxu0
    %2725 = vmatprep.mubr.f32.mxu0 0.0
    %2726 = vmatmul.mubr.f32.gmra.mxu0 %v2610
    %v2727 = vpop.f32.mrf.mxu0
    %v2728 = vadd.f32 %v2601, %v2727
    %v2729 = vpop.f32.mrf.mxu0
    %2730 = vmatprep.mubr.f32.mxu0 0.0
    %2731 = vmatmul.mubr.f32.gmra.mxu0 %v2613
    %v2732 = vpop.f32.mrf.mxu0
    %v2733 = vadd.f32 %v2601, %v2732
    %v2734 = vpop.f32.mrf.mxu0
    %2735 = vmatprep.mubr.f32.mxu0 0.0
    %2736 = vmatmul.mubr.f32.gmra.mxu0 %v2616
    %v2737 = vpop.f32.mrf.mxu0
    %v2738 = vadd.f32 %v2601, %v2737
    %v2739 = vpop.f32.mrf.mxu0
    %2740 = vmatprep.mubr.f32.mxu0 0.0
    %2741 = vmatmul.mubr.f32.gmra.mxu0 %v2619
    %v2742 = vpop.f32.mrf.mxu0
    %v2743 = vadd.f32 %v2601, %v2742
    %v2744 = vpop.f32.mrf.mxu0
    %2745 = vmatprep.mubr.f32.mxu0 0.0
    %2746 = vmatmul.mubr.f32.gmra.mxu0 %v2622
    %v2747 = vpop.f32.mrf.mxu0
    %v2748 = vadd.f32 %v2601, %v2747
    %v2749 = vpop.f32.mrf.mxu0
    %2750 = vmatprep.mubr.f32.mxu0 0.0
    %2751 = vmatmul.mubr.f32.gmra.mxu0 %v2625
    %v2752 = vpop.f32.mrf.mxu0
    %v2753 = vadd.f32 %v2601, %v2752
    %v2754 = vpop.f32.mrf.mxu0
    %2755 = vmatprep.mubr.f32.mxu0 0.0
    %2756 = vmatmul.mubr.f32.gmra.mxu0 %v2628
    %v2757 = vpop.f32.mrf.mxu0
    %v2758 = vadd.f32 %v2601, %v2757
    %v2759 = vpop.f32.mrf.mxu0
    %2760 = vmatprep.mubr.f32.mxu0 0.0
    %2761 = vmatmul.mubr.f32.gmra.mxu0 %v2631
    %v2762 = vpop.f32.mrf.mxu0
    %v2763 = vadd.f32 %v2601, %v2762
    %v2764 = vpop.f32.mrf.mxu0
    %2765 = vmatprep.mubr.f32.mxu0 0.0
    %2766 = vmatmul.mubr.f32.gmra.mxu0 %v2634
    %v2767 = vpop.f32.mrf.mxu0
    %v2768 = vadd.f32 %v2601, %v2767
    %v2769 = vpop.f32.mrf.mxu0
    %2770 = vmatprep.mubr.f32.mxu0 0.0
    %2771 = vmatmul.mubr.f32.gmra.mxu0 %v2637
    %v2772 = vpop.f32.mrf.mxu0
    %v2773 = vadd.f32 %v2601, %v2772
    %v2774 = vpop.f32.mrf.mxu0
    %2775 = vmatprep.mubr.f32.mxu0 0.0
    %2776 = vmatmul.mubr.f32.gmra.mxu0 %v2640
    %v2777 = vpop.f32.mrf.mxu0
    %v2778 = vadd.f32 %v2601, %v2777
    %v2779 = vpop.f32.mrf.mxu0
    %2780 = vmatprep.mubr.f32.mxu0 0.0
    %2781 = vmatmul.mubr.f32.gmra.mxu0 %v2643
    %v2782 = vpop.f32.mrf.mxu0
    %v2783 = vadd.f32 %v2601, %v2782
    %v2784 = vpop.f32.mrf.mxu0
    %2785 = vmatprep.mubr.f32.mxu0 0.0
    %2786 = vmatmul.mubr.f32.gmra.mxu0 %v2646
    %v2787 = vpop.f32.mrf.mxu0
    %v2788 = vadd.f32 %v2601, %v2787
    %v2789 = vpop.f32.mrf.mxu0
    %2790 = vmatprep.mubr.f32.mxu0 0.0
    %2791 = vmatmul.mubr.f32.gmra.mxu0 %v2649
    %v2792 = vpop.f32.mrf.mxu0
    %v2793 = vadd.f32 %v2601, %v2792
    %v2794 = vpop.f32.mrf.mxu0
    %2795 = vdwg.mxu0
    %v2796 = vmax.f32 %v2718, 0.0
    %v2797 = vmax.f32 %v2723, 0.0
    %v2798 = vmax.f32 %v2728, 0.0
    %v2799 = vmax.f32 %v2733, 0.0
    %v2800 = vmax.f32 %v2738, 0.0
    %v2801 = vmax.f32 %v2743, 0.0
    %v2802 = vmax.f32 %v2748, 0.0
    %v2803 = vmax.f32 %v2753, 0.0
    %v2804 = vmax.f32 %v2758, 0.0
    %v2805 = vmax.f32 %v2763, 0.0
    %v2806 = vmax.f32 %v2768, 0.0
    %v2807 = vmax.f32 %v2773, 0.0
    %v2808 = vmax.f32 %v2778, 0.0
    %v2809 = vmax.f32 %v2783, 0.0
    %v2810 = vmax.f32 %v2788, 0.0
    %v2811 = vmax.f32 %v2793, 0.0
    %v2812 = vld [vmem:[%s17] sm:$0xff]
    %v2813 = vld [vmem:[%s17 + $0x8] sm:$0xff]
    %v2814 = vld [vmem:[%s17 + $0x10] sm:$0xff]
    %v2815 = vld [vmem:[%s17 + $0x18] sm:$0xff]
    %v2816 = vld [vmem:[%s18] sm:$0x1]
    %v2818 = vlaneseq
    %v2819 = vshrl.u32 %v2818, 7
    %v2820 = vsub.s32 0, %v2819
    %v2821 = vrot.slane %v2816, %v2820
    %vm2823 = vcmask 261120
    %v2825 = vsel %vm2823, %v2796, 0
    %v2828 = vsel %vm2823, %v2797, 0
    %v2831 = vsel %vm2823, %v2798, 0
    %v2834 = vsel %vm2823, %v2799, 0
    %v2837 = vsel %vm2823, %v2800, 0
    %v2840 = vsel %vm2823, %v2801, 0
    %v2843 = vsel %vm2823, %v2802, 0
    %v2846 = vsel %vm2823, %v2803, 0
    %v2849 = vsel %vm2823, %v2804, 0
    %v2852 = vsel %vm2823, %v2805, 0
    %v2855 = vsel %vm2823, %v2806, 0
    %v2858 = vsel %vm2823, %v2807, 0
    %v2861 = vsel %vm2823, %v2808, 0
    %v2864 = vsel %vm2823, %v2809, 0
    %v2867 = vsel %vm2823, %v2810, 0
    %v2870 = vsel %vm2823, %v2811, 0
    %2872 = vmatprep.subr.mxu0 0.0
    %2873 = vmatpush1.msra.mxu0 0.0
    %2874 = vmatprep.subr.mxu0 0.0
    %2875 = vmatpush1.msra.mxu0 0.0
    %2876 = vmatprep.subr.mxu0 0.0
    %2877 = vmatpush1.msra.mxu0 0.0
    %2878 = vmatprep.subr.mxu0 0.0
    %2879 = vmatpush1.msra.mxu0 0.0
    %2880 = vmatprep.subr.mxu0 0.0
    %2881 = vmatpush1.msra.mxu0 0.0
    %2882 = vmatprep.subr.mxu0 0.0
    %2883 = vmatpush1.msra.mxu0 0.0
    %2884 = vmatprep.subr.mxu0 0.0
    %2885 = vmatpush1.msra.mxu0 0.0
    %2886 = vmatprep.subr.mxu0 0.0
    %2887 = vmatpush1.msra.mxu0 0.0
    %2888 = vmatprep.subr.mxu0 0.0
    %2889 = vmatpush1.msra.mxu0 0.0
    %2890 = vmatprep.subr.mxu0 0.0
    %2891 = vmatpush1.msra.mxu0 0.0
    %2892 = vmatprep.subr.mxu0 0.0
    %2893 = vmatpush1.msra.mxu0 0.0
    %2894 = vmatprep.subr.mxu0 0.0
    %2895 = vmatpush1.msra.mxu0 0.0
    %2896 = vmatprep.subr.mxu0 0.0
    %2897 = vmatpush1.msra.mxu0 %v2815
    %2898 = vmatprep.subr.mxu0 0.0
    %2899 = vmatpush1.msra.mxu0 %v2814
    %2900 = vmatprep.subr.mxu0 0.0
    %2901 = vmatpush1.msra.mxu0 %v2813
    %2902 = vmatprep.subr.mxu0 0.0
    %2903 = vmatpush1.msra.mxu0 %v2812
    %2904 = vmatprep.subr.mxu0 0.0
    %2905 = vmatpush2.msra.mxu0 0.0
    %2906 = vmatprep.subr.mxu0 0.0
    %2907 = vmatpush2.msra.mxu0 0.0
    %2908 = vmatprep.subr.mxu0 0.0
    %2909 = vmatpush2.msra.mxu0 0.0
    %2910 = vmatprep.subr.mxu0 0.0
    %2911 = vmatpush2.msra.mxu0 0.0
    %2912 = vmatprep.subr.mxu0 0.0
    %2913 = vmatpush2.msra.mxu0 0.0
    %2914 = vmatprep.subr.mxu0 0.0
    %2915 = vmatpush2.msra.mxu0 0.0
    %2916 = vmatprep.subr.mxu0 0.0
    %2917 = vmatpush2.msra.mxu0 0.0
    %2918 = vmatprep.subr.mxu0 0.0
    %2919 = vmatpush2.msra.mxu0 0.0
    %2920 = vmatprep.subr.mxu0 0.0
    %2921 = vmatpush2.msra.mxu0 0.0
    %2922 = vmatprep.subr.mxu0 0.0
    %2923 = vmatpush2.msra.mxu0 0.0
    %2924 = vmatprep.subr.mxu0 0.0
    %2925 = vmatpush2.msra.mxu0 0.0
    %2926 = vmatprep.subr.mxu0 0.0
    %2927 = vmatpush2.msra.mxu0 0.0
    %2928 = vmatprep.subr.mxu0 0.0
    %2929 = vmatpush2.msra.mxu0 0.0
    %2930 = vmatprep.subr.mxu0 0.0
    %2931 = vmatpush2.msra.mxu0 0.0
    %2932 = vmatprep.subr.mxu0 0.0
    %2933 = vmatpush2.msra.mxu0 0.0
    %2934 = vmatprep.subr.mxu0 0.0
    %2935 = vmatpush2.msra.mxu0 0.0
    %2936 = vmatprep.mubr.f32.mxu0 0.0
    %2937 = vmatmul.mubr.f32.gmra.mxu0 %v2825
    %v2938 = vpop.f32.mrf.mxu0
    %v2939 = vadd.f32 %v2821, %v2938
    %v2940 = vpop.f32.mrf.mxu0
    %2941 = vmatprep.mubr.f32.mxu0 0.0
    %2942 = vmatmul.mubr.f32.gmra.mxu0 %v2828
    %v2943 = vpop.f32.mrf.mxu0
    %v2944 = vadd.f32 %v2821, %v2943
    %v2945 = vpop.f32.mrf.mxu0
    %2946 = vmatprep.mubr.f32.mxu0 0.0
    %2947 = vmatmul.mubr.f32.gmra.mxu0 %v2831
    %v2948 = vpop.f32.mrf.mxu0
    %v2949 = vadd.f32 %v2821, %v2948
    %v2950 = vpop.f32.mrf.mxu0
    %2951 = vmatprep.mubr.f32.mxu0 0.0
    %2952 = vmatmul.mubr.f32.gmra.mxu0 %v2834
    %v2953 = vpop.f32.mrf.mxu0
    %v2954 = vadd.f32 %v2821, %v2953
    %v2955 = vpop.f32.mrf.mxu0
    %2956 = vmatprep.mubr.f32.mxu0 0.0
    %2957 = vmatmul.mubr.f32.gmra.mxu0 %v2837
    %v2958 = vpop.f32.mrf.mxu0
    %v2959 = vadd.f32 %v2821, %v2958
    %v2960 = vpop.f32.mrf.mxu0
    %2961 = vmatprep.mubr.f32.mxu0 0.0
    %2962 = vmatmul.mubr.f32.gmra.mxu0 %v2840
    %v2963 = vpop.f32.mrf.mxu0
    %v2964 = vadd.f32 %v2821, %v2963
    %v2965 = vpop.f32.mrf.mxu0
    %2966 = vmatprep.mubr.f32.mxu0 0.0
    %2967 = vmatmul.mubr.f32.gmra.mxu0 %v2843
    %v2968 = vpop.f32.mrf.mxu0
    %v2969 = vadd.f32 %v2821, %v2968
    %v2970 = vpop.f32.mrf.mxu0
    %2971 = vmatprep.mubr.f32.mxu0 0.0
    %2972 = vmatmul.mubr.f32.gmra.mxu0 %v2846
    %v2973 = vpop.f32.mrf.mxu0
    %v2974 = vadd.f32 %v2821, %v2973
    %v2975 = vpop.f32.mrf.mxu0
    %2976 = vmatprep.mubr.f32.mxu0 0.0
    %2977 = vmatmul.mubr.f32.gmra.mxu0 %v2849
    %v2978 = vpop.f32.mrf.mxu0
    %v2979 = vadd.f32 %v2821, %v2978
    %v2980 = vpop.f32.mrf.mxu0
    %2981 = vmatprep.mubr.f32.mxu0 0.0
    %2982 = vmatmul.mubr.f32.gmra.mxu0 %v2852
    %v2983 = vpop.f32.mrf.mxu0
    %v2984 = vadd.f32 %v2821, %v2983
    %v2985 = vpop.f32.mrf.mxu0
    %2986 = vmatprep.mubr.f32.mxu0 0.0
    %2987 = vmatmul.mubr.f32.gmra.mxu0 %v2855
    %v2988 = vpop.f32.mrf.mxu0
    %v2989 = vadd.f32 %v2821, %v2988
    %v2990 = vpop.f32.mrf.mxu0
    %2991 = vmatprep.mubr.f32.mxu0 0.0
    %2992 = vmatmul.mubr.f32.gmra.mxu0 %v2858
    %v2993 = vpop.f32.mrf.mxu0
    %v2994 = vadd.f32 %v2821, %v2993
    %v2995 = vpop.f32.mrf.mxu0
    %2996 = vmatprep.mubr.f32.mxu0 0.0
    %2997 = vmatmul.mubr.f32.gmra.mxu0 %v2861
    %v2998 = vpop.f32.mrf.mxu0
    %v2999 = vadd.f32 %v2821, %v2998
    %v3000 = vpop.f32.mrf.mxu0
    %3001 = vmatprep.mubr.f32.mxu0 0.0
    %3002 = vmatmul.mubr.f32.gmra.mxu0 %v2864
    %v3003 = vpop.f32.mrf.mxu0
    %v3004 = vadd.f32 %v2821, %v3003
    %v3005 = vpop.f32.mrf.mxu0
    %3006 = vmatprep.mubr.f32.mxu0 0.0
    %3007 = vmatmul.mubr.f32.gmra.mxu0 %v2867
    %v3008 = vpop.f32.mrf.mxu0
    %v3009 = vadd.f32 %v2821, %v3008
    %v3010 = vpop.f32.mrf.mxu0
    %3011 = vmatprep.mubr.f32.mxu0 0.0
    %3012 = vmatmul.mubr.f32.gmra.mxu0 %v2870
    %v3013 = vpop.f32.mrf.mxu0
    %v3014 = vadd.f32 %v2821, %v3013
    %v3015 = vpop.f32.mrf.mxu0
    %3016 = vdwg.mxu0
    %v3017 = vtanh.pop %v2939
    %v3018 = vtanh.pop %v2944
    %v3019 = vtanh.pop %v2949
    %v3020 = vtanh.pop %v2954
    %v3021 = vtanh.pop %v2959
    %v3022 = vtanh.pop %v2964
    %v3023 = vtanh.pop %v2969
    %v3024 = vtanh.pop %v2974
    %v3025 = vtanh.pop %v2979
    %v3026 = vtanh.pop %v2984
    %v3027 = vtanh.pop %v2989
    %v3028 = vtanh.pop %v2994
    %v3029 = vtanh.pop %v2999
    %v3030 = vtanh.pop %v3004
    %v3031 = vtanh.pop %v3009
    %v3032 = vtanh.pop %v3014
    %3033 = vst.msk [vmem:[%s19] sm:$0xff] %vm137, %v3017
    %3034 = vst.msk [vmem:[%s19 + $0x8] sm:$0xff] %vm137, %v3018
    %3035 = vst.msk [vmem:[%s19 + $0x10] sm:$0xff] %vm137, %v3019
    %3036 = vst.msk [vmem:[%s19 + $0x18] sm:$0xff] %vm137, %v3020
    %3037 = vst.msk [vmem:[%s19 + $0x20] sm:$0xff] %vm137, %v3021
    %3038 = vst.msk [vmem:[%s19 + $0x28] sm:$0xff] %vm137, %v3022
    %3039 = vst.msk [vmem:[%s19 + $0x30] sm:$0xff] %vm137, %v3023
    %3040 = vst.msk [vmem:[%s19 + $0x38] sm:$0xff] %vm137, %v3024
    %3041 = vst.msk [vmem:[%s19 + $0x100] sm:$0xff] %vm137, %v3025
    %3042 = vst.msk [vmem:[%s19 + $0x108] sm:$0xff] %vm137, %v3026
    %3043 = vst.msk [vmem:[%s19 + $0x110] sm:$0xff] %vm137, %v3027
    %3044 = vst.msk [vmem:[%s19 + $0x118] sm:$0xff] %vm137, %v3028
    %3045 = vst.msk [vmem:[%s19 + $0x120] sm:$0xff] %vm137, %v3029
    %3046 = vst.msk [vmem:[%s19 + $0x128] sm:$0xff] %vm137, %v3030
    %3047 = vst.msk [vmem:[%s19 + $0x130] sm:$0xff] %vm137, %v3031
    %3048 = vst.msk [vmem:[%s19 + $0x138] sm:$0xff] %vm137, %v3032
    %s3049 = scalar_lea.vmem %s11, 128
    %v3050 = vld [vmem:[%s3049] sm:$0xff]
    %v3051 = vld [vmem:[%s3049 + $0x8] sm:$0xff]
    %v3052 = vld [vmem:[%s3049 + $0x10] sm:$0xff]
    %v3053 = vld [vmem:[%s3049 + $0x18] sm:$0xff]
    %v3054 = vld [vmem:[%s3049 + $0x20] sm:$0xff]
    %v3055 = vld [vmem:[%s3049 + $0x28] sm:$0xff]
    %v3056 = vld [vmem:[%s3049 + $0x30] sm:$0xff]
    %v3057 = vld [vmem:[%s3049 + $0x38] sm:$0xff]
    %v3058 = vld [vmem:[%s3049 + $0x40] sm:$0xff]
    %v3059 = vld [vmem:[%s3049 + $0x48] sm:$0xff]
    %v3060 = vld [vmem:[%s3049 + $0x50] sm:$0xff]
    %v3061 = vld [vmem:[%s3049 + $0x58] sm:$0xff]
    %v3062 = vld [vmem:[%s3049 + $0x60] sm:$0xff]
    %v3063 = vld [vmem:[%s3049 + $0x68] sm:$0xff]
    %v3064 = vld [vmem:[%s3049 + $0x70] sm:$0xff]
    %v3065 = vld [vmem:[%s3049 + $0x78] sm:$0xff]
    %s3066 = scalar_lea.vmem %s12, 1
    %v3067 = vld [vmem:[%s3066] sm:$0x1]
    %v3069 = vlaneseq
    %v3070 = vshrl.u32 %v3069, 7
    %v3071 = vsub.s32 0, %v3070
    %v3072 = vrot.slane %v3067, %v3071
    %3074 = vmatprep.subr.mxu0 0.0
    %3075 = vmatpush1.msra.mxu0 %v3065
    %3076 = vmatprep.subr.mxu0 0.0
    %3077 = vmatpush1.msra.mxu0 %v3064
    %3078 = vmatprep.subr.mxu0 0.0
    %3079 = vmatpush1.msra.mxu0 %v3063
    %3080 = vmatprep.subr.mxu0 0.0
    %3081 = vmatpush1.msra.mxu0 %v3062
    %3082 = vmatprep.subr.mxu0 0.0
    %3083 = vmatpush1.msra.mxu0 %v3061
    %3084 = vmatprep.subr.mxu0 0.0
    %3085 = vmatpush1.msra.mxu0 %v3060
    %3086 = vmatprep.subr.mxu0 0.0
    %3087 = vmatpush1.msra.mxu0 %v3059
    %3088 = vmatprep.subr.mxu0 0.0
    %3089 = vmatpush1.msra.mxu0 %v3058
    %3090 = vmatprep.subr.mxu0 0.0
    %3091 = vmatpush1.msra.mxu0 %v3057
    %3092 = vmatprep.subr.mxu0 0.0
    %3093 = vmatpush1.msra.mxu0 %v3056
    %3094 = vmatprep.subr.mxu0 0.0
    %3095 = vmatpush1.msra.mxu0 %v3055
    %3096 = vmatprep.subr.mxu0 0.0
    %3097 = vmatpush1.msra.mxu0 %v3054
    %3098 = vmatprep.subr.mxu0 0.0
    %3099 = vmatpush1.msra.mxu0 %v3053
    %3100 = vmatprep.subr.mxu0 0.0
    %3101 = vmatpush1.msra.mxu0 %v3052
    %3102 = vmatprep.subr.mxu0 0.0
    %3103 = vmatpush1.msra.mxu0 %v3051
    %3104 = vmatprep.subr.mxu0 0.0
    %3105 = vmatpush1.msra.mxu0 %v3050
    %3106 = vmatprep.subr.mxu0 0.0
    %3107 = vmatpush2.msra.mxu0 0.0
    %3108 = vmatprep.subr.mxu0 0.0
    %3109 = vmatpush2.msra.mxu0 0.0
    %3110 = vmatprep.subr.mxu0 0.0
    %3111 = vmatpush2.msra.mxu0 0.0
    %3112 = vmatprep.subr.mxu0 0.0
    %3113 = vmatpush2.msra.mxu0 0.0
    %3114 = vmatprep.subr.mxu0 0.0
    %3115 = vmatpush2.msra.mxu0 0.0
    %3116 = vmatprep.subr.mxu0 0.0
    %3117 = vmatpush2.msra.mxu0 0.0
    %3118 = vmatprep.subr.mxu0 0.0
    %3119 = vmatpush2.msra.mxu0 0.0
    %3120 = vmatprep.subr.mxu0 0.0
    %3121 = vmatpush2.msra.mxu0 0.0
    %3122 = vmatprep.subr.mxu0 0.0
    %3123 = vmatpush2.msra.mxu0 0.0
    %3124 = vmatprep.subr.mxu0 0.0
    %3125 = vmatpush2.msra.mxu0 0.0
    %3126 = vmatprep.subr.mxu0 0.0
    %3127 = vmatpush2.msra.mxu0 0.0
    %3128 = vmatprep.subr.mxu0 0.0
    %3129 = vmatpush2.msra.mxu0 0.0
    %3130 = vmatprep.subr.mxu0 0.0
    %3131 = vmatpush2.msra.mxu0 0.0
    %3132 = vmatprep.subr.mxu0 0.0
    %3133 = vmatpush2.msra.mxu0 0.0
    %3134 = vmatprep.subr.mxu0 0.0
    %3135 = vmatpush2.msra.mxu0 0.0
    %3136 = vmatprep.subr.mxu0 0.0
    %3137 = vmatpush2.msra.mxu0 0.0
    %3138 = vmatprep.mubr.f32.mxu0 0.0
    %3139 = vmatmul.mubr.f32.gmra.mxu0 %v2046
    %v3140 = vpop.f32.mrf.mxu0
    %v3141 = vadd.f32 %v3072, %v3140
    %v3142 = vpop.f32.mrf.mxu0
    %3143 = vdwg.mxu0
    %v3146 = vunpack.c.l.s4 1966171168
    %v3147 = vunpack.c.0.s8 %v3146
    %v3148 = vlaneseq
    %v3149 = vshrl.u32 %v3148, 7
    %v3150 = vsub.s32 %v3147, %v3149
    %v3151 = vrot.slane %v3141, %v3150
    %v3152 = vcombine.high %v3151, %v3151
    %v3154 = vunpack.c.l.s4 1966171168
    %v3155 = vunpack.c.0.s8 %v3154
    %v3156 = vlaneseq
    %v3157 = vshrl.u32 %v3156, 7
    %v3158 = vsub.s32 %v3155, %v3157
    %v3159 = vrot.slane %v3151, %v3158
    %v3161 = vunpack.c.l.s4 1966171168
    %v3162 = vunpack.c.0.s8 %v3161
    %v3163 = vlaneseq
    %v3164 = vshrl.u32 %v3163, 7
    %v3165 = vsub.s32 %v3162, %v3164
    %v3166 = vrot.slane %v3152, %v3165
    %v3167 = vlaneseq
    %v3168 = vshrl.u32 %v3167, 7
    %v3169 = vsub.s32 0, %v3168
    %v3170 = vrot.slane %v3159, %v3169
    %v3171 = vlaneseq
    %v3172 = vshrl.u32 %v3171, 7
    %v3173 = vsub.s32 0, %v3172
    %v3174 = vrot.slane %v3166, %v3173
    %s3177 = scalar_lea.vmem %s1, 128
    %v3178 = vld [vmem:[%s3177] sm:$0xff]
    %v3179 = vld [vmem:[%s3177 + $0x8] sm:$0xff]
    %v3180 = vld [vmem:[%s3177 + $0x10] sm:$0xff]
    %v3181 = vld [vmem:[%s3177 + $0x18] sm:$0xff]
    %v3182 = vld [vmem:[%s3177 + $0x20] sm:$0xff]
    %v3183 = vld [vmem:[%s3177 + $0x28] sm:$0xff]
    %v3184 = vld [vmem:[%s3177 + $0x30] sm:$0xff]
    %v3185 = vld [vmem:[%s3177 + $0x38] sm:$0xff]
    %v3186 = vld [vmem:[%s3177 + $0x40] sm:$0xff]
    %v3187 = vld [vmem:[%s3177 + $0x48] sm:$0xff]
    %v3188 = vld [vmem:[%s3177 + $0x50] sm:$0xff]
    %v3189 = vld [vmem:[%s3177 + $0x58] sm:$0xff]
    %v3190 = vld [vmem:[%s3177 + $0x60] sm:$0xff]
    %v3191 = vld [vmem:[%s3177 + $0x68] sm:$0xff]
    %v3192 = vld [vmem:[%s3177 + $0x70] sm:$0xff]
    %v3193 = vld [vmem:[%s3177 + $0x78] sm:$0xff]
    %s3194 = scalar_lea.vmem %s10, 2
    %v3195 = vld [vmem:[%s3194] sm:$0x3]
    %v3197 = vsel %vm2190, %v3178, 0
    %v3200 = vsel %vm2190, %v3179, 0
    %v3203 = vsel %vm2190, %v3180, 0
    %v3206 = vsel %vm2190, %v3181, 0
    %v3209 = vsel %vm2190, %v3182, 0
    %v3212 = vsel %vm2190, %v3183, 0
    %v3215 = vsel %vm2190, %v3184, 0
    %v3218 = vsel %vm2190, %v3185, 0
    %v3221 = vsel %vm2190, %v3186, 0
    %v3224 = vsel %vm2190, %v3187, 0
    %v3227 = vsel %vm2190, %v3188, 0
    %v3230 = vsel %vm2190, %v3189, 0
    %v3233 = vsel %vm2190, %v3190, 0
    %v3236 = vsel %vm2190, %v3191, 0
    %v3239 = vsel %vm2190, %v3192, 0
    %v3242 = vsel %vm2190, %v3193, 0
    %v3245 = vsel %vm2239, %v3195, 0
    %3247 = vmatprep.subr.mxu0 0.0
    %3248 = vmatpush1.msra.mxu0 0.0
    %3249 = vmatprep.subr.mxu0 0.0
    %3250 = vmatpush1.msra.mxu0 0.0
    %3251 = vmatprep.subr.mxu0 0.0
    %3252 = vmatpush1.msra.mxu0 0.0
    %3253 = vmatprep.subr.mxu0 0.0
    %3254 = vmatpush1.msra.mxu0 0.0
    %3255 = vmatprep.subr.mxu0 0.0
    %3256 = vmatpush1.msra.mxu0 0.0
    %3257 = vmatprep.subr.mxu0 0.0
    %3258 = vmatpush1.msra.mxu0 0.0
    %3259 = vmatprep.subr.mxu0 0.0
    %3260 = vmatpush1.msra.mxu0 0.0
    %3261 = vmatprep.subr.mxu0 0.0
    %3262 = vmatpush1.msra.mxu0 0.0
    %3263 = vmatprep.subr.mxu0 0.0
    %3264 = vmatpush1.msra.mxu0 0.0
    %3265 = vmatprep.subr.mxu0 0.0
    %3266 = vmatpush1.msra.mxu0 0.0
    %3267 = vmatprep.subr.mxu0 0.0
    %3268 = vmatpush1.msra.mxu0 0.0
    %3269 = vmatprep.subr.mxu0 0.0
    %3270 = vmatpush1.msra.mxu0 0.0
    %3271 = vmatprep.subr.mxu0 0.0
    %3272 = vmatpush1.msra.mxu0 0.0
    %3273 = vmatprep.subr.mxu0 0.0
    %3274 = vmatpush1.msra.mxu0 0.0
    %3275 = vmatprep.subr.mxu0 0.0
    %3276 = vmatpush1.msra.mxu0 0.0
    %3277 = vmatprep.subr.mxu0 0.0
    %3278 = vmatpush1.msra.mxu0 %v3245
    %3279 = vmatprep.subr.mxu0 0.0
    %3280 = vmatpush2.msra.mxu0 0.0
    %3281 = vmatprep.subr.mxu0 0.0
    %3282 = vmatpush2.msra.mxu0 0.0
    %3283 = vmatprep.subr.mxu0 0.0
    %3284 = vmatpush2.msra.mxu0 0.0
    %3285 = vmatprep.subr.mxu0 0.0
    %3286 = vmatpush2.msra.mxu0 0.0
    %3287 = vmatprep.subr.mxu0 0.0
    %3288 = vmatpush2.msra.mxu0 0.0
    %3289 = vmatprep.subr.mxu0 0.0
    %3290 = vmatpush2.msra.mxu0 0.0
    %3291 = vmatprep.subr.mxu0 0.0
    %3292 = vmatpush2.msra.mxu0 0.0
    %3293 = vmatprep.subr.mxu0 0.0
    %3294 = vmatpush2.msra.mxu0 0.0
    %3295 = vmatprep.subr.mxu0 0.0
    %3296 = vmatpush2.msra.mxu0 0.0
    %3297 = vmatprep.subr.mxu0 0.0
    %3298 = vmatpush2.msra.mxu0 0.0
    %3299 = vmatprep.subr.mxu0 0.0
    %3300 = vmatpush2.msra.mxu0 0.0
    %3301 = vmatprep.subr.mxu0 0.0
    %3302 = vmatpush2.msra.mxu0 0.0
    %3303 = vmatprep.subr.mxu0 0.0
    %3304 = vmatpush2.msra.mxu0 0.0
    %3305 = vmatprep.subr.mxu0 0.0
    %3306 = vmatpush2.msra.mxu0 0.0
    %3307 = vmatprep.subr.mxu0 0.0
    %3308 = vmatpush2.msra.mxu0 0.0
    %3309 = vmatprep.subr.mxu0 0.0
    %3310 = vmatpush2.msra.mxu0 0.0
    %3311 = vmatprep.mubr.f32.mxu0 0.0
    %3312 = vmatmul.mubr.f32.gmra.mxu0 %v3197
    %v3313 = vpop.f32.mrf.mxu0
    %v3314 = vadd.f32 %v3170, %v3313
    %v3315 = vpop.f32.mrf.mxu0
    %3316 = vmatprep.mubr.f32.mxu0 0.0
    %3317 = vmatmul.mubr.f32.gmra.mxu0 %v3200
    %v3318 = vpop.f32.mrf.mxu0
    %v3319 = vadd.f32 %v3170, %v3318
    %v3320 = vpop.f32.mrf.mxu0
    %3321 = vmatprep.mubr.f32.mxu0 0.0
    %3322 = vmatmul.mubr.f32.gmra.mxu0 %v3203
    %v3323 = vpop.f32.mrf.mxu0
    %v3324 = vadd.f32 %v3170, %v3323
    %v3325 = vpop.f32.mrf.mxu0
    %3326 = vmatprep.mubr.f32.mxu0 0.0
    %3327 = vmatmul.mubr.f32.gmra.mxu0 %v3206
    %v3328 = vpop.f32.mrf.mxu0
    %v3329 = vadd.f32 %v3170, %v3328
    %v3330 = vpop.f32.mrf.mxu0
    %3331 = vmatprep.mubr.f32.mxu0 0.0
    %3332 = vmatmul.mubr.f32.gmra.mxu0 %v3209
    %v3333 = vpop.f32.mrf.mxu0
    %v3334 = vadd.f32 %v3170, %v3333
    %v3335 = vpop.f32.mrf.mxu0
    %3336 = vmatprep.mubr.f32.mxu0 0.0
    %3337 = vmatmul.mubr.f32.gmra.mxu0 %v3212
    %v3338 = vpop.f32.mrf.mxu0
    %v3339 = vadd.f32 %v3170, %v3338
    %v3340 = vpop.f32.mrf.mxu0
    %3341 = vmatprep.mubr.f32.mxu0 0.0
    %3342 = vmatmul.mubr.f32.gmra.mxu0 %v3215
    %v3343 = vpop.f32.mrf.mxu0
    %v3344 = vadd.f32 %v3170, %v3343
    %v3345 = vpop.f32.mrf.mxu0
    %3346 = vmatprep.mubr.f32.mxu0 0.0
    %3347 = vmatmul.mubr.f32.gmra.mxu0 %v3218
    %v3348 = vpop.f32.mrf.mxu0
    %v3349 = vadd.f32 %v3170, %v3348
    %v3350 = vpop.f32.mrf.mxu0
    %3351 = vmatprep.mubr.f32.mxu0 0.0
    %3352 = vmatmul.mubr.f32.gmra.mxu0 %v3221
    %v3353 = vpop.f32.mrf.mxu0
    %v3354 = vadd.f32 %v3174, %v3353
    %v3355 = vpop.f32.mrf.mxu0
    %3356 = vmatprep.mubr.f32.mxu0 0.0
    %3357 = vmatmul.mubr.f32.gmra.mxu0 %v3224
    %v3358 = vpop.f32.mrf.mxu0
    %v3359 = vadd.f32 %v3174, %v3358
    %v3360 = vpop.f32.mrf.mxu0
    %3361 = vmatprep.mubr.f32.mxu0 0.0
    %3362 = vmatmul.mubr.f32.gmra.mxu0 %v3227
    %v3363 = vpop.f32.mrf.mxu0
    %v3364 = vadd.f32 %v3174, %v3363
    %v3365 = vpop.f32.mrf.mxu0
    %3366 = vmatprep.mubr.f32.mxu0 0.0
    %3367 = vmatmul.mubr.f32.gmra.mxu0 %v3230
    %v3368 = vpop.f32.mrf.mxu0
    %v3369 = vadd.f32 %v3174, %v3368
    %v3370 = vpop.f32.mrf.mxu0
    %3371 = vmatprep.mubr.f32.mxu0 0.0
    %3372 = vmatmul.mubr.f32.gmra.mxu0 %v3233
    %v3373 = vpop.f32.mrf.mxu0
    %v3374 = vadd.f32 %v3174, %v3373
    %v3375 = vpop.f32.mrf.mxu0
    %3376 = vmatprep.mubr.f32.mxu0 0.0
    %3377 = vmatmul.mubr.f32.gmra.mxu0 %v3236
    %v3378 = vpop.f32.mrf.mxu0
    %v3379 = vadd.f32 %v3174, %v3378
    %v3380 = vpop.f32.mrf.mxu0
    %3381 = vmatprep.mubr.f32.mxu0 0.0
    %3382 = vmatmul.mubr.f32.gmra.mxu0 %v3239
    %v3383 = vpop.f32.mrf.mxu0
    %v3384 = vadd.f32 %v3174, %v3383
    %v3385 = vpop.f32.mrf.mxu0
    %3386 = vmatprep.mubr.f32.mxu0 0.0
    %3387 = vmatmul.mubr.f32.gmra.mxu0 %v3242
    %v3388 = vpop.f32.mrf.mxu0
    %v3389 = vadd.f32 %v3174, %v3388
    %v3390 = vpop.f32.mrf.mxu0
    %3391 = vdwg.mxu0
    %v3392 = vmax.f32 %v3314, 0.0
    %v3393 = vmax.f32 %v3319, 0.0
    %v3394 = vmax.f32 %v3324, 0.0
    %v3395 = vmax.f32 %v3329, 0.0
    %v3396 = vmax.f32 %v3334, 0.0
    %v3397 = vmax.f32 %v3339, 0.0
    %v3398 = vmax.f32 %v3344, 0.0
    %v3399 = vmax.f32 %v3349, 0.0
    %v3400 = vmax.f32 %v3354, 0.0
    %v3401 = vmax.f32 %v3359, 0.0
    %v3402 = vmax.f32 %v3364, 0.0
    %v3403 = vmax.f32 %v3369, 0.0
    %v3404 = vmax.f32 %v3374, 0.0
    %v3405 = vmax.f32 %v3379, 0.0
    %v3406 = vmax.f32 %v3384, 0.0
    %v3407 = vmax.f32 %v3389, 0.0
    %s3408 = scalar_lea.vmem %s13, 128
    %v3409 = vld [vmem:[%s3408] sm:$0xff]
    %v3410 = vld [vmem:[%s3408 + $0x8] sm:$0xff]
    %v3411 = vld [vmem:[%s3408 + $0x10] sm:$0xff]
    %v3412 = vld [vmem:[%s3408 + $0x18] sm:$0xff]
    %v3413 = vld [vmem:[%s3408 + $0x20] sm:$0xff]
    %v3414 = vld [vmem:[%s3408 + $0x28] sm:$0xff]
    %v3415 = vld [vmem:[%s3408 + $0x30] sm:$0xff]
    %v3416 = vld [vmem:[%s3408 + $0x38] sm:$0xff]
    %v3417 = vld [vmem:[%s3408 + $0x40] sm:$0xff]
    %v3418 = vld [vmem:[%s3408 + $0x48] sm:$0xff]
    %v3419 = vld [vmem:[%s3408 + $0x50] sm:$0xff]
    %v3420 = vld [vmem:[%s3408 + $0x58] sm:$0xff]
    %v3421 = vld [vmem:[%s3408 + $0x60] sm:$0xff]
    %v3422 = vld [vmem:[%s3408 + $0x68] sm:$0xff]
    %v3423 = vld [vmem:[%s3408 + $0x70] sm:$0xff]
    %v3424 = vld [vmem:[%s3408 + $0x78] sm:$0xff]
    %s3425 = scalar_lea.vmem %s14, 1
    %v3426 = vld [vmem:[%s3425] sm:$0x1]
    %v3428 = vlaneseq
    %v3429 = vshrl.u32 %v3428, 7
    %v3430 = vsub.s32 0, %v3429
    %v3431 = vrot.slane %v3426, %v3430
    %3433 = vmatprep.subr.mxu0 0.0
    %3434 = vmatpush1.msra.mxu0 %v3424
    %3435 = vmatprep.subr.mxu0 0.0
    %3436 = vmatpush1.msra.mxu0 %v3423
    %3437 = vmatprep.subr.mxu0 0.0
    %3438 = vmatpush1.msra.mxu0 %v3422
    %3439 = vmatprep.subr.mxu0 0.0
    %3440 = vmatpush1.msra.mxu0 %v3421
    %3441 = vmatprep.subr.mxu0 0.0
    %3442 = vmatpush1.msra.mxu0 %v3420
    %3443 = vmatprep.subr.mxu0 0.0
    %3444 = vmatpush1.msra.mxu0 %v3419
    %3445 = vmatprep.subr.mxu0 0.0
    %3446 = vmatpush1.msra.mxu0 %v3418
    %3447 = vmatprep.subr.mxu0 0.0
    %3448 = vmatpush1.msra.mxu0 %v3417
    %3449 = vmatprep.subr.mxu0 0.0
    %3450 = vmatpush1.msra.mxu0 %v3416
    %3451 = vmatprep.subr.mxu0 0.0
    %3452 = vmatpush1.msra.mxu0 %v3415
    %3453 = vmatprep.subr.mxu0 0.0
    %3454 = vmatpush1.msra.mxu0 %v3414
    %3455 = vmatprep.subr.mxu0 0.0
    %3456 = vmatpush1.msra.mxu0 %v3413
    %3457 = vmatprep.subr.mxu0 0.0
    %3458 = vmatpush1.msra.mxu0 %v3412
    %3459 = vmatprep.subr.mxu0 0.0
    %3460 = vmatpush1.msra.mxu0 %v3411
    %3461 = vmatprep.subr.mxu0 0.0
    %3462 = vmatpush1.msra.mxu0 %v3410
    %3463 = vmatprep.subr.mxu0 0.0
    %3464 = vmatpush1.msra.mxu0 %v3409
    %3465 = vmatprep.subr.mxu0 0.0
    %3466 = vmatpush2.msra.mxu0 0.0
    %3467 = vmatprep.subr.mxu0 0.0
    %3468 = vmatpush2.msra.mxu0 0.0
    %3469 = vmatprep.subr.mxu0 0.0
    %3470 = vmatpush2.msra.mxu0 0.0
    %3471 = vmatprep.subr.mxu0 0.0
    %3472 = vmatpush2.msra.mxu0 0.0
    %3473 = vmatprep.subr.mxu0 0.0
    %3474 = vmatpush2.msra.mxu0 0.0
    %3475 = vmatprep.subr.mxu0 0.0
    %3476 = vmatpush2.msra.mxu0 0.0
    %3477 = vmatprep.subr.mxu0 0.0
    %3478 = vmatpush2.msra.mxu0 0.0
    %3479 = vmatprep.subr.mxu0 0.0
    %3480 = vmatpush2.msra.mxu0 0.0
    %3481 = vmatprep.subr.mxu0 0.0
    %3482 = vmatpush2.msra.mxu0 0.0
    %3483 = vmatprep.subr.mxu0 0.0
    %3484 = vmatpush2.msra.mxu0 0.0
    %3485 = vmatprep.subr.mxu0 0.0
    %3486 = vmatpush2.msra.mxu0 0.0
    %3487 = vmatprep.subr.mxu0 0.0
    %3488 = vmatpush2.msra.mxu0 0.0
    %3489 = vmatprep.subr.mxu0 0.0
    %3490 = vmatpush2.msra.mxu0 0.0
    %3491 = vmatprep.subr.mxu0 0.0
    %3492 = vmatpush2.msra.mxu0 0.0
    %3493 = vmatprep.subr.mxu0 0.0
    %3494 = vmatpush2.msra.mxu0 0.0
    %3495 = vmatprep.subr.mxu0 0.0
    %3496 = vmatpush2.msra.mxu0 0.0
    %3497 = vmatprep.mubr.f32.mxu0 0.0
    %3498 = vmatmul.mubr.f32.gmra.mxu0 %v3392
    %v3499 = vpop.f32.mrf.mxu0
    %v3500 = vadd.f32 %v3431, %v3499
    %v3501 = vpop.f32.mrf.mxu0
    %3502 = vmatprep.mubr.f32.mxu0 0.0
    %3503 = vmatmul.mubr.f32.gmra.mxu0 %v3393
    %v3504 = vpop.f32.mrf.mxu0
    %v3505 = vadd.f32 %v3431, %v3504
    %v3506 = vpop.f32.mrf.mxu0
    %3507 = vmatprep.mubr.f32.mxu0 0.0
    %3508 = vmatmul.mubr.f32.gmra.mxu0 %v3394
    %v3509 = vpop.f32.mrf.mxu0
    %v3510 = vadd.f32 %v3431, %v3509
    %v3511 = vpop.f32.mrf.mxu0
    %3512 = vmatprep.mubr.f32.mxu0 0.0
    %3513 = vmatmul.mubr.f32.gmra.mxu0 %v3395
    %v3514 = vpop.f32.mrf.mxu0
    %v3515 = vadd.f32 %v3431, %v3514
    %v3516 = vpop.f32.mrf.mxu0
    %3517 = vmatprep.mubr.f32.mxu0 0.0
    %3518 = vmatmul.mubr.f32.gmra.mxu0 %v3396
    %v3519 = vpop.f32.mrf.mxu0
    %v3520 = vadd.f32 %v3431, %v3519
    %v3521 = vpop.f32.mrf.mxu0
    %3522 = vmatprep.mubr.f32.mxu0 0.0
    %3523 = vmatmul.mubr.f32.gmra.mxu0 %v3397
    %v3524 = vpop.f32.mrf.mxu0
    %v3525 = vadd.f32 %v3431, %v3524
    %v3526 = vpop.f32.mrf.mxu0
    %3527 = vmatprep.mubr.f32.mxu0 0.0
    %3528 = vmatmul.mubr.f32.gmra.mxu0 %v3398
    %v3529 = vpop.f32.mrf.mxu0
    %v3530 = vadd.f32 %v3431, %v3529
    %v3531 = vpop.f32.mrf.mxu0
    %3532 = vmatprep.mubr.f32.mxu0 0.0
    %3533 = vmatmul.mubr.f32.gmra.mxu0 %v3399
    %v3534 = vpop.f32.mrf.mxu0
    %v3535 = vadd.f32 %v3431, %v3534
    %v3536 = vpop.f32.mrf.mxu0
    %3537 = vmatprep.mubr.f32.mxu0 0.0
    %3538 = vmatmul.mubr.f32.gmra.mxu0 %v3400
    %v3539 = vpop.f32.mrf.mxu0
    %v3540 = vadd.f32 %v3431, %v3539
    %v3541 = vpop.f32.mrf.mxu0
    %3542 = vmatprep.mubr.f32.mxu0 0.0
    %3543 = vmatmul.mubr.f32.gmra.mxu0 %v3401
    %v3544 = vpop.f32.mrf.mxu0
    %v3545 = vadd.f32 %v3431, %v3544
    %v3546 = vpop.f32.mrf.mxu0
    %3547 = vmatprep.mubr.f32.mxu0 0.0
    %3548 = vmatmul.mubr.f32.gmra.mxu0 %v3402
    %v3549 = vpop.f32.mrf.mxu0
    %v3550 = vadd.f32 %v3431, %v3549
    %v3551 = vpop.f32.mrf.mxu0
    %3552 = vmatprep.mubr.f32.mxu0 0.0
    %3553 = vmatmul.mubr.f32.gmra.mxu0 %v3403
    %v3554 = vpop.f32.mrf.mxu0
    %v3555 = vadd.f32 %v3431, %v3554
    %v3556 = vpop.f32.mrf.mxu0
    %3557 = vmatprep.mubr.f32.mxu0 0.0
    %3558 = vmatmul.mubr.f32.gmra.mxu0 %v3404
    %v3559 = vpop.f32.mrf.mxu0
    %v3560 = vadd.f32 %v3431, %v3559
    %v3561 = vpop.f32.mrf.mxu0
    %3562 = vmatprep.mubr.f32.mxu0 0.0
    %3563 = vmatmul.mubr.f32.gmra.mxu0 %v3405
    %v3564 = vpop.f32.mrf.mxu0
    %v3565 = vadd.f32 %v3431, %v3564
    %v3566 = vpop.f32.mrf.mxu0
    %3567 = vmatprep.mubr.f32.mxu0 0.0
    %3568 = vmatmul.mubr.f32.gmra.mxu0 %v3406
    %v3569 = vpop.f32.mrf.mxu0
    %v3570 = vadd.f32 %v3431, %v3569
    %v3571 = vpop.f32.mrf.mxu0
    %3572 = vmatprep.mubr.f32.mxu0 0.0
    %3573 = vmatmul.mubr.f32.gmra.mxu0 %v3407
    %v3574 = vpop.f32.mrf.mxu0
    %v3575 = vadd.f32 %v3431, %v3574
    %v3576 = vpop.f32.mrf.mxu0
    %3577 = vdwg.mxu0
    %v3578 = vmax.f32 %v3500, 0.0
    %v3579 = vmax.f32 %v3505, 0.0
    %v3580 = vmax.f32 %v3510, 0.0
    %v3581 = vmax.f32 %v3515, 0.0
    %v3582 = vmax.f32 %v3520, 0.0
    %v3583 = vmax.f32 %v3525, 0.0
    %v3584 = vmax.f32 %v3530, 0.0
    %v3585 = vmax.f32 %v3535, 0.0
    %v3586 = vmax.f32 %v3540, 0.0
    %v3587 = vmax.f32 %v3545, 0.0
    %v3588 = vmax.f32 %v3550, 0.0
    %v3589 = vmax.f32 %v3555, 0.0
    %v3590 = vmax.f32 %v3560, 0.0
    %v3591 = vmax.f32 %v3565, 0.0
    %v3592 = vmax.f32 %v3570, 0.0
    %v3593 = vmax.f32 %v3575, 0.0
    %s3594 = scalar_lea.vmem %s15, 64
    %v3595 = vld [vmem:[%s3594] sm:$0xff]
    %v3596 = vld [vmem:[%s3594 + $0x8] sm:$0xff]
    %v3597 = vld [vmem:[%s3594 + $0x10] sm:$0xff]
    %v3598 = vld [vmem:[%s3594 + $0x18] sm:$0xff]
    %v3599 = vld [vmem:[%s3594 + $0x20] sm:$0xff]
    %v3600 = vld [vmem:[%s3594 + $0x28] sm:$0xff]
    %v3601 = vld [vmem:[%s3594 + $0x30] sm:$0xff]
    %v3602 = vld [vmem:[%s3594 + $0x38] sm:$0xff]
    %s3603 = scalar_lea.vmem %s16, 1
    %v3604 = vld [vmem:[%s3603] sm:$0x1]
    %v3606 = vlaneseq
    %v3607 = vshrl.u32 %v3606, 7
    %v3608 = vsub.s32 0, %v3607
    %v3609 = vrot.slane %v3604, %v3608
    %v3612 = vsel %vm366, %v3578, 0
    %v3615 = vsel %vm366, %v3579, 0
    %v3618 = vsel %vm366, %v3580, 0
    %v3621 = vsel %vm366, %v3581, 0
    %v3624 = vsel %vm366, %v3582, 0
    %v3627 = vsel %vm366, %v3583, 0
    %v3630 = vsel %vm366, %v3584, 0
    %v3633 = vsel %vm366, %v3585, 0
    %v3636 = vsel %vm366, %v3586, 0
    %v3639 = vsel %vm366, %v3587, 0
    %v3642 = vsel %vm366, %v3588, 0
    %v3645 = vsel %vm366, %v3589, 0
    %v3648 = vsel %vm366, %v3590, 0
    %v3651 = vsel %vm366, %v3591, 0
    %v3654 = vsel %vm366, %v3592, 0
    %v3657 = vsel %vm366, %v3593, 0
    %3659 = vmatprep.subr.mxu0 0.0
    %3660 = vmatpush1.msra.mxu0 0.0
    %3661 = vmatprep.subr.mxu0 0.0
    %3662 = vmatpush1.msra.mxu0 0.0
    %3663 = vmatprep.subr.mxu0 0.0
    %3664 = vmatpush1.msra.mxu0 0.0
    %3665 = vmatprep.subr.mxu0 0.0
    %3666 = vmatpush1.msra.mxu0 0.0
    %3667 = vmatprep.subr.mxu0 0.0
    %3668 = vmatpush1.msra.mxu0 0.0
    %3669 = vmatprep.subr.mxu0 0.0
    %3670 = vmatpush1.msra.mxu0 0.0
    %3671 = vmatprep.subr.mxu0 0.0
    %3672 = vmatpush1.msra.mxu0 0.0
    %3673 = vmatprep.subr.mxu0 0.0
    %3674 = vmatpush1.msra.mxu0 0.0
    %3675 = vmatprep.subr.mxu0 0.0
    %3676 = vmatpush1.msra.mxu0 %v3602
    %3677 = vmatprep.subr.mxu0 0.0
    %3678 = vmatpush1.msra.mxu0 %v3601
    %3679 = vmatprep.subr.mxu0 0.0
    %3680 = vmatpush1.msra.mxu0 %v3600
    %3681 = vmatprep.subr.mxu0 0.0
    %3682 = vmatpush1.msra.mxu0 %v3599
    %3683 = vmatprep.subr.mxu0 0.0
    %3684 = vmatpush1.msra.mxu0 %v3598
    %3685 = vmatprep.subr.mxu0 0.0
    %3686 = vmatpush1.msra.mxu0 %v3597
    %3687 = vmatprep.subr.mxu0 0.0
    %3688 = vmatpush1.msra.mxu0 %v3596
    %3689 = vmatprep.subr.mxu0 0.0
    %3690 = vmatpush1.msra.mxu0 %v3595
    %3691 = vmatprep.subr.mxu0 0.0
    %3692 = vmatpush2.msra.mxu0 0.0
    %3693 = vmatprep.subr.mxu0 0.0
    %3694 = vmatpush2.msra.mxu0 0.0
    %3695 = vmatprep.subr.mxu0 0.0
    %3696 = vmatpush2.msra.mxu0 0.0
    %3697 = vmatprep.subr.mxu0 0.0
    %3698 = vmatpush2.msra.mxu0 0.0
    %3699 = vmatprep.subr.mxu0 0.0
    %3700 = vmatpush2.msra.mxu0 0.0
    %3701 = vmatprep.subr.mxu0 0.0
    %3702 = vmatpush2.msra.mxu0 0.0
    %3703 = vmatprep.subr.mxu0 0.0
    %3704 = vmatpush2.msra.mxu0 0.0
    %3705 = vmatprep.subr.mxu0 0.0
    %3706 = vmatpush2.msra.mxu0 0.0
    %3707 = vmatprep.subr.mxu0 0.0
    %3708 = vmatpush2.msra.mxu0 0.0
    %3709 = vmatprep.subr.mxu0 0.0
    %3710 = vmatpush2.msra.mxu0 0.0
    %3711 = vmatprep.subr.mxu0 0.0
    %3712 = vmatpush2.msra.mxu0 0.0
    %3713 = vmatprep.subr.mxu0 0.0
    %3714 = vmatpush2.msra.mxu0 0.0
    %3715 = vmatprep.subr.mxu0 0.0
    %3716 = vmatpush2.msra.mxu0 0.0
    %3717 = vmatprep.subr.mxu0 0.0
    %3718 = vmatpush2.msra.mxu0 0.0
    %3719 = vmatprep.subr.mxu0 0.0
    %3720 = vmatpush2.msra.mxu0 0.0
    %3721 = vmatprep.subr.mxu0 0.0
    %3722 = vmatpush2.msra.mxu0 0.0
    %3723 = vmatprep.mubr.f32.mxu0 0.0
    %3724 = vmatmul.mubr.f32.gmra.mxu0 %v3612
    %v3725 = vpop.f32.mrf.mxu0
    %v3726 = vadd.f32 %v3609, %v3725
    %v3727 = vpop.f32.mrf.mxu0
    %3728 = vmatprep.mubr.f32.mxu0 0.0
    %3729 = vmatmul.mubr.f32.gmra.mxu0 %v3615
    %v3730 = vpop.f32.mrf.mxu0
    %v3731 = vadd.f32 %v3609, %v3730
    %v3732 = vpop.f32.mrf.mxu0
    %3733 = vmatprep.mubr.f32.mxu0 0.0
    %3734 = vmatmul.mubr.f32.gmra.mxu0 %v3618
    %v3735 = vpop.f32.mrf.mxu0
    %v3736 = vadd.f32 %v3609, %v3735
    %v3737 = vpop.f32.mrf.mxu0
    %3738 = vmatprep.mubr.f32.mxu0 0.0
    %3739 = vmatmul.mubr.f32.gmra.mxu0 %v3621
    %v3740 = vpop.f32.mrf.mxu0
    %v3741 = vadd.f32 %v3609, %v3740
    %v3742 = vpop.f32.mrf.mxu0
    %3743 = vmatprep.mubr.f32.mxu0 0.0
    %3744 = vmatmul.mubr.f32.gmra.mxu0 %v3624
    %v3745 = vpop.f32.mrf.mxu0
    %v3746 = vadd.f32 %v3609, %v3745
    %v3747 = vpop.f32.mrf.mxu0
    %3748 = vmatprep.mubr.f32.mxu0 0.0
    %3749 = vmatmul.mubr.f32.gmra.mxu0 %v3627
    %v3750 = vpop.f32.mrf.mxu0
    %v3751 = vadd.f32 %v3609, %v3750
    %v3752 = vpop.f32.mrf.mxu0
    %3753 = vmatprep.mubr.f32.mxu0 0.0
    %3754 = vmatmul.mubr.f32.gmra.mxu0 %v3630
    %v3755 = vpop.f32.mrf.mxu0
    %v3756 = vadd.f32 %v3609, %v3755
    %v3757 = vpop.f32.mrf.mxu0
    %3758 = vmatprep.mubr.f32.mxu0 0.0
    %3759 = vmatmul.mubr.f32.gmra.mxu0 %v3633
    %v3760 = vpop.f32.mrf.mxu0
    %v3761 = vadd.f32 %v3609, %v3760
    %v3762 = vpop.f32.mrf.mxu0
    %3763 = vmatprep.mubr.f32.mxu0 0.0
    %3764 = vmatmul.mubr.f32.gmra.mxu0 %v3636
    %v3765 = vpop.f32.mrf.mxu0
    %v3766 = vadd.f32 %v3609, %v3765
    %v3767 = vpop.f32.mrf.mxu0
    %3768 = vmatprep.mubr.f32.mxu0 0.0
    %3769 = vmatmul.mubr.f32.gmra.mxu0 %v3639
    %v3770 = vpop.f32.mrf.mxu0
    %v3771 = vadd.f32 %v3609, %v3770
    %v3772 = vpop.f32.mrf.mxu0
    %3773 = vmatprep.mubr.f32.mxu0 0.0
    %3774 = vmatmul.mubr.f32.gmra.mxu0 %v3642
    %v3775 = vpop.f32.mrf.mxu0
    %v3776 = vadd.f32 %v3609, %v3775
    %v3777 = vpop.f32.mrf.mxu0
    %3778 = vmatprep.mubr.f32.mxu0 0.0
    %3779 = vmatmul.mubr.f32.gmra.mxu0 %v3645
    %v3780 = vpop.f32.mrf.mxu0
    %v3781 = vadd.f32 %v3609, %v3780
    %v3782 = vpop.f32.mrf.mxu0
    %3783 = vmatprep.mubr.f32.mxu0 0.0
    %3784 = vmatmul.mubr.f32.gmra.mxu0 %v3648
    %v3785 = vpop.f32.mrf.mxu0
    %v3786 = vadd.f32 %v3609, %v3785
    %v3787 = vpop.f32.mrf.mxu0
    %3788 = vmatprep.mubr.f32.mxu0 0.0
    %3789 = vmatmul.mubr.f32.gmra.mxu0 %v3651
    %v3790 = vpop.f32.mrf.mxu0
    %v3791 = vadd.f32 %v3609, %v3790
    %v3792 = vpop.f32.mrf.mxu0
    %3793 = vmatprep.mubr.f32.mxu0 0.0
    %3794 = vmatmul.mubr.f32.gmra.mxu0 %v3654
    %v3795 = vpop.f32.mrf.mxu0
    %v3796 = vadd.f32 %v3609, %v3795
    %v3797 = vpop.f32.mrf.mxu0
    %3798 = vmatprep.mubr.f32.mxu0 0.0
    %3799 = vmatmul.mubr.f32.gmra.mxu0 %v3657
    %v3800 = vpop.f32.mrf.mxu0
    %v3801 = vadd.f32 %v3609, %v3800
    %v3802 = vpop.f32.mrf.mxu0
    %3803 = vdwg.mxu0
    %v3804 = vmax.f32 %v3726, 0.0
    %v3805 = vmax.f32 %v3731, 0.0
    %v3806 = vmax.f32 %v3736, 0.0
    %v3807 = vmax.f32 %v3741, 0.0
    %v3808 = vmax.f32 %v3746, 0.0
    %v3809 = vmax.f32 %v3751, 0.0
    %v3810 = vmax.f32 %v3756, 0.0
    %v3811 = vmax.f32 %v3761, 0.0
    %v3812 = vmax.f32 %v3766, 0.0
    %v3813 = vmax.f32 %v3771, 0.0
    %v3814 = vmax.f32 %v3776, 0.0
    %v3815 = vmax.f32 %v3781, 0.0
    %v3816 = vmax.f32 %v3786, 0.0
    %v3817 = vmax.f32 %v3791, 0.0
    %v3818 = vmax.f32 %v3796, 0.0
    %v3819 = vmax.f32 %v3801, 0.0
    %s3820 = scalar_lea.vmem %s17, 32
    %v3821 = vld [vmem:[%s3820] sm:$0xff]
    %v3822 = vld [vmem:[%s3820 + $0x8] sm:$0xff]
    %v3823 = vld [vmem:[%s3820 + $0x10] sm:$0xff]
    %v3824 = vld [vmem:[%s3820 + $0x18] sm:$0xff]
    %s3825 = scalar_lea.vmem %s18, 1
    %v3826 = vld [vmem:[%s3825] sm:$0x1]
    %v3828 = vlaneseq
    %v3829 = vshrl.u32 %v3828, 7
    %v3830 = vsub.s32 0, %v3829
    %v3831 = vrot.slane %v3826, %v3830
    %v3834 = vsel %vm2823, %v3804, 0
    %v3837 = vsel %vm2823, %v3805, 0
    %v3840 = vsel %vm2823, %v3806, 0
    %v3843 = vsel %vm2823, %v3807, 0
    %v3846 = vsel %vm2823, %v3808, 0
    %v3849 = vsel %vm2823, %v3809, 0
    %v3852 = vsel %vm2823, %v3810, 0
    %v3855 = vsel %vm2823, %v3811, 0
    %v3858 = vsel %vm2823, %v3812, 0
    %v3861 = vsel %vm2823, %v3813, 0
    %v3864 = vsel %vm2823, %v3814, 0
    %v3867 = vsel %vm2823, %v3815, 0
    %v3870 = vsel %vm2823, %v3816, 0
    %v3873 = vsel %vm2823, %v3817, 0
    %v3876 = vsel %vm2823, %v3818, 0
    %v3879 = vsel %vm2823, %v3819, 0
    %3881 = vmatprep.subr.mxu0 0.0
    %3882 = vmatpush1.msra.mxu0 0.0
    %3883 = vmatprep.subr.mxu0 0.0
    %3884 = vmatpush1.msra.mxu0 0.0
    %3885 = vmatprep.subr.mxu0 0.0
    %3886 = vmatpush1.msra.mxu0 0.0
    %3887 = vmatprep.subr.mxu0 0.0
    %3888 = vmatpush1.msra.mxu0 0.0
    %3889 = vmatprep.subr.mxu0 0.0
    %3890 = vmatpush1.msra.mxu0 0.0
    %3891 = vmatprep.subr.mxu0 0.0
    %3892 = vmatpush1.msra.mxu0 0.0
    %3893 = vmatprep.subr.mxu0 0.0
    %3894 = vmatpush1.msra.mxu0 0.0
    %3895 = vmatprep.subr.mxu0 0.0
    %3896 = vmatpush1.msra.mxu0 0.0
    %3897 = vmatprep.subr.mxu0 0.0
    %3898 = vmatpush1.msra.mxu0 0.0
    %3899 = vmatprep.subr.mxu0 0.0
    %3900 = vmatpush1.msra.mxu0 0.0
    %3901 = vmatprep.subr.mxu0 0.0
    %3902 = vmatpush1.msra.mxu0 0.0
    %3903 = vmatprep.subr.mxu0 0.0
    %3904 = vmatpush1.msra.mxu0 0.0
    %3905 = vmatprep.subr.mxu0 0.0
    %3906 = vmatpush1.msra.mxu0 %v3824
    %3907 = vmatprep.subr.mxu0 0.0
    %3908 = vmatpush1.msra.mxu0 %v3823
    %3909 = vmatprep.subr.mxu0 0.0
    %3910 = vmatpush1.msra.mxu0 %v3822
    %3911 = vmatprep.subr.mxu0 0.0
    %3912 = vmatpush1.msra.mxu0 %v3821
    %3913 = vmatprep.subr.mxu0 0.0
    %3914 = vmatpush2.msra.mxu0 0.0
    %3915 = vmatprep.subr.mxu0 0.0
    %3916 = vmatpush2.msra.mxu0 0.0
    %3917 = vmatprep.subr.mxu0 0.0
    %3918 = vmatpush2.msra.mxu0 0.0
    %3919 = vmatprep.subr.mxu0 0.0
    %3920 = vmatpush2.msra.mxu0 0.0
    %3921 = vmatprep.subr.mxu0 0.0
    %3922 = vmatpush2.msra.mxu0 0.0
    %3923 = vmatprep.subr.mxu0 0.0
    %3924 = vmatpush2.msra.mxu0 0.0
    %3925 = vmatprep.subr.mxu0 0.0
    %3926 = vmatpush2.msra.mxu0 0.0
    %3927 = vmatprep.subr.mxu0 0.0
    %3928 = vmatpush2.msra.mxu0 0.0
    %3929 = vmatprep.subr.mxu0 0.0
    %3930 = vmatpush2.msra.mxu0 0.0
    %3931 = vmatprep.subr.mxu0 0.0
    %3932 = vmatpush2.msra.mxu0 0.0
    %3933 = vmatprep.subr.mxu0 0.0
    %3934 = vmatpush2.msra.mxu0 0.0
    %3935 = vmatprep.subr.mxu0 0.0
    %3936 = vmatpush2.msra.mxu0 0.0
    %3937 = vmatprep.subr.mxu0 0.0
    %3938 = vmatpush2.msra.mxu0 0.0
    %3939 = vmatprep.subr.mxu0 0.0
    %3940 = vmatpush2.msra.mxu0 0.0
    %3941 = vmatprep.subr.mxu0 0.0
    %3942 = vmatpush2.msra.mxu0 0.0
    %3943 = vmatprep.subr.mxu0 0.0
    %3944 = vmatpush2.msra.mxu0 0.0
    %3945 = vmatprep.mubr.f32.mxu0 0.0
    %3946 = vmatmul.mubr.f32.gmra.mxu0 %v3834
    %v3947 = vpop.f32.mrf.mxu0
    %v3948 = vadd.f32 %v3831, %v3947
    %v3949 = vpop.f32.mrf.mxu0
    %3950 = vmatprep.mubr.f32.mxu0 0.0
    %3951 = vmatmul.mubr.f32.gmra.mxu0 %v3837
    %v3952 = vpop.f32.mrf.mxu0
    %v3953 = vadd.f32 %v3831, %v3952
    %v3954 = vpop.f32.mrf.mxu0
    %3955 = vmatprep.mubr.f32.mxu0 0.0
    %3956 = vmatmul.mubr.f32.gmra.mxu0 %v3840
    %v3957 = vpop.f32.mrf.mxu0
    %v3958 = vadd.f32 %v3831, %v3957
    %v3959 = vpop.f32.mrf.mxu0
    %3960 = vmatprep.mubr.f32.mxu0 0.0
    %3961 = vmatmul.mubr.f32.gmra.mxu0 %v3843
    %v3962 = vpop.f32.mrf.mxu0
    %v3963 = vadd.f32 %v3831, %v3962
    %v3964 = vpop.f32.mrf.mxu0
    %3965 = vmatprep.mubr.f32.mxu0 0.0
    %3966 = vmatmul.mubr.f32.gmra.mxu0 %v3846
    %v3967 = vpop.f32.mrf.mxu0
    %v3968 = vadd.f32 %v3831, %v3967
    %v3969 = vpop.f32.mrf.mxu0
    %3970 = vmatprep.mubr.f32.mxu0 0.0
    %3971 = vmatmul.mubr.f32.gmra.mxu0 %v3849
    %v3972 = vpop.f32.mrf.mxu0
    %v3973 = vadd.f32 %v3831, %v3972
    %v3974 = vpop.f32.mrf.mxu0
    %3975 = vmatprep.mubr.f32.mxu0 0.0
    %3976 = vmatmul.mubr.f32.gmra.mxu0 %v3852
    %v3977 = vpop.f32.mrf.mxu0
    %v3978 = vadd.f32 %v3831, %v3977
    %v3979 = vpop.f32.mrf.mxu0
    %3980 = vmatprep.mubr.f32.mxu0 0.0
    %3981 = vmatmul.mubr.f32.gmra.mxu0 %v3855
    %v3982 = vpop.f32.mrf.mxu0
    %v3983 = vadd.f32 %v3831, %v3982
    %v3984 = vpop.f32.mrf.mxu0
    %3985 = vmatprep.mubr.f32.mxu0 0.0
    %3986 = vmatmul.mubr.f32.gmra.mxu0 %v3858
    %v3987 = vpop.f32.mrf.mxu0
    %v3988 = vadd.f32 %v3831, %v3987
    %v3989 = vpop.f32.mrf.mxu0
    %3990 = vmatprep.mubr.f32.mxu0 0.0
    %3991 = vmatmul.mubr.f32.gmra.mxu0 %v3861
    %v3992 = vpop.f32.mrf.mxu0
    %v3993 = vadd.f32 %v3831, %v3992
    %v3994 = vpop.f32.mrf.mxu0
    %3995 = vmatprep.mubr.f32.mxu0 0.0
    %3996 = vmatmul.mubr.f32.gmra.mxu0 %v3864
    %v3997 = vpop.f32.mrf.mxu0
    %v3998 = vadd.f32 %v3831, %v3997
    %v3999 = vpop.f32.mrf.mxu0
    %4000 = vmatprep.mubr.f32.mxu0 0.0
    %4001 = vmatmul.mubr.f32.gmra.mxu0 %v3867
    %v4002 = vpop.f32.mrf.mxu0
    %v4003 = vadd.f32 %v3831, %v4002
    %v4004 = vpop.f32.mrf.mxu0
    %4005 = vmatprep.mubr.f32.mxu0 0.0
    %4006 = vmatmul.mubr.f32.gmra.mxu0 %v3870
    %v4007 = vpop.f32.mrf.mxu0
    %v4008 = vadd.f32 %v3831, %v4007
    %v4009 = vpop.f32.mrf.mxu0
    %4010 = vmatprep.mubr.f32.mxu0 0.0
    %4011 = vmatmul.mubr.f32.gmra.mxu0 %v3873
    %v4012 = vpop.f32.mrf.mxu0
    %v4013 = vadd.f32 %v3831, %v4012
    %v4014 = vpop.f32.mrf.mxu0
    %4015 = vmatprep.mubr.f32.mxu0 0.0
    %4016 = vmatmul.mubr.f32.gmra.mxu0 %v3876
    %v4017 = vpop.f32.mrf.mxu0
    %v4018 = vadd.f32 %v3831, %v4017
    %v4019 = vpop.f32.mrf.mxu0
    %4020 = vmatprep.mubr.f32.mxu0 0.0
    %4021 = vmatmul.mubr.f32.gmra.mxu0 %v3879
    %v4022 = vpop.f32.mrf.mxu0
    %v4023 = vadd.f32 %v3831, %v4022
    %v4024 = vpop.f32.mrf.mxu0
    %4025 = vdwg.mxu0
    %v4026 = vtanh.pop %v3948
    %v4027 = vtanh.pop %v3953
    %v4028 = vtanh.pop %v3958
    %v4029 = vtanh.pop %v3963
    %v4030 = vtanh.pop %v3968
    %v4031 = vtanh.pop %v3973
    %v4032 = vtanh.pop %v3978
    %v4033 = vtanh.pop %v3983
    %v4034 = vtanh.pop %v3988
    %v4035 = vtanh.pop %v3993
    %v4036 = vtanh.pop %v3998
    %v4037 = vtanh.pop %v4003
    %v4038 = vtanh.pop %v4008
    %v4039 = vtanh.pop %v4013
    %v4040 = vtanh.pop %v4018
    %v4041 = vtanh.pop %v4023
    %4042 = vst.msk [vmem:[%s19 + $0x40] sm:$0xff] %vm137, %v4026
    %4043 = vst.msk [vmem:[%s19 + $0x48] sm:$0xff] %vm137, %v4027
    %4044 = vst.msk [vmem:[%s19 + $0x50] sm:$0xff] %vm137, %v4028
    %4045 = vst.msk [vmem:[%s19 + $0x58] sm:$0xff] %vm137, %v4029
    %4046 = vst.msk [vmem:[%s19 + $0x60] sm:$0xff] %vm137, %v4030
    %4047 = vst.msk [vmem:[%s19 + $0x68] sm:$0xff] %vm137, %v4031
    %4048 = vst.msk [vmem:[%s19 + $0x70] sm:$0xff] %vm137, %v4032
    %4049 = vst.msk [vmem:[%s19 + $0x78] sm:$0xff] %vm137, %v4033
    %4050 = vst.msk [vmem:[%s19 + $0x140] sm:$0xff] %vm137, %v4034
    %4051 = vst.msk [vmem:[%s19 + $0x148] sm:$0xff] %vm137, %v4035
    %4052 = vst.msk [vmem:[%s19 + $0x150] sm:$0xff] %vm137, %v4036
    %4053 = vst.msk [vmem:[%s19 + $0x158] sm:$0xff] %vm137, %v4037
    %4054 = vst.msk [vmem:[%s19 + $0x160] sm:$0xff] %vm137, %v4038
    %4055 = vst.msk [vmem:[%s19 + $0x168] sm:$0xff] %vm137, %v4039
    %4056 = vst.msk [vmem:[%s19 + $0x170] sm:$0xff] %vm137, %v4040
    %4057 = vst.msk [vmem:[%s19 + $0x178] sm:$0xff] %vm137, %v4041
    %s4058 = scalar_lea.vmem %s11, 256
    %v4059 = vld [vmem:[%s4058] sm:$0xff]
    %v4060 = vld [vmem:[%s4058 + $0x8] sm:$0xff]
    %v4061 = vld [vmem:[%s4058 + $0x10] sm:$0xff]
    %v4062 = vld [vmem:[%s4058 + $0x18] sm:$0xff]
    %v4063 = vld [vmem:[%s4058 + $0x20] sm:$0xff]
    %v4064 = vld [vmem:[%s4058 + $0x28] sm:$0xff]
    %v4065 = vld [vmem:[%s4058 + $0x30] sm:$0xff]
    %v4066 = vld [vmem:[%s4058 + $0x38] sm:$0xff]
    %v4067 = vld [vmem:[%s4058 + $0x40] sm:$0xff]
    %v4068 = vld [vmem:[%s4058 + $0x48] sm:$0xff]
    %v4069 = vld [vmem:[%s4058 + $0x50] sm:$0xff]
    %v4070 = vld [vmem:[%s4058 + $0x58] sm:$0xff]
    %v4071 = vld [vmem:[%s4058 + $0x60] sm:$0xff]
    %v4072 = vld [vmem:[%s4058 + $0x68] sm:$0xff]
    %v4073 = vld [vmem:[%s4058 + $0x70] sm:$0xff]
    %v4074 = vld [vmem:[%s4058 + $0x78] sm:$0xff]
    %s4075 = scalar_lea.vmem %s12, 2
    %v4076 = vld [vmem:[%s4075] sm:$0x1]
    %v4078 = vlaneseq
    %v4079 = vshrl.u32 %v4078, 7
    %v4080 = vsub.s32 0, %v4079
    %v4081 = vrot.slane %v4076, %v4080
    %4083 = vmatprep.subr.mxu0 0.0
    %4084 = vmatpush1.msra.mxu0 %v4074
    %4085 = vmatprep.subr.mxu0 0.0
    %4086 = vmatpush1.msra.mxu0 %v4073
    %4087 = vmatprep.subr.mxu0 0.0
    %4088 = vmatpush1.msra.mxu0 %v4072
    %4089 = vmatprep.subr.mxu0 0.0
    %4090 = vmatpush1.msra.mxu0 %v4071
    %4091 = vmatprep.subr.mxu0 0.0
    %4092 = vmatpush1.msra.mxu0 %v4070
    %4093 = vmatprep.subr.mxu0 0.0
    %4094 = vmatpush1.msra.mxu0 %v4069
    %4095 = vmatprep.subr.mxu0 0.0
    %4096 = vmatpush1.msra.mxu0 %v4068
    %4097 = vmatprep.subr.mxu0 0.0
    %4098 = vmatpush1.msra.mxu0 %v4067
    %4099 = vmatprep.subr.mxu0 0.0
    %4100 = vmatpush1.msra.mxu0 %v4066
    %4101 = vmatprep.subr.mxu0 0.0
    %4102 = vmatpush1.msra.mxu0 %v4065
    %4103 = vmatprep.subr.mxu0 0.0
    %4104 = vmatpush1.msra.mxu0 %v4064
    %4105 = vmatprep.subr.mxu0 0.0
    %4106 = vmatpush1.msra.mxu0 %v4063
    %4107 = vmatprep.subr.mxu0 0.0
    %4108 = vmatpush1.msra.mxu0 %v4062
    %4109 = vmatprep.subr.mxu0 0.0
    %4110 = vmatpush1.msra.mxu0 %v4061
    %4111 = vmatprep.subr.mxu0 0.0
    %4112 = vmatpush1.msra.mxu0 %v4060
    %4113 = vmatprep.subr.mxu0 0.0
    %4114 = vmatpush1.msra.mxu0 %v4059
    %4115 = vmatprep.subr.mxu0 0.0
    %4116 = vmatpush2.msra.mxu0 0.0
    %4117 = vmatprep.subr.mxu0 0.0
    %4118 = vmatpush2.msra.mxu0 0.0
    %4119 = vmatprep.subr.mxu0 0.0
    %4120 = vmatpush2.msra.mxu0 0.0
    %4121 = vmatprep.subr.mxu0 0.0
    %4122 = vmatpush2.msra.mxu0 0.0
    %4123 = vmatprep.subr.mxu0 0.0
    %4124 = vmatpush2.msra.mxu0 0.0
    %4125 = vmatprep.subr.mxu0 0.0
    %4126 = vmatpush2.msra.mxu0 0.0
    %4127 = vmatprep.subr.mxu0 0.0
    %4128 = vmatpush2.msra.mxu0 0.0
    %4129 = vmatprep.subr.mxu0 0.0
    %4130 = vmatpush2.msra.mxu0 0.0
    %4131 = vmatprep.subr.mxu0 0.0
    %4132 = vmatpush2.msra.mxu0 0.0
    %4133 = vmatprep.subr.mxu0 0.0
    %4134 = vmatpush2.msra.mxu0 0.0
    %4135 = vmatprep.subr.mxu0 0.0
    %4136 = vmatpush2.msra.mxu0 0.0
    %4137 = vmatprep.subr.mxu0 0.0
    %4138 = vmatpush2.msra.mxu0 0.0
    %4139 = vmatprep.subr.mxu0 0.0
    %4140 = vmatpush2.msra.mxu0 0.0
    %4141 = vmatprep.subr.mxu0 0.0
    %4142 = vmatpush2.msra.mxu0 0.0
    %4143 = vmatprep.subr.mxu0 0.0
    %4144 = vmatpush2.msra.mxu0 0.0
    %4145 = vmatprep.subr.mxu0 0.0
    %4146 = vmatpush2.msra.mxu0 0.0
    %4147 = vmatprep.mubr.f32.mxu0 0.0
    %4148 = vmatmul.mubr.f32.gmra.mxu0 %v2046
    %v4149 = vpop.f32.mrf.mxu0
    %v4150 = vadd.f32 %v4081, %v4149
    %v4151 = vpop.f32.mrf.mxu0
    %4152 = vdwg.mxu0
    %v4155 = vunpack.c.l.s4 1966171168
    %v4156 = vunpack.c.0.s8 %v4155
    %v4157 = vlaneseq
    %v4158 = vshrl.u32 %v4157, 7
    %v4159 = vsub.s32 %v4156, %v4158
    %v4160 = vrot.slane %v4150, %v4159
    %v4161 = vcombine.high %v4160, %v4160
    %v4163 = vunpack.c.l.s4 1966171168
    %v4164 = vunpack.c.0.s8 %v4163
    %v4165 = vlaneseq
    %v4166 = vshrl.u32 %v4165, 7
    %v4167 = vsub.s32 %v4164, %v4166
    %v4168 = vrot.slane %v4160, %v4167
    %v4170 = vunpack.c.l.s4 1966171168
    %v4171 = vunpack.c.0.s8 %v4170
    %v4172 = vlaneseq
    %v4173 = vshrl.u32 %v4172, 7
    %v4174 = vsub.s32 %v4171, %v4173
    %v4175 = vrot.slane %v4161, %v4174
    %v4176 = vlaneseq
    %v4177 = vshrl.u32 %v4176, 7
    %v4178 = vsub.s32 0, %v4177
    %v4179 = vrot.slane %v4168, %v4178
    %v4180 = vlaneseq
    %v4181 = vshrl.u32 %v4180, 7
    %v4182 = vsub.s32 0, %v4181
    %v4183 = vrot.slane %v4175, %v4182
    %s4186 = scalar_lea.vmem %s1, 256
    %v4187 = vld [vmem:[%s4186] sm:$0xff]
    %v4188 = vld [vmem:[%s4186 + $0x8] sm:$0xff]
    %v4189 = vld [vmem:[%s4186 + $0x10] sm:$0xff]
    %v4190 = vld [vmem:[%s4186 + $0x18] sm:$0xff]
    %v4191 = vld [vmem:[%s4186 + $0x20] sm:$0xff]
    %v4192 = vld [vmem:[%s4186 + $0x28] sm:$0xff]
    %v4193 = vld [vmem:[%s4186 + $0x30] sm:$0xff]
    %v4194 = vld [vmem:[%s4186 + $0x38] sm:$0xff]
    %v4195 = vld [vmem:[%s4186 + $0x40] sm:$0xff]
    %v4196 = vld [vmem:[%s4186 + $0x48] sm:$0xff]
    %v4197 = vld [vmem:[%s4186 + $0x50] sm:$0xff]
    %v4198 = vld [vmem:[%s4186 + $0x58] sm:$0xff]
    %v4199 = vld [vmem:[%s4186 + $0x60] sm:$0xff]
    %v4200 = vld [vmem:[%s4186 + $0x68] sm:$0xff]
    %v4201 = vld [vmem:[%s4186 + $0x70] sm:$0xff]
    %v4202 = vld [vmem:[%s4186 + $0x78] sm:$0xff]
    %s4203 = scalar_lea.vmem %s10, 4
    %v4204 = vld [vmem:[%s4203] sm:$0x3]
    %v4206 = vsel %vm2190, %v4187, 0
    %v4209 = vsel %vm2190, %v4188, 0
    %v4212 = vsel %vm2190, %v4189, 0
    %v4215 = vsel %vm2190, %v4190, 0
    %v4218 = vsel %vm2190, %v4191, 0
    %v4221 = vsel %vm2190, %v4192, 0
    %v4224 = vsel %vm2190, %v4193, 0
    %v4227 = vsel %vm2190, %v4194, 0
    %v4230 = vsel %vm2190, %v4195, 0
    %v4233 = vsel %vm2190, %v4196, 0
    %v4236 = vsel %vm2190, %v4197, 0
    %v4239 = vsel %vm2190, %v4198, 0
    %v4242 = vsel %vm2190, %v4199, 0
    %v4245 = vsel %vm2190, %v4200, 0
    %v4248 = vsel %vm2190, %v4201, 0
    %v4251 = vsel %vm2190, %v4202, 0
    %v4254 = vsel %vm2239, %v4204, 0
    %4256 = vmatprep.subr.mxu0 0.0
    %4257 = vmatpush1.msra.mxu0 0.0
    %4258 = vmatprep.subr.mxu0 0.0
    %4259 = vmatpush1.msra.mxu0 0.0
    %4260 = vmatprep.subr.mxu0 0.0
    %4261 = vmatpush1.msra.mxu0 0.0
    %4262 = vmatprep.subr.mxu0 0.0
    %4263 = vmatpush1.msra.mxu0 0.0
    %4264 = vmatprep.subr.mxu0 0.0
    %4265 = vmatpush1.msra.mxu0 0.0
    %4266 = vmatprep.subr.mxu0 0.0
    %4267 = vmatpush1.msra.mxu0 0.0
    %4268 = vmatprep.subr.mxu0 0.0
    %4269 = vmatpush1.msra.mxu0 0.0
    %4270 = vmatprep.subr.mxu0 0.0
    %4271 = vmatpush1.msra.mxu0 0.0
    %4272 = vmatprep.subr.mxu0 0.0
    %4273 = vmatpush1.msra.mxu0 0.0
    %4274 = vmatprep.subr.mxu0 0.0
    %4275 = vmatpush1.msra.mxu0 0.0
    %4276 = vmatprep.subr.mxu0 0.0
    %4277 = vmatpush1.msra.mxu0 0.0
    %4278 = vmatprep.subr.mxu0 0.0
    %4279 = vmatpush1.msra.mxu0 0.0
    %4280 = vmatprep.subr.mxu0 0.0
    %4281 = vmatpush1.msra.mxu0 0.0
    %4282 = vmatprep.subr.mxu0 0.0
    %4283 = vmatpush1.msra.mxu0 0.0
    %4284 = vmatprep.subr.mxu0 0.0
    %4285 = vmatpush1.msra.mxu0 0.0
    %4286 = vmatprep.subr.mxu0 0.0
    %4287 = vmatpush1.msra.mxu0 %v4254
    %4288 = vmatprep.subr.mxu0 0.0
    %4289 = vmatpush2.msra.mxu0 0.0
    %4290 = vmatprep.subr.mxu0 0.0
    %4291 = vmatpush2.msra.mxu0 0.0
    %4292 = vmatprep.subr.mxu0 0.0
    %4293 = vmatpush2.msra.mxu0 0.0
    %4294 = vmatprep.subr.mxu0 0.0
    %4295 = vmatpush2.msra.mxu0 0.0
    %4296 = vmatprep.subr.mxu0 0.0
    %4297 = vmatpush2.msra.mxu0 0.0
    %4298 = vmatprep.subr.mxu0 0.0
    %4299 = vmatpush2.msra.mxu0 0.0
    %4300 = vmatprep.subr.mxu0 0.0
    %4301 = vmatpush2.msra.mxu0 0.0
    %4302 = vmatprep.subr.mxu0 0.0
    %4303 = vmatpush2.msra.mxu0 0.0
    %4304 = vmatprep.subr.mxu0 0.0
    %4305 = vmatpush2.msra.mxu0 0.0
    %4306 = vmatprep.subr.mxu0 0.0
    %4307 = vmatpush2.msra.mxu0 0.0
    %4308 = vmatprep.subr.mxu0 0.0
    %4309 = vmatpush2.msra.mxu0 0.0
    %4310 = vmatprep.subr.mxu0 0.0
    %4311 = vmatpush2.msra.mxu0 0.0
    %4312 = vmatprep.subr.mxu0 0.0
    %4313 = vmatpush2.msra.mxu0 0.0
    %4314 = vmatprep.subr.mxu0 0.0
    %4315 = vmatpush2.msra.mxu0 0.0
    %4316 = vmatprep.subr.mxu0 0.0
    %4317 = vmatpush2.msra.mxu0 0.0
    %4318 = vmatprep.subr.mxu0 0.0
    %4319 = vmatpush2.msra.mxu0 0.0
    %4320 = vmatprep.mubr.f32.mxu0 0.0
    %4321 = vmatmul.mubr.f32.gmra.mxu0 %v4206
    %v4322 = vpop.f32.mrf.mxu0
    %v4323 = vadd.f32 %v4179, %v4322
    %v4324 = vpop.f32.mrf.mxu0
    %4325 = vmatprep.mubr.f32.mxu0 0.0
    %4326 = vmatmul.mubr.f32.gmra.mxu0 %v4209
    %v4327 = vpop.f32.mrf.mxu0
    %v4328 = vadd.f32 %v4179, %v4327
    %v4329 = vpop.f32.mrf.mxu0
    %4330 = vmatprep.mubr.f32.mxu0 0.0
    %4331 = vmatmul.mubr.f32.gmra.mxu0 %v4212
    %v4332 = vpop.f32.mrf.mxu0
    %v4333 = vadd.f32 %v4179, %v4332
    %v4334 = vpop.f32.mrf.mxu0
    %4335 = vmatprep.mubr.f32.mxu0 0.0
    %4336 = vmatmul.mubr.f32.gmra.mxu0 %v4215
    %v4337 = vpop.f32.mrf.mxu0
    %v4338 = vadd.f32 %v4179, %v4337
    %v4339 = vpop.f32.mrf.mxu0
    %4340 = vmatprep.mubr.f32.mxu0 0.0
    %4341 = vmatmul.mubr.f32.gmra.mxu0 %v4218
    %v4342 = vpop.f32.mrf.mxu0
    %v4343 = vadd.f32 %v4179, %v4342
    %v4344 = vpop.f32.mrf.mxu0
    %4345 = vmatprep.mubr.f32.mxu0 0.0
    %4346 = vmatmul.mubr.f32.gmra.mxu0 %v4221
    %v4347 = vpop.f32.mrf.mxu0
    %v4348 = vadd.f32 %v4179, %v4347
    %v4349 = vpop.f32.mrf.mxu0
    %4350 = vmatprep.mubr.f32.mxu0 0.0
    %4351 = vmatmul.mubr.f32.gmra.mxu0 %v4224
    %v4352 = vpop.f32.mrf.mxu0
    %v4353 = vadd.f32 %v4179, %v4352
    %v4354 = vpop.f32.mrf.mxu0
    %4355 = vmatprep.mubr.f32.mxu0 0.0
    %4356 = vmatmul.mubr.f32.gmra.mxu0 %v4227
    %v4357 = vpop.f32.mrf.mxu0
    %v4358 = vadd.f32 %v4179, %v4357
    %v4359 = vpop.f32.mrf.mxu0
    %4360 = vmatprep.mubr.f32.mxu0 0.0
    %4361 = vmatmul.mubr.f32.gmra.mxu0 %v4230
    %v4362 = vpop.f32.mrf.mxu0
    %v4363 = vadd.f32 %v4183, %v4362
    %v4364 = vpop.f32.mrf.mxu0
    %4365 = vmatprep.mubr.f32.mxu0 0.0
    %4366 = vmatmul.mubr.f32.gmra.mxu0 %v4233
    %v4367 = vpop.f32.mrf.mxu0
    %v4368 = vadd.f32 %v4183, %v4367
    %v4369 = vpop.f32.mrf.mxu0
    %4370 = vmatprep.mubr.f32.mxu0 0.0
    %4371 = vmatmul.mubr.f32.gmra.mxu0 %v4236
    %v4372 = vpop.f32.mrf.mxu0
    %v4373 = vadd.f32 %v4183, %v4372
    %v4374 = vpop.f32.mrf.mxu0
    %4375 = vmatprep.mubr.f32.mxu0 0.0
    %4376 = vmatmul.mubr.f32.gmra.mxu0 %v4239
    %v4377 = vpop.f32.mrf.mxu0
    %v4378 = vadd.f32 %v4183, %v4377
    %v4379 = vpop.f32.mrf.mxu0
    %4380 = vmatprep.mubr.f32.mxu0 0.0
    %4381 = vmatmul.mubr.f32.gmra.mxu0 %v4242
    %v4382 = vpop.f32.mrf.mxu0
    %v4383 = vadd.f32 %v4183, %v4382
    %v4384 = vpop.f32.mrf.mxu0
    %4385 = vmatprep.mubr.f32.mxu0 0.0
    %4386 = vmatmul.mubr.f32.gmra.mxu0 %v4245
    %v4387 = vpop.f32.mrf.mxu0
    %v4388 = vadd.f32 %v4183, %v4387
    %v4389 = vpop.f32.mrf.mxu0
    %4390 = vmatprep.mubr.f32.mxu0 0.0
    %4391 = vmatmul.mubr.f32.gmra.mxu0 %v4248
    %v4392 = vpop.f32.mrf.mxu0
    %v4393 = vadd.f32 %v4183, %v4392
    %v4394 = vpop.f32.mrf.mxu0
    %4395 = vmatprep.mubr.f32.mxu0 0.0
    %4396 = vmatmul.mubr.f32.gmra.mxu0 %v4251
    %v4397 = vpop.f32.mrf.mxu0
    %v4398 = vadd.f32 %v4183, %v4397
    %v4399 = vpop.f32.mrf.mxu0
    %4400 = vdwg.mxu0
    %v4401 = vmax.f32 %v4323, 0.0
    %v4402 = vmax.f32 %v4328, 0.0
    %v4403 = vmax.f32 %v4333, 0.0
    %v4404 = vmax.f32 %v4338, 0.0
    %v4405 = vmax.f32 %v4343, 0.0
    %v4406 = vmax.f32 %v4348, 0.0
    %v4407 = vmax.f32 %v4353, 0.0
    %v4408 = vmax.f32 %v4358, 0.0
    %v4409 = vmax.f32 %v4363, 0.0
    %v4410 = vmax.f32 %v4368, 0.0
    %v4411 = vmax.f32 %v4373, 0.0
    %v4412 = vmax.f32 %v4378, 0.0
    %v4413 = vmax.f32 %v4383, 0.0
    %v4414 = vmax.f32 %v4388, 0.0
    %v4415 = vmax.f32 %v4393, 0.0
    %v4416 = vmax.f32 %v4398, 0.0
    %s4417 = scalar_lea.vmem %s13, 256
    %v4418 = vld [vmem:[%s4417] sm:$0xff]
    %v4419 = vld [vmem:[%s4417 + $0x8] sm:$0xff]
    %v4420 = vld [vmem:[%s4417 + $0x10] sm:$0xff]
    %v4421 = vld [vmem:[%s4417 + $0x18] sm:$0xff]
    %v4422 = vld [vmem:[%s4417 + $0x20] sm:$0xff]
    %v4423 = vld [vmem:[%s4417 + $0x28] sm:$0xff]
    %v4424 = vld [vmem:[%s4417 + $0x30] sm:$0xff]
    %v4425 = vld [vmem:[%s4417 + $0x38] sm:$0xff]
    %v4426 = vld [vmem:[%s4417 + $0x40] sm:$0xff]
    %v4427 = vld [vmem:[%s4417 + $0x48] sm:$0xff]
    %v4428 = vld [vmem:[%s4417 + $0x50] sm:$0xff]
    %v4429 = vld [vmem:[%s4417 + $0x58] sm:$0xff]
    %v4430 = vld [vmem:[%s4417 + $0x60] sm:$0xff]
    %v4431 = vld [vmem:[%s4417 + $0x68] sm:$0xff]
    %v4432 = vld [vmem:[%s4417 + $0x70] sm:$0xff]
    %v4433 = vld [vmem:[%s4417 + $0x78] sm:$0xff]
    %s4434 = scalar_lea.vmem %s14, 2
    %v4435 = vld [vmem:[%s4434] sm:$0x1]
    %v4437 = vlaneseq
    %v4438 = vshrl.u32 %v4437, 7
    %v4439 = vsub.s32 0, %v4438
    %v4440 = vrot.slane %v4435, %v4439
    %4442 = vmatprep.subr.mxu0 0.0
    %4443 = vmatpush1.msra.mxu0 %v4433
    %4444 = vmatprep.subr.mxu0 0.0
    %4445 = vmatpush1.msra.mxu0 %v4432
    %4446 = vmatprep.subr.mxu0 0.0
    %4447 = vmatpush1.msra.mxu0 %v4431
    %4448 = vmatprep.subr.mxu0 0.0
    %4449 = vmatpush1.msra.mxu0 %v4430
    %4450 = vmatprep.subr.mxu0 0.0
    %4451 = vmatpush1.msra.mxu0 %v4429
    %4452 = vmatprep.subr.mxu0 0.0
    %4453 = vmatpush1.msra.mxu0 %v4428
    %4454 = vmatprep.subr.mxu0 0.0
    %4455 = vmatpush1.msra.mxu0 %v4427
    %4456 = vmatprep.subr.mxu0 0.0
    %4457 = vmatpush1.msra.mxu0 %v4426
    %4458 = vmatprep.subr.mxu0 0.0
    %4459 = vmatpush1.msra.mxu0 %v4425
    %4460 = vmatprep.subr.mxu0 0.0
    %4461 = vmatpush1.msra.mxu0 %v4424
    %4462 = vmatprep.subr.mxu0 0.0
    %4463 = vmatpush1.msra.mxu0 %v4423
    %4464 = vmatprep.subr.mxu0 0.0
    %4465 = vmatpush1.msra.mxu0 %v4422
    %4466 = vmatprep.subr.mxu0 0.0
    %4467 = vmatpush1.msra.mxu0 %v4421
    %4468 = vmatprep.subr.mxu0 0.0
    %4469 = vmatpush1.msra.mxu0 %v4420
    %4470 = vmatprep.subr.mxu0 0.0
    %4471 = vmatpush1.msra.mxu0 %v4419
    %4472 = vmatprep.subr.mxu0 0.0
    %4473 = vmatpush1.msra.mxu0 %v4418
    %4474 = vmatprep.subr.mxu0 0.0
    %4475 = vmatpush2.msra.mxu0 0.0
    %4476 = vmatprep.subr.mxu0 0.0
    %4477 = vmatpush2.msra.mxu0 0.0
    %4478 = vmatprep.subr.mxu0 0.0
    %4479 = vmatpush2.msra.mxu0 0.0
    %4480 = vmatprep.subr.mxu0 0.0
    %4481 = vmatpush2.msra.mxu0 0.0
    %4482 = vmatprep.subr.mxu0 0.0
    %4483 = vmatpush2.msra.mxu0 0.0
    %4484 = vmatprep.subr.mxu0 0.0
    %4485 = vmatpush2.msra.mxu0 0.0
    %4486 = vmatprep.subr.mxu0 0.0
    %4487 = vmatpush2.msra.mxu0 0.0
    %4488 = vmatprep.subr.mxu0 0.0
    %4489 = vmatpush2.msra.mxu0 0.0
    %4490 = vmatprep.subr.mxu0 0.0
    %4491 = vmatpush2.msra.mxu0 0.0
    %4492 = vmatprep.subr.mxu0 0.0
    %4493 = vmatpush2.msra.mxu0 0.0
    %4494 = vmatprep.subr.mxu0 0.0
    %4495 = vmatpush2.msra.mxu0 0.0
    %4496 = vmatprep.subr.mxu0 0.0
    %4497 = vmatpush2.msra.mxu0 0.0
    %4498 = vmatprep.subr.mxu0 0.0
    %4499 = vmatpush2.msra.mxu0 0.0
    %4500 = vmatprep.subr.mxu0 0.0
    %4501 = vmatpush2.msra.mxu0 0.0
    %4502 = vmatprep.subr.mxu0 0.0
    %4503 = vmatpush2.msra.mxu0 0.0
    %4504 = vmatprep.subr.mxu0 0.0
    %4505 = vmatpush2.msra.mxu0 0.0
    %4506 = vmatprep.mubr.f32.mxu0 0.0
    %4507 = vmatmul.mubr.f32.gmra.mxu0 %v4401
    %v4508 = vpop.f32.mrf.mxu0
    %v4509 = vadd.f32 %v4440, %v4508
    %v4510 = vpop.f32.mrf.mxu0
    %4511 = vmatprep.mubr.f32.mxu0 0.0
    %4512 = vmatmul.mubr.f32.gmra.mxu0 %v4402
    %v4513 = vpop.f32.mrf.mxu0
    %v4514 = vadd.f32 %v4440, %v4513
    %v4515 = vpop.f32.mrf.mxu0
    %4516 = vmatprep.mubr.f32.mxu0 0.0
    %4517 = vmatmul.mubr.f32.gmra.mxu0 %v4403
    %v4518 = vpop.f32.mrf.mxu0
    %v4519 = vadd.f32 %v4440, %v4518
    %v4520 = vpop.f32.mrf.mxu0
    %4521 = vmatprep.mubr.f32.mxu0 0.0
    %4522 = vmatmul.mubr.f32.gmra.mxu0 %v4404
    %v4523 = vpop.f32.mrf.mxu0
    %v4524 = vadd.f32 %v4440, %v4523
    %v4525 = vpop.f32.mrf.mxu0
    %4526 = vmatprep.mubr.f32.mxu0 0.0
    %4527 = vmatmul.mubr.f32.gmra.mxu0 %v4405
    %v4528 = vpop.f32.mrf.mxu0
    %v4529 = vadd.f32 %v4440, %v4528
    %v4530 = vpop.f32.mrf.mxu0
    %4531 = vmatprep.mubr.f32.mxu0 0.0
    %4532 = vmatmul.mubr.f32.gmra.mxu0 %v4406
    %v4533 = vpop.f32.mrf.mxu0
    %v4534 = vadd.f32 %v4440, %v4533
    %v4535 = vpop.f32.mrf.mxu0
    %4536 = vmatprep.mubr.f32.mxu0 0.0
    %4537 = vmatmul.mubr.f32.gmra.mxu0 %v4407
    %v4538 = vpop.f32.mrf.mxu0
    %v4539 = vadd.f32 %v4440, %v4538
    %v4540 = vpop.f32.mrf.mxu0
    %4541 = vmatprep.mubr.f32.mxu0 0.0
    %4542 = vmatmul.mubr.f32.gmra.mxu0 %v4408
    %v4543 = vpop.f32.mrf.mxu0
    %v4544 = vadd.f32 %v4440, %v4543
    %v4545 = vpop.f32.mrf.mxu0
    %4546 = vmatprep.mubr.f32.mxu0 0.0
    %4547 = vmatmul.mubr.f32.gmra.mxu0 %v4409
    %v4548 = vpop.f32.mrf.mxu0
    %v4549 = vadd.f32 %v4440, %v4548
    %v4550 = vpop.f32.mrf.mxu0
    %4551 = vmatprep.mubr.f32.mxu0 0.0
    %4552 = vmatmul.mubr.f32.gmra.mxu0 %v4410
    %v4553 = vpop.f32.mrf.mxu0
    %v4554 = vadd.f32 %v4440, %v4553
    %v4555 = vpop.f32.mrf.mxu0
    %4556 = vmatprep.mubr.f32.mxu0 0.0
    %4557 = vmatmul.mubr.f32.gmra.mxu0 %v4411
    %v4558 = vpop.f32.mrf.mxu0
    %v4559 = vadd.f32 %v4440, %v4558
    %v4560 = vpop.f32.mrf.mxu0
    %4561 = vmatprep.mubr.f32.mxu0 0.0
    %4562 = vmatmul.mubr.f32.gmra.mxu0 %v4412
    %v4563 = vpop.f32.mrf.mxu0
    %v4564 = vadd.f32 %v4440, %v4563
    %v4565 = vpop.f32.mrf.mxu0
    %4566 = vmatprep.mubr.f32.mxu0 0.0
    %4567 = vmatmul.mubr.f32.gmra.mxu0 %v4413
    %v4568 = vpop.f32.mrf.mxu0
    %v4569 = vadd.f32 %v4440, %v4568
    %v4570 = vpop.f32.mrf.mxu0
    %4571 = vmatprep.mubr.f32.mxu0 0.0
    %4572 = vmatmul.mubr.f32.gmra.mxu0 %v4414
    %v4573 = vpop.f32.mrf.mxu0
    %v4574 = vadd.f32 %v4440, %v4573
    %v4575 = vpop.f32.mrf.mxu0
    %4576 = vmatprep.mubr.f32.mxu0 0.0
    %4577 = vmatmul.mubr.f32.gmra.mxu0 %v4415
    %v4578 = vpop.f32.mrf.mxu0
    %v4579 = vadd.f32 %v4440, %v4578
    %v4580 = vpop.f32.mrf.mxu0
    %4581 = vmatprep.mubr.f32.mxu0 0.0
    %4582 = vmatmul.mubr.f32.gmra.mxu0 %v4416
    %v4583 = vpop.f32.mrf.mxu0
    %v4584 = vadd.f32 %v4440, %v4583
    %v4585 = vpop.f32.mrf.mxu0
    %4586 = vdwg.mxu0
    %v4587 = vmax.f32 %v4509, 0.0
    %v4588 = vmax.f32 %v4514, 0.0
    %v4589 = vmax.f32 %v4519, 0.0
    %v4590 = vmax.f32 %v4524, 0.0
    %v4591 = vmax.f32 %v4529, 0.0
    %v4592 = vmax.f32 %v4534, 0.0
    %v4593 = vmax.f32 %v4539, 0.0
    %v4594 = vmax.f32 %v4544, 0.0
    %v4595 = vmax.f32 %v4549, 0.0
    %v4596 = vmax.f32 %v4554, 0.0
    %v4597 = vmax.f32 %v4559, 0.0
    %v4598 = vmax.f32 %v4564, 0.0
    %v4599 = vmax.f32 %v4569, 0.0
    %v4600 = vmax.f32 %v4574, 0.0
    %v4601 = vmax.f32 %v4579, 0.0
    %v4602 = vmax.f32 %v4584, 0.0
    %s4603 = scalar_lea.vmem %s15, 128
    %v4604 = vld [vmem:[%s4603] sm:$0xff]
    %v4605 = vld [vmem:[%s4603 + $0x8] sm:$0xff]
    %v4606 = vld [vmem:[%s4603 + $0x10] sm:$0xff]
    %v4607 = vld [vmem:[%s4603 + $0x18] sm:$0xff]
    %v4608 = vld [vmem:[%s4603 + $0x20] sm:$0xff]
    %v4609 = vld [vmem:[%s4603 + $0x28] sm:$0xff]
    %v4610 = vld [vmem:[%s4603 + $0x30] sm:$0xff]
    %v4611 = vld [vmem:[%s4603 + $0x38] sm:$0xff]
    %s4612 = scalar_lea.vmem %s16, 2
    %v4613 = vld [vmem:[%s4612] sm:$0x1]
    %v4615 = vlaneseq
    %v4616 = vshrl.u32 %v4615, 7
    %v4617 = vsub.s32 0, %v4616
    %v4618 = vrot.slane %v4613, %v4617
    %v4621 = vsel %vm366, %v4587, 0
    %v4624 = vsel %vm366, %v4588, 0
    %v4627 = vsel %vm366, %v4589, 0
    %v4630 = vsel %vm366, %v4590, 0
    %v4633 = vsel %vm366, %v4591, 0
    %v4636 = vsel %vm366, %v4592, 0
    %v4639 = vsel %vm366, %v4593, 0
    %v4642 = vsel %vm366, %v4594, 0
    %v4645 = vsel %vm366, %v4595, 0
    %v4648 = vsel %vm366, %v4596, 0
    %v4651 = vsel %vm366, %v4597, 0
    %v4654 = vsel %vm366, %v4598, 0
    %v4657 = vsel %vm366, %v4599, 0
    %v4660 = vsel %vm366, %v4600, 0
    %v4663 = vsel %vm366, %v4601, 0
    %v4666 = vsel %vm366, %v4602, 0
    %4668 = vmatprep.subr.mxu0 0.0
    %4669 = vmatpush1.msra.mxu0 0.0
    %4670 = vmatprep.subr.mxu0 0.0
    %4671 = vmatpush1.msra.mxu0 0.0
    %4672 = vmatprep.subr.mxu0 0.0
    %4673 = vmatpush1.msra.mxu0 0.0
    %4674 = vmatprep.subr.mxu0 0.0
    %4675 = vmatpush1.msra.mxu0 0.0
    %4676 = vmatprep.subr.mxu0 0.0
    %4677 = vmatpush1.msra.mxu0 0.0
    %4678 = vmatprep.subr.mxu0 0.0
    %4679 = vmatpush1.msra.mxu0 0.0
    %4680 = vmatprep.subr.mxu0 0.0
    %4681 = vmatpush1.msra.mxu0 0.0
    %4682 = vmatprep.subr.mxu0 0.0
    %4683 = vmatpush1.msra.mxu0 0.0
    %4684 = vmatprep.subr.mxu0 0.0
    %4685 = vmatpush1.msra.mxu0 %v4611
    %4686 = vmatprep.subr.mxu0 0.0
    %4687 = vmatpush1.msra.mxu0 %v4610
    %4688 = vmatprep.subr.mxu0 0.0
    %4689 = vmatpush1.msra.mxu0 %v4609
    %4690 = vmatprep.subr.mxu0 0.0
    %4691 = vmatpush1.msra.mxu0 %v4608
    %4692 = vmatprep.subr.mxu0 0.0
    %4693 = vmatpush1.msra.mxu0 %v4607
    %4694 = vmatprep.subr.mxu0 0.0
    %4695 = vmatpush1.msra.mxu0 %v4606
    %4696 = vmatprep.subr.mxu0 0.0
    %4697 = vmatpush1.msra.mxu0 %v4605
    %4698 = vmatprep.subr.mxu0 0.0
    %4699 = vmatpush1.msra.mxu0 %v4604
    %4700 = vmatprep.subr.mxu0 0.0
    %4701 = vmatpush2.msra.mxu0 0.0
    %4702 = vmatprep.subr.mxu0 0.0
    %4703 = vmatpush2.msra.mxu0 0.0
    %4704 = vmatprep.subr.mxu0 0.0
    %4705 = vmatpush2.msra.mxu0 0.0
    %4706 = vmatprep.subr.mxu0 0.0
    %4707 = vmatpush2.msra.mxu0 0.0
    %4708 = vmatprep.subr.mxu0 0.0
    %4709 = vmatpush2.msra.mxu0 0.0
    %4710 = vmatprep.subr.mxu0 0.0
    %4711 = vmatpush2.msra.mxu0 0.0
    %4712 = vmatprep.subr.mxu0 0.0
    %4713 = vmatpush2.msra.mxu0 0.0
    %4714 = vmatprep.subr.mxu0 0.0
    %4715 = vmatpush2.msra.mxu0 0.0
    %4716 = vmatprep.subr.mxu0 0.0
    %4717 = vmatpush2.msra.mxu0 0.0
    %4718 = vmatprep.subr.mxu0 0.0
    %4719 = vmatpush2.msra.mxu0 0.0
    %4720 = vmatprep.subr.mxu0 0.0
    %4721 = vmatpush2.msra.mxu0 0.0
    %4722 = vmatprep.subr.mxu0 0.0
    %4723 = vmatpush2.msra.mxu0 0.0
    %4724 = vmatprep.subr.mxu0 0.0
    %4725 = vmatpush2.msra.mxu0 0.0
    %4726 = vmatprep.subr.mxu0 0.0
    %4727 = vmatpush2.msra.mxu0 0.0
    %4728 = vmatprep.subr.mxu0 0.0
    %4729 = vmatpush2.msra.mxu0 0.0
    %4730 = vmatprep.subr.mxu0 0.0
    %4731 = vmatpush2.msra.mxu0 0.0
    %4732 = vmatprep.mubr.f32.mxu0 0.0
    %4733 = vmatmul.mubr.f32.gmra.mxu0 %v4621
    %v4734 = vpop.f32.mrf.mxu0
    %v4735 = vadd.f32 %v4618, %v4734
    %v4736 = vpop.f32.mrf.mxu0
    %4737 = vmatprep.mubr.f32.mxu0 0.0
    %4738 = vmatmul.mubr.f32.gmra.mxu0 %v4624
    %v4739 = vpop.f32.mrf.mxu0
    %v4740 = vadd.f32 %v4618, %v4739
    %v4741 = vpop.f32.mrf.mxu0
    %4742 = vmatprep.mubr.f32.mxu0 0.0
    %4743 = vmatmul.mubr.f32.gmra.mxu0 %v4627
    %v4744 = vpop.f32.mrf.mxu0
    %v4745 = vadd.f32 %v4618, %v4744
    %v4746 = vpop.f32.mrf.mxu0
    %4747 = vmatprep.mubr.f32.mxu0 0.0
    %4748 = vmatmul.mubr.f32.gmra.mxu0 %v4630
    %v4749 = vpop.f32.mrf.mxu0
    %v4750 = vadd.f32 %v4618, %v4749
    %v4751 = vpop.f32.mrf.mxu0
    %4752 = vmatprep.mubr.f32.mxu0 0.0
    %4753 = vmatmul.mubr.f32.gmra.mxu0 %v4633
    %v4754 = vpop.f32.mrf.mxu0
    %v4755 = vadd.f32 %v4618, %v4754
    %v4756 = vpop.f32.mrf.mxu0
    %4757 = vmatprep.mubr.f32.mxu0 0.0
    %4758 = vmatmul.mubr.f32.gmra.mxu0 %v4636
    %v4759 = vpop.f32.mrf.mxu0
    %v4760 = vadd.f32 %v4618, %v4759
    %v4761 = vpop.f32.mrf.mxu0
    %4762 = vmatprep.mubr.f32.mxu0 0.0
    %4763 = vmatmul.mubr.f32.gmra.mxu0 %v4639
    %v4764 = vpop.f32.mrf.mxu0
    %v4765 = vadd.f32 %v4618, %v4764
    %v4766 = vpop.f32.mrf.mxu0
    %4767 = vmatprep.mubr.f32.mxu0 0.0
    %4768 = vmatmul.mubr.f32.gmra.mxu0 %v4642
    %v4769 = vpop.f32.mrf.mxu0
    %v4770 = vadd.f32 %v4618, %v4769
    %v4771 = vpop.f32.mrf.mxu0
    %4772 = vmatprep.mubr.f32.mxu0 0.0
    %4773 = vmatmul.mubr.f32.gmra.mxu0 %v4645
    %v4774 = vpop.f32.mrf.mxu0
    %v4775 = vadd.f32 %v4618, %v4774
    %v4776 = vpop.f32.mrf.mxu0
    %4777 = vmatprep.mubr.f32.mxu0 0.0
    %4778 = vmatmul.mubr.f32.gmra.mxu0 %v4648
    %v4779 = vpop.f32.mrf.mxu0
    %v4780 = vadd.f32 %v4618, %v4779
    %v4781 = vpop.f32.mrf.mxu0
    %4782 = vmatprep.mubr.f32.mxu0 0.0
    %4783 = vmatmul.mubr.f32.gmra.mxu0 %v4651
    %v4784 = vpop.f32.mrf.mxu0
    %v4785 = vadd.f32 %v4618, %v4784
    %v4786 = vpop.f32.mrf.mxu0
    %4787 = vmatprep.mubr.f32.mxu0 0.0
    %4788 = vmatmul.mubr.f32.gmra.mxu0 %v4654
    %v4789 = vpop.f32.mrf.mxu0
    %v4790 = vadd.f32 %v4618, %v4789
    %v4791 = vpop.f32.mrf.mxu0
    %4792 = vmatprep.mubr.f32.mxu0 0.0
    %4793 = vmatmul.mubr.f32.gmra.mxu0 %v4657
    %v4794 = vpop.f32.mrf.mxu0
    %v4795 = vadd.f32 %v4618, %v4794
    %v4796 = vpop.f32.mrf.mxu0
    %4797 = vmatprep.mubr.f32.mxu0 0.0
    %4798 = vmatmul.mubr.f32.gmra.mxu0 %v4660
    %v4799 = vpop.f32.mrf.mxu0
    %v4800 = vadd.f32 %v4618, %v4799
    %v4801 = vpop.f32.mrf.mxu0
    %4802 = vmatprep.mubr.f32.mxu0 0.0
    %4803 = vmatmul.mubr.f32.gmra.mxu0 %v4663
    %v4804 = vpop.f32.mrf.mxu0
    %v4805 = vadd.f32 %v4618, %v4804
    %v4806 = vpop.f32.mrf.mxu0
    %4807 = vmatprep.mubr.f32.mxu0 0.0
    %4808 = vmatmul.mubr.f32.gmra.mxu0 %v4666
    %v4809 = vpop.f32.mrf.mxu0
    %v4810 = vadd.f32 %v4618, %v4809
    %v4811 = vpop.f32.mrf.mxu0
    %4812 = vdwg.mxu0
    %v4813 = vmax.f32 %v4735, 0.0
    %v4814 = vmax.f32 %v4740, 0.0
    %v4815 = vmax.f32 %v4745, 0.0
    %v4816 = vmax.f32 %v4750, 0.0
    %v4817 = vmax.f32 %v4755, 0.0
    %v4818 = vmax.f32 %v4760, 0.0
    %v4819 = vmax.f32 %v4765, 0.0
    %v4820 = vmax.f32 %v4770, 0.0
    %v4821 = vmax.f32 %v4775, 0.0
    %v4822 = vmax.f32 %v4780, 0.0
    %v4823 = vmax.f32 %v4785, 0.0
    %v4824 = vmax.f32 %v4790, 0.0
    %v4825 = vmax.f32 %v4795, 0.0
    %v4826 = vmax.f32 %v4800, 0.0
    %v4827 = vmax.f32 %v4805, 0.0
    %v4828 = vmax.f32 %v4810, 0.0
    %s4829 = scalar_lea.vmem %s17, 64
    %v4830 = vld [vmem:[%s4829] sm:$0xff]
    %v4831 = vld [vmem:[%s4829 + $0x8] sm:$0xff]
    %v4832 = vld [vmem:[%s4829 + $0x10] sm:$0xff]
    %v4833 = vld [vmem:[%s4829 + $0x18] sm:$0xff]
    %s4834 = scalar_lea.vmem %s18, 2
    %v4835 = vld [vmem:[%s4834] sm:$0x1]
    %v4837 = vlaneseq
    %v4838 = vshrl.u32 %v4837, 7
    %v4839 = vsub.s32 0, %v4838
    %v4840 = vrot.slane %v4835, %v4839
    %v4843 = vsel %vm2823, %v4813, 0
    %v4846 = vsel %vm2823, %v4814, 0
    %v4849 = vsel %vm2823, %v4815, 0
    %v4852 = vsel %vm2823, %v4816, 0
    %v4855 = vsel %vm2823, %v4817, 0
    %v4858 = vsel %vm2823, %v4818, 0
    %v4861 = vsel %vm2823, %v4819, 0
    %v4864 = vsel %vm2823, %v4820, 0
    %v4867 = vsel %vm2823, %v4821, 0
    %v4870 = vsel %vm2823, %v4822, 0
    %v4873 = vsel %vm2823, %v4823, 0
    %v4876 = vsel %vm2823, %v4824, 0
    %v4879 = vsel %vm2823, %v4825, 0
    %v4882 = vsel %vm2823, %v4826, 0
    %v4885 = vsel %vm2823, %v4827, 0
    %v4888 = vsel %vm2823, %v4828, 0
    %4890 = vmatprep.subr.mxu0 0.0
    %4891 = vmatpush1.msra.mxu0 0.0
    %4892 = vmatprep.subr.mxu0 0.0
    %4893 = vmatpush1.msra.mxu0 0.0
    %4894 = vmatprep.subr.mxu0 0.0
    %4895 = vmatpush1.msra.mxu0 0.0
    %4896 = vmatprep.subr.mxu0 0.0
    %4897 = vmatpush1.msra.mxu0 0.0
    %4898 = vmatprep.subr.mxu0 0.0
    %4899 = vmatpush1.msra.mxu0 0.0
    %4900 = vmatprep.subr.mxu0 0.0
    %4901 = vmatpush1.msra.mxu0 0.0
    %4902 = vmatprep.subr.mxu0 0.0
    %4903 = vmatpush1.msra.mxu0 0.0
    %4904 = vmatprep.subr.mxu0 0.0
    %4905 = vmatpush1.msra.mxu0 0.0
    %4906 = vmatprep.subr.mxu0 0.0
    %4907 = vmatpush1.msra.mxu0 0.0
    %4908 = vmatprep.subr.mxu0 0.0
    %4909 = vmatpush1.msra.mxu0 0.0
    %4910 = vmatprep.subr.mxu0 0.0
    %4911 = vmatpush1.msra.mxu0 0.0
    %4912 = vmatprep.subr.mxu0 0.0
    %4913 = vmatpush1.msra.mxu0 0.0
    %4914 = vmatprep.subr.mxu0 0.0
    %4915 = vmatpush1.msra.mxu0 %v4833
    %4916 = vmatprep.subr.mxu0 0.0
    %4917 = vmatpush1.msra.mxu0 %v4832
    %4918 = vmatprep.subr.mxu0 0.0
    %4919 = vmatpush1.msra.mxu0 %v4831
    %4920 = vmatprep.subr.mxu0 0.0
    %4921 = vmatpush1.msra.mxu0 %v4830
    %4922 = vmatprep.subr.mxu0 0.0
    %4923 = vmatpush2.msra.mxu0 0.0
    %4924 = vmatprep.subr.mxu0 0.0
    %4925 = vmatpush2.msra.mxu0 0.0
    %4926 = vmatprep.subr.mxu0 0.0
    %4927 = vmatpush2.msra.mxu0 0.0
    %4928 = vmatprep.subr.mxu0 0.0
    %4929 = vmatpush2.msra.mxu0 0.0
    %4930 = vmatprep.subr.mxu0 0.0
    %4931 = vmatpush2.msra.mxu0 0.0
    %4932 = vmatprep.subr.mxu0 0.0
    %4933 = vmatpush2.msra.mxu0 0.0
    %4934 = vmatprep.subr.mxu0 0.0
    %4935 = vmatpush2.msra.mxu0 0.0
    %4936 = vmatprep.subr.mxu0 0.0
    %4937 = vmatpush2.msra.mxu0 0.0
    %4938 = vmatprep.subr.mxu0 0.0
    %4939 = vmatpush2.msra.mxu0 0.0
    %4940 = vmatprep.subr.mxu0 0.0
    %4941 = vmatpush2.msra.mxu0 0.0
    %4942 = vmatprep.subr.mxu0 0.0
    %4943 = vmatpush2.msra.mxu0 0.0
    %4944 = vmatprep.subr.mxu0 0.0
    %4945 = vmatpush2.msra.mxu0 0.0
    %4946 = vmatprep.subr.mxu0 0.0
    %4947 = vmatpush2.msra.mxu0 0.0
    %4948 = vmatprep.subr.mxu0 0.0
    %4949 = vmatpush2.msra.mxu0 0.0
    %4950 = vmatprep.subr.mxu0 0.0
    %4951 = vmatpush2.msra.mxu0 0.0
    %4952 = vmatprep.subr.mxu0 0.0
    %4953 = vmatpush2.msra.mxu0 0.0
    %4954 = vmatprep.mubr.f32.mxu0 0.0
    %4955 = vmatmul.mubr.f32.gmra.mxu0 %v4843
    %v4956 = vpop.f32.mrf.mxu0
    %v4957 = vadd.f32 %v4840, %v4956
    %v4958 = vpop.f32.mrf.mxu0
    %4959 = vmatprep.mubr.f32.mxu0 0.0
    %4960 = vmatmul.mubr.f32.gmra.mxu0 %v4846
    %v4961 = vpop.f32.mrf.mxu0
    %v4962 = vadd.f32 %v4840, %v4961
    %v4963 = vpop.f32.mrf.mxu0
    %4964 = vmatprep.mubr.f32.mxu0 0.0
    %4965 = vmatmul.mubr.f32.gmra.mxu0 %v4849
    %v4966 = vpop.f32.mrf.mxu0
    %v4967 = vadd.f32 %v4840, %v4966
    %v4968 = vpop.f32.mrf.mxu0
    %4969 = vmatprep.mubr.f32.mxu0 0.0
    %4970 = vmatmul.mubr.f32.gmra.mxu0 %v4852
    %v4971 = vpop.f32.mrf.mxu0
    %v4972 = vadd.f32 %v4840, %v4971
    %v4973 = vpop.f32.mrf.mxu0
    %4974 = vmatprep.mubr.f32.mxu0 0.0
    %4975 = vmatmul.mubr.f32.gmra.mxu0 %v4855
    %v4976 = vpop.f32.mrf.mxu0
    %v4977 = vadd.f32 %v4840, %v4976
    %v4978 = vpop.f32.mrf.mxu0
    %4979 = vmatprep.mubr.f32.mxu0 0.0
    %4980 = vmatmul.mubr.f32.gmra.mxu0 %v4858
    %v4981 = vpop.f32.mrf.mxu0
    %v4982 = vadd.f32 %v4840, %v4981
    %v4983 = vpop.f32.mrf.mxu0
    %4984 = vmatprep.mubr.f32.mxu0 0.0
    %4985 = vmatmul.mubr.f32.gmra.mxu0 %v4861
    %v4986 = vpop.f32.mrf.mxu0
    %v4987 = vadd.f32 %v4840, %v4986
    %v4988 = vpop.f32.mrf.mxu0
    %4989 = vmatprep.mubr.f32.mxu0 0.0
    %4990 = vmatmul.mubr.f32.gmra.mxu0 %v4864
    %v4991 = vpop.f32.mrf.mxu0
    %v4992 = vadd.f32 %v4840, %v4991
    %v4993 = vpop.f32.mrf.mxu0
    %4994 = vmatprep.mubr.f32.mxu0 0.0
    %4995 = vmatmul.mubr.f32.gmra.mxu0 %v4867
    %v4996 = vpop.f32.mrf.mxu0
    %v4997 = vadd.f32 %v4840, %v4996
    %v4998 = vpop.f32.mrf.mxu0
    %4999 = vmatprep.mubr.f32.mxu0 0.0
    %5000 = vmatmul.mubr.f32.gmra.mxu0 %v4870
    %v5001 = vpop.f32.mrf.mxu0
    %v5002 = vadd.f32 %v4840, %v5001
    %v5003 = vpop.f32.mrf.mxu0
    %5004 = vmatprep.mubr.f32.mxu0 0.0
    %5005 = vmatmul.mubr.f32.gmra.mxu0 %v4873
    %v5006 = vpop.f32.mrf.mxu0
    %v5007 = vadd.f32 %v4840, %v5006
    %v5008 = vpop.f32.mrf.mxu0
    %5009 = vmatprep.mubr.f32.mxu0 0.0
    %5010 = vmatmul.mubr.f32.gmra.mxu0 %v4876
    %v5011 = vpop.f32.mrf.mxu0
    %v5012 = vadd.f32 %v4840, %v5011
    %v5013 = vpop.f32.mrf.mxu0
    %5014 = vmatprep.mubr.f32.mxu0 0.0
    %5015 = vmatmul.mubr.f32.gmra.mxu0 %v4879
    %v5016 = vpop.f32.mrf.mxu0
    %v5017 = vadd.f32 %v4840, %v5016
    %v5018 = vpop.f32.mrf.mxu0
    %5019 = vmatprep.mubr.f32.mxu0 0.0
    %5020 = vmatmul.mubr.f32.gmra.mxu0 %v4882
    %v5021 = vpop.f32.mrf.mxu0
    %v5022 = vadd.f32 %v4840, %v5021
    %v5023 = vpop.f32.mrf.mxu0
    %5024 = vmatprep.mubr.f32.mxu0 0.0
    %5025 = vmatmul.mubr.f32.gmra.mxu0 %v4885
    %v5026 = vpop.f32.mrf.mxu0
    %v5027 = vadd.f32 %v4840, %v5026
    %v5028 = vpop.f32.mrf.mxu0
    %5029 = vmatprep.mubr.f32.mxu0 0.0
    %5030 = vmatmul.mubr.f32.gmra.mxu0 %v4888
    %v5031 = vpop.f32.mrf.mxu0
    %v5032 = vadd.f32 %v4840, %v5031
    %v5033 = vpop.f32.mrf.mxu0
    %5034 = vdwg.mxu0
    %v5035 = vtanh.pop %v4957
    %v5036 = vtanh.pop %v4962
    %v5037 = vtanh.pop %v4967
    %v5038 = vtanh.pop %v4972
    %v5039 = vtanh.pop %v4977
    %v5040 = vtanh.pop %v4982
    %v5041 = vtanh.pop %v4987
    %v5042 = vtanh.pop %v4992
    %v5043 = vtanh.pop %v4997
    %v5044 = vtanh.pop %v5002
    %v5045 = vtanh.pop %v5007
    %v5046 = vtanh.pop %v5012
    %v5047 = vtanh.pop %v5017
    %v5048 = vtanh.pop %v5022
    %v5049 = vtanh.pop %v5027
    %v5050 = vtanh.pop %v5032
    %5051 = vst.msk [vmem:[%s19 + $0x80] sm:$0xff] %vm137, %v5035
    %5052 = vst.msk [vmem:[%s19 + $0x88] sm:$0xff] %vm137, %v5036
    %5053 = vst.msk [vmem:[%s19 + $0x90] sm:$0xff] %vm137, %v5037
    %5054 = vst.msk [vmem:[%s19 + $0x98] sm:$0xff] %vm137, %v5038
    %5055 = vst.msk [vmem:[%s19 + $0xa0] sm:$0xff] %vm137, %v5039
    %5056 = vst.msk [vmem:[%s19 + $0xa8] sm:$0xff] %vm137, %v5040
    %5057 = vst.msk [vmem:[%s19 + $0xb0] sm:$0xff] %vm137, %v5041
    %5058 = vst.msk [vmem:[%s19 + $0xb8] sm:$0xff] %vm137, %v5042
    %5059 = vst.msk [vmem:[%s19 + $0x180] sm:$0xff] %vm137, %v5043
    %5060 = vst.msk [vmem:[%s19 + $0x188] sm:$0xff] %vm137, %v5044
    %5061 = vst.msk [vmem:[%s19 + $0x190] sm:$0xff] %vm137, %v5045
    %5062 = vst.msk [vmem:[%s19 + $0x198] sm:$0xff] %vm137, %v5046
    %5063 = vst.msk [vmem:[%s19 + $0x1a0] sm:$0xff] %vm137, %v5047
    %5064 = vst.msk [vmem:[%s19 + $0x1a8] sm:$0xff] %vm137, %v5048
    %5065 = vst.msk [vmem:[%s19 + $0x1b0] sm:$0xff] %vm137, %v5049
    %5066 = vst.msk [vmem:[%s19 + $0x1b8] sm:$0xff] %vm137, %v5050
    %s5067 = scalar_lea.vmem %s11, 384
    %v5068 = vld [vmem:[%s5067] sm:$0xff]
    %v5069 = vld [vmem:[%s5067 + $0x8] sm:$0xff]
    %v5070 = vld [vmem:[%s5067 + $0x10] sm:$0xff]
    %v5071 = vld [vmem:[%s5067 + $0x18] sm:$0xff]
    %v5072 = vld [vmem:[%s5067 + $0x20] sm:$0xff]
    %v5073 = vld [vmem:[%s5067 + $0x28] sm:$0xff]
    %v5074 = vld [vmem:[%s5067 + $0x30] sm:$0xff]
    %v5075 = vld [vmem:[%s5067 + $0x38] sm:$0xff]
    %v5076 = vld [vmem:[%s5067 + $0x40] sm:$0xff]
    %v5077 = vld [vmem:[%s5067 + $0x48] sm:$0xff]
    %v5078 = vld [vmem:[%s5067 + $0x50] sm:$0xff]
    %v5079 = vld [vmem:[%s5067 + $0x58] sm:$0xff]
    %v5080 = vld [vmem:[%s5067 + $0x60] sm:$0xff]
    %v5081 = vld [vmem:[%s5067 + $0x68] sm:$0xff]
    %v5082 = vld [vmem:[%s5067 + $0x70] sm:$0xff]
    %v5083 = vld [vmem:[%s5067 + $0x78] sm:$0xff]
    %s5084 = scalar_lea.vmem %s12, 3
    %v5085 = vld [vmem:[%s5084] sm:$0x1]
    %v5087 = vlaneseq
    %v5088 = vshrl.u32 %v5087, 7
    %v5089 = vsub.s32 0, %v5088
    %v5090 = vrot.slane %v5085, %v5089
    %5092 = vmatprep.subr.mxu0 0.0
    %5093 = vmatpush1.msra.mxu0 %v5083
    %5094 = vmatprep.subr.mxu0 0.0
    %5095 = vmatpush1.msra.mxu0 %v5082
    %5096 = vmatprep.subr.mxu0 0.0
    %5097 = vmatpush1.msra.mxu0 %v5081
    %5098 = vmatprep.subr.mxu0 0.0
    %5099 = vmatpush1.msra.mxu0 %v5080
    %5100 = vmatprep.subr.mxu0 0.0
    %5101 = vmatpush1.msra.mxu0 %v5079
    %5102 = vmatprep.subr.mxu0 0.0
    %5103 = vmatpush1.msra.mxu0 %v5078
    %5104 = vmatprep.subr.mxu0 0.0
    %5105 = vmatpush1.msra.mxu0 %v5077
    %5106 = vmatprep.subr.mxu0 0.0
    %5107 = vmatpush1.msra.mxu0 %v5076
    %5108 = vmatprep.subr.mxu0 0.0
    %5109 = vmatpush1.msra.mxu0 %v5075
    %5110 = vmatprep.subr.mxu0 0.0
    %5111 = vmatpush1.msra.mxu0 %v5074
    %5112 = vmatprep.subr.mxu0 0.0
    %5113 = vmatpush1.msra.mxu0 %v5073
    %5114 = vmatprep.subr.mxu0 0.0
    %5115 = vmatpush1.msra.mxu0 %v5072
    %5116 = vmatprep.subr.mxu0 0.0
    %5117 = vmatpush1.msra.mxu0 %v5071
    %5118 = vmatprep.subr.mxu0 0.0
    %5119 = vmatpush1.msra.mxu0 %v5070
    %5120 = vmatprep.subr.mxu0 0.0
    %5121 = vmatpush1.msra.mxu0 %v5069
    %5122 = vmatprep.subr.mxu0 0.0
    %5123 = vmatpush1.msra.mxu0 %v5068
    %5124 = vmatprep.subr.mxu0 0.0
    %5125 = vmatpush2.msra.mxu0 0.0
    %5126 = vmatprep.subr.mxu0 0.0
    %5127 = vmatpush2.msra.mxu0 0.0
    %5128 = vmatprep.subr.mxu0 0.0
    %5129 = vmatpush2.msra.mxu0 0.0
    %5130 = vmatprep.subr.mxu0 0.0
    %5131 = vmatpush2.msra.mxu0 0.0
    %5132 = vmatprep.subr.mxu0 0.0
    %5133 = vmatpush2.msra.mxu0 0.0
    %5134 = vmatprep.subr.mxu0 0.0
    %5135 = vmatpush2.msra.mxu0 0.0
    %5136 = vmatprep.subr.mxu0 0.0
    %5137 = vmatpush2.msra.mxu0 0.0
    %5138 = vmatprep.subr.mxu0 0.0
    %5139 = vmatpush2.msra.mxu0 0.0
    %5140 = vmatprep.subr.mxu0 0.0
    %5141 = vmatpush2.msra.mxu0 0.0
    %5142 = vmatprep.subr.mxu0 0.0
    %5143 = vmatpush2.msra.mxu0 0.0
    %5144 = vmatprep.subr.mxu0 0.0
    %5145 = vmatpush2.msra.mxu0 0.0
    %5146 = vmatprep.subr.mxu0 0.0
    %5147 = vmatpush2.msra.mxu0 0.0
    %5148 = vmatprep.subr.mxu0 0.0
    %5149 = vmatpush2.msra.mxu0 0.0
    %5150 = vmatprep.subr.mxu0 0.0
    %5151 = vmatpush2.msra.mxu0 0.0
    %5152 = vmatprep.subr.mxu0 0.0
    %5153 = vmatpush2.msra.mxu0 0.0
    %5154 = vmatprep.subr.mxu0 0.0
    %5155 = vmatpush2.msra.mxu0 0.0
    %5156 = vmatprep.mubr.f32.mxu0 0.0
    %5157 = vmatmul.mubr.f32.gmra.mxu0 %v2046
    %v5158 = vpop.f32.mrf.mxu0
    %v5159 = vadd.f32 %v5090, %v5158
    %v5160 = vpop.f32.mrf.mxu0
    %5161 = vdwg.mxu0
    %v5164 = vunpack.c.l.s4 1966171168
    %v5165 = vunpack.c.0.s8 %v5164
    %v5166 = vlaneseq
    %v5167 = vshrl.u32 %v5166, 7
    %v5168 = vsub.s32 %v5165, %v5167
    %v5169 = vrot.slane %v5159, %v5168
    %v5170 = vcombine.high %v5169, %v5169
    %v5172 = vunpack.c.l.s4 1966171168
    %v5173 = vunpack.c.0.s8 %v5172
    %v5174 = vlaneseq
    %v5175 = vshrl.u32 %v5174, 7
    %v5176 = vsub.s32 %v5173, %v5175
    %v5177 = vrot.slane %v5169, %v5176
    %v5179 = vunpack.c.l.s4 1966171168
    %v5180 = vunpack.c.0.s8 %v5179
    %v5181 = vlaneseq
    %v5182 = vshrl.u32 %v5181, 7
    %v5183 = vsub.s32 %v5180, %v5182
    %v5184 = vrot.slane %v5170, %v5183
    %v5185 = vlaneseq
    %v5186 = vshrl.u32 %v5185, 7
    %v5187 = vsub.s32 0, %v5186
    %v5188 = vrot.slane %v5177, %v5187
    %v5189 = vlaneseq
    %v5190 = vshrl.u32 %v5189, 7
    %v5191 = vsub.s32 0, %v5190
    %v5192 = vrot.slane %v5184, %v5191
    %s5195 = scalar_lea.vmem %s1, 384
    %v5196 = vld [vmem:[%s5195] sm:$0xff]
    %v5197 = vld [vmem:[%s5195 + $0x8] sm:$0xff]
    %v5198 = vld [vmem:[%s5195 + $0x10] sm:$0xff]
    %v5199 = vld [vmem:[%s5195 + $0x18] sm:$0xff]
    %v5200 = vld [vmem:[%s5195 + $0x20] sm:$0xff]
    %v5201 = vld [vmem:[%s5195 + $0x28] sm:$0xff]
    %v5202 = vld [vmem:[%s5195 + $0x30] sm:$0xff]
    %v5203 = vld [vmem:[%s5195 + $0x38] sm:$0xff]
    %v5204 = vld [vmem:[%s5195 + $0x40] sm:$0xff]
    %v5205 = vld [vmem:[%s5195 + $0x48] sm:$0xff]
    %v5206 = vld [vmem:[%s5195 + $0x50] sm:$0xff]
    %v5207 = vld [vmem:[%s5195 + $0x58] sm:$0xff]
    %v5208 = vld [vmem:[%s5195 + $0x60] sm:$0xff]
    %v5209 = vld [vmem:[%s5195 + $0x68] sm:$0xff]
    %v5210 = vld [vmem:[%s5195 + $0x70] sm:$0xff]
    %v5211 = vld [vmem:[%s5195 + $0x78] sm:$0xff]
    %s5212 = scalar_lea.vmem %s10, 6
    %v5213 = vld [vmem:[%s5212] sm:$0x3]
    %v5215 = vsel %vm2190, %v5196, 0
    %v5218 = vsel %vm2190, %v5197, 0
    %v5221 = vsel %vm2190, %v5198, 0
    %v5224 = vsel %vm2190, %v5199, 0
    %v5227 = vsel %vm2190, %v5200, 0
    %v5230 = vsel %vm2190, %v5201, 0
    %v5233 = vsel %vm2190, %v5202, 0
    %v5236 = vsel %vm2190, %v5203, 0
    %v5239 = vsel %vm2190, %v5204, 0
    %v5242 = vsel %vm2190, %v5205, 0
    %v5245 = vsel %vm2190, %v5206, 0
    %v5248 = vsel %vm2190, %v5207, 0
    %v5251 = vsel %vm2190, %v5208, 0
    %v5254 = vsel %vm2190, %v5209, 0
    %v5257 = vsel %vm2190, %v5210, 0
    %v5260 = vsel %vm2190, %v5211, 0
    %v5263 = vsel %vm2239, %v5213, 0
    %5265 = vmatprep.subr.mxu0 0.0
    %5266 = vmatpush1.msra.mxu0 0.0
    %5267 = vmatprep.subr.mxu0 0.0
    %5268 = vmatpush1.msra.mxu0 0.0
    %5269 = vmatprep.subr.mxu0 0.0
    %5270 = vmatpush1.msra.mxu0 0.0
    %5271 = vmatprep.subr.mxu0 0.0
    %5272 = vmatpush1.msra.mxu0 0.0
    %5273 = vmatprep.subr.mxu0 0.0
    %5274 = vmatpush1.msra.mxu0 0.0
    %5275 = vmatprep.subr.mxu0 0.0
    %5276 = vmatpush1.msra.mxu0 0.0
    %5277 = vmatprep.subr.mxu0 0.0
    %5278 = vmatpush1.msra.mxu0 0.0
    %5279 = vmatprep.subr.mxu0 0.0
    %5280 = vmatpush1.msra.mxu0 0.0
    %5281 = vmatprep.subr.mxu0 0.0
    %5282 = vmatpush1.msra.mxu0 0.0
    %5283 = vmatprep.subr.mxu0 0.0
    %5284 = vmatpush1.msra.mxu0 0.0
    %5285 = vmatprep.subr.mxu0 0.0
    %5286 = vmatpush1.msra.mxu0 0.0
    %5287 = vmatprep.subr.mxu0 0.0
    %5288 = vmatpush1.msra.mxu0 0.0
    %5289 = vmatprep.subr.mxu0 0.0
    %5290 = vmatpush1.msra.mxu0 0.0
    %5291 = vmatprep.subr.mxu0 0.0
    %5292 = vmatpush1.msra.mxu0 0.0
    %5293 = vmatprep.subr.mxu0 0.0
    %5294 = vmatpush1.msra.mxu0 0.0
    %5295 = vmatprep.subr.mxu0 0.0
    %5296 = vmatpush1.msra.mxu0 %v5263
    %5297 = vmatprep.subr.mxu0 0.0
    %5298 = vmatpush2.msra.mxu0 0.0
    %5299 = vmatprep.subr.mxu0 0.0
    %5300 = vmatpush2.msra.mxu0 0.0
    %5301 = vmatprep.subr.mxu0 0.0
    %5302 = vmatpush2.msra.mxu0 0.0
    %5303 = vmatprep.subr.mxu0 0.0
    %5304 = vmatpush2.msra.mxu0 0.0
    %5305 = vmatprep.subr.mxu0 0.0
    %5306 = vmatpush2.msra.mxu0 0.0
    %5307 = vmatprep.subr.mxu0 0.0
    %5308 = vmatpush2.msra.mxu0 0.0
    %5309 = vmatprep.subr.mxu0 0.0
    %5310 = vmatpush2.msra.mxu0 0.0
    %5311 = vmatprep.subr.mxu0 0.0
    %5312 = vmatpush2.msra.mxu0 0.0
    %5313 = vmatprep.subr.mxu0 0.0
    %5314 = vmatpush2.msra.mxu0 0.0
    %5315 = vmatprep.subr.mxu0 0.0
    %5316 = vmatpush2.msra.mxu0 0.0
    %5317 = vmatprep.subr.mxu0 0.0
    %5318 = vmatpush2.msra.mxu0 0.0
    %5319 = vmatprep.subr.mxu0 0.0
    %5320 = vmatpush2.msra.mxu0 0.0
    %5321 = vmatprep.subr.mxu0 0.0
    %5322 = vmatpush2.msra.mxu0 0.0
    %5323 = vmatprep.subr.mxu0 0.0
    %5324 = vmatpush2.msra.mxu0 0.0
    %5325 = vmatprep.subr.mxu0 0.0
    %5326 = vmatpush2.msra.mxu0 0.0
    %5327 = vmatprep.subr.mxu0 0.0
    %5328 = vmatpush2.msra.mxu0 0.0
    %5329 = vmatprep.mubr.f32.mxu0 0.0
    %5330 = vmatmul.mubr.f32.gmra.mxu0 %v5215
    %v5331 = vpop.f32.mrf.mxu0
    %v5332 = vadd.f32 %v5188, %v5331
    %v5333 = vpop.f32.mrf.mxu0
    %5334 = vmatprep.mubr.f32.mxu0 0.0
    %5335 = vmatmul.mubr.f32.gmra.mxu0 %v5218
    %v5336 = vpop.f32.mrf.mxu0
    %v5337 = vadd.f32 %v5188, %v5336
    %v5338 = vpop.f32.mrf.mxu0
    %5339 = vmatprep.mubr.f32.mxu0 0.0
    %5340 = vmatmul.mubr.f32.gmra.mxu0 %v5221
    %v5341 = vpop.f32.mrf.mxu0
    %v5342 = vadd.f32 %v5188, %v5341
    %v5343 = vpop.f32.mrf.mxu0
    %5344 = vmatprep.mubr.f32.mxu0 0.0
    %5345 = vmatmul.mubr.f32.gmra.mxu0 %v5224
    %v5346 = vpop.f32.mrf.mxu0
    %v5347 = vadd.f32 %v5188, %v5346
    %v5348 = vpop.f32.mrf.mxu0
    %5349 = vmatprep.mubr.f32.mxu0 0.0
    %5350 = vmatmul.mubr.f32.gmra.mxu0 %v5227
    %v5351 = vpop.f32.mrf.mxu0
    %v5352 = vadd.f32 %v5188, %v5351
    %v5353 = vpop.f32.mrf.mxu0
    %5354 = vmatprep.mubr.f32.mxu0 0.0
    %5355 = vmatmul.mubr.f32.gmra.mxu0 %v5230
    %v5356 = vpop.f32.mrf.mxu0
    %v5357 = vadd.f32 %v5188, %v5356
    %v5358 = vpop.f32.mrf.mxu0
    %5359 = vmatprep.mubr.f32.mxu0 0.0
    %5360 = vmatmul.mubr.f32.gmra.mxu0 %v5233
    %v5361 = vpop.f32.mrf.mxu0
    %v5362 = vadd.f32 %v5188, %v5361
    %v5363 = vpop.f32.mrf.mxu0
    %5364 = vmatprep.mubr.f32.mxu0 0.0
    %5365 = vmatmul.mubr.f32.gmra.mxu0 %v5236
    %v5366 = vpop.f32.mrf.mxu0
    %v5367 = vadd.f32 %v5188, %v5366
    %v5368 = vpop.f32.mrf.mxu0
    %5369 = vmatprep.mubr.f32.mxu0 0.0
    %5370 = vmatmul.mubr.f32.gmra.mxu0 %v5239
    %v5371 = vpop.f32.mrf.mxu0
    %v5372 = vadd.f32 %v5192, %v5371
    %v5373 = vpop.f32.mrf.mxu0
    %5374 = vmatprep.mubr.f32.mxu0 0.0
    %5375 = vmatmul.mubr.f32.gmra.mxu0 %v5242
    %v5376 = vpop.f32.mrf.mxu0
    %v5377 = vadd.f32 %v5192, %v5376
    %v5378 = vpop.f32.mrf.mxu0
    %5379 = vmatprep.mubr.f32.mxu0 0.0
    %5380 = vmatmul.mubr.f32.gmra.mxu0 %v5245
    %v5381 = vpop.f32.mrf.mxu0
    %v5382 = vadd.f32 %v5192, %v5381
    %v5383 = vpop.f32.mrf.mxu0
    %5384 = vmatprep.mubr.f32.mxu0 0.0
    %5385 = vmatmul.mubr.f32.gmra.mxu0 %v5248
    %v5386 = vpop.f32.mrf.mxu0
    %v5387 = vadd.f32 %v5192, %v5386
    %v5388 = vpop.f32.mrf.mxu0
    %5389 = vmatprep.mubr.f32.mxu0 0.0
    %5390 = vmatmul.mubr.f32.gmra.mxu0 %v5251
    %v5391 = vpop.f32.mrf.mxu0
    %v5392 = vadd.f32 %v5192, %v5391
    %v5393 = vpop.f32.mrf.mxu0
    %5394 = vmatprep.mubr.f32.mxu0 0.0
    %5395 = vmatmul.mubr.f32.gmra.mxu0 %v5254
    %v5396 = vpop.f32.mrf.mxu0
    %v5397 = vadd.f32 %v5192, %v5396
    %v5398 = vpop.f32.mrf.mxu0
    %5399 = vmatprep.mubr.f32.mxu0 0.0
    %5400 = vmatmul.mubr.f32.gmra.mxu0 %v5257
    %v5401 = vpop.f32.mrf.mxu0
    %v5402 = vadd.f32 %v5192, %v5401
    %v5403 = vpop.f32.mrf.mxu0
    %5404 = vmatprep.mubr.f32.mxu0 0.0
    %5405 = vmatmul.mubr.f32.gmra.mxu0 %v5260
    %v5406 = vpop.f32.mrf.mxu0
    %v5407 = vadd.f32 %v5192, %v5406
    %v5408 = vpop.f32.mrf.mxu0
    %5409 = vdwg.mxu0
    %v5410 = vmax.f32 %v5332, 0.0
    %v5411 = vmax.f32 %v5337, 0.0
    %v5412 = vmax.f32 %v5342, 0.0
    %v5413 = vmax.f32 %v5347, 0.0
    %v5414 = vmax.f32 %v5352, 0.0
    %v5415 = vmax.f32 %v5357, 0.0
    %v5416 = vmax.f32 %v5362, 0.0
    %v5417 = vmax.f32 %v5367, 0.0
    %v5418 = vmax.f32 %v5372, 0.0
    %v5419 = vmax.f32 %v5377, 0.0
    %v5420 = vmax.f32 %v5382, 0.0
    %v5421 = vmax.f32 %v5387, 0.0
    %v5422 = vmax.f32 %v5392, 0.0
    %v5423 = vmax.f32 %v5397, 0.0
    %v5424 = vmax.f32 %v5402, 0.0
    %v5425 = vmax.f32 %v5407, 0.0
    %s5426 = scalar_lea.vmem %s13, 384
    %v5427 = vld [vmem:[%s5426] sm:$0xff]
    %v5428 = vld [vmem:[%s5426 + $0x8] sm:$0xff]
    %v5429 = vld [vmem:[%s5426 + $0x10] sm:$0xff]
    %v5430 = vld [vmem:[%s5426 + $0x18] sm:$0xff]
    %v5431 = vld [vmem:[%s5426 + $0x20] sm:$0xff]
    %v5432 = vld [vmem:[%s5426 + $0x28] sm:$0xff]
    %v5433 = vld [vmem:[%s5426 + $0x30] sm:$0xff]
    %v5434 = vld [vmem:[%s5426 + $0x38] sm:$0xff]
    %v5435 = vld [vmem:[%s5426 + $0x40] sm:$0xff]
    %v5436 = vld [vmem:[%s5426 + $0x48] sm:$0xff]
    %v5437 = vld [vmem:[%s5426 + $0x50] sm:$0xff]
    %v5438 = vld [vmem:[%s5426 + $0x58] sm:$0xff]
    %v5439 = vld [vmem:[%s5426 + $0x60] sm:$0xff]
    %v5440 = vld [vmem:[%s5426 + $0x68] sm:$0xff]
    %v5441 = vld [vmem:[%s5426 + $0x70] sm:$0xff]
    %v5442 = vld [vmem:[%s5426 + $0x78] sm:$0xff]
    %s5443 = scalar_lea.vmem %s14, 3
    %v5444 = vld [vmem:[%s5443] sm:$0x1]
    %v5446 = vlaneseq
    %v5447 = vshrl.u32 %v5446, 7
    %v5448 = vsub.s32 0, %v5447
    %v5449 = vrot.slane %v5444, %v5448
    %5451 = vmatprep.subr.mxu0 0.0
    %5452 = vmatpush1.msra.mxu0 %v5442
    %5453 = vmatprep.subr.mxu0 0.0
    %5454 = vmatpush1.msra.mxu0 %v5441
    %5455 = vmatprep.subr.mxu0 0.0
    %5456 = vmatpush1.msra.mxu0 %v5440
    %5457 = vmatprep.subr.mxu0 0.0
    %5458 = vmatpush1.msra.mxu0 %v5439
    %5459 = vmatprep.subr.mxu0 0.0
    %5460 = vmatpush1.msra.mxu0 %v5438
    %5461 = vmatprep.subr.mxu0 0.0
    %5462 = vmatpush1.msra.mxu0 %v5437
    %5463 = vmatprep.subr.mxu0 0.0
    %5464 = vmatpush1.msra.mxu0 %v5436
    %5465 = vmatprep.subr.mxu0 0.0
    %5466 = vmatpush1.msra.mxu0 %v5435
    %5467 = vmatprep.subr.mxu0 0.0
    %5468 = vmatpush1.msra.mxu0 %v5434
    %5469 = vmatprep.subr.mxu0 0.0
    %5470 = vmatpush1.msra.mxu0 %v5433
    %5471 = vmatprep.subr.mxu0 0.0
    %5472 = vmatpush1.msra.mxu0 %v5432
    %5473 = vmatprep.subr.mxu0 0.0
    %5474 = vmatpush1.msra.mxu0 %v5431
    %5475 = vmatprep.subr.mxu0 0.0
    %5476 = vmatpush1.msra.mxu0 %v5430
    %5477 = vmatprep.subr.mxu0 0.0
    %5478 = vmatpush1.msra.mxu0 %v5429
    %5479 = vmatprep.subr.mxu0 0.0
    %5480 = vmatpush1.msra.mxu0 %v5428
    %5481 = vmatprep.subr.mxu0 0.0
    %5482 = vmatpush1.msra.mxu0 %v5427
    %5483 = vmatprep.subr.mxu0 0.0
    %5484 = vmatpush2.msra.mxu0 0.0
    %5485 = vmatprep.subr.mxu0 0.0
    %5486 = vmatpush2.msra.mxu0 0.0
    %5487 = vmatprep.subr.mxu0 0.0
    %5488 = vmatpush2.msra.mxu0 0.0
    %5489 = vmatprep.subr.mxu0 0.0
    %5490 = vmatpush2.msra.mxu0 0.0
    %5491 = vmatprep.subr.mxu0 0.0
    %5492 = vmatpush2.msra.mxu0 0.0
    %5493 = vmatprep.subr.mxu0 0.0
    %5494 = vmatpush2.msra.mxu0 0.0
    %5495 = vmatprep.subr.mxu0 0.0
    %5496 = vmatpush2.msra.mxu0 0.0
    %5497 = vmatprep.subr.mxu0 0.0
    %5498 = vmatpush2.msra.mxu0 0.0
    %5499 = vmatprep.subr.mxu0 0.0
    %5500 = vmatpush2.msra.mxu0 0.0
    %5501 = vmatprep.subr.mxu0 0.0
    %5502 = vmatpush2.msra.mxu0 0.0
    %5503 = vmatprep.subr.mxu0 0.0
    %5504 = vmatpush2.msra.mxu0 0.0
    %5505 = vmatprep.subr.mxu0 0.0
    %5506 = vmatpush2.msra.mxu0 0.0
    %5507 = vmatprep.subr.mxu0 0.0
    %5508 = vmatpush2.msra.mxu0 0.0
    %5509 = vmatprep.subr.mxu0 0.0
    %5510 = vmatpush2.msra.mxu0 0.0
    %5511 = vmatprep.subr.mxu0 0.0
    %5512 = vmatpush2.msra.mxu0 0.0
    %5513 = vmatprep.subr.mxu0 0.0
    %5514 = vmatpush2.msra.mxu0 0.0
    %5515 = vmatprep.mubr.f32.mxu0 0.0
    %5516 = vmatmul.mubr.f32.gmra.mxu0 %v5410
    %v5517 = vpop.f32.mrf.mxu0
    %v5518 = vadd.f32 %v5449, %v5517
    %v5519 = vpop.f32.mrf.mxu0
    %5520 = vmatprep.mubr.f32.mxu0 0.0
    %5521 = vmatmul.mubr.f32.gmra.mxu0 %v5411
    %v5522 = vpop.f32.mrf.mxu0
    %v5523 = vadd.f32 %v5449, %v5522
    %v5524 = vpop.f32.mrf.mxu0
    %5525 = vmatprep.mubr.f32.mxu0 0.0
    %5526 = vmatmul.mubr.f32.gmra.mxu0 %v5412
    %v5527 = vpop.f32.mrf.mxu0
    %v5528 = vadd.f32 %v5449, %v5527
    %v5529 = vpop.f32.mrf.mxu0
    %5530 = vmatprep.mubr.f32.mxu0 0.0
    %5531 = vmatmul.mubr.f32.gmra.mxu0 %v5413
    %v5532 = vpop.f32.mrf.mxu0
    %v5533 = vadd.f32 %v5449, %v5532
    %v5534 = vpop.f32.mrf.mxu0
    %5535 = vmatprep.mubr.f32.mxu0 0.0
    %5536 = vmatmul.mubr.f32.gmra.mxu0 %v5414
    %v5537 = vpop.f32.mrf.mxu0
    %v5538 = vadd.f32 %v5449, %v5537
    %v5539 = vpop.f32.mrf.mxu0
    %5540 = vmatprep.mubr.f32.mxu0 0.0
    %5541 = vmatmul.mubr.f32.gmra.mxu0 %v5415
    %v5542 = vpop.f32.mrf.mxu0
    %v5543 = vadd.f32 %v5449, %v5542
    %v5544 = vpop.f32.mrf.mxu0
    %5545 = vmatprep.mubr.f32.mxu0 0.0
    %5546 = vmatmul.mubr.f32.gmra.mxu0 %v5416
    %v5547 = vpop.f32.mrf.mxu0
    %v5548 = vadd.f32 %v5449, %v5547
    %v5549 = vpop.f32.mrf.mxu0
    %5550 = vmatprep.mubr.f32.mxu0 0.0
    %5551 = vmatmul.mubr.f32.gmra.mxu0 %v5417
    %v5552 = vpop.f32.mrf.mxu0
    %v5553 = vadd.f32 %v5449, %v5552
    %v5554 = vpop.f32.mrf.mxu0
    %5555 = vmatprep.mubr.f32.mxu0 0.0
    %5556 = vmatmul.mubr.f32.gmra.mxu0 %v5418
    %v5557 = vpop.f32.mrf.mxu0
    %v5558 = vadd.f32 %v5449, %v5557
    %v5559 = vpop.f32.mrf.mxu0
    %5560 = vmatprep.mubr.f32.mxu0 0.0
    %5561 = vmatmul.mubr.f32.gmra.mxu0 %v5419
    %v5562 = vpop.f32.mrf.mxu0
    %v5563 = vadd.f32 %v5449, %v5562
    %v5564 = vpop.f32.mrf.mxu0
    %5565 = vmatprep.mubr.f32.mxu0 0.0
    %5566 = vmatmul.mubr.f32.gmra.mxu0 %v5420
    %v5567 = vpop.f32.mrf.mxu0
    %v5568 = vadd.f32 %v5449, %v5567
    %v5569 = vpop.f32.mrf.mxu0
    %5570 = vmatprep.mubr.f32.mxu0 0.0
    %5571 = vmatmul.mubr.f32.gmra.mxu0 %v5421
    %v5572 = vpop.f32.mrf.mxu0
    %v5573 = vadd.f32 %v5449, %v5572
    %v5574 = vpop.f32.mrf.mxu0
    %5575 = vmatprep.mubr.f32.mxu0 0.0
    %5576 = vmatmul.mubr.f32.gmra.mxu0 %v5422
    %v5577 = vpop.f32.mrf.mxu0
    %v5578 = vadd.f32 %v5449, %v5577
    %v5579 = vpop.f32.mrf.mxu0
    %5580 = vmatprep.mubr.f32.mxu0 0.0
    %5581 = vmatmul.mubr.f32.gmra.mxu0 %v5423
    %v5582 = vpop.f32.mrf.mxu0
    %v5583 = vadd.f32 %v5449, %v5582
    %v5584 = vpop.f32.mrf.mxu0
    %5585 = vmatprep.mubr.f32.mxu0 0.0
    %5586 = vmatmul.mubr.f32.gmra.mxu0 %v5424
    %v5587 = vpop.f32.mrf.mxu0
    %v5588 = vadd.f32 %v5449, %v5587
    %v5589 = vpop.f32.mrf.mxu0
    %5590 = vmatprep.mubr.f32.mxu0 0.0
    %5591 = vmatmul.mubr.f32.gmra.mxu0 %v5425
    %v5592 = vpop.f32.mrf.mxu0
    %v5593 = vadd.f32 %v5449, %v5592
    %v5594 = vpop.f32.mrf.mxu0
    %5595 = vdwg.mxu0
    %v5596 = vmax.f32 %v5518, 0.0
    %v5597 = vmax.f32 %v5523, 0.0
    %v5598 = vmax.f32 %v5528, 0.0
    %v5599 = vmax.f32 %v5533, 0.0
    %v5600 = vmax.f32 %v5538, 0.0
    %v5601 = vmax.f32 %v5543, 0.0
    %v5602 = vmax.f32 %v5548, 0.0
    %v5603 = vmax.f32 %v5553, 0.0
    %v5604 = vmax.f32 %v5558, 0.0
    %v5605 = vmax.f32 %v5563, 0.0
    %v5606 = vmax.f32 %v5568, 0.0
    %v5607 = vmax.f32 %v5573, 0.0
    %v5608 = vmax.f32 %v5578, 0.0
    %v5609 = vmax.f32 %v5583, 0.0
    %v5610 = vmax.f32 %v5588, 0.0
    %v5611 = vmax.f32 %v5593, 0.0
    %s5612 = scalar_lea.vmem %s15, 192
    %v5613 = vld [vmem:[%s5612] sm:$0xff]
    %v5614 = vld [vmem:[%s5612 + $0x8] sm:$0xff]
    %v5615 = vld [vmem:[%s5612 + $0x10] sm:$0xff]
    %v5616 = vld [vmem:[%s5612 + $0x18] sm:$0xff]
    %v5617 = vld [vmem:[%s5612 + $0x20] sm:$0xff]
    %v5618 = vld [vmem:[%s5612 + $0x28] sm:$0xff]
    %v5619 = vld [vmem:[%s5612 + $0x30] sm:$0xff]
    %v5620 = vld [vmem:[%s5612 + $0x38] sm:$0xff]
    %s5621 = scalar_lea.vmem %s16, 3
    %v5622 = vld [vmem:[%s5621] sm:$0x1]
    %v5624 = vlaneseq
    %v5625 = vshrl.u32 %v5624, 7
    %v5626 = vsub.s32 0, %v5625
    %v5627 = vrot.slane %v5622, %v5626
    %v5630 = vsel %vm366, %v5596, 0
    %v5633 = vsel %vm366, %v5597, 0
    %v5636 = vsel %vm366, %v5598, 0
    %v5639 = vsel %vm366, %v5599, 0
    %v5642 = vsel %vm366, %v5600, 0
    %v5645 = vsel %vm366, %v5601, 0
    %v5648 = vsel %vm366, %v5602, 0
    %v5651 = vsel %vm366, %v5603, 0
    %v5654 = vsel %vm366, %v5604, 0
    %v5657 = vsel %vm366, %v5605, 0
    %v5660 = vsel %vm366, %v5606, 0
    %v5663 = vsel %vm366, %v5607, 0
    %v5666 = vsel %vm366, %v5608, 0
    %v5669 = vsel %vm366, %v5609, 0
    %v5672 = vsel %vm366, %v5610, 0
    %v5675 = vsel %vm366, %v5611, 0
    %5677 = vmatprep.subr.mxu0 0.0
    %5678 = vmatpush1.msra.mxu0 0.0
    %5679 = vmatprep.subr.mxu0 0.0
    %5680 = vmatpush1.msra.mxu0 0.0
    %5681 = vmatprep.subr.mxu0 0.0
    %5682 = vmatpush1.msra.mxu0 0.0
    %5683 = vmatprep.subr.mxu0 0.0
    %5684 = vmatpush1.msra.mxu0 0.0
    %5685 = vmatprep.subr.mxu0 0.0
    %5686 = vmatpush1.msra.mxu0 0.0
    %5687 = vmatprep.subr.mxu0 0.0
    %5688 = vmatpush1.msra.mxu0 0.0
    %5689 = vmatprep.subr.mxu0 0.0
    %5690 = vmatpush1.msra.mxu0 0.0
    %5691 = vmatprep.subr.mxu0 0.0
    %5692 = vmatpush1.msra.mxu0 0.0
    %5693 = vmatprep.subr.mxu0 0.0
    %5694 = vmatpush1.msra.mxu0 %v5620
    %5695 = vmatprep.subr.mxu0 0.0
    %5696 = vmatpush1.msra.mxu0 %v5619
    %5697 = vmatprep.subr.mxu0 0.0
    %5698 = vmatpush1.msra.mxu0 %v5618
    %5699 = vmatprep.subr.mxu0 0.0
    %5700 = vmatpush1.msra.mxu0 %v5617
    %5701 = vmatprep.subr.mxu0 0.0
    %5702 = vmatpush1.msra.mxu0 %v5616
    %5703 = vmatprep.subr.mxu0 0.0
    %5704 = vmatpush1.msra.mxu0 %v5615
    %5705 = vmatprep.subr.mxu0 0.0
    %5706 = vmatpush1.msra.mxu0 %v5614
    %5707 = vmatprep.subr.mxu0 0.0
    %5708 = vmatpush1.msra.mxu0 %v5613
    %5709 = vmatprep.subr.mxu0 0.0
    %5710 = vmatpush2.msra.mxu0 0.0
    %5711 = vmatprep.subr.mxu0 0.0
    %5712 = vmatpush2.msra.mxu0 0.0
    %5713 = vmatprep.subr.mxu0 0.0
    %5714 = vmatpush2.msra.mxu0 0.0
    %5715 = vmatprep.subr.mxu0 0.0
    %5716 = vmatpush2.msra.mxu0 0.0
    %5717 = vmatprep.subr.mxu0 0.0
    %5718 = vmatpush2.msra.mxu0 0.0
    %5719 = vmatprep.subr.mxu0 0.0
    %5720 = vmatpush2.msra.mxu0 0.0
    %5721 = vmatprep.subr.mxu0 0.0
    %5722 = vmatpush2.msra.mxu0 0.0
    %5723 = vmatprep.subr.mxu0 0.0
    %5724 = vmatpush2.msra.mxu0 0.0
    %5725 = vmatprep.subr.mxu0 0.0
    %5726 = vmatpush2.msra.mxu0 0.0
    %5727 = vmatprep.subr.mxu0 0.0
    %5728 = vmatpush2.msra.mxu0 0.0
    %5729 = vmatprep.subr.mxu0 0.0
    %5730 = vmatpush2.msra.mxu0 0.0
    %5731 = vmatprep.subr.mxu0 0.0
    %5732 = vmatpush2.msra.mxu0 0.0
    %5733 = vmatprep.subr.mxu0 0.0
    %5734 = vmatpush2.msra.mxu0 0.0
    %5735 = vmatprep.subr.mxu0 0.0
    %5736 = vmatpush2.msra.mxu0 0.0
    %5737 = vmatprep.subr.mxu0 0.0
    %5738 = vmatpush2.msra.mxu0 0.0
    %5739 = vmatprep.subr.mxu0 0.0
    %5740 = vmatpush2.msra.mxu0 0.0
    %5741 = vmatprep.mubr.f32.mxu0 0.0
    %5742 = vmatmul.mubr.f32.gmra.mxu0 %v5630
    %v5743 = vpop.f32.mrf.mxu0
    %v5744 = vadd.f32 %v5627, %v5743
    %v5745 = vpop.f32.mrf.mxu0
    %5746 = vmatprep.mubr.f32.mxu0 0.0
    %5747 = vmatmul.mubr.f32.gmra.mxu0 %v5633
    %v5748 = vpop.f32.mrf.mxu0
    %v5749 = vadd.f32 %v5627, %v5748
    %v5750 = vpop.f32.mrf.mxu0
    %5751 = vmatprep.mubr.f32.mxu0 0.0
    %5752 = vmatmul.mubr.f32.gmra.mxu0 %v5636
    %v5753 = vpop.f32.mrf.mxu0
    %v5754 = vadd.f32 %v5627, %v5753
    %v5755 = vpop.f32.mrf.mxu0
    %5756 = vmatprep.mubr.f32.mxu0 0.0
    %5757 = vmatmul.mubr.f32.gmra.mxu0 %v5639
    %v5758 = vpop.f32.mrf.mxu0
    %v5759 = vadd.f32 %v5627, %v5758
    %v5760 = vpop.f32.mrf.mxu0
    %5761 = vmatprep.mubr.f32.mxu0 0.0
    %5762 = vmatmul.mubr.f32.gmra.mxu0 %v5642
    %v5763 = vpop.f32.mrf.mxu0
    %v5764 = vadd.f32 %v5627, %v5763
    %v5765 = vpop.f32.mrf.mxu0
    %5766 = vmatprep.mubr.f32.mxu0 0.0
    %5767 = vmatmul.mubr.f32.gmra.mxu0 %v5645
    %v5768 = vpop.f32.mrf.mxu0
    %v5769 = vadd.f32 %v5627, %v5768
    %v5770 = vpop.f32.mrf.mxu0
    %5771 = vmatprep.mubr.f32.mxu0 0.0
    %5772 = vmatmul.mubr.f32.gmra.mxu0 %v5648
    %v5773 = vpop.f32.mrf.mxu0
    %v5774 = vadd.f32 %v5627, %v5773
    %v5775 = vpop.f32.mrf.mxu0
    %5776 = vmatprep.mubr.f32.mxu0 0.0
    %5777 = vmatmul.mubr.f32.gmra.mxu0 %v5651
    %v5778 = vpop.f32.mrf.mxu0
    %v5779 = vadd.f32 %v5627, %v5778
    %v5780 = vpop.f32.mrf.mxu0
    %5781 = vmatprep.mubr.f32.mxu0 0.0
    %5782 = vmatmul.mubr.f32.gmra.mxu0 %v5654
    %v5783 = vpop.f32.mrf.mxu0
    %v5784 = vadd.f32 %v5627, %v5783
    %v5785 = vpop.f32.mrf.mxu0
    %5786 = vmatprep.mubr.f32.mxu0 0.0
    %5787 = vmatmul.mubr.f32.gmra.mxu0 %v5657
    %v5788 = vpop.f32.mrf.mxu0
    %v5789 = vadd.f32 %v5627, %v5788
    %v5790 = vpop.f32.mrf.mxu0
    %5791 = vmatprep.mubr.f32.mxu0 0.0
    %5792 = vmatmul.mubr.f32.gmra.mxu0 %v5660
    %v5793 = vpop.f32.mrf.mxu0
    %v5794 = vadd.f32 %v5627, %v5793
    %v5795 = vpop.f32.mrf.mxu0
    %5796 = vmatprep.mubr.f32.mxu0 0.0
    %5797 = vmatmul.mubr.f32.gmra.mxu0 %v5663
    %v5798 = vpop.f32.mrf.mxu0
    %v5799 = vadd.f32 %v5627, %v5798
    %v5800 = vpop.f32.mrf.mxu0
    %5801 = vmatprep.mubr.f32.mxu0 0.0
    %5802 = vmatmul.mubr.f32.gmra.mxu0 %v5666
    %v5803 = vpop.f32.mrf.mxu0
    %v5804 = vadd.f32 %v5627, %v5803
    %v5805 = vpop.f32.mrf.mxu0
    %5806 = vmatprep.mubr.f32.mxu0 0.0
    %5807 = vmatmul.mubr.f32.gmra.mxu0 %v5669
    %v5808 = vpop.f32.mrf.mxu0
    %v5809 = vadd.f32 %v5627, %v5808
    %v5810 = vpop.f32.mrf.mxu0
    %5811 = vmatprep.mubr.f32.mxu0 0.0
    %5812 = vmatmul.mubr.f32.gmra.mxu0 %v5672
    %v5813 = vpop.f32.mrf.mxu0
    %v5814 = vadd.f32 %v5627, %v5813
    %v5815 = vpop.f32.mrf.mxu0
    %5816 = vmatprep.mubr.f32.mxu0 0.0
    %5817 = vmatmul.mubr.f32.gmra.mxu0 %v5675
    %v5818 = vpop.f32.mrf.mxu0
    %v5819 = vadd.f32 %v5627, %v5818
    %v5820 = vpop.f32.mrf.mxu0
    %5821 = vdwg.mxu0
    %v5822 = vmax.f32 %v5744, 0.0
    %v5823 = vmax.f32 %v5749, 0.0
    %v5824 = vmax.f32 %v5754, 0.0
    %v5825 = vmax.f32 %v5759, 0.0
    %v5826 = vmax.f32 %v5764, 0.0
    %v5827 = vmax.f32 %v5769, 0.0
    %v5828 = vmax.f32 %v5774, 0.0
    %v5829 = vmax.f32 %v5779, 0.0
    %v5830 = vmax.f32 %v5784, 0.0
    %v5831 = vmax.f32 %v5789, 0.0
    %v5832 = vmax.f32 %v5794, 0.0
    %v5833 = vmax.f32 %v5799, 0.0
    %v5834 = vmax.f32 %v5804, 0.0
    %v5835 = vmax.f32 %v5809, 0.0
    %v5836 = vmax.f32 %v5814, 0.0
    %v5837 = vmax.f32 %v5819, 0.0
    %s5838 = scalar_lea.vmem %s17, 96
    %v5839 = vld [vmem:[%s5838] sm:$0xff]
    %v5840 = vld [vmem:[%s5838 + $0x8] sm:$0xff]
    %v5841 = vld [vmem:[%s5838 + $0x10] sm:$0xff]
    %v5842 = vld [vmem:[%s5838 + $0x18] sm:$0xff]
    %s5843 = scalar_lea.vmem %s18, 3
    %v5844 = vld [vmem:[%s5843] sm:$0x1]
    %v5846 = vlaneseq
    %v5847 = vshrl.u32 %v5846, 7
    %v5848 = vsub.s32 0, %v5847
    %v5849 = vrot.slane %v5844, %v5848
    %v5852 = vsel %vm2823, %v5822, 0
    %v5855 = vsel %vm2823, %v5823, 0
    %v5858 = vsel %vm2823, %v5824, 0
    %v5861 = vsel %vm2823, %v5825, 0
    %v5864 = vsel %vm2823, %v5826, 0
    %v5867 = vsel %vm2823, %v5827, 0
    %v5870 = vsel %vm2823, %v5828, 0
    %v5873 = vsel %vm2823, %v5829, 0
    %v5876 = vsel %vm2823, %v5830, 0
    %v5879 = vsel %vm2823, %v5831, 0
    %v5882 = vsel %vm2823, %v5832, 0
    %v5885 = vsel %vm2823, %v5833, 0
    %v5888 = vsel %vm2823, %v5834, 0
    %v5891 = vsel %vm2823, %v5835, 0
    %v5894 = vsel %vm2823, %v5836, 0
    %v5897 = vsel %vm2823, %v5837, 0
    %5899 = vmatprep.subr.mxu0 0.0
    %5900 = vmatpush1.msra.mxu0 0.0
    %5901 = vmatprep.subr.mxu0 0.0
    %5902 = vmatpush1.msra.mxu0 0.0
    %5903 = vmatprep.subr.mxu0 0.0
    %5904 = vmatpush1.msra.mxu0 0.0
    %5905 = vmatprep.subr.mxu0 0.0
    %5906 = vmatpush1.msra.mxu0 0.0
    %5907 = vmatprep.subr.mxu0 0.0
    %5908 = vmatpush1.msra.mxu0 0.0
    %5909 = vmatprep.subr.mxu0 0.0
    %5910 = vmatpush1.msra.mxu0 0.0
    %5911 = vmatprep.subr.mxu0 0.0
    %5912 = vmatpush1.msra.mxu0 0.0
    %5913 = vmatprep.subr.mxu0 0.0
    %5914 = vmatpush1.msra.mxu0 0.0
    %5915 = vmatprep.subr.mxu0 0.0
    %5916 = vmatpush1.msra.mxu0 0.0
    %5917 = vmatprep.subr.mxu0 0.0
    %5918 = vmatpush1.msra.mxu0 0.0
    %5919 = vmatprep.subr.mxu0 0.0
    %5920 = vmatpush1.msra.mxu0 0.0
    %5921 = vmatprep.subr.mxu0 0.0
    %5922 = vmatpush1.msra.mxu0 0.0
    %5923 = vmatprep.subr.mxu0 0.0
    %5924 = vmatpush1.msra.mxu0 %v5842
    %5925 = vmatprep.subr.mxu0 0.0
    %5926 = vmatpush1.msra.mxu0 %v5841
    %5927 = vmatprep.subr.mxu0 0.0
    %5928 = vmatpush1.msra.mxu0 %v5840
    %5929 = vmatprep.subr.mxu0 0.0
    %5930 = vmatpush1.msra.mxu0 %v5839
    %5931 = vmatprep.subr.mxu0 0.0
    %5932 = vmatpush2.msra.mxu0 0.0
    %5933 = vmatprep.subr.mxu0 0.0
    %5934 = vmatpush2.msra.mxu0 0.0
    %5935 = vmatprep.subr.mxu0 0.0
    %5936 = vmatpush2.msra.mxu0 0.0
    %5937 = vmatprep.subr.mxu0 0.0
    %5938 = vmatpush2.msra.mxu0 0.0
    %5939 = vmatprep.subr.mxu0 0.0
    %5940 = vmatpush2.msra.mxu0 0.0
    %5941 = vmatprep.subr.mxu0 0.0
    %5942 = vmatpush2.msra.mxu0 0.0
    %5943 = vmatprep.subr.mxu0 0.0
    %5944 = vmatpush2.msra.mxu0 0.0
    %5945 = vmatprep.subr.mxu0 0.0
    %5946 = vmatpush2.msra.mxu0 0.0
    %5947 = vmatprep.subr.mxu0 0.0
    %5948 = vmatpush2.msra.mxu0 0.0
    %5949 = vmatprep.subr.mxu0 0.0
    %5950 = vmatpush2.msra.mxu0 0.0
    %5951 = vmatprep.subr.mxu0 0.0
    %5952 = vmatpush2.msra.mxu0 0.0
    %5953 = vmatprep.subr.mxu0 0.0
    %5954 = vmatpush2.msra.mxu0 0.0
    %5955 = vmatprep.subr.mxu0 0.0
    %5956 = vmatpush2.msra.mxu0 0.0
    %5957 = vmatprep.subr.mxu0 0.0
    %5958 = vmatpush2.msra.mxu0 0.0
    %5959 = vmatprep.subr.mxu0 0.0
    %5960 = vmatpush2.msra.mxu0 0.0
    %5961 = vmatprep.subr.mxu0 0.0
    %5962 = vmatpush2.msra.mxu0 0.0
    %5963 = vmatprep.mubr.f32.mxu0 0.0
    %5964 = vmatmul.mubr.f32.gmra.mxu0 %v5852
    %v5965 = vpop.f32.mrf.mxu0
    %v5966 = vadd.f32 %v5849, %v5965
    %v5967 = vpop.f32.mrf.mxu0
    %5968 = vmatprep.mubr.f32.mxu0 0.0
    %5969 = vmatmul.mubr.f32.gmra.mxu0 %v5855
    %v5970 = vpop.f32.mrf.mxu0
    %v5971 = vadd.f32 %v5849, %v5970
    %v5972 = vpop.f32.mrf.mxu0
    %5973 = vmatprep.mubr.f32.mxu0 0.0
    %5974 = vmatmul.mubr.f32.gmra.mxu0 %v5858
    %v5975 = vpop.f32.mrf.mxu0
    %v5976 = vadd.f32 %v5849, %v5975
    %v5977 = vpop.f32.mrf.mxu0
    %5978 = vmatprep.mubr.f32.mxu0 0.0
    %5979 = vmatmul.mubr.f32.gmra.mxu0 %v5861
    %v5980 = vpop.f32.mrf.mxu0
    %v5981 = vadd.f32 %v5849, %v5980
    %v5982 = vpop.f32.mrf.mxu0
    %5983 = vmatprep.mubr.f32.mxu0 0.0
    %5984 = vmatmul.mubr.f32.gmra.mxu0 %v5864
    %v5985 = vpop.f32.mrf.mxu0
    %v5986 = vadd.f32 %v5849, %v5985
    %v5987 = vpop.f32.mrf.mxu0
    %5988 = vmatprep.mubr.f32.mxu0 0.0
    %5989 = vmatmul.mubr.f32.gmra.mxu0 %v5867
    %v5990 = vpop.f32.mrf.mxu0
    %v5991 = vadd.f32 %v5849, %v5990
    %v5992 = vpop.f32.mrf.mxu0
    %5993 = vmatprep.mubr.f32.mxu0 0.0
    %5994 = vmatmul.mubr.f32.gmra.mxu0 %v5870
    %v5995 = vpop.f32.mrf.mxu0
    %v5996 = vadd.f32 %v5849, %v5995
    %v5997 = vpop.f32.mrf.mxu0
    %5998 = vmatprep.mubr.f32.mxu0 0.0
    %5999 = vmatmul.mubr.f32.gmra.mxu0 %v5873
    %v6000 = vpop.f32.mrf.mxu0
    %v6001 = vadd.f32 %v5849, %v6000
    %v6002 = vpop.f32.mrf.mxu0
    %6003 = vmatprep.mubr.f32.mxu0 0.0
    %6004 = vmatmul.mubr.f32.gmra.mxu0 %v5876
    %v6005 = vpop.f32.mrf.mxu0
    %v6006 = vadd.f32 %v5849, %v6005
    %v6007 = vpop.f32.mrf.mxu0
    %6008 = vmatprep.mubr.f32.mxu0 0.0
    %6009 = vmatmul.mubr.f32.gmra.mxu0 %v5879
    %v6010 = vpop.f32.mrf.mxu0
    %v6011 = vadd.f32 %v5849, %v6010
    %v6012 = vpop.f32.mrf.mxu0
    %6013 = vmatprep.mubr.f32.mxu0 0.0
    %6014 = vmatmul.mubr.f32.gmra.mxu0 %v5882
    %v6015 = vpop.f32.mrf.mxu0
    %v6016 = vadd.f32 %v5849, %v6015
    %v6017 = vpop.f32.mrf.mxu0
    %6018 = vmatprep.mubr.f32.mxu0 0.0
    %6019 = vmatmul.mubr.f32.gmra.mxu0 %v5885
    %v6020 = vpop.f32.mrf.mxu0
    %v6021 = vadd.f32 %v5849, %v6020
    %v6022 = vpop.f32.mrf.mxu0
    %6023 = vmatprep.mubr.f32.mxu0 0.0
    %6024 = vmatmul.mubr.f32.gmra.mxu0 %v5888
    %v6025 = vpop.f32.mrf.mxu0
    %v6026 = vadd.f32 %v5849, %v6025
    %v6027 = vpop.f32.mrf.mxu0
    %6028 = vmatprep.mubr.f32.mxu0 0.0
    %6029 = vmatmul.mubr.f32.gmra.mxu0 %v5891
    %v6030 = vpop.f32.mrf.mxu0
    %v6031 = vadd.f32 %v5849, %v6030
    %v6032 = vpop.f32.mrf.mxu0
    %6033 = vmatprep.mubr.f32.mxu0 0.0
    %6034 = vmatmul.mubr.f32.gmra.mxu0 %v5894
    %v6035 = vpop.f32.mrf.mxu0
    %v6036 = vadd.f32 %v5849, %v6035
    %v6037 = vpop.f32.mrf.mxu0
    %6038 = vmatprep.mubr.f32.mxu0 0.0
    %6039 = vmatmul.mubr.f32.gmra.mxu0 %v5897
    %v6040 = vpop.f32.mrf.mxu0
    %v6041 = vadd.f32 %v5849, %v6040
    %v6042 = vpop.f32.mrf.mxu0
    %6043 = vdwg.mxu0
    %v6044 = vtanh.pop %v5966
    %v6045 = vtanh.pop %v5971
    %v6046 = vtanh.pop %v5976
    %v6047 = vtanh.pop %v5981
    %v6048 = vtanh.pop %v5986
    %v6049 = vtanh.pop %v5991
    %v6050 = vtanh.pop %v5996
    %v6051 = vtanh.pop %v6001
    %v6052 = vtanh.pop %v6006
    %v6053 = vtanh.pop %v6011
    %v6054 = vtanh.pop %v6016
    %v6055 = vtanh.pop %v6021
    %v6056 = vtanh.pop %v6026
    %v6057 = vtanh.pop %v6031
    %v6058 = vtanh.pop %v6036
    %v6059 = vtanh.pop %v6041
    %6060 = vst.msk [vmem:[%s19 + $0xc0] sm:$0xff] %vm137, %v6044
    %6061 = vst.msk [vmem:[%s19 + $0xc8] sm:$0xff] %vm137, %v6045
    %6062 = vst.msk [vmem:[%s19 + $0xd0] sm:$0xff] %vm137, %v6046
    %6063 = vst.msk [vmem:[%s19 + $0xd8] sm:$0xff] %vm137, %v6047
    %6064 = vst.msk [vmem:[%s19 + $0xe0] sm:$0xff] %vm137, %v6048
    %6065 = vst.msk [vmem:[%s19 + $0xe8] sm:$0xff] %vm137, %v6049
    %6066 = vst.msk [vmem:[%s19 + $0xf0] sm:$0xff] %vm137, %v6050
    %6067 = vst.msk [vmem:[%s19 + $0xf8] sm:$0xff] %vm137, %v6051
    %6068 = vst.msk [vmem:[%s19 + $0x1c0] sm:$0xff] %vm137, %v6052
    %6069 = vst.msk [vmem:[%s19 + $0x1c8] sm:$0xff] %vm137, %v6053
    %6070 = vst.msk [vmem:[%s19 + $0x1d0] sm:$0xff] %vm137, %v6054
    %6071 = vst.msk [vmem:[%s19 + $0x1d8] sm:$0xff] %vm137, %v6055
    %6072 = vst.msk [vmem:[%s19 + $0x1e0] sm:$0xff] %vm137, %v6056
    %6073 = vst.msk [vmem:[%s19 + $0x1e8] sm:$0xff] %vm137, %v6057
    %6074 = vst.msk [vmem:[%s19 + $0x1f0] sm:$0xff] %vm137, %v6058
    %6075 = vst.msk [vmem:[%s19 + $0x1f8] sm:$0xff] %vm137, %v6059
    // Predicated region
    $region94: #{atlasnet_forward.1} parent=1 // pred_check
      _
    $region95: #{atlasnet_forward.1} parent=1 // pred_check_branch
      %6077 = sbr.rel (0) target = $region97
    $region96: #{atlasnet_forward.1} parent=1 // pred_region
      _
    $region97: #{atlasnet_forward.1} parent=1 // pred_fallthru
      _
    // Predicated region
    $region98: #{atlasnet_forward.1} parent=1 // pred_check
      _
    $region99: #{atlasnet_forward.1} parent=1 // pred_check_branch
      %6079 = sbr.rel (0) target = $region101
    $region100: #{atlasnet_forward.1} parent=1 // pred_region
      _
    $region101: #{atlasnet_forward.1} parent=1 // pred_fallthru
      _
    %6080 = vsyncpa [#allocation3], 1
    %6081 = vsyncpa [#allocation5], 1
    %6082 = vsyncpa [#allocation8], 1

</llo_original>
